<compile_context>
chip_gen: v7x
topology: tpu7x:2x2x1
jax: 0.10.0
libtpu: 0.0.40
codegen_flags: <defaults>
</compile_context>

<pallas_src>
import math

import jax
import jax.numpy as jnp
from jax import lax
from jax.experimental import pallas as pl
from jax.experimental.pallas import tpu as pltpu

F32 = jnp.float32

# ---------------- config (small synthetic shapes consistent with the module) ----
EMB_DIM = 32          # args.emb_dim
HEADS = 2             # args.heads
HEAD_DIM = EMB_DIM // HEADS
PF_DIM = 64           # args.pf_dim
LAYERS = 2            # args.layers
BERT_DIM = 48         # args.bert_dim
GRAPH_HEADS = 2       # args.graph_heads
VOCAB_IN = 50         # len(vocabs[INPUT])
VOCAB_LF = 40         # len(vocabs[LOGICAL_FORM])
NER_TAGS = 5          # len(vocabs[NER])
COREF_TAGS = 3        # len(vocabs[COREF])
NUM_GRAPH_NODES = 10  # len(vocabs[GRAPH])
MAX_POS = 64          # args.max_positions
PAD_ID = 0
B = 2
S_SRC = 8
S_TRG = 8
HEAD_PAD = 128        # lane-dense packed width for all tiny output heads
NEG_INF = -1e10


# ============================ in-kernel helpers ================================

def _layer_norm(x, g, b):
    mu = jnp.mean(x, axis=-1, keepdims=True)
    var = jnp.mean((x - mu) ** 2, axis=-1, keepdims=True)
    return (x - mu) * lax.rsqrt(var + 1e-5) * g + b


def _leaky(x, slope=0.01):
    return jnp.where(x > 0, x, slope * x)


def _mha(q_all, k_all, v_all, bsz, sq, sk, mask_add, wo_full, bo):
    """Multi-head attention on pre-projected, flattened activations.

    q_all : (bsz*sq, H*d)   k_all/v_all : (bsz*sk, H*d)
    wo_full : (H*d, E) output projection, bo : (1, E)
    mask_add : (bsz, sq, sk) additive mask (0 keep / -1e10 mask).
    Per-head accumulation into the output projection equals the torch
    concat-heads-then-linear formulation exactly.
    """
    d = HEAD_DIM
    e_out = wo_full.shape[1]
    inv_scale = 1.0 / math.sqrt(d)
    out = jnp.zeros((bsz * sq, e_out), F32) + bo
    for h in range(HEADS):       # static, H=2; single-batch-dim einsums only
        q = q_all[:, h * d:(h + 1) * d].reshape(bsz, sq, d)
        k = k_all[:, h * d:(h + 1) * d].reshape(bsz, sk, d)
        v = v_all[:, h * d:(h + 1) * d].reshape(bsz, sk, d)
        e = jnp.einsum("bqd,bkd->bqk", q, k,
                       preferred_element_type=F32) * inv_scale
        e = e + mask_add
        e = e - jnp.max(e, axis=-1, keepdims=True)
        p = jnp.exp(e)
        p = p * pl.reciprocal(jnp.sum(p, axis=-1, keepdims=True), approx=True)
        ctx = jnp.einsum("bqk,bkd->bqd", p, v, preferred_element_type=F32)
        out = out + jnp.dot(ctx.reshape(bsz * sq, d),
                            wo_full[h * d:(h + 1) * d, :],
                            preferred_element_type=F32)
    return out


# ============================ the fused kernel =================================

def _lasagne_kernel(
    # activations / masks
    xsrc_ref, ytrg_ref, encm_ref, trgm_ref, crossm_ref,
    # encoder stack (stacked over LAYERS)
    e_wqkv_ref, e_bqkv_ref, e_wo_ref, e_bo_ref, e_lng_ref, e_lnb_ref,
    e_w1_ref, e_b1_ref, e_w2_ref, e_b2_ref,
    # NER / coref
    wih_ref, whh_ref, blstm_ref, cor_w1_ref, cor_b1_ref,
    wner_pad_ref, wcor2_pad_ref, bheads_pad_ref,
    # decoder stack (stacked over LAYERS)
    d_wqkv_ref, d_bqkv_ref, d_wo_s_ref, d_bo_s_ref,
    d_wq_c_ref, d_bq_c_ref, d_wkv_c_ref, d_bkv_c_ref, d_wo_c_ref, d_bo_c_ref,
    d_lng_ref, d_lnb_ref, d_w1_ref, d_b1_ref, d_w2_ref, d_b2_ref,
    # decoder heads / graph score (lane-dense packed, host-folded)
    wdec_pad_ref, bdec_pad_ref, vctx_blk_ref, gbias_pad_ref,
    ctx_w1_ref, ctx_b1_ref, wc2_pad_ref, bc2_pad_ref,
    # outputs
    heads_src_ref, heads_trg_ref,
    # scratch
    hs_sc,
):
    e = EMB_DIM
    bsz, ss, _ = xsrc_ref.shape
    st = ytrg_ref.shape[1]
    enc_mask = encm_ref[...]
    trg_mask = trgm_ref[...]
    cross_mask = crossm_ref[...]

    # ---------------- encoder stack (all layers in-kernel) ----------------
    x2 = xsrc_ref[...].reshape(bsz * ss, e)
    for l in range(LAYERS):                                  # static, LAYERS=2
        g, b = e_lng_ref[l], e_lnb_ref[l]
        qkv = jnp.dot(x2, e_wqkv_ref[l], preferred_element_type=F32) + e_bqkv_ref[l]
        attn = _mha(qkv[:, 0:e], qkv[:, e:2 * e], qkv[:, 2 * e:3 * e],
                    bsz, ss, ss, enc_mask, e_wo_ref[l], e_bo_ref[l])
        h1 = _layer_norm(x2 + attn, g, b)
        ff = jnp.maximum(jnp.dot(h1, e_w1_ref[l], preferred_element_type=F32)
                         + e_b1_ref[l], 0.0)
        ff = jnp.dot(ff, e_w2_ref[l], preferred_element_type=F32) + e_b2_ref[l]
        x2 = _layer_norm(h1 + ff, g, b)
    enc2 = x2                                                # (B*S_SRC, E)
    enc3 = enc2.reshape(bsz, ss, e)

    # ---------------- NER + coref (LSTM vectorized over batch) ----------------
    # input projection for all timesteps at once (one MXU matmul)
    gates_x3 = (jnp.dot(enc2, wih_ref[...], preferred_element_type=F32)
                + blstm_ref[...]).reshape(bsz, ss, 4 * e)    # (B, S, 4E)
    whh = whh_ref[...]
    h = jnp.zeros((bsz, e), F32)
    c = jnp.zeros((bsz, e), F32)
    for t in range(ss):                                      # static unroll, S=8
        pre = gates_x3[:, t, :] + jnp.dot(h, whh, preferred_element_type=F32)
        sg = jax.nn.sigmoid(pre)                             # full 128-lane EUP pass
        th = jnp.tanh(pre)
        i_g = sg[:, 0:e]
        f_g = sg[:, e:2 * e]
        g_g = th[:, 2 * e:3 * e]
        o_g = sg[:, 3 * e:4 * e]
        c = f_g * c + i_g * g_g
        h = o_g * jnp.tanh(c)
        for bb in range(bsz):                                # B=2 row writes
            hs_sc[bb * ss + t: bb * ss + t + 1, :] = h[bb:bb + 1, :]
    lstm_out = hs_sc[...]                                    # (B*S_SRC, E)
    ner_h = _leaky(lstm_out)                                 # LeakyReLU(0.01)
    # coref l1 on cat([encoder_out, ner_h]) == split-weight sum of two matmuls
    wc1 = cor_w1_ref[...]
    cor_hid = _leaky(jnp.dot(enc2, wc1[0:e], preferred_element_type=F32)
                     + jnp.dot(ner_h, wc1[e:2 * e], preferred_element_type=F32)
                     + cor_b1_ref[...])
    # NER (cols 0:5) + coref (cols 5:8) packed lane-dense into one 128-wide store
    heads_src_ref[...] = (
        jnp.dot(ner_h, wner_pad_ref[...], preferred_element_type=F32)
        + jnp.dot(cor_hid, wcor2_pad_ref[...], preferred_element_type=F32)
        + bheads_pad_ref[...])

    # ---------------- decoder stack (all layers in-kernel) ----------------
    y2 = ytrg_ref[...].reshape(bsz * st, e)
    for l in range(LAYERS):
        g, b = d_lng_ref[l], d_lnb_ref[l]
        # self-attention
        qkv = jnp.dot(y2, d_wqkv_ref[l], preferred_element_type=F32) + d_bqkv_ref[l]
        a = _mha(qkv[:, 0:e], qkv[:, e:2 * e], qkv[:, 2 * e:3 * e],
                 bsz, st, st, trg_mask, d_wo_s_ref[l], d_bo_s_ref[l])
        h1 = _layer_norm(y2 + a, g, b)
        # cross-attention (queries from decoder state, keys/values from encoder)
        q = jnp.dot(h1, d_wq_c_ref[l], preferred_element_type=F32) + d_bq_c_ref[l]
        kv = jnp.dot(enc2, d_wkv_c_ref[l], preferred_element_type=F32) + d_bkv_c_ref[l]
        a = _mha(q, kv[:, 0:e], kv[:, e:2 * e],
                 bsz, st, ss, cross_mask, d_wo_c_ref[l], d_bo_c_ref[l])
        h2 = _layer_norm(h1 + a, g, b)
        ff = jnp.maximum(jnp.dot(h2, d_w1_ref[l], preferred_element_type=F32)
                         + d_b1_ref[l], 0.0)
        ff = jnp.dot(ff, d_w2_ref[l], preferred_element_type=F32) + d_b2_ref[l]
        y2 = _layer_norm(h2 + ff, g, b)
    dh2 = y2                                                 # (B*S_TRG, E)

    # -------- decoder heads: logical form (cols 0:40) + graph (cols 40:50) --------
    ctx = enc3[:, ss - 1, :]                                 # encoder_out[:, -1, :]
    lf_pad = (jnp.dot(dh2, wdec_pad_ref[...], preferred_element_type=F32)
              + bdec_pad_ref[...])                           # (B*S_TRG, 128)
    # graph score: folded affine chain; nonzero only on the graph columns
    score_pad = (jnp.dot(ctx, vctx_blk_ref[...], preferred_element_type=F32)
                 + gbias_pad_ref[...])                       # (B, 128)
    # context net on cat([encoder_ctx expanded, decoder_h])
    wc1 = ctx_w1_ref[...]
    ctx_c = jnp.dot(ctx, wc1[0:e], preferred_element_type=F32)       # (B, E)
    ctx_rep = jnp.broadcast_to(ctx_c[:, None, :], (bsz, st, e)).reshape(bsz * st, e)
    hid = _leaky(jnp.dot(dh2, wc1[e:2 * e], preferred_element_type=F32)
                 + ctx_rep + ctx_b1_ref[...])
    gnet_pad = (jnp.dot(hid, wc2_pad_ref[...], preferred_element_type=F32)
                + bc2_pad_ref[...])                          # (B*S_TRG, 128)
    score_rep = jnp.broadcast_to(score_pad[:, None, :],
                                 (bsz, st, HEAD_PAD)).reshape(bsz * st, HEAD_PAD)
    heads_trg_ref[...] = lf_pad + gnet_pad * score_rep


# ============================ host-side pieces =================================

def gat_conv(x, edge_index, p):
    """GATConv(BERT_DIM -> EMB_DIM, heads=GRAPH_HEADS, concat=True), plain XLA.

    TODO(synk): sparse edge softmax / scatter-add stay in plain JAX segment ops;
    no dense Pallas equivalent is worthwhile at N=10 nodes / 30 edges."""
    n = x.shape[0]
    xp = x @ p["w"]                                          # (N, GH*E)
    xp_h = xp.reshape(n, GRAPH_HEADS, EMB_DIM)
    a_src = jnp.sum(xp_h * p["att_src"][None], axis=-1)      # (N, GH)
    a_dst = jnp.sum(xp_h * p["att_dst"][None], axis=-1)
    src, dst = edge_index[0], edge_index[1]
    alpha = a_src[src] + a_dst[dst]
    alpha = jnp.where(alpha > 0, alpha, 0.2 * alpha)         # LeakyReLU(0.2)
    amax = jax.ops.segment_max(alpha, dst, num_segments=n)
    alpha = jnp.exp(alpha - amax[dst])
    asum = jax.ops.segment_sum(alpha, dst, num_segments=n)
    alpha = alpha / asum[dst]
    msg = alpha[:, :, None] * xp_h[src]
    out = jax.ops.segment_sum(msg, dst, num_segments=n)
    return out.reshape(n, GRAPH_HEADS * EMB_DIM) + p["bias"]


def positional_embedding(max_len, d):
    position = jnp.arange(max_len, dtype=F32)[:, None]
    div = jnp.exp(jnp.arange(0, d, 2, dtype=F32) * -(math.log(10000.0) / d))
    pe = jnp.zeros((max_len, d), F32)
    pe = pe.at[:, 0::2].set(jnp.sin(position * div))
    pe = pe.at[:, 1::2].set(jnp.cos(position * div))
    return pe


def lasagne_forward(src_tokens, trg_tokens, params, graph_x, edge_index):
    bx, ss = src_tokens.shape
    st = trg_tokens.shape[1]
    e = EMB_DIM

    # additive masks computed once on the host, shared by all layers
    src_keep = (src_tokens != PAD_ID)
    enc_keep = jnp.broadcast_to(src_keep[:, None, :], (bx, ss, ss))
    cross_keep = jnp.broadcast_to(src_keep[:, None, :], (bx, st, ss))
    causal = jnp.tril(jnp.ones((st, st), dtype=bool))[None]
    trg_keep = (trg_tokens != PAD_ID)[:, :, None] & causal
    to_add = lambda m: jnp.where(m, 0.0, NEG_INF).astype(F32)
    enc_mask_add = to_add(enc_keep)
    trg_mask_add = to_add(trg_keep)
    cross_mask_add = to_add(cross_keep)

    # embeddings (gathers stay in XLA)
    x = jnp.take(params["enc_embed"], src_tokens, axis=0) * math.sqrt(e)
    x = x + params["pos_embed"][None, :ss, :]
    y = jnp.take(params["dec_embed"], trg_tokens, axis=0) * math.sqrt(e)
    y = y + params["pos_embed"][None, :st, :]

    # GAT (sparse part) + exact host-side folding of linear_out -> score
    gp = params["graph_net"]
    g = gat_conv(graph_x, edge_index, gp["gat"])             # (N, GH*E)
    wlo, blo = gp["linear_out"]["w"], gp["linear_out"]["b"]
    wsc, bsc = gp["score"]["w"], gp["score"]["b"]
    v_ctx = wlo[:e] @ wsc                                    # (E, 1)
    g_term = (g @ (wlo[e:] @ wsc)).T + (blo @ wsc + bsc)     # (1, N)
    lo, hi = VOCAB_LF, VOCAB_LF + NUM_GRAPH_NODES
    v_ctx_blk = jnp.zeros((e, HEAD_PAD), F32).at[:, lo:hi].set(
        jnp.broadcast_to(v_ctx, (e, NUM_GRAPH_NODES)))
    g_bias_pad = jnp.zeros((1, HEAD_PAD), F32).at[:, lo:hi].set(g_term)

    ep, dp = params["enc_stack"], params["dec_stack"]
    nc, hp = params["ner_coref"], params["heads"]

    heads_src, heads_trg = pl.pallas_call(
        _lasagne_kernel,
        out_shape=(jax.ShapeDtypeStruct((bx * ss, HEAD_PAD), F32),
                   jax.ShapeDtypeStruct((bx * st, HEAD_PAD), F32)),
        scratch_shapes=[pltpu.VMEM((bx * ss, e), F32)],
    )(x, y, enc_mask_add, trg_mask_add, cross_mask_add,
      ep["wqkv"], ep["bqkv"], ep["wo"], ep["bo"], ep["lng"], ep["lnb"],
      ep["w1"], ep["b1"], ep["w2"], ep["b2"],
      nc["w_ih"], nc["w_hh"], nc["b"], nc["cor_w1"], nc["cor_b1"],
      nc["w_ner_pad"], nc["w_cor2_pad"], nc["b_heads_pad"],
      dp["wqkv"], dp["bqkv"], dp["wo_s"], dp["bo_s"],
      dp["wq_c"], dp["bq_c"], dp["wkv_c"], dp["bkv_c"], dp["wo_c"], dp["bo_c"],
      dp["lng"], dp["lnb"], dp["w1"], dp["b1"], dp["w2"], dp["b2"],
      hp["w_dec_pad"], hp["b_dec_pad"], v_ctx_blk, g_bias_pad,
      gp["ctx_l1"]["w"], gp["ctx_l1"]["b"], hp["w_c2_pad"], hp["b_c2_pad"])

    return {"logical_form": heads_trg[:, :VOCAB_LF],
            "ner": heads_src[:, :NER_TAGS],
            "coref": heads_src[:, NER_TAGS:NER_TAGS + COREF_TAGS],
            "graph": heads_trg[:, VOCAB_LF:VOCAB_LF + NUM_GRAPH_NODES]}


# ================================ parameter init ================================

class _KeyGen:
    def __init__(self, key):
        self.key = key
        self.i = 0

    def __call__(self):
        self.i += 1
        return jax.random.fold_in(self.key, self.i)


def init_params(key):
    kg = _KeyGen(key)
    e = EMB_DIM

    def lin(i, o):
        bd = 1.0 / math.sqrt(i)
        return {"w": jax.random.uniform(kg(), (i, o), F32, -bd, bd),
                "b": jax.random.uniform(kg(), (1, o), F32, -bd, bd)}

    def attn_self():     # fused QKV (one (E,3E) matmul in-kernel)
        q, k, v, o = lin(e, e), lin(e, e), lin(e, e), lin(e, e)
        return {"wqkv": jnp.concatenate([q["w"], k["w"], v["w"]], axis=1),
                "bqkv": jnp.concatenate([q["b"], k["b"], v["b"]], axis=1),
                "wo": o["w"], "bo": o["b"]}

    def attn_cross():    # separate q (from decoder) and fused kv (from encoder)
        q, k, v, o = lin(e, e), lin(e, e), lin(e, e), lin(e, e)
        return {"wq": q["w"], "bq": q["b"],
                "wkv": jnp.concatenate([k["w"], v["w"]], axis=1),
                "bkv": jnp.concatenate([k["b"], v["b"]], axis=1),
                "wo": o["w"], "bo": o["b"]}

    # encoder layers -> stacked with leading LAYERS dim
    enc_layers = []
    for _ in range(LAYERS):
        a = attn_self()
        l1, l2 = lin(e, PF_DIM), lin(PF_DIM, e)
        # note: the reference layer reuses ONE LayerNorm module for both LN sites
        enc_layers.append(dict(wqkv=a["wqkv"], bqkv=a["bqkv"], wo=a["wo"], bo=a["bo"],
                               lng=jnp.ones((1, e), F32), lnb=jnp.zeros((1, e), F32),
                               w1=l1["w"], b1=l1["b"], w2=l2["w"], b2=l2["b"]))
    enc_stack = {k: jnp.stack([lyr[k] for lyr in enc_layers]) for k in enc_layers[0]}

    dec_layers = []
    for _ in range(LAYERS):
        sa, ca = attn_self(), attn_cross()
        l1, l2 = lin(e, PF_DIM), lin(PF_DIM, e)
        dec_layers.append(dict(
            wqkv=sa["wqkv"], bqkv=sa["bqkv"], wo_s=sa["wo"], bo_s=sa["bo"],
            wq_c=ca["wq"], bq_c=ca["bq"], wkv_c=ca["wkv"], bkv_c=ca["bkv"],
            wo_c=ca["wo"], bo_c=ca["bo"],
            lng=jnp.ones((1, e), F32), lnb=jnp.zeros((1, e), F32),
            w1=l1["w"], b1=l1["b"], w2=l2["w"], b2=l2["b"]))
    dec_stack = {k: jnp.stack([lyr[k] for lyr in dec_layers]) for k in dec_layers[0]}

    # NER/coref heads, zero-padded into one lane-dense 128-wide projection.
    ner_lin = lin(e, NER_TAGS)
    cor_l1 = lin(2 * e, e)
    cor_l2 = lin(e, COREF_TAGS)
    w_ner_pad = jnp.zeros((e, HEAD_PAD), F32).at[:, :NER_TAGS].set(ner_lin["w"])
    w_cor2_pad = jnp.zeros((e, HEAD_PAD), F32).at[
        :, NER_TAGS:NER_TAGS + COREF_TAGS].set(cor_l2["w"])
    b_heads = (jnp.zeros((1, HEAD_PAD), F32)
               .at[:, :NER_TAGS].set(ner_lin["b"])
               .at[:, NER_TAGS:NER_TAGS + COREF_TAGS].set(cor_l2["b"]))
    # TODO(synk): torch LSTM has separate bias_ih/bias_hh; a single combined bias
    # is used here (mathematically equivalent to their sum).
    ner_coref = {
        "w_ih": jax.random.uniform(kg(), (e, 4 * e), F32, -0.1, 0.1),
        "w_hh": jax.random.uniform(kg(), (e, 4 * e), F32, -0.1, 0.1),
        "b": jax.random.uniform(kg(), (1, 4 * e), F32, -0.1, 0.1),
        "cor_w1": cor_l1["w"], "cor_b1": cor_l1["b"],
        "w_ner_pad": w_ner_pad, "w_cor2_pad": w_cor2_pad, "b_heads_pad": b_heads,
    }

    # decoder output head + GraphNet context-net l2, packed into the same 128 lanes
    dec_out = lin(e, VOCAB_LF)
    ctx_l2 = lin(e, NUM_GRAPH_NODES)
    lo, hi = VOCAB_LF, VOCAB_LF + NUM_GRAPH_NODES
    heads = {
        "w_dec_pad": jnp.zeros((e, HEAD_PAD), F32).at[:, :VOCAB_LF].set(dec_out["w"]),
        "b_dec_pad": jnp.zeros((1, HEAD_PAD), F32).at[:, :VOCAB_LF].set(dec_out["b"]),
        "w_c2_pad": jnp.zeros((e, HEAD_PAD), F32).at[:, lo:hi].set(ctx_l2["w"]),
        "b_c2_pad": jnp.zeros((1, HEAD_PAD), F32).at[:, lo:hi].set(ctx_l2["b"]),
    }

    graph_net = {
        "gat": {
            "w": jax.random.uniform(kg(), (BERT_DIM, GRAPH_HEADS * e), F32, -0.1, 0.1),
            "att_src": jax.random.uniform(kg(), (GRAPH_HEADS, e), F32, -0.1, 0.1),
            "att_dst": jax.random.uniform(kg(), (GRAPH_HEADS, e), F32, -0.1, 0.1),
            "bias": jnp.zeros((GRAPH_HEADS * e,), F32),
        },
        "linear_out": lin(e * GRAPH_HEADS + e, e),
        "score": lin(e, 1),
        "ctx_l1": lin(2 * e, e),
    }

    return {"enc_embed": jax.random.normal(kg(), (VOCAB_IN, e), F32),
            "dec_embed": jax.random.normal(kg(), (VOCAB_LF, e), F32),
            "pos_embed": positional_embedding(MAX_POS, e),
            "enc_stack": enc_stack, "dec_stack": dec_stack,
            "ner_coref": ner_coref, "heads": heads, "graph_net": graph_net}


def build_graph(key):
    """Synthetic TypeRelationGraph: node features + ring edges + self loops."""
    n = NUM_GRAPH_NODES
    x = jax.random.normal(key, (n, BERT_DIM), F32)
    idx = jnp.arange(n)
    src = jnp.concatenate([idx, idx, idx])
    dst = jnp.concatenate([(idx + 1) % n, (idx - 1) % n, idx])
    edge_index = jnp.stack([src, dst], axis=0)
    return x, edge_index


# ==================================== main ======================================

if __name__ == "__main__":
    root = jax.random.PRNGKey(0)
    k_param, k_graph, k_src, k_trg = jax.random.split(root, 4)

    params = init_params(k_param)
    graph_x, edge_index = build_graph(k_graph)

    src_tokens = jax.random.randint(k_src, (B, S_SRC), 0, VOCAB_IN)
    trg_tokens = jax.random.randint(k_trg, (B, S_TRG), 0, VOCAB_LF)

    fwd = jax.jit(lasagne_forward)
    out = fwd(src_tokens, trg_tokens, params, graph_x, edge_index)
    out = jax.tree_util.tree_map(jax.block_until_ready, out)

    assert out["logical_form"].shape == (B * S_TRG, VOCAB_LF)
    assert out["ner"].shape == (B * S_SRC, NER_TAGS)
    assert out["coref"].shape == (B * S_SRC, COREF_TAGS)
    assert out["graph"].shape == (B * S_TRG, NUM_GRAPH_NODES)
    assert all(bool(jnp.all(jnp.isfinite(v))) for v in out.values())

    print("KERNEL_OK")
</pallas_src>

<mosaic_0001>
module attributes {stable_mosaic.version = 11 : i64} {
  func.func @_lasagne_kernel(%arg0: memref<2x8x32xf32, #tpu.memory_space<vmem>>, %arg1: memref<2x8x32xf32, #tpu.memory_space<vmem>>, %arg2: memref<2x8x8xf32, #tpu.memory_space<vmem>>, %arg3: memref<2x8x8xf32, #tpu.memory_space<vmem>>, %arg4: memref<2x8x8xf32, #tpu.memory_space<vmem>>, %arg5: memref<2x32x96xf32, #tpu.memory_space<vmem>>, %arg6: memref<2x1x96xf32, #tpu.memory_space<vmem>>, %arg7: memref<2x32x32xf32, #tpu.memory_space<vmem>>, %arg8: memref<2x1x32xf32, #tpu.memory_space<vmem>>, %arg9: memref<2x1x32xf32, #tpu.memory_space<vmem>>, %arg10: memref<2x1x32xf32, #tpu.memory_space<vmem>>, %arg11: memref<2x32x64xf32, #tpu.memory_space<vmem>>, %arg12: memref<2x1x64xf32, #tpu.memory_space<vmem>>, %arg13: memref<2x64x32xf32, #tpu.memory_space<vmem>>, %arg14: memref<2x1x32xf32, #tpu.memory_space<vmem>>, %arg15: memref<32x128xf32, #tpu.memory_space<vmem>>, %arg16: memref<32x128xf32, #tpu.memory_space<vmem>>, %arg17: memref<1x128xf32, #tpu.memory_space<vmem>>, %arg18: memref<64x32xf32, #tpu.memory_space<vmem>>, %arg19: memref<1x32xf32, #tpu.memory_space<vmem>>, %arg20: memref<32x128xf32, #tpu.memory_space<vmem>>, %arg21: memref<32x128xf32, #tpu.memory_space<vmem>>, %arg22: memref<1x128xf32, #tpu.memory_space<vmem>>, %arg23: memref<2x32x96xf32, #tpu.memory_space<vmem>>, %arg24: memref<2x1x96xf32, #tpu.memory_space<vmem>>, %arg25: memref<2x32x32xf32, #tpu.memory_space<vmem>>, %arg26: memref<2x1x32xf32, #tpu.memory_space<vmem>>, %arg27: memref<2x32x32xf32, #tpu.memory_space<vmem>>, %arg28: memref<2x1x32xf32, #tpu.memory_space<vmem>>, %arg29: memref<2x32x64xf32, #tpu.memory_space<vmem>>, %arg30: memref<2x1x64xf32, #tpu.memory_space<vmem>>, %arg31: memref<2x32x32xf32, #tpu.memory_space<vmem>>, %arg32: memref<2x1x32xf32, #tpu.memory_space<vmem>>, %arg33: memref<2x1x32xf32, #tpu.memory_space<vmem>>, %arg34: memref<2x1x32xf32, #tpu.memory_space<vmem>>, %arg35: memref<2x32x64xf32, #tpu.memory_space<vmem>>, %arg36: memref<2x1x64xf32, #tpu.memory_space<vmem>>, %arg37: memref<2x64x32xf32, #tpu.memory_space<vmem>>, %arg38: memref<2x1x32xf32, #tpu.memory_space<vmem>>, %arg39: memref<32x128xf32, #tpu.memory_space<vmem>>, %arg40: memref<1x128xf32, #tpu.memory_space<vmem>>, %arg41: memref<32x128xf32, #tpu.memory_space<vmem>>, %arg42: memref<1x128xf32, #tpu.memory_space<vmem>>, %arg43: memref<64x32xf32, #tpu.memory_space<vmem>>, %arg44: memref<1x32xf32, #tpu.memory_space<vmem>>, %arg45: memref<32x128xf32, #tpu.memory_space<vmem>>, %arg46: memref<1x128xf32, #tpu.memory_space<vmem>>, %arg47: memref<16x128xf32, #tpu.memory_space<vmem>>, %arg48: memref<16x128xf32, #tpu.memory_space<vmem>>, %arg49: memref<16x32xf32, #tpu.memory_space<vmem>>) attributes {dimension_semantics = [], scalar_prefetch = 0 : i64, scratch_operands = 1 : i64, tpu.core_type = #tpu.core_type<tc>} {
    %c0 = arith.constant 0 : index
    %c0_0 = arith.constant 0 : index
    %c0_1 = arith.constant 0 : index
    %0 = vector.load %arg2[%c0, %c0_0, %c0_1] : memref<2x8x8xf32, #tpu.memory_space<vmem>>, vector<2x8x8xf32>
    %c0_2 = arith.constant 0 : index
    %c0_3 = arith.constant 0 : index
    %c0_4 = arith.constant 0 : index
    %1 = vector.load %arg3[%c0_2, %c0_3, %c0_4] : memref<2x8x8xf32, #tpu.memory_space<vmem>>, vector<2x8x8xf32>
    %c0_5 = arith.constant 0 : index
    %c0_6 = arith.constant 0 : index
    %c0_7 = arith.constant 0 : index
    %2 = vector.load %arg4[%c0_5, %c0_6, %c0_7] : memref<2x8x8xf32, #tpu.memory_space<vmem>>, vector<2x8x8xf32>
    %c0_8 = arith.constant 0 : index
    %c0_9 = arith.constant 0 : index
    %c0_10 = arith.constant 0 : index
    %3 = vector.load %arg0[%c0_8, %c0_9, %c0_10] : memref<2x8x32xf32, #tpu.memory_space<vmem>>, vector<2x8x32xf32>
    %4 = vector.shape_cast %3 : vector<2x8x32xf32> to vector<16x32xf32>
    %c0_11 = arith.constant 0 : index
    %c0_12 = arith.constant 0 : index
    %c0_13 = arith.constant 0 : index
    %5 = vector.load %arg9[%c0_11, %c0_12, %c0_13] : memref<2x1x32xf32, #tpu.memory_space<vmem>>, vector<1x1x32xf32>
    %6 = vector.shape_cast %5 : vector<1x1x32xf32> to vector<1x32xf32>
    %c0_14 = arith.constant 0 : index
    %c0_15 = arith.constant 0 : index
    %c0_16 = arith.constant 0 : index
    %7 = vector.load %arg10[%c0_14, %c0_15, %c0_16] : memref<2x1x32xf32, #tpu.memory_space<vmem>>, vector<1x1x32xf32>
    %8 = vector.shape_cast %7 : vector<1x1x32xf32> to vector<1x32xf32>
    %c0_17 = arith.constant 0 : index
    %c0_18 = arith.constant 0 : index
    %c0_19 = arith.constant 0 : index
    %9 = vector.load %arg5[%c0_17, %c0_18, %c0_19] : memref<2x32x96xf32, #tpu.memory_space<vmem>>, vector<1x32x96xf32>
    %10 = vector.shape_cast %9 : vector<1x32x96xf32> to vector<32x96xf32>
    %cst = arith.constant dense<0.000000e+00> : vector<16x96xf32>
    %11 = tpu.matmul %4, %10, %cst {dimension_numbers = #tpu.dot_dimension_numbers<[1], [0], [0], [1], [0, 0, 1, 1], [], []>} : vector<16x32xf32>, vector<32x96xf32>, vector<16x96xf32> -> vector<16x96xf32>
    %c0_20 = arith.constant 0 : index
    %c0_21 = arith.constant 0 : index
    %c0_22 = arith.constant 0 : index
    %12 = vector.load %arg6[%c0_20, %c0_21, %c0_22] : memref<2x1x96xf32, #tpu.memory_space<vmem>>, vector<1x1x96xf32>
    %13 = vector.shape_cast %12 : vector<1x1x96xf32> to vector<1x96xf32>
    %14 = vector.broadcast %13 : vector<1x96xf32> to vector<16x96xf32>
    %15 = arith.addf %11, %14 : vector<16x96xf32>
    %16 = vector.extract_strided_slice %15 {offsets = [0, 0], sizes = [16, 32], strides = [1, 1]} : vector<16x96xf32> to vector<16x32xf32>
    %17 = vector.extract_strided_slice %15 {offsets = [0, 32], sizes = [16, 32], strides = [1, 1]} : vector<16x96xf32> to vector<16x32xf32>
    %18 = vector.extract_strided_slice %15 {offsets = [0, 64], sizes = [16, 32], strides = [1, 1]} : vector<16x96xf32> to vector<16x32xf32>
    %c0_23 = arith.constant 0 : index
    %c0_24 = arith.constant 0 : index
    %c0_25 = arith.constant 0 : index
    %19 = vector.load %arg7[%c0_23, %c0_24, %c0_25] : memref<2x32x32xf32, #tpu.memory_space<vmem>>, vector<1x32x32xf32>
    %20 = vector.shape_cast %19 : vector<1x32x32xf32> to vector<32x32xf32>
    %c0_26 = arith.constant 0 : index
    %c0_27 = arith.constant 0 : index
    %c0_28 = arith.constant 0 : index
    %21 = vector.load %arg8[%c0_26, %c0_27, %c0_28] : memref<2x1x32xf32, #tpu.memory_space<vmem>>, vector<1x1x32xf32>
    %22 = vector.shape_cast %21 : vector<1x1x32xf32> to vector<1x32xf32>
    %cst_29 = arith.constant 0.000000e+00 : f32
    %23 = vector.broadcast %cst_29 : f32 to vector<16x32xf32>
    %24 = vector.broadcast %22 : vector<1x32xf32> to vector<16x32xf32>
    %25 = arith.addf %23, %24 : vector<16x32xf32>
    %26 = vector.extract_strided_slice %16 {offsets = [0, 0], sizes = [16, 16], strides = [1, 1]} : vector<16x32xf32> to vector<16x16xf32>
    %27 = vector.shape_cast %26 : vector<16x16xf32> to vector<2x8x16xf32>
    %28 = vector.extract_strided_slice %17 {offsets = [0, 0], sizes = [16, 16], strides = [1, 1]} : vector<16x32xf32> to vector<16x16xf32>
    %29 = vector.shape_cast %28 : vector<16x16xf32> to vector<2x8x16xf32>
    %30 = vector.extract_strided_slice %18 {offsets = [0, 0], sizes = [16, 16], strides = [1, 1]} : vector<16x32xf32> to vector<16x16xf32>
    %31 = vector.shape_cast %30 : vector<16x16xf32> to vector<2x8x16xf32>
    "tpu.trace_start"() <{level = 10 : i32, message = "bqd,bkd->bqk"}> : () -> ()
    %cst_30 = arith.constant dense<0.000000e+00> : vector<2x8x8xf32>
    %32 = tpu.matmul %27, %29, %cst_30 {dimension_numbers = #tpu.dot_dimension_numbers<[2], [2], [1], [1], [0, 0, 0, 1, 1, 1], [0], [0]>} : vector<2x8x16xf32>, vector<2x8x16xf32>, vector<2x8x8xf32> -> vector<2x8x8xf32>
    "tpu.trace_stop"() : () -> ()
    %cst_31 = arith.constant 2.500000e-01 : f32
    %33 = vector.broadcast %cst_31 : f32 to vector<2x8x8xf32>
    %34 = arith.mulf %32, %33 : vector<2x8x8xf32>
    %35 = arith.addf %34, %0 : vector<2x8x8xf32>
    %cst_32 = arith.constant dense<0xFF800000> : vector<2x8xf32>
    %36 = vector.multi_reduction <maximumf>, %35, %cst_32 [2] : vector<2x8x8xf32> to vector<2x8xf32>
    %37 = vector.shape_cast %36 : vector<2x8xf32> to vector<2x8x1xf32>
    %38 = vector.broadcast %37 : vector<2x8x1xf32> to vector<2x8x8xf32>
    %39 = arith.subf %35, %38 : vector<2x8x8xf32>
    %40 = math.exp %39 : vector<2x8x8xf32>
    %cst_33 = arith.constant dense<0.000000e+00> : vector<2x8xf32>
    %41 = vector.multi_reduction <add>, %40, %cst_33 [2] : vector<2x8x8xf32> to vector<2x8xf32>
    %42 = vector.shape_cast %41 : vector<2x8xf32> to vector<2x8x1xf32>
    %43 = tpu.reciprocal %42 {approx = true} : vector<2x8x1xf32> -> vector<2x8x1xf32>
    %44 = vector.broadcast %43 : vector<2x8x1xf32> to vector<2x8x8xf32>
    %45 = arith.mulf %40, %44 : vector<2x8x8xf32>
    "tpu.trace_start"() <{level = 10 : i32, message = "bqk,bkd->bqd"}> : () -> ()
    %cst_34 = arith.constant dense<0.000000e+00> : vector<2x8x16xf32>
    %46 = tpu.matmul %45, %31, %cst_34 {dimension_numbers = #tpu.dot_dimension_numbers<[2], [1], [1], [2], [0, 0, 0, 1, 1, 2], [0], [0]>} : vector<2x8x8xf32>, vector<2x8x16xf32>, vector<2x8x16xf32> -> vector<2x8x16xf32>
    "tpu.trace_stop"() : () -> ()
    %47 = vector.shape_cast %46 : vector<2x8x16xf32> to vector<16x16xf32>
    %48 = vector.extract_strided_slice %20 {offsets = [0, 0], sizes = [16, 32], strides = [1, 1]} : vector<32x32xf32> to vector<16x32xf32>
    %cst_35 = arith.constant dense<0.000000e+00> : vector<16x32xf32>
    %49 = tpu.matmul %47, %48, %cst_35 {dimension_numbers = #tpu.dot_dimension_numbers<[1], [0], [0], [1], [0, 0, 1, 1], [], []>} : vector<16x16xf32>, vector<16x32xf32>, vector<16x32xf32> -> vector<16x32xf32>
    %50 = arith.addf %25, %49 : vector<16x32xf32>
    %51 = vector.extract_strided_slice %16 {offsets = [0, 16], sizes = [16, 16], strides = [1, 1]} : vector<16x32xf32> to vector<16x16xf32>
    %52 = vector.shape_cast %51 : vector<16x16xf32> to vector<2x8x16xf32>
    %53 = vector.extract_strided_slice %17 {offsets = [0, 16], sizes = [16, 16], strides = [1, 1]} : vector<16x32xf32> to vector<16x16xf32>
    %54 = vector.shape_cast %53 : vector<16x16xf32> to vector<2x8x16xf32>
    %55 = vector.extract_strided_slice %18 {offsets = [0, 16], sizes = [16, 16], strides = [1, 1]} : vector<16x32xf32> to vector<16x16xf32>
    %56 = vector.shape_cast %55 : vector<16x16xf32> to vector<2x8x16xf32>
    "tpu.trace_start"() <{level = 10 : i32, message = "bqd,bkd->bqk"}> : () -> ()
    %cst_36 = arith.constant dense<0.000000e+00> : vector<2x8x8xf32>
    %57 = tpu.matmul %52, %54, %cst_36 {dimension_numbers = #tpu.dot_dimension_numbers<[2], [2], [1], [1], [0, 0, 0, 1, 1, 1], [0], [0]>} : vector<2x8x16xf32>, vector<2x8x16xf32>, vector<2x8x8xf32> -> vector<2x8x8xf32>
    "tpu.trace_stop"() : () -> ()
    %cst_37 = arith.constant 2.500000e-01 : f32
    %58 = vector.broadcast %cst_37 : f32 to vector<2x8x8xf32>
    %59 = arith.mulf %57, %58 : vector<2x8x8xf32>
    %60 = arith.addf %59, %0 : vector<2x8x8xf32>
    %cst_38 = arith.constant dense<0xFF800000> : vector<2x8xf32>
    %61 = vector.multi_reduction <maximumf>, %60, %cst_38 [2] : vector<2x8x8xf32> to vector<2x8xf32>
    %62 = vector.shape_cast %61 : vector<2x8xf32> to vector<2x8x1xf32>
    %63 = vector.broadcast %62 : vector<2x8x1xf32> to vector<2x8x8xf32>
    %64 = arith.subf %60, %63 : vector<2x8x8xf32>
    %65 = math.exp %64 : vector<2x8x8xf32>
    %cst_39 = arith.constant dense<0.000000e+00> : vector<2x8xf32>
    %66 = vector.multi_reduction <add>, %65, %cst_39 [2] : vector<2x8x8xf32> to vector<2x8xf32>
    %67 = vector.shape_cast %66 : vector<2x8xf32> to vector<2x8x1xf32>
    %68 = tpu.reciprocal %67 {approx = true} : vector<2x8x1xf32> -> vector<2x8x1xf32>
    %69 = vector.broadcast %68 : vector<2x8x1xf32> to vector<2x8x8xf32>
    %70 = arith.mulf %65, %69 : vector<2x8x8xf32>
    "tpu.trace_start"() <{level = 10 : i32, message = "bqk,bkd->bqd"}> : () -> ()
    %cst_40 = arith.constant dense<0.000000e+00> : vector<2x8x16xf32>
    %71 = tpu.matmul %70, %56, %cst_40 {dimension_numbers = #tpu.dot_dimension_numbers<[2], [1], [1], [2], [0, 0, 0, 1, 1, 2], [0], [0]>} : vector<2x8x8xf32>, vector<2x8x16xf32>, vector<2x8x16xf32> -> vector<2x8x16xf32>
    "tpu.trace_stop"() : () -> ()
    %72 = vector.shape_cast %71 : vector<2x8x16xf32> to vector<16x16xf32>
    %73 = vector.extract_strided_slice %20 {offsets = [16, 0], sizes = [16, 32], strides = [1, 1]} : vector<32x32xf32> to vector<16x32xf32>
    %cst_41 = arith.constant dense<0.000000e+00> : vector<16x32xf32>
    %74 = tpu.matmul %72, %73, %cst_41 {dimension_numbers = #tpu.dot_dimension_numbers<[1], [0], [0], [1], [0, 0, 1, 1], [], []>} : vector<16x16xf32>, vector<16x32xf32>, vector<16x32xf32> -> vector<16x32xf32>
    %75 = arith.addf %50, %74 : vector<16x32xf32>
    %76 = arith.addf %4, %75 : vector<16x32xf32>
    %cst_42 = arith.constant dense<0.000000e+00> : vector<16xf32>
    %77 = vector.multi_reduction <add>, %76, %cst_42 [1] : vector<16x32xf32> to vector<16xf32>
    %78 = vector.shape_cast %77 : vector<16xf32> to vector<16x1xf32>
    %cst_43 = arith.constant 3.200000e+01 : f32
    %79 = vector.broadcast %cst_43 : f32 to vector<16x1xf32>
    %80 = arith.divf %78, %79 : vector<16x1xf32>
    %81 = vector.broadcast %80 : vector<16x1xf32> to vector<16x32xf32>
    %82 = arith.subf %76, %81 : vector<16x32xf32>
    %83 = arith.mulf %82, %82 : vector<16x32xf32>
    %cst_44 = arith.constant dense<0.000000e+00> : vector<16xf32>
    %84 = vector.multi_reduction <add>, %83, %cst_44 [1] : vector<16x32xf32> to vector<16xf32>
    %85 = vector.shape_cast %84 : vector<16xf32> to vector<16x1xf32>
    %cst_45 = arith.constant 3.200000e+01 : f32
    %86 = vector.broadcast %cst_45 : f32 to vector<16x1xf32>
    %87 = arith.divf %85, %86 : vector<16x1xf32>
    %88 = vector.broadcast %80 : vector<16x1xf32> to vector<16x32xf32>
    %89 = arith.subf %76, %88 : vector<16x32xf32>
    %cst_46 = arith.constant 9.99999974E-6 : f32
    %90 = vector.broadcast %cst_46 : f32 to vector<16x1xf32>
    %91 = arith.addf %87, %90 : vector<16x1xf32>
    %92 = math.rsqrt %91 : vector<16x1xf32>
    %93 = vector.broadcast %92 : vector<16x1xf32> to vector<16x32xf32>
    %94 = arith.mulf %89, %93 : vector<16x32xf32>
    %95 = vector.broadcast %6 : vector<1x32xf32> to vector<16x32xf32>
    %96 = arith.mulf %94, %95 : vector<16x32xf32>
    %97 = vector.broadcast %8 : vector<1x32xf32> to vector<16x32xf32>
    %98 = arith.addf %96, %97 : vector<16x32xf32>
    %c0_47 = arith.constant 0 : index
    %c0_48 = arith.constant 0 : index
    %c0_49 = arith.constant 0 : index
    %99 = vector.load %arg11[%c0_47, %c0_48, %c0_49] : memref<2x32x64xf32, #tpu.memory_space<vmem>>, vector<1x32x64xf32>
    %100 = vector.shape_cast %99 : vector<1x32x64xf32> to vector<32x64xf32>
    %cst_50 = arith.constant dense<0.000000e+00> : vector<16x64xf32>
    %101 = tpu.matmul %98, %100, %cst_50 {dimension_numbers = #tpu.dot_dimension_numbers<[1], [0], [0], [1], [0, 0, 1, 1], [], []>} : vector<16x32xf32>, vector<32x64xf32>, vector<16x64xf32> -> vector<16x64xf32>
    %c0_51 = arith.constant 0 : index
    %c0_52 = arith.constant 0 : index
    %c0_53 = arith.constant 0 : index
    %102 = vector.load %arg12[%c0_51, %c0_52, %c0_53] : memref<2x1x64xf32, #tpu.memory_space<vmem>>, vector<1x1x64xf32>
    %103 = vector.shape_cast %102 : vector<1x1x64xf32> to vector<1x64xf32>
    %104 = vector.broadcast %103 : vector<1x64xf32> to vector<16x64xf32>
    %105 = arith.addf %101, %104 : vector<16x64xf32>
    %cst_54 = arith.constant 0.000000e+00 : f32
    %106 = vector.broadcast %cst_54 : f32 to vector<16x64xf32>
    %107 = arith.maximumf %105, %106 : vector<16x64xf32>
    %c0_55 = arith.constant 0 : index
    %c0_56 = arith.constant 0 : index
    %c0_57 = arith.constant 0 : index
    %108 = vector.load %arg13[%c0_55, %c0_56, %c0_57] : memref<2x64x32xf32, #tpu.memory_space<vmem>>, vector<1x64x32xf32>
    %109 = vector.shape_cast %108 : vector<1x64x32xf32> to vector<64x32xf32>
    %cst_58 = arith.constant dense<0.000000e+00> : vector<16x32xf32>
    %110 = tpu.matmul %107, %109, %cst_58 {dimension_numbers = #tpu.dot_dimension_numbers<[1], [0], [0], [1], [0, 0, 1, 1], [], []>} : vector<16x64xf32>, vector<64x32xf32>, vector<16x32xf32> -> vector<16x32xf32>
    %c0_59 = arith.constant 0 : index
    %c0_60 = arith.constant 0 : index
    %c0_61 = arith.constant 0 : index
    %111 = vector.load %arg14[%c0_59, %c0_60, %c0_61] : memref<2x1x32xf32, #tpu.memory_space<vmem>>, vector<1x1x32xf32>
    %112 = vector.shape_cast %111 : vector<1x1x32xf32> to vector<1x32xf32>
    %113 = vector.broadcast %112 : vector<1x32xf32> to vector<16x32xf32>
    %114 = arith.addf %110, %113 : vector<16x32xf32>
    %115 = arith.addf %98, %114 : vector<16x32xf32>
    %cst_62 = arith.constant dense<0.000000e+00> : vector<16xf32>
    %116 = vector.multi_reduction <add>, %115, %cst_62 [1] : vector<16x32xf32> to vector<16xf32>
    %117 = vector.shape_cast %116 : vector<16xf32> to vector<16x1xf32>
    %cst_63 = arith.constant 3.200000e+01 : f32
    %118 = vector.broadcast %cst_63 : f32 to vector<16x1xf32>
    %119 = arith.divf %117, %118 : vector<16x1xf32>
    %120 = vector.broadcast %119 : vector<16x1xf32> to vector<16x32xf32>
    %121 = arith.subf %115, %120 : vector<16x32xf32>
    %122 = arith.mulf %121, %121 : vector<16x32xf32>
    %cst_64 = arith.constant dense<0.000000e+00> : vector<16xf32>
    %123 = vector.multi_reduction <add>, %122, %cst_64 [1] : vector<16x32xf32> to vector<16xf32>
    %124 = vector.shape_cast %123 : vector<16xf32> to vector<16x1xf32>
    %cst_65 = arith.constant 3.200000e+01 : f32
    %125 = vector.broadcast %cst_65 : f32 to vector<16x1xf32>
    %126 = arith.divf %124, %125 : vector<16x1xf32>
    %127 = vector.broadcast %119 : vector<16x1xf32> to vector<16x32xf32>
    %128 = arith.subf %115, %127 : vector<16x32xf32>
    %cst_66 = arith.constant 9.99999974E-6 : f32
    %129 = vector.broadcast %cst_66 : f32 to vector<16x1xf32>
    %130 = arith.addf %126, %129 : vector<16x1xf32>
    %131 = math.rsqrt %130 : vector<16x1xf32>
    %132 = vector.broadcast %131 : vector<16x1xf32> to vector<16x32xf32>
    %133 = arith.mulf %128, %132 : vector<16x32xf32>
    %134 = vector.broadcast %6 : vector<1x32xf32> to vector<16x32xf32>
    %135 = arith.mulf %133, %134 : vector<16x32xf32>
    %136 = vector.broadcast %8 : vector<1x32xf32> to vector<16x32xf32>
    %137 = arith.addf %135, %136 : vector<16x32xf32>
    %c1 = arith.constant 1 : index
    %c0_67 = arith.constant 0 : index
    %c0_68 = arith.constant 0 : index
    %138 = vector.load %arg9[%c1, %c0_67, %c0_68] : memref<2x1x32xf32, #tpu.memory_space<vmem>>, vector<1x1x32xf32>
    %139 = vector.shape_cast %138 : vector<1x1x32xf32> to vector<1x32xf32>
    %c1_69 = arith.constant 1 : index
    %c0_70 = arith.constant 0 : index
    %c0_71 = arith.constant 0 : index
    %140 = vector.load %arg10[%c1_69, %c0_70, %c0_71] : memref<2x1x32xf32, #tpu.memory_space<vmem>>, vector<1x1x32xf32>
    %141 = vector.shape_cast %140 : vector<1x1x32xf32> to vector<1x32xf32>
    %c1_72 = arith.constant 1 : index
    %c0_73 = arith.constant 0 : index
    %c0_74 = arith.constant 0 : index
    %142 = vector.load %arg5[%c1_72, %c0_73, %c0_74] : memref<2x32x96xf32, #tpu.memory_space<vmem>>, vector<1x32x96xf32>
    %143 = vector.shape_cast %142 : vector<1x32x96xf32> to vector<32x96xf32>
    %cst_75 = arith.constant dense<0.000000e+00> : vector<16x96xf32>
    %144 = tpu.matmul %137, %143, %cst_75 {dimension_numbers = #tpu.dot_dimension_numbers<[1], [0], [0], [1], [0, 0, 1, 1], [], []>} : vector<16x32xf32>, vector<32x96xf32>, vector<16x96xf32> -> vector<16x96xf32>
    %c1_76 = arith.constant 1 : index
    %c0_77 = arith.constant 0 : index
    %c0_78 = arith.constant 0 : index
    %145 = vector.load %arg6[%c1_76, %c0_77, %c0_78] : memref<2x1x96xf32, #tpu.memory_space<vmem>>, vector<1x1x96xf32>
    %146 = vector.shape_cast %145 : vector<1x1x96xf32> to vector<1x96xf32>
    %147 = vector.broadcast %146 : vector<1x96xf32> to vector<16x96xf32>
    %148 = arith.addf %144, %147 : vector<16x96xf32>
    %149 = vector.extract_strided_slice %148 {offsets = [0, 0], sizes = [16, 32], strides = [1, 1]} : vector<16x96xf32> to vector<16x32xf32>
    %150 = vector.extract_strided_slice %148 {offsets = [0, 32], sizes = [16, 32], strides = [1, 1]} : vector<16x96xf32> to vector<16x32xf32>
    %151 = vector.extract_strided_slice %148 {offsets = [0, 64], sizes = [16, 32], strides = [1, 1]} : vector<16x96xf32> to vector<16x32xf32>
    %c1_79 = arith.constant 1 : index
    %c0_80 = arith.constant 0 : index
    %c0_81 = arith.constant 0 : index
    %152 = vector.load %arg7[%c1_79, %c0_80, %c0_81] : memref<2x32x32xf32, #tpu.memory_space<vmem>>, vector<1x32x32xf32>
    %153 = vector.shape_cast %152 : vector<1x32x32xf32> to vector<32x32xf32>
    %c1_82 = arith.constant 1 : index
    %c0_83 = arith.constant 0 : index
    %c0_84 = arith.constant 0 : index
    %154 = vector.load %arg8[%c1_82, %c0_83, %c0_84] : memref<2x1x32xf32, #tpu.memory_space<vmem>>, vector<1x1x32xf32>
    %155 = vector.shape_cast %154 : vector<1x1x32xf32> to vector<1x32xf32>
    %cst_85 = arith.constant 0.000000e+00 : f32
    %156 = vector.broadcast %cst_85 : f32 to vector<16x32xf32>
    %157 = vector.broadcast %155 : vector<1x32xf32> to vector<16x32xf32>
    %158 = arith.addf %156, %157 : vector<16x32xf32>
    %159 = vector.extract_strided_slice %149 {offsets = [0, 0], sizes = [16, 16], strides = [1, 1]} : vector<16x32xf32> to vector<16x16xf32>
    %160 = vector.shape_cast %159 : vector<16x16xf32> to vector<2x8x16xf32>
    %161 = vector.extract_strided_slice %150 {offsets = [0, 0], sizes = [16, 16], strides = [1, 1]} : vector<16x32xf32> to vector<16x16xf32>
    %162 = vector.shape_cast %161 : vector<16x16xf32> to vector<2x8x16xf32>
    %163 = vector.extract_strided_slice %151 {offsets = [0, 0], sizes = [16, 16], strides = [1, 1]} : vector<16x32xf32> to vector<16x16xf32>
    %164 = vector.shape_cast %163 : vector<16x16xf32> to vector<2x8x16xf32>
    "tpu.trace_start"() <{level = 10 : i32, message = "bqd,bkd->bqk"}> : () -> ()
    %cst_86 = arith.constant dense<0.000000e+00> : vector<2x8x8xf32>
    %165 = tpu.matmul %160, %162, %cst_86 {dimension_numbers = #tpu.dot_dimension_numbers<[2], [2], [1], [1], [0, 0, 0, 1, 1, 1], [0], [0]>} : vector<2x8x16xf32>, vector<2x8x16xf32>, vector<2x8x8xf32> -> vector<2x8x8xf32>
    "tpu.trace_stop"() : () -> ()
    %cst_87 = arith.constant 2.500000e-01 : f32
    %166 = vector.broadcast %cst_87 : f32 to vector<2x8x8xf32>
    %167 = arith.mulf %165, %166 : vector<2x8x8xf32>
    %168 = arith.addf %167, %0 : vector<2x8x8xf32>
    %cst_88 = arith.constant dense<0xFF800000> : vector<2x8xf32>
    %169 = vector.multi_reduction <maximumf>, %168, %cst_88 [2] : vector<2x8x8xf32> to vector<2x8xf32>
    %170 = vector.shape_cast %169 : vector<2x8xf32> to vector<2x8x1xf32>
    %171 = vector.broadcast %170 : vector<2x8x1xf32> to vector<2x8x8xf32>
    %172 = arith.subf %168, %171 : vector<2x8x8xf32>
    %173 = math.exp %172 : vector<2x8x8xf32>
    %cst_89 = arith.constant dense<0.000000e+00> : vector<2x8xf32>
    %174 = vector.multi_reduction <add>, %173, %cst_89 [2] : vector<2x8x8xf32> to vector<2x8xf32>
    %175 = vector.shape_cast %174 : vector<2x8xf32> to vector<2x8x1xf32>
    %176 = tpu.reciprocal %175 {approx = true} : vector<2x8x1xf32> -> vector<2x8x1xf32>
    %177 = vector.broadcast %176 : vector<2x8x1xf32> to vector<2x8x8xf32>
    %178 = arith.mulf %173, %177 : vector<2x8x8xf32>
    "tpu.trace_start"() <{level = 10 : i32, message = "bqk,bkd->bqd"}> : () -> ()
    %cst_90 = arith.constant dense<0.000000e+00> : vector<2x8x16xf32>
    %179 = tpu.matmul %178, %164, %cst_90 {dimension_numbers = #tpu.dot_dimension_numbers<[2], [1], [1], [2], [0, 0, 0, 1, 1, 2], [0], [0]>} : vector<2x8x8xf32>, vector<2x8x16xf32>, vector<2x8x16xf32> -> vector<2x8x16xf32>
    "tpu.trace_stop"() : () -> ()
    %180 = vector.shape_cast %179 : vector<2x8x16xf32> to vector<16x16xf32>
    %181 = vector.extract_strided_slice %153 {offsets = [0, 0], sizes = [16, 32], strides = [1, 1]} : vector<32x32xf32> to vector<16x32xf32>
    %cst_91 = arith.constant dense<0.000000e+00> : vector<16x32xf32>
    %182 = tpu.matmul %180, %181, %cst_91 {dimension_numbers = #tpu.dot_dimension_numbers<[1], [0], [0], [1], [0, 0, 1, 1], [], []>} : vector<16x16xf32>, vector<16x32xf32>, vector<16x32xf32> -> vector<16x32xf32>
    %183 = arith.addf %158, %182 : vector<16x32xf32>
    %184 = vector.extract_strided_slice %149 {offsets = [0, 16], sizes = [16, 16], strides = [1, 1]} : vector<16x32xf32> to vector<16x16xf32>
    %185 = vector.shape_cast %184 : vector<16x16xf32> to vector<2x8x16xf32>
    %186 = vector.extract_strided_slice %150 {offsets = [0, 16], sizes = [16, 16], strides = [1, 1]} : vector<16x32xf32> to vector<16x16xf32>
    %187 = vector.shape_cast %186 : vector<16x16xf32> to vector<2x8x16xf32>
    %188 = vector.extract_strided_slice %151 {offsets = [0, 16], sizes = [16, 16], strides = [1, 1]} : vector<16x32xf32> to vector<16x16xf32>
    %189 = vector.shape_cast %188 : vector<16x16xf32> to vector<2x8x16xf32>
    "tpu.trace_start"() <{level = 10 : i32, message = "bqd,bkd->bqk"}> : () -> ()
    %cst_92 = arith.constant dense<0.000000e+00> : vector<2x8x8xf32>
    %190 = tpu.matmul %185, %187, %cst_92 {dimension_numbers = #tpu.dot_dimension_numbers<[2], [2], [1], [1], [0, 0, 0, 1, 1, 1], [0], [0]>} : vector<2x8x16xf32>, vector<2x8x16xf32>, vector<2x8x8xf32> -> vector<2x8x8xf32>
    "tpu.trace_stop"() : () -> ()
    %cst_93 = arith.constant 2.500000e-01 : f32
    %191 = vector.broadcast %cst_93 : f32 to vector<2x8x8xf32>
    %192 = arith.mulf %190, %191 : vector<2x8x8xf32>
    %193 = arith.addf %192, %0 : vector<2x8x8xf32>
    %cst_94 = arith.constant dense<0xFF800000> : vector<2x8xf32>
    %194 = vector.multi_reduction <maximumf>, %193, %cst_94 [2] : vector<2x8x8xf32> to vector<2x8xf32>
    %195 = vector.shape_cast %194 : vector<2x8xf32> to vector<2x8x1xf32>
    %196 = vector.broadcast %195 : vector<2x8x1xf32> to vector<2x8x8xf32>
    %197 = arith.subf %193, %196 : vector<2x8x8xf32>
    %198 = math.exp %197 : vector<2x8x8xf32>
    %cst_95 = arith.constant dense<0.000000e+00> : vector<2x8xf32>
    %199 = vector.multi_reduction <add>, %198, %cst_95 [2] : vector<2x8x8xf32> to vector<2x8xf32>
    %200 = vector.shape_cast %199 : vector<2x8xf32> to vector<2x8x1xf32>
    %201 = tpu.reciprocal %200 {approx = true} : vector<2x8x1xf32> -> vector<2x8x1xf32>
    %202 = vector.broadcast %201 : vector<2x8x1xf32> to vector<2x8x8xf32>
    %203 = arith.mulf %198, %202 : vector<2x8x8xf32>
    "tpu.trace_start"() <{level = 10 : i32, message = "bqk,bkd->bqd"}> : () -> ()
    %cst_96 = arith.constant dense<0.000000e+00> : vector<2x8x16xf32>
    %204 = tpu.matmul %203, %189, %cst_96 {dimension_numbers = #tpu.dot_dimension_numbers<[2], [1], [1], [2], [0, 0, 0, 1, 1, 2], [0], [0]>} : vector<2x8x8xf32>, vector<2x8x16xf32>, vector<2x8x16xf32> -> vector<2x8x16xf32>
    "tpu.trace_stop"() : () -> ()
    %205 = vector.shape_cast %204 : vector<2x8x16xf32> to vector<16x16xf32>
    %206 = vector.extract_strided_slice %153 {offsets = [16, 0], sizes = [16, 32], strides = [1, 1]} : vector<32x32xf32> to vector<16x32xf32>
    %cst_97 = arith.constant dense<0.000000e+00> : vector<16x32xf32>
    %207 = tpu.matmul %205, %206, %cst_97 {dimension_numbers = #tpu.dot_dimension_numbers<[1], [0], [0], [1], [0, 0, 1, 1], [], []>} : vector<16x16xf32>, vector<16x32xf32>, vector<16x32xf32> -> vector<16x32xf32>
    %208 = arith.addf %183, %207 : vector<16x32xf32>
    %209 = arith.addf %137, %208 : vector<16x32xf32>
    %cst_98 = arith.constant dense<0.000000e+00> : vector<16xf32>
    %210 = vector.multi_reduction <add>, %209, %cst_98 [1] : vector<16x32xf32> to vector<16xf32>
    %211 = vector.shape_cast %210 : vector<16xf32> to vector<16x1xf32>
    %cst_99 = arith.constant 3.200000e+01 : f32
    %212 = vector.broadcast %cst_99 : f32 to vector<16x1xf32>
    %213 = arith.divf %211, %212 : vector<16x1xf32>
    %214 = vector.broadcast %213 : vector<16x1xf32> to vector<16x32xf32>
    %215 = arith.subf %209, %214 : vector<16x32xf32>
    %216 = arith.mulf %215, %215 : vector<16x32xf32>
    %cst_100 = arith.constant dense<0.000000e+00> : vector<16xf32>
    %217 = vector.multi_reduction <add>, %216, %cst_100 [1] : vector<16x32xf32> to vector<16xf32>
    %218 = vector.shape_cast %217 : vector<16xf32> to vector<16x1xf32>
    %cst_101 = arith.constant 3.200000e+01 : f32
    %219 = vector.broadcast %cst_101 : f32 to vector<16x1xf32>
    %220 = arith.divf %218, %219 : vector<16x1xf32>
    %221 = vector.broadcast %213 : vector<16x1xf32> to vector<16x32xf32>
    %222 = arith.subf %209, %221 : vector<16x32xf32>
    %cst_102 = arith.constant 9.99999974E-6 : f32
    %223 = vector.broadcast %cst_102 : f32 to vector<16x1xf32>
    %224 = arith.addf %220, %223 : vector<16x1xf32>
    %225 = math.rsqrt %224 : vector<16x1xf32>
    %226 = vector.broadcast %225 : vector<16x1xf32> to vector<16x32xf32>
    %227 = arith.mulf %222, %226 : vector<16x32xf32>
    %228 = vector.broadcast %139 : vector<1x32xf32> to vector<16x32xf32>
    %229 = arith.mulf %227, %228 : vector<16x32xf32>
    %230 = vector.broadcast %141 : vector<1x32xf32> to vector<16x32xf32>
    %231 = arith.addf %229, %230 : vector<16x32xf32>
    %c1_103 = arith.constant 1 : index
    %c0_104 = arith.constant 0 : index
    %c0_105 = arith.constant 0 : index
    %232 = vector.load %arg11[%c1_103, %c0_104, %c0_105] : memref<2x32x64xf32, #tpu.memory_space<vmem>>, vector<1x32x64xf32>
    %233 = vector.shape_cast %232 : vector<1x32x64xf32> to vector<32x64xf32>
    %cst_106 = arith.constant dense<0.000000e+00> : vector<16x64xf32>
    %234 = tpu.matmul %231, %233, %cst_106 {dimension_numbers = #tpu.dot_dimension_numbers<[1], [0], [0], [1], [0, 0, 1, 1], [], []>} : vector<16x32xf32>, vector<32x64xf32>, vector<16x64xf32> -> vector<16x64xf32>
    %c1_107 = arith.constant 1 : index
    %c0_108 = arith.constant 0 : index
    %c0_109 = arith.constant 0 : index
    %235 = vector.load %arg12[%c1_107, %c0_108, %c0_109] : memref<2x1x64xf32, #tpu.memory_space<vmem>>, vector<1x1x64xf32>
    %236 = vector.shape_cast %235 : vector<1x1x64xf32> to vector<1x64xf32>
    %237 = vector.broadcast %236 : vector<1x64xf32> to vector<16x64xf32>
    %238 = arith.addf %234, %237 : vector<16x64xf32>
    %cst_110 = arith.constant 0.000000e+00 : f32
    %239 = vector.broadcast %cst_110 : f32 to vector<16x64xf32>
    %240 = arith.maximumf %238, %239 : vector<16x64xf32>
    %c1_111 = arith.constant 1 : index
    %c0_112 = arith.constant 0 : index
    %c0_113 = arith.constant 0 : index
    %241 = vector.load %arg13[%c1_111, %c0_112, %c0_113] : memref<2x64x32xf32, #tpu.memory_space<vmem>>, vector<1x64x32xf32>
    %242 = vector.shape_cast %241 : vector<1x64x32xf32> to vector<64x32xf32>
    %cst_114 = arith.constant dense<0.000000e+00> : vector<16x32xf32>
    %243 = tpu.matmul %240, %242, %cst_114 {dimension_numbers = #tpu.dot_dimension_numbers<[1], [0], [0], [1], [0, 0, 1, 1], [], []>} : vector<16x64xf32>, vector<64x32xf32>, vector<16x32xf32> -> vector<16x32xf32>
    %c1_115 = arith.constant 1 : index
    %c0_116 = arith.constant 0 : index
    %c0_117 = arith.constant 0 : index
    %244 = vector.load %arg14[%c1_115, %c0_116, %c0_117] : memref<2x1x32xf32, #tpu.memory_space<vmem>>, vector<1x1x32xf32>
    %245 = vector.shape_cast %244 : vector<1x1x32xf32> to vector<1x32xf32>
    %246 = vector.broadcast %245 : vector<1x32xf32> to vector<16x32xf32>
    %247 = arith.addf %243, %246 : vector<16x32xf32>
    %248 = arith.addf %231, %247 : vector<16x32xf32>
    %cst_118 = arith.constant dense<0.000000e+00> : vector<16xf32>
    %249 = vector.multi_reduction <add>, %248, %cst_118 [1] : vector<16x32xf32> to vector<16xf32>
    %250 = vector.shape_cast %249 : vector<16xf32> to vector<16x1xf32>
    %cst_119 = arith.constant 3.200000e+01 : f32
    %251 = vector.broadcast %cst_119 : f32 to vector<16x1xf32>
    %252 = arith.divf %250, %251 : vector<16x1xf32>
    %253 = vector.broadcast %252 : vector<16x1xf32> to vector<16x32xf32>
    %254 = arith.subf %248, %253 : vector<16x32xf32>
    %255 = arith.mulf %254, %254 : vector<16x32xf32>
    %cst_120 = arith.constant dense<0.000000e+00> : vector<16xf32>
    %256 = vector.multi_reduction <add>, %255, %cst_120 [1] : vector<16x32xf32> to vector<16xf32>
    %257 = vector.shape_cast %256 : vector<16xf32> to vector<16x1xf32>
    %cst_121 = arith.constant 3.200000e+01 : f32
    %258 = vector.broadcast %cst_121 : f32 to vector<16x1xf32>
    %259 = arith.divf %257, %258 : vector<16x1xf32>
    %260 = vector.broadcast %252 : vector<16x1xf32> to vector<16x32xf32>
    %261 = arith.subf %248, %260 : vector<16x32xf32>
    %cst_122 = arith.constant 9.99999974E-6 : f32
    %262 = vector.broadcast %cst_122 : f32 to vector<16x1xf32>
    %263 = arith.addf %259, %262 : vector<16x1xf32>
    %264 = math.rsqrt %263 : vector<16x1xf32>
    %265 = vector.broadcast %264 : vector<16x1xf32> to vector<16x32xf32>
    %266 = arith.mulf %261, %265 : vector<16x32xf32>
    %267 = vector.broadcast %139 : vector<1x32xf32> to vector<16x32xf32>
    %268 = arith.mulf %266, %267 : vector<16x32xf32>
    %269 = vector.broadcast %141 : vector<1x32xf32> to vector<16x32xf32>
    %270 = arith.addf %268, %269 : vector<16x32xf32>
    %271 = vector.shape_cast %270 : vector<16x32xf32> to vector<2x8x32xf32>
    %c0_123 = arith.constant 0 : index
    %c0_124 = arith.constant 0 : index
    %272 = vector.load %arg15[%c0_123, %c0_124] : memref<32x128xf32, #tpu.memory_space<vmem>>, vector<32x128xf32>
    %cst_125 = arith.constant dense<0.000000e+00> : vector<16x128xf32>
    %273 = tpu.matmul %270, %272, %cst_125 {dimension_numbers = #tpu.dot_dimension_numbers<[1], [0], [0], [1], [0, 0, 1, 1], [], []>} : vector<16x32xf32>, vector<32x128xf32>, vector<16x128xf32> -> vector<16x128xf32>
    %c0_126 = arith.constant 0 : index
    %c0_127 = arith.constant 0 : index
    %274 = vector.load %arg17[%c0_126, %c0_127] : memref<1x128xf32, #tpu.memory_space<vmem>>, vector<1x128xf32>
    %275 = vector.broadcast %274 : vector<1x128xf32> to vector<16x128xf32>
    %276 = arith.addf %273, %275 : vector<16x128xf32>
    %277 = vector.shape_cast %276 : vector<16x128xf32> to vector<2x8x128xf32>
    %c0_128 = arith.constant 0 : index
    %c0_129 = arith.constant 0 : index
    %278 = vector.load %arg16[%c0_128, %c0_129] : memref<32x128xf32, #tpu.memory_space<vmem>>, vector<32x128xf32>
    %cst_130 = arith.constant 0.000000e+00 : f32
    %279 = vector.broadcast %cst_130 : f32 to vector<2x32xf32>
    %cst_131 = arith.constant 0.000000e+00 : f32
    %280 = vector.broadcast %cst_131 : f32 to vector<2x32xf32>
    %281 = vector.extract_strided_slice %277 {offsets = [0, 0, 0], sizes = [2, 1, 128], strides = [1, 1, 1]} : vector<2x8x128xf32> to vector<2x1x128xf32>
    %282 = vector.shape_cast %281 : vector<2x1x128xf32> to vector<2x128xf32>
    %cst_132 = arith.constant dense<0.000000e+00> : vector<2x128xf32>
    %283 = tpu.matmul %279, %278, %cst_132 {dimension_numbers = #tpu.dot_dimension_numbers<[1], [0], [0], [1], [0, 0, 1, 1], [], []>} : vector<2x32xf32>, vector<32x128xf32>, vector<2x128xf32> -> vector<2x128xf32>
    %284 = arith.addf %282, %283 : vector<2x128xf32>
    %285 = arith.negf %284 : vector<2x128xf32>
    %286 = math.exp %285 : vector<2x128xf32>
    %cst_133 = arith.constant 1.000000e+00 : f32
    %287 = vector.broadcast %cst_133 : f32 to vector<2x128xf32>
    %288 = arith.addf %287, %286 : vector<2x128xf32>
    %289 = arith.divf %287, %288 : vector<2x128xf32>
    %290 = math.tanh %284 : vector<2x128xf32>
    %291 = vector.extract_strided_slice %289 {offsets = [0, 0], sizes = [2, 32], strides = [1, 1]} : vector<2x128xf32> to vector<2x32xf32>
    %292 = vector.extract_strided_slice %289 {offsets = [0, 32], sizes = [2, 32], strides = [1, 1]} : vector<2x128xf32> to vector<2x32xf32>
    %293 = vector.extract_strided_slice %290 {offsets = [0, 64], sizes = [2, 32], strides = [1, 1]} : vector<2x128xf32> to vector<2x32xf32>
    %294 = vector.extract_strided_slice %289 {offsets = [0, 96], sizes = [2, 32], strides = [1, 1]} : vector<2x128xf32> to vector<2x32xf32>
    %295 = arith.mulf %292, %280 : vector<2x32xf32>
    %296 = arith.mulf %291, %293 : vector<2x32xf32>
    %297 = arith.addf %295, %296 : vector<2x32xf32>
    %298 = math.tanh %297 : vector<2x32xf32>
    %299 = arith.mulf %294, %298 : vector<2x32xf32>
    %300 = vector.extract_strided_slice %299 {offsets = [0, 0], sizes = [1, 32], strides = [1, 1]} : vector<2x32xf32> to vector<1x32xf32>
    %c0_134 = arith.constant 0 : index
    %c0_135 = arith.constant 0 : index
    %301 = vector.load %arg49[%c0_134, %c0_135] : memref<16x32xf32, #tpu.memory_space<vmem>>, vector<1x32xf32>
    tpu.vector_store %arg49[%c0_134, %c0_135], %300 {strides = array<i32>} : memref<16x32xf32, #tpu.memory_space<vmem>>, vector<1x32xf32>,
    %302 = vector.extract_strided_slice %299 {offsets = [1, 0], sizes = [1, 32], strides = [1, 1]} : vector<2x32xf32> to vector<1x32xf32>
    %c8 = arith.constant 8 : index
    %c0_136 = arith.constant 0 : index
    %303 = vector.load %arg49[%c8, %c0_136] : memref<16x32xf32, #tpu.memory_space<vmem>>, vector<1x32xf32>
    tpu.vector_store %arg49[%c8, %c0_136], %302 {strides = array<i32>} : memref<16x32xf32, #tpu.memory_space<vmem>>, vector<1x32xf32>,
    %304 = vector.extract_strided_slice %277 {offsets = [0, 1, 0], sizes = [2, 1, 128], strides = [1, 1, 1]} : vector<2x8x128xf32> to vector<2x1x128xf32>
    %305 = vector.shape_cast %304 : vector<2x1x128xf32> to vector<2x128xf32>
    %cst_137 = arith.constant dense<0.000000e+00> : vector<2x128xf32>
    %306 = tpu.matmul %299, %278, %cst_137 {dimension_numbers = #tpu.dot_dimension_numbers<[1], [0], [0], [1], [0, 0, 1, 1], [], []>} : vector<2x32xf32>, vector<32x128xf32>, vector<2x128xf32> -> vector<2x128xf32>
    %307 = arith.addf %305, %306 : vector<2x128xf32>
    %308 = arith.negf %307 : vector<2x128xf32>
    %309 = math.exp %308 : vector<2x128xf32>
    %cst_138 = arith.constant 1.000000e+00 : f32
    %310 = vector.broadcast %cst_138 : f32 to vector<2x128xf32>
    %311 = arith.addf %310, %309 : vector<2x128xf32>
    %312 = arith.divf %310, %311 : vector<2x128xf32>
    %313 = math.tanh %307 : vector<2x128xf32>
    %314 = vector.extract_strided_slice %312 {offsets = [0, 0], sizes = [2, 32], strides = [1, 1]} : vector<2x128xf32> to vector<2x32xf32>
    %315 = vector.extract_strided_slice %312 {offsets = [0, 32], sizes = [2, 32], strides = [1, 1]} : vector<2x128xf32> to vector<2x32xf32>
    %316 = vector.extract_strided_slice %313 {offsets = [0, 64], sizes = [2, 32], strides = [1, 1]} : vector<2x128xf32> to vector<2x32xf32>
    %317 = vector.extract_strided_slice %312 {offsets = [0, 96], sizes = [2, 32], strides = [1, 1]} : vector<2x128xf32> to vector<2x32xf32>
    %318 = arith.mulf %315, %297 : vector<2x32xf32>
    %319 = arith.mulf %314, %316 : vector<2x32xf32>
    %320 = arith.addf %318, %319 : vector<2x32xf32>
    %321 = math.tanh %320 : vector<2x32xf32>
    %322 = arith.mulf %317, %321 : vector<2x32xf32>
    %323 = vector.extract_strided_slice %322 {offsets = [0, 0], sizes = [1, 32], strides = [1, 1]} : vector<2x32xf32> to vector<1x32xf32>
    %c1_139 = arith.constant 1 : index
    %c0_140 = arith.constant 0 : index
    %324 = vector.load %arg49[%c1_139, %c0_140] : memref<16x32xf32, #tpu.memory_space<vmem>>, vector<1x32xf32>
    tpu.vector_store %arg49[%c1_139, %c0_140], %323 {strides = array<i32>} : memref<16x32xf32, #tpu.memory_space<vmem>>, vector<1x32xf32>,
    %325 = vector.extract_strided_slice %322 {offsets = [1, 0], sizes = [1, 32], strides = [1, 1]} : vector<2x32xf32> to vector<1x32xf32>
    %c9 = arith.constant 9 : index
    %c0_141 = arith.constant 0 : index
    %326 = vector.load %arg49[%c9, %c0_141] : memref<16x32xf32, #tpu.memory_space<vmem>>, vector<1x32xf32>
    tpu.vector_store %arg49[%c9, %c0_141], %325 {strides = array<i32>} : memref<16x32xf32, #tpu.memory_space<vmem>>, vector<1x32xf32>,
    %327 = vector.extract_strided_slice %277 {offsets = [0, 2, 0], sizes = [2, 1, 128], strides = [1, 1, 1]} : vector<2x8x128xf32> to vector<2x1x128xf32>
    %328 = vector.shape_cast %327 : vector<2x1x128xf32> to vector<2x128xf32>
    %cst_142 = arith.constant dense<0.000000e+00> : vector<2x128xf32>
    %329 = tpu.matmul %322, %278, %cst_142 {dimension_numbers = #tpu.dot_dimension_numbers<[1], [0], [0], [1], [0, 0, 1, 1], [], []>} : vector<2x32xf32>, vector<32x128xf32>, vector<2x128xf32> -> vector<2x128xf32>
    %330 = arith.addf %328, %329 : vector<2x128xf32>
    %331 = arith.negf %330 : vector<2x128xf32>
    %332 = math.exp %331 : vector<2x128xf32>
    %cst_143 = arith.constant 1.000000e+00 : f32
    %333 = vector.broadcast %cst_143 : f32 to vector<2x128xf32>
    %334 = arith.addf %333, %332 : vector<2x128xf32>
    %335 = arith.divf %333, %334 : vector<2x128xf32>
    %336 = math.tanh %330 : vector<2x128xf32>
    %337 = vector.extract_strided_slice %335 {offsets = [0, 0], sizes = [2, 32], strides = [1, 1]} : vector<2x128xf32> to vector<2x32xf32>
    %338 = vector.extract_strided_slice %335 {offsets = [0, 32], sizes = [2, 32], strides = [1, 1]} : vector<2x128xf32> to vector<2x32xf32>
    %339 = vector.extract_strided_slice %336 {offsets = [0, 64], sizes = [2, 32], strides = [1, 1]} : vector<2x128xf32> to vector<2x32xf32>
    %340 = vector.extract_strided_slice %335 {offsets = [0, 96], sizes = [2, 32], strides = [1, 1]} : vector<2x128xf32> to vector<2x32xf32>
    %341 = arith.mulf %338, %320 : vector<2x32xf32>
    %342 = arith.mulf %337, %339 : vector<2x32xf32>
    %343 = arith.addf %341, %342 : vector<2x32xf32>
    %344 = math.tanh %343 : vector<2x32xf32>
    %345 = arith.mulf %340, %344 : vector<2x32xf32>
    %346 = vector.extract_strided_slice %345 {offsets = [0, 0], sizes = [1, 32], strides = [1, 1]} : vector<2x32xf32> to vector<1x32xf32>
    %c2 = arith.constant 2 : index
    %c0_144 = arith.constant 0 : index
    %347 = vector.load %arg49[%c2, %c0_144] : memref<16x32xf32, #tpu.memory_space<vmem>>, vector<1x32xf32>
    tpu.vector_store %arg49[%c2, %c0_144], %346 {strides = array<i32>} : memref<16x32xf32, #tpu.memory_space<vmem>>, vector<1x32xf32>,
    %348 = vector.extract_strided_slice %345 {offsets = [1, 0], sizes = [1, 32], strides = [1, 1]} : vector<2x32xf32> to vector<1x32xf32>
    %c10 = arith.constant 10 : index
    %c0_145 = arith.constant 0 : index
    %349 = vector.load %arg49[%c10, %c0_145] : memref<16x32xf32, #tpu.memory_space<vmem>>, vector<1x32xf32>
    tpu.vector_store %arg49[%c10, %c0_145], %348 {strides = array<i32>} : memref<16x32xf32, #tpu.memory_space<vmem>>, vector<1x32xf32>,
    %350 = vector.extract_strided_slice %277 {offsets = [0, 3, 0], sizes = [2, 1, 128], strides = [1, 1, 1]} : vector<2x8x128xf32> to vector<2x1x128xf32>
    %351 = vector.shape_cast %350 : vector<2x1x128xf32> to vector<2x128xf32>
    %cst_146 = arith.constant dense<0.000000e+00> : vector<2x128xf32>
    %352 = tpu.matmul %345, %278, %cst_146 {dimension_numbers = #tpu.dot_dimension_numbers<[1], [0], [0], [1], [0, 0, 1, 1], [], []>} : vector<2x32xf32>, vector<32x128xf32>, vector<2x128xf32> -> vector<2x128xf32>
    %353 = arith.addf %351, %352 : vector<2x128xf32>
    %354 = arith.negf %353 : vector<2x128xf32>
    %355 = math.exp %354 : vector<2x128xf32>
    %cst_147 = arith.constant 1.000000e+00 : f32
    %356 = vector.broadcast %cst_147 : f32 to vector<2x128xf32>
    %357 = arith.addf %356, %355 : vector<2x128xf32>
    %358 = arith.divf %356, %357 : vector<2x128xf32>
    %359 = math.tanh %353 : vector<2x128xf32>
    %360 = vector.extract_strided_slice %358 {offsets = [0, 0], sizes = [2, 32], strides = [1, 1]} : vector<2x128xf32> to vector<2x32xf32>
    %361 = vector.extract_strided_slice %358 {offsets = [0, 32], sizes = [2, 32], strides = [1, 1]} : vector<2x128xf32> to vector<2x32xf32>
    %362 = vector.extract_strided_slice %359 {offsets = [0, 64], sizes = [2, 32], strides = [1, 1]} : vector<2x128xf32> to vector<2x32xf32>
    %363 = vector.extract_strided_slice %358 {offsets = [0, 96], sizes = [2, 32], strides = [1, 1]} : vector<2x128xf32> to vector<2x32xf32>
    %364 = arith.mulf %361, %343 : vector<2x32xf32>
    %365 = arith.mulf %360, %362 : vector<2x32xf32>
    %366 = arith.addf %364, %365 : vector<2x32xf32>
    %367 = math.tanh %366 : vector<2x32xf32>
    %368 = arith.mulf %363, %367 : vector<2x32xf32>
    %369 = vector.extract_strided_slice %368 {offsets = [0, 0], sizes = [1, 32], strides = [1, 1]} : vector<2x32xf32> to vector<1x32xf32>
    %c3 = arith.constant 3 : index
    %c0_148 = arith.constant 0 : index
    %370 = vector.load %arg49[%c3, %c0_148] : memref<16x32xf32, #tpu.memory_space<vmem>>, vector<1x32xf32>
    tpu.vector_store %arg49[%c3, %c0_148], %369 {strides = array<i32>} : memref<16x32xf32, #tpu.memory_space<vmem>>, vector<1x32xf32>,
    %371 = vector.extract_strided_slice %368 {offsets = [1, 0], sizes = [1, 32], strides = [1, 1]} : vector<2x32xf32> to vector<1x32xf32>
    %c11 = arith.constant 11 : index
    %c0_149 = arith.constant 0 : index
    %372 = vector.load %arg49[%c11, %c0_149] : memref<16x32xf32, #tpu.memory_space<vmem>>, vector<1x32xf32>
    tpu.vector_store %arg49[%c11, %c0_149], %371 {strides = array<i32>} : memref<16x32xf32, #tpu.memory_space<vmem>>, vector<1x32xf32>,
    %373 = vector.extract_strided_slice %277 {offsets = [0, 4, 0], sizes = [2, 1, 128], strides = [1, 1, 1]} : vector<2x8x128xf32> to vector<2x1x128xf32>
    %374 = vector.shape_cast %373 : vector<2x1x128xf32> to vector<2x128xf32>
    %cst_150 = arith.constant dense<0.000000e+00> : vector<2x128xf32>
    %375 = tpu.matmul %368, %278, %cst_150 {dimension_numbers = #tpu.dot_dimension_numbers<[1], [0], [0], [1], [0, 0, 1, 1], [], []>} : vector<2x32xf32>, vector<32x128xf32>, vector<2x128xf32> -> vector<2x128xf32>
    %376 = arith.addf %374, %375 : vector<2x128xf32>
    %377 = arith.negf %376 : vector<2x128xf32>
    %378 = math.exp %377 : vector<2x128xf32>
    %cst_151 = arith.constant 1.000000e+00 : f32
    %379 = vector.broadcast %cst_151 : f32 to vector<2x128xf32>
    %380 = arith.addf %379, %378 : vector<2x128xf32>
    %381 = arith.divf %379, %380 : vector<2x128xf32>
    %382 = math.tanh %376 : vector<2x128xf32>
    %383 = vector.extract_strided_slice %381 {offsets = [0, 0], sizes = [2, 32], strides = [1, 1]} : vector<2x128xf32> to vector<2x32xf32>
    %384 = vector.extract_strided_slice %381 {offsets = [0, 32], sizes = [2, 32], strides = [1, 1]} : vector<2x128xf32> to vector<2x32xf32>
    %385 = vector.extract_strided_slice %382 {offsets = [0, 64], sizes = [2, 32], strides = [1, 1]} : vector<2x128xf32> to vector<2x32xf32>
    %386 = vector.extract_strided_slice %381 {offsets = [0, 96], sizes = [2, 32], strides = [1, 1]} : vector<2x128xf32> to vector<2x32xf32>
    %387 = arith.mulf %384, %366 : vector<2x32xf32>
    %388 = arith.mulf %383, %385 : vector<2x32xf32>
    %389 = arith.addf %387, %388 : vector<2x32xf32>
    %390 = math.tanh %389 : vector<2x32xf32>
    %391 = arith.mulf %386, %390 : vector<2x32xf32>
    %392 = vector.extract_strided_slice %391 {offsets = [0, 0], sizes = [1, 32], strides = [1, 1]} : vector<2x32xf32> to vector<1x32xf32>
    %c4 = arith.constant 4 : index
    %c0_152 = arith.constant 0 : index
    %393 = vector.load %arg49[%c4, %c0_152] : memref<16x32xf32, #tpu.memory_space<vmem>>, vector<1x32xf32>
    tpu.vector_store %arg49[%c4, %c0_152], %392 {strides = array<i32>} : memref<16x32xf32, #tpu.memory_space<vmem>>, vector<1x32xf32>,
    %394 = vector.extract_strided_slice %391 {offsets = [1, 0], sizes = [1, 32], strides = [1, 1]} : vector<2x32xf32> to vector<1x32xf32>
    %c12 = arith.constant 12 : index
    %c0_153 = arith.constant 0 : index
    %395 = vector.load %arg49[%c12, %c0_153] : memref<16x32xf32, #tpu.memory_space<vmem>>, vector<1x32xf32>
    tpu.vector_store %arg49[%c12, %c0_153], %394 {strides = array<i32>} : memref<16x32xf32, #tpu.memory_space<vmem>>, vector<1x32xf32>,
    %396 = vector.extract_strided_slice %277 {offsets = [0, 5, 0], sizes = [2, 1, 128], strides = [1, 1, 1]} : vector<2x8x128xf32> to vector<2x1x128xf32>
    %397 = vector.shape_cast %396 : vector<2x1x128xf32> to vector<2x128xf32>
    %cst_154 = arith.constant dense<0.000000e+00> : vector<2x128xf32>
    %398 = tpu.matmul %391, %278, %cst_154 {dimension_numbers = #tpu.dot_dimension_numbers<[1], [0], [0], [1], [0, 0, 1, 1], [], []>} : vector<2x32xf32>, vector<32x128xf32>, vector<2x128xf32> -> vector<2x128xf32>
    %399 = arith.addf %397, %398 : vector<2x128xf32>
    %400 = arith.negf %399 : vector<2x128xf32>
    %401 = math.exp %400 : vector<2x128xf32>
    %cst_155 = arith.constant 1.000000e+00 : f32
    %402 = vector.broadcast %cst_155 : f32 to vector<2x128xf32>
    %403 = arith.addf %402, %401 : vector<2x128xf32>
    %404 = arith.divf %402, %403 : vector<2x128xf32>
    %405 = math.tanh %399 : vector<2x128xf32>
    %406 = vector.extract_strided_slice %404 {offsets = [0, 0], sizes = [2, 32], strides = [1, 1]} : vector<2x128xf32> to vector<2x32xf32>
    %407 = vector.extract_strided_slice %404 {offsets = [0, 32], sizes = [2, 32], strides = [1, 1]} : vector<2x128xf32> to vector<2x32xf32>
    %408 = vector.extract_strided_slice %405 {offsets = [0, 64], sizes = [2, 32], strides = [1, 1]} : vector<2x128xf32> to vector<2x32xf32>
    %409 = vector.extract_strided_slice %404 {offsets = [0, 96], sizes = [2, 32], strides = [1, 1]} : vector<2x128xf32> to vector<2x32xf32>
    %410 = arith.mulf %407, %389 : vector<2x32xf32>
    %411 = arith.mulf %406, %408 : vector<2x32xf32>
    %412 = arith.addf %410, %411 : vector<2x32xf32>
    %413 = math.tanh %412 : vector<2x32xf32>
    %414 = arith.mulf %409, %413 : vector<2x32xf32>
    %415 = vector.extract_strided_slice %414 {offsets = [0, 0], sizes = [1, 32], strides = [1, 1]} : vector<2x32xf32> to vector<1x32xf32>
    %c5 = arith.constant 5 : index
    %c0_156 = arith.constant 0 : index
    %416 = vector.load %arg49[%c5, %c0_156] : memref<16x32xf32, #tpu.memory_space<vmem>>, vector<1x32xf32>
    tpu.vector_store %arg49[%c5, %c0_156], %415 {strides = array<i32>} : memref<16x32xf32, #tpu.memory_space<vmem>>, vector<1x32xf32>,
    %417 = vector.extract_strided_slice %414 {offsets = [1, 0], sizes = [1, 32], strides = [1, 1]} : vector<2x32xf32> to vector<1x32xf32>
    %c13 = arith.constant 13 : index
    %c0_157 = arith.constant 0 : index
    %418 = vector.load %arg49[%c13, %c0_157] : memref<16x32xf32, #tpu.memory_space<vmem>>, vector<1x32xf32>
    tpu.vector_store %arg49[%c13, %c0_157], %417 {strides = array<i32>} : memref<16x32xf32, #tpu.memory_space<vmem>>, vector<1x32xf32>,
    %419 = vector.extract_strided_slice %277 {offsets = [0, 6, 0], sizes = [2, 1, 128], strides = [1, 1, 1]} : vector<2x8x128xf32> to vector<2x1x128xf32>
    %420 = vector.shape_cast %419 : vector<2x1x128xf32> to vector<2x128xf32>
    %cst_158 = arith.constant dense<0.000000e+00> : vector<2x128xf32>
    %421 = tpu.matmul %414, %278, %cst_158 {dimension_numbers = #tpu.dot_dimension_numbers<[1], [0], [0], [1], [0, 0, 1, 1], [], []>} : vector<2x32xf32>, vector<32x128xf32>, vector<2x128xf32> -> vector<2x128xf32>
    %422 = arith.addf %420, %421 : vector<2x128xf32>
    %423 = arith.negf %422 : vector<2x128xf32>
    %424 = math.exp %423 : vector<2x128xf32>
    %cst_159 = arith.constant 1.000000e+00 : f32
    %425 = vector.broadcast %cst_159 : f32 to vector<2x128xf32>
    %426 = arith.addf %425, %424 : vector<2x128xf32>
    %427 = arith.divf %425, %426 : vector<2x128xf32>
    %428 = math.tanh %422 : vector<2x128xf32>
    %429 = vector.extract_strided_slice %427 {offsets = [0, 0], sizes = [2, 32], strides = [1, 1]} : vector<2x128xf32> to vector<2x32xf32>
    %430 = vector.extract_strided_slice %427 {offsets = [0, 32], sizes = [2, 32], strides = [1, 1]} : vector<2x128xf32> to vector<2x32xf32>
    %431 = vector.extract_strided_slice %428 {offsets = [0, 64], sizes = [2, 32], strides = [1, 1]} : vector<2x128xf32> to vector<2x32xf32>
    %432 = vector.extract_strided_slice %427 {offsets = [0, 96], sizes = [2, 32], strides = [1, 1]} : vector<2x128xf32> to vector<2x32xf32>
    %433 = arith.mulf %430, %412 : vector<2x32xf32>
    %434 = arith.mulf %429, %431 : vector<2x32xf32>
    %435 = arith.addf %433, %434 : vector<2x32xf32>
    %436 = math.tanh %435 : vector<2x32xf32>
    %437 = arith.mulf %432, %436 : vector<2x32xf32>
    %438 = vector.extract_strided_slice %437 {offsets = [0, 0], sizes = [1, 32], strides = [1, 1]} : vector<2x32xf32> to vector<1x32xf32>
    %c6 = arith.constant 6 : index
    %c0_160 = arith.constant 0 : index
    %439 = vector.load %arg49[%c6, %c0_160] : memref<16x32xf32, #tpu.memory_space<vmem>>, vector<1x32xf32>
    tpu.vector_store %arg49[%c6, %c0_160], %438 {strides = array<i32>} : memref<16x32xf32, #tpu.memory_space<vmem>>, vector<1x32xf32>,
    %440 = vector.extract_strided_slice %437 {offsets = [1, 0], sizes = [1, 32], strides = [1, 1]} : vector<2x32xf32> to vector<1x32xf32>
    %c14 = arith.constant 14 : index
    %c0_161 = arith.constant 0 : index
    %441 = vector.load %arg49[%c14, %c0_161] : memref<16x32xf32, #tpu.memory_space<vmem>>, vector<1x32xf32>
    tpu.vector_store %arg49[%c14, %c0_161], %440 {strides = array<i32>} : memref<16x32xf32, #tpu.memory_space<vmem>>, vector<1x32xf32>,
    %442 = vector.extract_strided_slice %277 {offsets = [0, 7, 0], sizes = [2, 1, 128], strides = [1, 1, 1]} : vector<2x8x128xf32> to vector<2x1x128xf32>
    %443 = vector.shape_cast %442 : vector<2x1x128xf32> to vector<2x128xf32>
    %cst_162 = arith.constant dense<0.000000e+00> : vector<2x128xf32>
    %444 = tpu.matmul %437, %278, %cst_162 {dimension_numbers = #tpu.dot_dimension_numbers<[1], [0], [0], [1], [0, 0, 1, 1], [], []>} : vector<2x32xf32>, vector<32x128xf32>, vector<2x128xf32> -> vector<2x128xf32>
    %445 = arith.addf %443, %444 : vector<2x128xf32>
    %446 = arith.negf %445 : vector<2x128xf32>
    %447 = math.exp %446 : vector<2x128xf32>
    %cst_163 = arith.constant 1.000000e+00 : f32
    %448 = vector.broadcast %cst_163 : f32 to vector<2x128xf32>
    %449 = arith.addf %448, %447 : vector<2x128xf32>
    %450 = arith.divf %448, %449 : vector<2x128xf32>
    %451 = math.tanh %445 : vector<2x128xf32>
    %452 = vector.extract_strided_slice %450 {offsets = [0, 0], sizes = [2, 32], strides = [1, 1]} : vector<2x128xf32> to vector<2x32xf32>
    %453 = vector.extract_strided_slice %450 {offsets = [0, 32], sizes = [2, 32], strides = [1, 1]} : vector<2x128xf32> to vector<2x32xf32>
    %454 = vector.extract_strided_slice %451 {offsets = [0, 64], sizes = [2, 32], strides = [1, 1]} : vector<2x128xf32> to vector<2x32xf32>
    %455 = vector.extract_strided_slice %450 {offsets = [0, 96], sizes = [2, 32], strides = [1, 1]} : vector<2x128xf32> to vector<2x32xf32>
    %456 = arith.mulf %453, %435 : vector<2x32xf32>
    %457 = arith.mulf %452, %454 : vector<2x32xf32>
    %458 = arith.addf %456, %457 : vector<2x32xf32>
    %459 = math.tanh %458 : vector<2x32xf32>
    %460 = arith.mulf %455, %459 : vector<2x32xf32>
    %461 = vector.extract_strided_slice %460 {offsets = [0, 0], sizes = [1, 32], strides = [1, 1]} : vector<2x32xf32> to vector<1x32xf32>
    %c7 = arith.constant 7 : index
    %c0_164 = arith.constant 0 : index
    %462 = vector.load %arg49[%c7, %c0_164] : memref<16x32xf32, #tpu.memory_space<vmem>>, vector<1x32xf32>
    tpu.vector_store %arg49[%c7, %c0_164], %461 {strides = array<i32>} : memref<16x32xf32, #tpu.memory_space<vmem>>, vector<1x32xf32>,
    %463 = vector.extract_strided_slice %460 {offsets = [1, 0], sizes = [1, 32], strides = [1, 1]} : vector<2x32xf32> to vector<1x32xf32>
    %c15 = arith.constant 15 : index
    %c0_165 = arith.constant 0 : index
    %464 = vector.load %arg49[%c15, %c0_165] : memref<16x32xf32, #tpu.memory_space<vmem>>, vector<1x32xf32>
    tpu.vector_store %arg49[%c15, %c0_165], %463 {strides = array<i32>} : memref<16x32xf32, #tpu.memory_space<vmem>>, vector<1x32xf32>,
    %c0_166 = arith.constant 0 : index
    %c0_167 = arith.constant 0 : index
    %465 = vector.load %arg49[%c0_166, %c0_167] : memref<16x32xf32, #tpu.memory_space<vmem>>, vector<16x32xf32>
    %cst_168 = arith.constant 0.000000e+00 : f32
    %466 = vector.broadcast %cst_168 : f32 to vector<16x32xf32>
    %467 = arith.cmpf ogt, %465, %466 : vector<16x32xf32>
    %cst_169 = arith.constant 0.00999999977 : f32
    %468 = vector.broadcast %cst_169 : f32 to vector<16x32xf32>
    %469 = arith.mulf %468, %465 : vector<16x32xf32>
    %470 = arith.select %467, %465, %469 : vector<16x32xi1>, vector<16x32xf32>
    %c0_170 = arith.constant 0 : index
    %c0_171 = arith.constant 0 : index
    %471 = vector.load %arg18[%c0_170, %c0_171] : memref<64x32xf32, #tpu.memory_space<vmem>>, vector<64x32xf32>
    %472 = vector.extract_strided_slice %471 {offsets = [0, 0], sizes = [32, 32], strides = [1, 1]} : vector<64x32xf32> to vector<32x32xf32>
    %cst_172 = arith.constant dense<0.000000e+00> : vector<16x32xf32>
    %473 = tpu.matmul %270, %472, %cst_172 {dimension_numbers = #tpu.dot_dimension_numbers<[1], [0], [0], [1], [0, 0, 1, 1], [], []>} : vector<16x32xf32>, vector<32x32xf32>, vector<16x32xf32> -> vector<16x32xf32>
    %474 = vector.extract_strided_slice %471 {offsets = [32, 0], sizes = [32, 32], strides = [1, 1]} : vector<64x32xf32> to vector<32x32xf32>
    %cst_173 = arith.constant dense<0.000000e+00> : vector<16x32xf32>
    %475 = tpu.matmul %470, %474, %cst_173 {dimension_numbers = #tpu.dot_dimension_numbers<[1], [0], [0], [1], [0, 0, 1, 1], [], []>} : vector<16x32xf32>, vector<32x32xf32>, vector<16x32xf32> -> vector<16x32xf32>
    %476 = arith.addf %473, %475 : vector<16x32xf32>
    %c0_174 = arith.constant 0 : index
    %c0_175 = arith.constant 0 : index
    %477 = vector.load %arg19[%c0_174, %c0_175] : memref<1x32xf32, #tpu.memory_space<vmem>>, vector<1x32xf32>
    %478 = vector.broadcast %477 : vector<1x32xf32> to vector<16x32xf32>
    %479 = arith.addf %476, %478 : vector<16x32xf32>
    %cst_176 = arith.constant 0.000000e+00 : f32
    %480 = vector.broadcast %cst_176 : f32 to vector<16x32xf32>
    %481 = arith.cmpf ogt, %479, %480 : vector<16x32xf32>
    %cst_177 = arith.constant 0.00999999977 : f32
    %482 = vector.broadcast %cst_177 : f32 to vector<16x32xf32>
    %483 = arith.mulf %482, %479 : vector<16x32xf32>
    %484 = arith.select %481, %479, %483 : vector<16x32xi1>, vector<16x32xf32>
    %c0_178 = arith.constant 0 : index
    %c0_179 = arith.constant 0 : index
    %485 = vector.load %arg20[%c0_178, %c0_179] : memref<32x128xf32, #tpu.memory_space<vmem>>, vector<32x128xf32>
    %cst_180 = arith.constant dense<0.000000e+00> : vector<16x128xf32>
    %486 = tpu.matmul %470, %485, %cst_180 {dimension_numbers = #tpu.dot_dimension_numbers<[1], [0], [0], [1], [0, 0, 1, 1], [], []>} : vector<16x32xf32>, vector<32x128xf32>, vector<16x128xf32> -> vector<16x128xf32>
    %c0_181 = arith.constant 0 : index
    %c0_182 = arith.constant 0 : index
    %487 = vector.load %arg21[%c0_181, %c0_182] : memref<32x128xf32, #tpu.memory_space<vmem>>, vector<32x128xf32>
    %cst_183 = arith.constant dense<0.000000e+00> : vector<16x128xf32>
    %488 = tpu.matmul %484, %487, %cst_183 {dimension_numbers = #tpu.dot_dimension_numbers<[1], [0], [0], [1], [0, 0, 1, 1], [], []>} : vector<16x32xf32>, vector<32x128xf32>, vector<16x128xf32> -> vector<16x128xf32>
    %489 = arith.addf %486, %488 : vector<16x128xf32>
    %c0_184 = arith.constant 0 : index
    %c0_185 = arith.constant 0 : index
    %490 = vector.load %arg22[%c0_184, %c0_185] : memref<1x128xf32, #tpu.memory_space<vmem>>, vector<1x128xf32>
    %491 = vector.broadcast %490 : vector<1x128xf32> to vector<16x128xf32>
    %492 = arith.addf %489, %491 : vector<16x128xf32>
    %c0_186 = arith.constant 0 : index
    %c0_187 = arith.constant 0 : index
    %493 = vector.load %arg47[%c0_186, %c0_187] : memref<16x128xf32, #tpu.memory_space<vmem>>, vector<16x128xf32>
    tpu.vector_store %arg47[%c0_186, %c0_187], %492 {strides = array<i32>} : memref<16x128xf32, #tpu.memory_space<vmem>>, vector<16x128xf32>,
    %c0_188 = arith.constant 0 : index
    %c0_189 = arith.constant 0 : index
    %c0_190 = arith.constant 0 : index
    %494 = vector.load %arg1[%c0_188, %c0_189, %c0_190] : memref<2x8x32xf32, #tpu.memory_space<vmem>>, vector<2x8x32xf32>
    %495 = vector.shape_cast %494 : vector<2x8x32xf32> to vector<16x32xf32>
    %c0_191 = arith.constant 0 : index
    %c0_192 = arith.constant 0 : index
    %c0_193 = arith.constant 0 : index
    %496 = vector.load %arg33[%c0_191, %c0_192, %c0_193] : memref<2x1x32xf32, #tpu.memory_space<vmem>>, vector<1x1x32xf32>
    %497 = vector.shape_cast %496 : vector<1x1x32xf32> to vector<1x32xf32>
    %c0_194 = arith.constant 0 : index
    %c0_195 = arith.constant 0 : index
    %c0_196 = arith.constant 0 : index
    %498 = vector.load %arg34[%c0_194, %c0_195, %c0_196] : memref<2x1x32xf32, #tpu.memory_space<vmem>>, vector<1x1x32xf32>
    %499 = vector.shape_cast %498 : vector<1x1x32xf32> to vector<1x32xf32>
    %c0_197 = arith.constant 0 : index
    %c0_198 = arith.constant 0 : index
    %c0_199 = arith.constant 0 : index
    %500 = vector.load %arg23[%c0_197, %c0_198, %c0_199] : memref<2x32x96xf32, #tpu.memory_space<vmem>>, vector<1x32x96xf32>
    %501 = vector.shape_cast %500 : vector<1x32x96xf32> to vector<32x96xf32>
    %cst_200 = arith.constant dense<0.000000e+00> : vector<16x96xf32>
    %502 = tpu.matmul %495, %501, %cst_200 {dimension_numbers = #tpu.dot_dimension_numbers<[1], [0], [0], [1], [0, 0, 1, 1], [], []>} : vector<16x32xf32>, vector<32x96xf32>, vector<16x96xf32> -> vector<16x96xf32>
    %c0_201 = arith.constant 0 : index
    %c0_202 = arith.constant 0 : index
    %c0_203 = arith.constant 0 : index
    %503 = vector.load %arg24[%c0_201, %c0_202, %c0_203] : memref<2x1x96xf32, #tpu.memory_space<vmem>>, vector<1x1x96xf32>
    %504 = vector.shape_cast %503 : vector<1x1x96xf32> to vector<1x96xf32>
    %505 = vector.broadcast %504 : vector<1x96xf32> to vector<16x96xf32>
    %506 = arith.addf %502, %505 : vector<16x96xf32>
    %507 = vector.extract_strided_slice %506 {offsets = [0, 0], sizes = [16, 32], strides = [1, 1]} : vector<16x96xf32> to vector<16x32xf32>
    %508 = vector.extract_strided_slice %506 {offsets = [0, 32], sizes = [16, 32], strides = [1, 1]} : vector<16x96xf32> to vector<16x32xf32>
    %509 = vector.extract_strided_slice %506 {offsets = [0, 64], sizes = [16, 32], strides = [1, 1]} : vector<16x96xf32> to vector<16x32xf32>
    %c0_204 = arith.constant 0 : index
    %c0_205 = arith.constant 0 : index
    %c0_206 = arith.constant 0 : index
    %510 = vector.load %arg25[%c0_204, %c0_205, %c0_206] : memref<2x32x32xf32, #tpu.memory_space<vmem>>, vector<1x32x32xf32>
    %511 = vector.shape_cast %510 : vector<1x32x32xf32> to vector<32x32xf32>
    %c0_207 = arith.constant 0 : index
    %c0_208 = arith.constant 0 : index
    %c0_209 = arith.constant 0 : index
    %512 = vector.load %arg26[%c0_207, %c0_208, %c0_209] : memref<2x1x32xf32, #tpu.memory_space<vmem>>, vector<1x1x32xf32>
    %513 = vector.shape_cast %512 : vector<1x1x32xf32> to vector<1x32xf32>
    %cst_210 = arith.constant 0.000000e+00 : f32
    %514 = vector.broadcast %cst_210 : f32 to vector<16x32xf32>
    %515 = vector.broadcast %513 : vector<1x32xf32> to vector<16x32xf32>
    %516 = arith.addf %514, %515 : vector<16x32xf32>
    %517 = vector.extract_strided_slice %507 {offsets = [0, 0], sizes = [16, 16], strides = [1, 1]} : vector<16x32xf32> to vector<16x16xf32>
    %518 = vector.shape_cast %517 : vector<16x16xf32> to vector<2x8x16xf32>
    %519 = vector.extract_strided_slice %508 {offsets = [0, 0], sizes = [16, 16], strides = [1, 1]} : vector<16x32xf32> to vector<16x16xf32>
    %520 = vector.shape_cast %519 : vector<16x16xf32> to vector<2x8x16xf32>
    %521 = vector.extract_strided_slice %509 {offsets = [0, 0], sizes = [16, 16], strides = [1, 1]} : vector<16x32xf32> to vector<16x16xf32>
    %522 = vector.shape_cast %521 : vector<16x16xf32> to vector<2x8x16xf32>
    "tpu.trace_start"() <{level = 10 : i32, message = "bqd,bkd->bqk"}> : () -> ()
    %cst_211 = arith.constant dense<0.000000e+00> : vector<2x8x8xf32>
    %523 = tpu.matmul %518, %520, %cst_211 {dimension_numbers = #tpu.dot_dimension_numbers<[2], [2], [1], [1], [0, 0, 0, 1, 1, 1], [0], [0]>} : vector<2x8x16xf32>, vector<2x8x16xf32>, vector<2x8x8xf32> -> vector<2x8x8xf32>
    "tpu.trace_stop"() : () -> ()
    %cst_212 = arith.constant 2.500000e-01 : f32
    %524 = vector.broadcast %cst_212 : f32 to vector<2x8x8xf32>
    %525 = arith.mulf %523, %524 : vector<2x8x8xf32>
    %526 = arith.addf %525, %1 : vector<2x8x8xf32>
    %cst_213 = arith.constant dense<0xFF800000> : vector<2x8xf32>
    %527 = vector.multi_reduction <maximumf>, %526, %cst_213 [2] : vector<2x8x8xf32> to vector<2x8xf32>
    %528 = vector.shape_cast %527 : vector<2x8xf32> to vector<2x8x1xf32>
    %529 = vector.broadcast %528 : vector<2x8x1xf32> to vector<2x8x8xf32>
    %530 = arith.subf %526, %529 : vector<2x8x8xf32>
    %531 = math.exp %530 : vector<2x8x8xf32>
    %cst_214 = arith.constant dense<0.000000e+00> : vector<2x8xf32>
    %532 = vector.multi_reduction <add>, %531, %cst_214 [2] : vector<2x8x8xf32> to vector<2x8xf32>
    %533 = vector.shape_cast %532 : vector<2x8xf32> to vector<2x8x1xf32>
    %534 = tpu.reciprocal %533 {approx = true} : vector<2x8x1xf32> -> vector<2x8x1xf32>
    %535 = vector.broadcast %534 : vector<2x8x1xf32> to vector<2x8x8xf32>
    %536 = arith.mulf %531, %535 : vector<2x8x8xf32>
    "tpu.trace_start"() <{level = 10 : i32, message = "bqk,bkd->bqd"}> : () -> ()
    %cst_215 = arith.constant dense<0.000000e+00> : vector<2x8x16xf32>
    %537 = tpu.matmul %536, %522, %cst_215 {dimension_numbers = #tpu.dot_dimension_numbers<[2], [1], [1], [2], [0, 0, 0, 1, 1, 2], [0], [0]>} : vector<2x8x8xf32>, vector<2x8x16xf32>, vector<2x8x16xf32> -> vector<2x8x16xf32>
    "tpu.trace_stop"() : () -> ()
    %538 = vector.shape_cast %537 : vector<2x8x16xf32> to vector<16x16xf32>
    %539 = vector.extract_strided_slice %511 {offsets = [0, 0], sizes = [16, 32], strides = [1, 1]} : vector<32x32xf32> to vector<16x32xf32>
    %cst_216 = arith.constant dense<0.000000e+00> : vector<16x32xf32>
    %540 = tpu.matmul %538, %539, %cst_216 {dimension_numbers = #tpu.dot_dimension_numbers<[1], [0], [0], [1], [0, 0, 1, 1], [], []>} : vector<16x16xf32>, vector<16x32xf32>, vector<16x32xf32> -> vector<16x32xf32>
    %541 = arith.addf %516, %540 : vector<16x32xf32>
    %542 = vector.extract_strided_slice %507 {offsets = [0, 16], sizes = [16, 16], strides = [1, 1]} : vector<16x32xf32> to vector<16x16xf32>
    %543 = vector.shape_cast %542 : vector<16x16xf32> to vector<2x8x16xf32>
    %544 = vector.extract_strided_slice %508 {offsets = [0, 16], sizes = [16, 16], strides = [1, 1]} : vector<16x32xf32> to vector<16x16xf32>
    %545 = vector.shape_cast %544 : vector<16x16xf32> to vector<2x8x16xf32>
    %546 = vector.extract_strided_slice %509 {offsets = [0, 16], sizes = [16, 16], strides = [1, 1]} : vector<16x32xf32> to vector<16x16xf32>
    %547 = vector.shape_cast %546 : vector<16x16xf32> to vector<2x8x16xf32>
    "tpu.trace_start"() <{level = 10 : i32, message = "bqd,bkd->bqk"}> : () -> ()
    %cst_217 = arith.constant dense<0.000000e+00> : vector<2x8x8xf32>
    %548 = tpu.matmul %543, %545, %cst_217 {dimension_numbers = #tpu.dot_dimension_numbers<[2], [2], [1], [1], [0, 0, 0, 1, 1, 1], [0], [0]>} : vector<2x8x16xf32>, vector<2x8x16xf32>, vector<2x8x8xf32> -> vector<2x8x8xf32>
    "tpu.trace_stop"() : () -> ()
    %cst_218 = arith.constant 2.500000e-01 : f32
    %549 = vector.broadcast %cst_218 : f32 to vector<2x8x8xf32>
    %550 = arith.mulf %548, %549 : vector<2x8x8xf32>
    %551 = arith.addf %550, %1 : vector<2x8x8xf32>
    %cst_219 = arith.constant dense<0xFF800000> : vector<2x8xf32>
    %552 = vector.multi_reduction <maximumf>, %551, %cst_219 [2] : vector<2x8x8xf32> to vector<2x8xf32>
    %553 = vector.shape_cast %552 : vector<2x8xf32> to vector<2x8x1xf32>
    %554 = vector.broadcast %553 : vector<2x8x1xf32> to vector<2x8x8xf32>
    %555 = arith.subf %551, %554 : vector<2x8x8xf32>
    %556 = math.exp %555 : vector<2x8x8xf32>
    %cst_220 = arith.constant dense<0.000000e+00> : vector<2x8xf32>
    %557 = vector.multi_reduction <add>, %556, %cst_220 [2] : vector<2x8x8xf32> to vector<2x8xf32>
    %558 = vector.shape_cast %557 : vector<2x8xf32> to vector<2x8x1xf32>
    %559 = tpu.reciprocal %558 {approx = true} : vector<2x8x1xf32> -> vector<2x8x1xf32>
    %560 = vector.broadcast %559 : vector<2x8x1xf32> to vector<2x8x8xf32>
    %561 = arith.mulf %556, %560 : vector<2x8x8xf32>
    "tpu.trace_start"() <{level = 10 : i32, message = "bqk,bkd->bqd"}> : () -> ()
    %cst_221 = arith.constant dense<0.000000e+00> : vector<2x8x16xf32>
    %562 = tpu.matmul %561, %547, %cst_221 {dimension_numbers = #tpu.dot_dimension_numbers<[2], [1], [1], [2], [0, 0, 0, 1, 1, 2], [0], [0]>} : vector<2x8x8xf32>, vector<2x8x16xf32>, vector<2x8x16xf32> -> vector<2x8x16xf32>
    "tpu.trace_stop"() : () -> ()
    %563 = vector.shape_cast %562 : vector<2x8x16xf32> to vector<16x16xf32>
    %564 = vector.extract_strided_slice %511 {offsets = [16, 0], sizes = [16, 32], strides = [1, 1]} : vector<32x32xf32> to vector<16x32xf32>
    %cst_222 = arith.constant dense<0.000000e+00> : vector<16x32xf32>
    %565 = tpu.matmul %563, %564, %cst_222 {dimension_numbers = #tpu.dot_dimension_numbers<[1], [0], [0], [1], [0, 0, 1, 1], [], []>} : vector<16x16xf32>, vector<16x32xf32>, vector<16x32xf32> -> vector<16x32xf32>
    %566 = arith.addf %541, %565 : vector<16x32xf32>
    %567 = arith.addf %495, %566 : vector<16x32xf32>
    %cst_223 = arith.constant dense<0.000000e+00> : vector<16xf32>
    %568 = vector.multi_reduction <add>, %567, %cst_223 [1] : vector<16x32xf32> to vector<16xf32>
    %569 = vector.shape_cast %568 : vector<16xf32> to vector<16x1xf32>
    %cst_224 = arith.constant 3.200000e+01 : f32
    %570 = vector.broadcast %cst_224 : f32 to vector<16x1xf32>
    %571 = arith.divf %569, %570 : vector<16x1xf32>
    %572 = vector.broadcast %571 : vector<16x1xf32> to vector<16x32xf32>
    %573 = arith.subf %567, %572 : vector<16x32xf32>
    %574 = arith.mulf %573, %573 : vector<16x32xf32>
    %cst_225 = arith.constant dense<0.000000e+00> : vector<16xf32>
    %575 = vector.multi_reduction <add>, %574, %cst_225 [1] : vector<16x32xf32> to vector<16xf32>
    %576 = vector.shape_cast %575 : vector<16xf32> to vector<16x1xf32>
    %cst_226 = arith.constant 3.200000e+01 : f32
    %577 = vector.broadcast %cst_226 : f32 to vector<16x1xf32>
    %578 = arith.divf %576, %577 : vector<16x1xf32>
    %579 = vector.broadcast %571 : vector<16x1xf32> to vector<16x32xf32>
    %580 = arith.subf %567, %579 : vector<16x32xf32>
    %cst_227 = arith.constant 9.99999974E-6 : f32
    %581 = vector.broadcast %cst_227 : f32 to vector<16x1xf32>
    %582 = arith.addf %578, %581 : vector<16x1xf32>
    %583 = math.rsqrt %582 : vector<16x1xf32>
    %584 = vector.broadcast %583 : vector<16x1xf32> to vector<16x32xf32>
    %585 = arith.mulf %580, %584 : vector<16x32xf32>
    %586 = vector.broadcast %497 : vector<1x32xf32> to vector<16x32xf32>
    %587 = arith.mulf %585, %586 : vector<16x32xf32>
    %588 = vector.broadcast %499 : vector<1x32xf32> to vector<16x32xf32>
    %589 = arith.addf %587, %588 : vector<16x32xf32>
    %c0_228 = arith.constant 0 : index
    %c0_229 = arith.constant 0 : index
    %c0_230 = arith.constant 0 : index
    %590 = vector.load %arg27[%c0_228, %c0_229, %c0_230] : memref<2x32x32xf32, #tpu.memory_space<vmem>>, vector<1x32x32xf32>
    %591 = vector.shape_cast %590 : vector<1x32x32xf32> to vector<32x32xf32>
    %cst_231 = arith.constant dense<0.000000e+00> : vector<16x32xf32>
    %592 = tpu.matmul %589, %591, %cst_231 {dimension_numbers = #tpu.dot_dimension_numbers<[1], [0], [0], [1], [0, 0, 1, 1], [], []>} : vector<16x32xf32>, vector<32x32xf32>, vector<16x32xf32> -> vector<16x32xf32>
    %c0_232 = arith.constant 0 : index
    %c0_233 = arith.constant 0 : index
    %c0_234 = arith.constant 0 : index
    %593 = vector.load %arg28[%c0_232, %c0_233, %c0_234] : memref<2x1x32xf32, #tpu.memory_space<vmem>>, vector<1x1x32xf32>
    %594 = vector.shape_cast %593 : vector<1x1x32xf32> to vector<1x32xf32>
    %595 = vector.broadcast %594 : vector<1x32xf32> to vector<16x32xf32>
    %596 = arith.addf %592, %595 : vector<16x32xf32>
    %c0_235 = arith.constant 0 : index
    %c0_236 = arith.constant 0 : index
    %c0_237 = arith.constant 0 : index
    %597 = vector.load %arg29[%c0_235, %c0_236, %c0_237] : memref<2x32x64xf32, #tpu.memory_space<vmem>>, vector<1x32x64xf32>
    %598 = vector.shape_cast %597 : vector<1x32x64xf32> to vector<32x64xf32>
    %cst_238 = arith.constant dense<0.000000e+00> : vector<16x64xf32>
    %599 = tpu.matmul %270, %598, %cst_238 {dimension_numbers = #tpu.dot_dimension_numbers<[1], [0], [0], [1], [0, 0, 1, 1], [], []>} : vector<16x32xf32>, vector<32x64xf32>, vector<16x64xf32> -> vector<16x64xf32>
    %c0_239 = arith.constant 0 : index
    %c0_240 = arith.constant 0 : index
    %c0_241 = arith.constant 0 : index
    %600 = vector.load %arg30[%c0_239, %c0_240, %c0_241] : memref<2x1x64xf32, #tpu.memory_space<vmem>>, vector<1x1x64xf32>
    %601 = vector.shape_cast %600 : vector<1x1x64xf32> to vector<1x64xf32>
    %602 = vector.broadcast %601 : vector<1x64xf32> to vector<16x64xf32>
    %603 = arith.addf %599, %602 : vector<16x64xf32>
    %604 = vector.extract_strided_slice %603 {offsets = [0, 0], sizes = [16, 32], strides = [1, 1]} : vector<16x64xf32> to vector<16x32xf32>
    %605 = vector.extract_strided_slice %603 {offsets = [0, 32], sizes = [16, 32], strides = [1, 1]} : vector<16x64xf32> to vector<16x32xf32>
    %c0_242 = arith.constant 0 : index
    %c0_243 = arith.constant 0 : index
    %c0_244 = arith.constant 0 : index
    %606 = vector.load %arg31[%c0_242, %c0_243, %c0_244] : memref<2x32x32xf32, #tpu.memory_space<vmem>>, vector<1x32x32xf32>
    %607 = vector.shape_cast %606 : vector<1x32x32xf32> to vector<32x32xf32>
    %c0_245 = arith.constant 0 : index
    %c0_246 = arith.constant 0 : index
    %c0_247 = arith.constant 0 : index
    %608 = vector.load %arg32[%c0_245, %c0_246, %c0_247] : memref<2x1x32xf32, #tpu.memory_space<vmem>>, vector<1x1x32xf32>
    %609 = vector.shape_cast %608 : vector<1x1x32xf32> to vector<1x32xf32>
    %cst_248 = arith.constant 0.000000e+00 : f32
    %610 = vector.broadcast %cst_248 : f32 to vector<16x32xf32>
    %611 = vector.broadcast %609 : vector<1x32xf32> to vector<16x32xf32>
    %612 = arith.addf %610, %611 : vector<16x32xf32>
    %613 = vector.extract_strided_slice %596 {offsets = [0, 0], sizes = [16, 16], strides = [1, 1]} : vector<16x32xf32> to vector<16x16xf32>
    %614 = vector.shape_cast %613 : vector<16x16xf32> to vector<2x8x16xf32>
    %615 = vector.extract_strided_slice %604 {offsets = [0, 0], sizes = [16, 16], strides = [1, 1]} : vector<16x32xf32> to vector<16x16xf32>
    %616 = vector.shape_cast %615 : vector<16x16xf32> to vector<2x8x16xf32>
    %617 = vector.extract_strided_slice %605 {offsets = [0, 0], sizes = [16, 16], strides = [1, 1]} : vector<16x32xf32> to vector<16x16xf32>
    %618 = vector.shape_cast %617 : vector<16x16xf32> to vector<2x8x16xf32>
    "tpu.trace_start"() <{level = 10 : i32, message = "bqd,bkd->bqk"}> : () -> ()
    %cst_249 = arith.constant dense<0.000000e+00> : vector<2x8x8xf32>
    %619 = tpu.matmul %614, %616, %cst_249 {dimension_numbers = #tpu.dot_dimension_numbers<[2], [2], [1], [1], [0, 0, 0, 1, 1, 1], [0], [0]>} : vector<2x8x16xf32>, vector<2x8x16xf32>, vector<2x8x8xf32> -> vector<2x8x8xf32>
    "tpu.trace_stop"() : () -> ()
    %cst_250 = arith.constant 2.500000e-01 : f32
    %620 = vector.broadcast %cst_250 : f32 to vector<2x8x8xf32>
    %621 = arith.mulf %619, %620 : vector<2x8x8xf32>
    %622 = arith.addf %621, %2 : vector<2x8x8xf32>
    %cst_251 = arith.constant dense<0xFF800000> : vector<2x8xf32>
    %623 = vector.multi_reduction <maximumf>, %622, %cst_251 [2] : vector<2x8x8xf32> to vector<2x8xf32>
    %624 = vector.shape_cast %623 : vector<2x8xf32> to vector<2x8x1xf32>
    %625 = vector.broadcast %624 : vector<2x8x1xf32> to vector<2x8x8xf32>
    %626 = arith.subf %622, %625 : vector<2x8x8xf32>
    %627 = math.exp %626 : vector<2x8x8xf32>
    %cst_252 = arith.constant dense<0.000000e+00> : vector<2x8xf32>
    %628 = vector.multi_reduction <add>, %627, %cst_252 [2] : vector<2x8x8xf32> to vector<2x8xf32>
    %629 = vector.shape_cast %628 : vector<2x8xf32> to vector<2x8x1xf32>
    %630 = tpu.reciprocal %629 {approx = true} : vector<2x8x1xf32> -> vector<2x8x1xf32>
    %631 = vector.broadcast %630 : vector<2x8x1xf32> to vector<2x8x8xf32>
    %632 = arith.mulf %627, %631 : vector<2x8x8xf32>
    "tpu.trace_start"() <{level = 10 : i32, message = "bqk,bkd->bqd"}> : () -> ()
    %cst_253 = arith.constant dense<0.000000e+00> : vector<2x8x16xf32>
    %633 = tpu.matmul %632, %618, %cst_253 {dimension_numbers = #tpu.dot_dimension_numbers<[2], [1], [1], [2], [0, 0, 0, 1, 1, 2], [0], [0]>} : vector<2x8x8xf32>, vector<2x8x16xf32>, vector<2x8x16xf32> -> vector<2x8x16xf32>
    "tpu.trace_stop"() : () -> ()
    %634 = vector.shape_cast %633 : vector<2x8x16xf32> to vector<16x16xf32>
    %635 = vector.extract_strided_slice %607 {offsets = [0, 0], sizes = [16, 32], strides = [1, 1]} : vector<32x32xf32> to vector<16x32xf32>
    %cst_254 = arith.constant dense<0.000000e+00> : vector<16x32xf32>
    %636 = tpu.matmul %634, %635, %cst_254 {dimension_numbers = #tpu.dot_dimension_numbers<[1], [0], [0], [1], [0, 0, 1, 1], [], []>} : vector<16x16xf32>, vector<16x32xf32>, vector<16x32xf32> -> vector<16x32xf32>
    %637 = arith.addf %612, %636 : vector<16x32xf32>
    %638 = vector.extract_strided_slice %596 {offsets = [0, 16], sizes = [16, 16], strides = [1, 1]} : vector<16x32xf32> to vector<16x16xf32>
    %639 = vector.shape_cast %638 : vector<16x16xf32> to vector<2x8x16xf32>
    %640 = vector.extract_strided_slice %604 {offsets = [0, 16], sizes = [16, 16], strides = [1, 1]} : vector<16x32xf32> to vector<16x16xf32>
    %641 = vector.shape_cast %640 : vector<16x16xf32> to vector<2x8x16xf32>
    %642 = vector.extract_strided_slice %605 {offsets = [0, 16], sizes = [16, 16], strides = [1, 1]} : vector<16x32xf32> to vector<16x16xf32>
    %643 = vector.shape_cast %642 : vector<16x16xf32> to vector<2x8x16xf32>
    "tpu.trace_start"() <{level = 10 : i32, message = "bqd,bkd->bqk"}> : () -> ()
    %cst_255 = arith.constant dense<0.000000e+00> : vector<2x8x8xf32>
    %644 = tpu.matmul %639, %641, %cst_255 {dimension_numbers = #tpu.dot_dimension_numbers<[2], [2], [1], [1], [0, 0, 0, 1, 1, 1], [0], [0]>} : vector<2x8x16xf32>, vector<2x8x16xf32>, vector<2x8x8xf32> -> vector<2x8x8xf32>
    "tpu.trace_stop"() : () -> ()
    %cst_256 = arith.constant 2.500000e-01 : f32
    %645 = vector.broadcast %cst_256 : f32 to vector<2x8x8xf32>
    %646 = arith.mulf %644, %645 : vector<2x8x8xf32>
    %647 = arith.addf %646, %2 : vector<2x8x8xf32>
    %cst_257 = arith.constant dense<0xFF800000> : vector<2x8xf32>
    %648 = vector.multi_reduction <maximumf>, %647, %cst_257 [2] : vector<2x8x8xf32> to vector<2x8xf32>
    %649 = vector.shape_cast %648 : vector<2x8xf32> to vector<2x8x1xf32>
    %650 = vector.broadcast %649 : vector<2x8x1xf32> to vector<2x8x8xf32>
    %651 = arith.subf %647, %650 : vector<2x8x8xf32>
    %652 = math.exp %651 : vector<2x8x8xf32>
    %cst_258 = arith.constant dense<0.000000e+00> : vector<2x8xf32>
    %653 = vector.multi_reduction <add>, %652, %cst_258 [2] : vector<2x8x8xf32> to vector<2x8xf32>
    %654 = vector.shape_cast %653 : vector<2x8xf32> to vector<2x8x1xf32>
    %655 = tpu.reciprocal %654 {approx = true} : vector<2x8x1xf32> -> vector<2x8x1xf32>
    %656 = vector.broadcast %655 : vector<2x8x1xf32> to vector<2x8x8xf32>
    %657 = arith.mulf %652, %656 : vector<2x8x8xf32>
    "tpu.trace_start"() <{level = 10 : i32, message = "bqk,bkd->bqd"}> : () -> ()
    %cst_259 = arith.constant dense<0.000000e+00> : vector<2x8x16xf32>
    %658 = tpu.matmul %657, %643, %cst_259 {dimension_numbers = #tpu.dot_dimension_numbers<[2], [1], [1], [2], [0, 0, 0, 1, 1, 2], [0], [0]>} : vector<2x8x8xf32>, vector<2x8x16xf32>, vector<2x8x16xf32> -> vector<2x8x16xf32>
    "tpu.trace_stop"() : () -> ()
    %659 = vector.shape_cast %658 : vector<2x8x16xf32> to vector<16x16xf32>
    %660 = vector.extract_strided_slice %607 {offsets = [16, 0], sizes = [16, 32], strides = [1, 1]} : vector<32x32xf32> to vector<16x32xf32>
    %cst_260 = arith.constant dense<0.000000e+00> : vector<16x32xf32>
    %661 = tpu.matmul %659, %660, %cst_260 {dimension_numbers = #tpu.dot_dimension_numbers<[1], [0], [0], [1], [0, 0, 1, 1], [], []>} : vector<16x16xf32>, vector<16x32xf32>, vector<16x32xf32> -> vector<16x32xf32>
    %662 = arith.addf %637, %661 : vector<16x32xf32>
    %663 = arith.addf %589, %662 : vector<16x32xf32>
    %cst_261 = arith.constant dense<0.000000e+00> : vector<16xf32>
    %664 = vector.multi_reduction <add>, %663, %cst_261 [1] : vector<16x32xf32> to vector<16xf32>
    %665 = vector.shape_cast %664 : vector<16xf32> to vector<16x1xf32>
    %cst_262 = arith.constant 3.200000e+01 : f32
    %666 = vector.broadcast %cst_262 : f32 to vector<16x1xf32>
    %667 = arith.divf %665, %666 : vector<16x1xf32>
    %668 = vector.broadcast %667 : vector<16x1xf32> to vector<16x32xf32>
    %669 = arith.subf %663, %668 : vector<16x32xf32>
    %670 = arith.mulf %669, %669 : vector<16x32xf32>
    %cst_263 = arith.constant dense<0.000000e+00> : vector<16xf32>
    %671 = vector.multi_reduction <add>, %670, %cst_263 [1] : vector<16x32xf32> to vector<16xf32>
    %672 = vector.shape_cast %671 : vector<16xf32> to vector<16x1xf32>
    %cst_264 = arith.constant 3.200000e+01 : f32
    %673 = vector.broadcast %cst_264 : f32 to vector<16x1xf32>
    %674 = arith.divf %672, %673 : vector<16x1xf32>
    %675 = vector.broadcast %667 : vector<16x1xf32> to vector<16x32xf32>
    %676 = arith.subf %663, %675 : vector<16x32xf32>
    %cst_265 = arith.constant 9.99999974E-6 : f32
    %677 = vector.broadcast %cst_265 : f32 to vector<16x1xf32>
    %678 = arith.addf %674, %677 : vector<16x1xf32>
    %679 = math.rsqrt %678 : vector<16x1xf32>
    %680 = vector.broadcast %679 : vector<16x1xf32> to vector<16x32xf32>
    %681 = arith.mulf %676, %680 : vector<16x32xf32>
    %682 = vector.broadcast %497 : vector<1x32xf32> to vector<16x32xf32>
    %683 = arith.mulf %681, %682 : vector<16x32xf32>
    %684 = vector.broadcast %499 : vector<1x32xf32> to vector<16x32xf32>
    %685 = arith.addf %683, %684 : vector<16x32xf32>
    %c0_266 = arith.constant 0 : index
    %c0_267 = arith.constant 0 : index
    %c0_268 = arith.constant 0 : index
    %686 = vector.load %arg35[%c0_266, %c0_267, %c0_268] : memref<2x32x64xf32, #tpu.memory_space<vmem>>, vector<1x32x64xf32>
    %687 = vector.shape_cast %686 : vector<1x32x64xf32> to vector<32x64xf32>
    %cst_269 = arith.constant dense<0.000000e+00> : vector<16x64xf32>
    %688 = tpu.matmul %685, %687, %cst_269 {dimension_numbers = #tpu.dot_dimension_numbers<[1], [0], [0], [1], [0, 0, 1, 1], [], []>} : vector<16x32xf32>, vector<32x64xf32>, vector<16x64xf32> -> vector<16x64xf32>
    %c0_270 = arith.constant 0 : index
    %c0_271 = arith.constant 0 : index
    %c0_272 = arith.constant 0 : index
    %689 = vector.load %arg36[%c0_270, %c0_271, %c0_272] : memref<2x1x64xf32, #tpu.memory_space<vmem>>, vector<1x1x64xf32>
    %690 = vector.shape_cast %689 : vector<1x1x64xf32> to vector<1x64xf32>
    %691 = vector.broadcast %690 : vector<1x64xf32> to vector<16x64xf32>
    %692 = arith.addf %688, %691 : vector<16x64xf32>
    %cst_273 = arith.constant 0.000000e+00 : f32
    %693 = vector.broadcast %cst_273 : f32 to vector<16x64xf32>
    %694 = arith.maximumf %692, %693 : vector<16x64xf32>
    %c0_274 = arith.constant 0 : index
    %c0_275 = arith.constant 0 : index
    %c0_276 = arith.constant 0 : index
    %695 = vector.load %arg37[%c0_274, %c0_275, %c0_276] : memref<2x64x32xf32, #tpu.memory_space<vmem>>, vector<1x64x32xf32>
    %696 = vector.shape_cast %695 : vector<1x64x32xf32> to vector<64x32xf32>
    %cst_277 = arith.constant dense<0.000000e+00> : vector<16x32xf32>
    %697 = tpu.matmul %694, %696, %cst_277 {dimension_numbers = #tpu.dot_dimension_numbers<[1], [0], [0], [1], [0, 0, 1, 1], [], []>} : vector<16x64xf32>, vector<64x32xf32>, vector<16x32xf32> -> vector<16x32xf32>
    %c0_278 = arith.constant 0 : index
    %c0_279 = arith.constant 0 : index
    %c0_280 = arith.constant 0 : index
    %698 = vector.load %arg38[%c0_278, %c0_279, %c0_280] : memref<2x1x32xf32, #tpu.memory_space<vmem>>, vector<1x1x32xf32>
    %699 = vector.shape_cast %698 : vector<1x1x32xf32> to vector<1x32xf32>
    %700 = vector.broadcast %699 : vector<1x32xf32> to vector<16x32xf32>
    %701 = arith.addf %697, %700 : vector<16x32xf32>
    %702 = arith.addf %685, %701 : vector<16x32xf32>
    %cst_281 = arith.constant dense<0.000000e+00> : vector<16xf32>
    %703 = vector.multi_reduction <add>, %702, %cst_281 [1] : vector<16x32xf32> to vector<16xf32>
    %704 = vector.shape_cast %703 : vector<16xf32> to vector<16x1xf32>
    %cst_282 = arith.constant 3.200000e+01 : f32
    %705 = vector.broadcast %cst_282 : f32 to vector<16x1xf32>
    %706 = arith.divf %704, %705 : vector<16x1xf32>
    %707 = vector.broadcast %706 : vector<16x1xf32> to vector<16x32xf32>
    %708 = arith.subf %702, %707 : vector<16x32xf32>
    %709 = arith.mulf %708, %708 : vector<16x32xf32>
    %cst_283 = arith.constant dense<0.000000e+00> : vector<16xf32>
    %710 = vector.multi_reduction <add>, %709, %cst_283 [1] : vector<16x32xf32> to vector<16xf32>
    %711 = vector.shape_cast %710 : vector<16xf32> to vector<16x1xf32>
    %cst_284 = arith.constant 3.200000e+01 : f32
    %712 = vector.broadcast %cst_284 : f32 to vector<16x1xf32>
    %713 = arith.divf %711, %712 : vector<16x1xf32>
    %714 = vector.broadcast %706 : vector<16x1xf32> to vector<16x32xf32>
    %715 = arith.subf %702, %714 : vector<16x32xf32>
    %cst_285 = arith.constant 9.99999974E-6 : f32
    %716 = vector.broadcast %cst_285 : f32 to vector<16x1xf32>
    %717 = arith.addf %713, %716 : vector<16x1xf32>
    %718 = math.rsqrt %717 : vector<16x1xf32>
    %719 = vector.broadcast %718 : vector<16x1xf32> to vector<16x32xf32>
    %720 = arith.mulf %715, %719 : vector<16x32xf32>
    %721 = vector.broadcast %497 : vector<1x32xf32> to vector<16x32xf32>
    %722 = arith.mulf %720, %721 : vector<16x32xf32>
    %723 = vector.broadcast %499 : vector<1x32xf32> to vector<16x32xf32>
    %724 = arith.addf %722, %723 : vector<16x32xf32>
    %c1_286 = arith.constant 1 : index
    %c0_287 = arith.constant 0 : index
    %c0_288 = arith.constant 0 : index
    %725 = vector.load %arg33[%c1_286, %c0_287, %c0_288] : memref<2x1x32xf32, #tpu.memory_space<vmem>>, vector<1x1x32xf32>
    %726 = vector.shape_cast %725 : vector<1x1x32xf32> to vector<1x32xf32>
    %c1_289 = arith.constant 1 : index
    %c0_290 = arith.constant 0 : index
    %c0_291 = arith.constant 0 : index
    %727 = vector.load %arg34[%c1_289, %c0_290, %c0_291] : memref<2x1x32xf32, #tpu.memory_space<vmem>>, vector<1x1x32xf32>
    %728 = vector.shape_cast %727 : vector<1x1x32xf32> to vector<1x32xf32>
    %c1_292 = arith.constant 1 : index
    %c0_293 = arith.constant 0 : index
    %c0_294 = arith.constant 0 : index
    %729 = vector.load %arg23[%c1_292, %c0_293, %c0_294] : memref<2x32x96xf32, #tpu.memory_space<vmem>>, vector<1x32x96xf32>
    %730 = vector.shape_cast %729 : vector<1x32x96xf32> to vector<32x96xf32>
    %cst_295 = arith.constant dense<0.000000e+00> : vector<16x96xf32>
    %731 = tpu.matmul %724, %730, %cst_295 {dimension_numbers = #tpu.dot_dimension_numbers<[1], [0], [0], [1], [0, 0, 1, 1], [], []>} : vector<16x32xf32>, vector<32x96xf32>, vector<16x96xf32> -> vector<16x96xf32>
    %c1_296 = arith.constant 1 : index
    %c0_297 = arith.constant 0 : index
    %c0_298 = arith.constant 0 : index
    %732 = vector.load %arg24[%c1_296, %c0_297, %c0_298] : memref<2x1x96xf32, #tpu.memory_space<vmem>>, vector<1x1x96xf32>
    %733 = vector.shape_cast %732 : vector<1x1x96xf32> to vector<1x96xf32>
    %734 = vector.broadcast %733 : vector<1x96xf32> to vector<16x96xf32>
    %735 = arith.addf %731, %734 : vector<16x96xf32>
    %736 = vector.extract_strided_slice %735 {offsets = [0, 0], sizes = [16, 32], strides = [1, 1]} : vector<16x96xf32> to vector<16x32xf32>
    %737 = vector.extract_strided_slice %735 {offsets = [0, 32], sizes = [16, 32], strides = [1, 1]} : vector<16x96xf32> to vector<16x32xf32>
    %738 = vector.extract_strided_slice %735 {offsets = [0, 64], sizes = [16, 32], strides = [1, 1]} : vector<16x96xf32> to vector<16x32xf32>
    %c1_299 = arith.constant 1 : index
    %c0_300 = arith.constant 0 : index
    %c0_301 = arith.constant 0 : index
    %739 = vector.load %arg25[%c1_299, %c0_300, %c0_301] : memref<2x32x32xf32, #tpu.memory_space<vmem>>, vector<1x32x32xf32>
    %740 = vector.shape_cast %739 : vector<1x32x32xf32> to vector<32x32xf32>
    %c1_302 = arith.constant 1 : index
    %c0_303 = arith.constant 0 : index
    %c0_304 = arith.constant 0 : index
    %741 = vector.load %arg26[%c1_302, %c0_303, %c0_304] : memref<2x1x32xf32, #tpu.memory_space<vmem>>, vector<1x1x32xf32>
    %742 = vector.shape_cast %741 : vector<1x1x32xf32> to vector<1x32xf32>
    %cst_305 = arith.constant 0.000000e+00 : f32
    %743 = vector.broadcast %cst_305 : f32 to vector<16x32xf32>
    %744 = vector.broadcast %742 : vector<1x32xf32> to vector<16x32xf32>
    %745 = arith.addf %743, %744 : vector<16x32xf32>
    %746 = vector.extract_strided_slice %736 {offsets = [0, 0], sizes = [16, 16], strides = [1, 1]} : vector<16x32xf32> to vector<16x16xf32>
    %747 = vector.shape_cast %746 : vector<16x16xf32> to vector<2x8x16xf32>
    %748 = vector.extract_strided_slice %737 {offsets = [0, 0], sizes = [16, 16], strides = [1, 1]} : vector<16x32xf32> to vector<16x16xf32>
    %749 = vector.shape_cast %748 : vector<16x16xf32> to vector<2x8x16xf32>
    %750 = vector.extract_strided_slice %738 {offsets = [0, 0], sizes = [16, 16], strides = [1, 1]} : vector<16x32xf32> to vector<16x16xf32>
    %751 = vector.shape_cast %750 : vector<16x16xf32> to vector<2x8x16xf32>
    "tpu.trace_start"() <{level = 10 : i32, message = "bqd,bkd->bqk"}> : () -> ()
    %cst_306 = arith.constant dense<0.000000e+00> : vector<2x8x8xf32>
    %752 = tpu.matmul %747, %749, %cst_306 {dimension_numbers = #tpu.dot_dimension_numbers<[2], [2], [1], [1], [0, 0, 0, 1, 1, 1], [0], [0]>} : vector<2x8x16xf32>, vector<2x8x16xf32>, vector<2x8x8xf32> -> vector<2x8x8xf32>
    "tpu.trace_stop"() : () -> ()
    %cst_307 = arith.constant 2.500000e-01 : f32
    %753 = vector.broadcast %cst_307 : f32 to vector<2x8x8xf32>
    %754 = arith.mulf %752, %753 : vector<2x8x8xf32>
    %755 = arith.addf %754, %1 : vector<2x8x8xf32>
    %cst_308 = arith.constant dense<0xFF800000> : vector<2x8xf32>
    %756 = vector.multi_reduction <maximumf>, %755, %cst_308 [2] : vector<2x8x8xf32> to vector<2x8xf32>
    %757 = vector.shape_cast %756 : vector<2x8xf32> to vector<2x8x1xf32>
    %758 = vector.broadcast %757 : vector<2x8x1xf32> to vector<2x8x8xf32>
    %759 = arith.subf %755, %758 : vector<2x8x8xf32>
    %760 = math.exp %759 : vector<2x8x8xf32>
    %cst_309 = arith.constant dense<0.000000e+00> : vector<2x8xf32>
    %761 = vector.multi_reduction <add>, %760, %cst_309 [2] : vector<2x8x8xf32> to vector<2x8xf32>
    %762 = vector.shape_cast %761 : vector<2x8xf32> to vector<2x8x1xf32>
    %763 = tpu.reciprocal %762 {approx = true} : vector<2x8x1xf32> -> vector<2x8x1xf32>
    %764 = vector.broadcast %763 : vector<2x8x1xf32> to vector<2x8x8xf32>
    %765 = arith.mulf %760, %764 : vector<2x8x8xf32>
    "tpu.trace_start"() <{level = 10 : i32, message = "bqk,bkd->bqd"}> : () -> ()
    %cst_310 = arith.constant dense<0.000000e+00> : vector<2x8x16xf32>
    %766 = tpu.matmul %765, %751, %cst_310 {dimension_numbers = #tpu.dot_dimension_numbers<[2], [1], [1], [2], [0, 0, 0, 1, 1, 2], [0], [0]>} : vector<2x8x8xf32>, vector<2x8x16xf32>, vector<2x8x16xf32> -> vector<2x8x16xf32>
    "tpu.trace_stop"() : () -> ()
    %767 = vector.shape_cast %766 : vector<2x8x16xf32> to vector<16x16xf32>
    %768 = vector.extract_strided_slice %740 {offsets = [0, 0], sizes = [16, 32], strides = [1, 1]} : vector<32x32xf32> to vector<16x32xf32>
    %cst_311 = arith.constant dense<0.000000e+00> : vector<16x32xf32>
    %769 = tpu.matmul %767, %768, %cst_311 {dimension_numbers = #tpu.dot_dimension_numbers<[1], [0], [0], [1], [0, 0, 1, 1], [], []>} : vector<16x16xf32>, vector<16x32xf32>, vector<16x32xf32> -> vector<16x32xf32>
    %770 = arith.addf %745, %769 : vector<16x32xf32>
    %771 = vector.extract_strided_slice %736 {offsets = [0, 16], sizes = [16, 16], strides = [1, 1]} : vector<16x32xf32> to vector<16x16xf32>
    %772 = vector.shape_cast %771 : vector<16x16xf32> to vector<2x8x16xf32>
    %773 = vector.extract_strided_slice %737 {offsets = [0, 16], sizes = [16, 16], strides = [1, 1]} : vector<16x32xf32> to vector<16x16xf32>
    %774 = vector.shape_cast %773 : vector<16x16xf32> to vector<2x8x16xf32>
    %775 = vector.extract_strided_slice %738 {offsets = [0, 16], sizes = [16, 16], strides = [1, 1]} : vector<16x32xf32> to vector<16x16xf32>
    %776 = vector.shape_cast %775 : vector<16x16xf32> to vector<2x8x16xf32>
    "tpu.trace_start"() <{level = 10 : i32, message = "bqd,bkd->bqk"}> : () -> ()
    %cst_312 = arith.constant dense<0.000000e+00> : vector<2x8x8xf32>
    %777 = tpu.matmul %772, %774, %cst_312 {dimension_numbers = #tpu.dot_dimension_numbers<[2], [2], [1], [1], [0, 0, 0, 1, 1, 1], [0], [0]>} : vector<2x8x16xf32>, vector<2x8x16xf32>, vector<2x8x8xf32> -> vector<2x8x8xf32>
    "tpu.trace_stop"() : () -> ()
    %cst_313 = arith.constant 2.500000e-01 : f32
    %778 = vector.broadcast %cst_313 : f32 to vector<2x8x8xf32>
    %779 = arith.mulf %777, %778 : vector<2x8x8xf32>
    %780 = arith.addf %779, %1 : vector<2x8x8xf32>
    %cst_314 = arith.constant dense<0xFF800000> : vector<2x8xf32>
    %781 = vector.multi_reduction <maximumf>, %780, %cst_314 [2] : vector<2x8x8xf32> to vector<2x8xf32>
    %782 = vector.shape_cast %781 : vector<2x8xf32> to vector<2x8x1xf32>
    %783 = vector.broadcast %782 : vector<2x8x1xf32> to vector<2x8x8xf32>
    %784 = arith.subf %780, %783 : vector<2x8x8xf32>
    %785 = math.exp %784 : vector<2x8x8xf32>
    %cst_315 = arith.constant dense<0.000000e+00> : vector<2x8xf32>
    %786 = vector.multi_reduction <add>, %785, %cst_315 [2] : vector<2x8x8xf32> to vector<2x8xf32>
    %787 = vector.shape_cast %786 : vector<2x8xf32> to vector<2x8x1xf32>
    %788 = tpu.reciprocal %787 {approx = true} : vector<2x8x1xf32> -> vector<2x8x1xf32>
    %789 = vector.broadcast %788 : vector<2x8x1xf32> to vector<2x8x8xf32>
    %790 = arith.mulf %785, %789 : vector<2x8x8xf32>
    "tpu.trace_start"() <{level = 10 : i32, message = "bqk,bkd->bqd"}> : () -> ()
    %cst_316 = arith.constant dense<0.000000e+00> : vector<2x8x16xf32>
    %791 = tpu.matmul %790, %776, %cst_316 {dimension_numbers = #tpu.dot_dimension_numbers<[2], [1], [1], [2], [0, 0, 0, 1, 1, 2], [0], [0]>} : vector<2x8x8xf32>, vector<2x8x16xf32>, vector<2x8x16xf32> -> vector<2x8x16xf32>
    "tpu.trace_stop"() : () -> ()
    %792 = vector.shape_cast %791 : vector<2x8x16xf32> to vector<16x16xf32>
    %793 = vector.extract_strided_slice %740 {offsets = [16, 0], sizes = [16, 32], strides = [1, 1]} : vector<32x32xf32> to vector<16x32xf32>
    %cst_317 = arith.constant dense<0.000000e+00> : vector<16x32xf32>
    %794 = tpu.matmul %792, %793, %cst_317 {dimension_numbers = #tpu.dot_dimension_numbers<[1], [0], [0], [1], [0, 0, 1, 1], [], []>} : vector<16x16xf32>, vector<16x32xf32>, vector<16x32xf32> -> vector<16x32xf32>
    %795 = arith.addf %770, %794 : vector<16x32xf32>
    %796 = arith.addf %724, %795 : vector<16x32xf32>
    %cst_318 = arith.constant dense<0.000000e+00> : vector<16xf32>
    %797 = vector.multi_reduction <add>, %796, %cst_318 [1] : vector<16x32xf32> to vector<16xf32>
    %798 = vector.shape_cast %797 : vector<16xf32> to vector<16x1xf32>
    %cst_319 = arith.constant 3.200000e+01 : f32
    %799 = vector.broadcast %cst_319 : f32 to vector<16x1xf32>
    %800 = arith.divf %798, %799 : vector<16x1xf32>
    %801 = vector.broadcast %800 : vector<16x1xf32> to vector<16x32xf32>
    %802 = arith.subf %796, %801 : vector<16x32xf32>
    %803 = arith.mulf %802, %802 : vector<16x32xf32>
    %cst_320 = arith.constant dense<0.000000e+00> : vector<16xf32>
    %804 = vector.multi_reduction <add>, %803, %cst_320 [1] : vector<16x32xf32> to vector<16xf32>
    %805 = vector.shape_cast %804 : vector<16xf32> to vector<16x1xf32>
    %cst_321 = arith.constant 3.200000e+01 : f32
    %806 = vector.broadcast %cst_321 : f32 to vector<16x1xf32>
    %807 = arith.divf %805, %806 : vector<16x1xf32>
    %808 = vector.broadcast %800 : vector<16x1xf32> to vector<16x32xf32>
    %809 = arith.subf %796, %808 : vector<16x32xf32>
    %cst_322 = arith.constant 9.99999974E-6 : f32
    %810 = vector.broadcast %cst_322 : f32 to vector<16x1xf32>
    %811 = arith.addf %807, %810 : vector<16x1xf32>
    %812 = math.rsqrt %811 : vector<16x1xf32>
    %813 = vector.broadcast %812 : vector<16x1xf32> to vector<16x32xf32>
    %814 = arith.mulf %809, %813 : vector<16x32xf32>
    %815 = vector.broadcast %726 : vector<1x32xf32> to vector<16x32xf32>
    %816 = arith.mulf %814, %815 : vector<16x32xf32>
    %817 = vector.broadcast %728 : vector<1x32xf32> to vector<16x32xf32>
    %818 = arith.addf %816, %817 : vector<16x32xf32>
    %c1_323 = arith.constant 1 : index
    %c0_324 = arith.constant 0 : index
    %c0_325 = arith.constant 0 : index
    %819 = vector.load %arg27[%c1_323, %c0_324, %c0_325] : memref<2x32x32xf32, #tpu.memory_space<vmem>>, vector<1x32x32xf32>
    %820 = vector.shape_cast %819 : vector<1x32x32xf32> to vector<32x32xf32>
    %cst_326 = arith.constant dense<0.000000e+00> : vector<16x32xf32>
    %821 = tpu.matmul %818, %820, %cst_326 {dimension_numbers = #tpu.dot_dimension_numbers<[1], [0], [0], [1], [0, 0, 1, 1], [], []>} : vector<16x32xf32>, vector<32x32xf32>, vector<16x32xf32> -> vector<16x32xf32>
    %c1_327 = arith.constant 1 : index
    %c0_328 = arith.constant 0 : index
    %c0_329 = arith.constant 0 : index
    %822 = vector.load %arg28[%c1_327, %c0_328, %c0_329] : memref<2x1x32xf32, #tpu.memory_space<vmem>>, vector<1x1x32xf32>
    %823 = vector.shape_cast %822 : vector<1x1x32xf32> to vector<1x32xf32>
    %824 = vector.broadcast %823 : vector<1x32xf32> to vector<16x32xf32>
    %825 = arith.addf %821, %824 : vector<16x32xf32>
    %c1_330 = arith.constant 1 : index
    %c0_331 = arith.constant 0 : index
    %c0_332 = arith.constant 0 : index
    %826 = vector.load %arg29[%c1_330, %c0_331, %c0_332] : memref<2x32x64xf32, #tpu.memory_space<vmem>>, vector<1x32x64xf32>
    %827 = vector.shape_cast %826 : vector<1x32x64xf32> to vector<32x64xf32>
    %cst_333 = arith.constant dense<0.000000e+00> : vector<16x64xf32>
    %828 = tpu.matmul %270, %827, %cst_333 {dimension_numbers = #tpu.dot_dimension_numbers<[1], [0], [0], [1], [0, 0, 1, 1], [], []>} : vector<16x32xf32>, vector<32x64xf32>, vector<16x64xf32> -> vector<16x64xf32>
    %c1_334 = arith.constant 1 : index
    %c0_335 = arith.constant 0 : index
    %c0_336 = arith.constant 0 : index
    %829 = vector.load %arg30[%c1_334, %c0_335, %c0_336] : memref<2x1x64xf32, #tpu.memory_space<vmem>>, vector<1x1x64xf32>
    %830 = vector.shape_cast %829 : vector<1x1x64xf32> to vector<1x64xf32>
    %831 = vector.broadcast %830 : vector<1x64xf32> to vector<16x64xf32>
    %832 = arith.addf %828, %831 : vector<16x64xf32>
    %833 = vector.extract_strided_slice %832 {offsets = [0, 0], sizes = [16, 32], strides = [1, 1]} : vector<16x64xf32> to vector<16x32xf32>
    %834 = vector.extract_strided_slice %832 {offsets = [0, 32], sizes = [16, 32], strides = [1, 1]} : vector<16x64xf32> to vector<16x32xf32>
    %c1_337 = arith.constant 1 : index
    %c0_338 = arith.constant 0 : index
    %c0_339 = arith.constant 0 : index
    %835 = vector.load %arg31[%c1_337, %c0_338, %c0_339] : memref<2x32x32xf32, #tpu.memory_space<vmem>>, vector<1x32x32xf32>
    %836 = vector.shape_cast %835 : vector<1x32x32xf32> to vector<32x32xf32>
    %c1_340 = arith.constant 1 : index
    %c0_341 = arith.constant 0 : index
    %c0_342 = arith.constant 0 : index
    %837 = vector.load %arg32[%c1_340, %c0_341, %c0_342] : memref<2x1x32xf32, #tpu.memory_space<vmem>>, vector<1x1x32xf32>
    %838 = vector.shape_cast %837 : vector<1x1x32xf32> to vector<1x32xf32>
    %cst_343 = arith.constant 0.000000e+00 : f32
    %839 = vector.broadcast %cst_343 : f32 to vector<16x32xf32>
    %840 = vector.broadcast %838 : vector<1x32xf32> to vector<16x32xf32>
    %841 = arith.addf %839, %840 : vector<16x32xf32>
    %842 = vector.extract_strided_slice %825 {offsets = [0, 0], sizes = [16, 16], strides = [1, 1]} : vector<16x32xf32> to vector<16x16xf32>
    %843 = vector.shape_cast %842 : vector<16x16xf32> to vector<2x8x16xf32>
    %844 = vector.extract_strided_slice %833 {offsets = [0, 0], sizes = [16, 16], strides = [1, 1]} : vector<16x32xf32> to vector<16x16xf32>
    %845 = vector.shape_cast %844 : vector<16x16xf32> to vector<2x8x16xf32>
    %846 = vector.extract_strided_slice %834 {offsets = [0, 0], sizes = [16, 16], strides = [1, 1]} : vector<16x32xf32> to vector<16x16xf32>
    %847 = vector.shape_cast %846 : vector<16x16xf32> to vector<2x8x16xf32>
    "tpu.trace_start"() <{level = 10 : i32, message = "bqd,bkd->bqk"}> : () -> ()
    %cst_344 = arith.constant dense<0.000000e+00> : vector<2x8x8xf32>
    %848 = tpu.matmul %843, %845, %cst_344 {dimension_numbers = #tpu.dot_dimension_numbers<[2], [2], [1], [1], [0, 0, 0, 1, 1, 1], [0], [0]>} : vector<2x8x16xf32>, vector<2x8x16xf32>, vector<2x8x8xf32> -> vector<2x8x8xf32>
    "tpu.trace_stop"() : () -> ()
    %cst_345 = arith.constant 2.500000e-01 : f32
    %849 = vector.broadcast %cst_345 : f32 to vector<2x8x8xf32>
    %850 = arith.mulf %848, %849 : vector<2x8x8xf32>
    %851 = arith.addf %850, %2 : vector<2x8x8xf32>
    %cst_346 = arith.constant dense<0xFF800000> : vector<2x8xf32>
    %852 = vector.multi_reduction <maximumf>, %851, %cst_346 [2] : vector<2x8x8xf32> to vector<2x8xf32>
    %853 = vector.shape_cast %852 : vector<2x8xf32> to vector<2x8x1xf32>
    %854 = vector.broadcast %853 : vector<2x8x1xf32> to vector<2x8x8xf32>
    %855 = arith.subf %851, %854 : vector<2x8x8xf32>
    %856 = math.exp %855 : vector<2x8x8xf32>
    %cst_347 = arith.constant dense<0.000000e+00> : vector<2x8xf32>
    %857 = vector.multi_reduction <add>, %856, %cst_347 [2] : vector<2x8x8xf32> to vector<2x8xf32>
    %858 = vector.shape_cast %857 : vector<2x8xf32> to vector<2x8x1xf32>
    %859 = tpu.reciprocal %858 {approx = true} : vector<2x8x1xf32> -> vector<2x8x1xf32>
    %860 = vector.broadcast %859 : vector<2x8x1xf32> to vector<2x8x8xf32>
    %861 = arith.mulf %856, %860 : vector<2x8x8xf32>
    "tpu.trace_start"() <{level = 10 : i32, message = "bqk,bkd->bqd"}> : () -> ()
    %cst_348 = arith.constant dense<0.000000e+00> : vector<2x8x16xf32>
    %862 = tpu.matmul %861, %847, %cst_348 {dimension_numbers = #tpu.dot_dimension_numbers<[2], [1], [1], [2], [0, 0, 0, 1, 1, 2], [0], [0]>} : vector<2x8x8xf32>, vector<2x8x16xf32>, vector<2x8x16xf32> -> vector<2x8x16xf32>
    "tpu.trace_stop"() : () -> ()
    %863 = vector.shape_cast %862 : vector<2x8x16xf32> to vector<16x16xf32>
    %864 = vector.extract_strided_slice %836 {offsets = [0, 0], sizes = [16, 32], strides = [1, 1]} : vector<32x32xf32> to vector<16x32xf32>
    %cst_349 = arith.constant dense<0.000000e+00> : vector<16x32xf32>
    %865 = tpu.matmul %863, %864, %cst_349 {dimension_numbers = #tpu.dot_dimension_numbers<[1], [0], [0], [1], [0, 0, 1, 1], [], []>} : vector<16x16xf32>, vector<16x32xf32>, vector<16x32xf32> -> vector<16x32xf32>
    %866 = arith.addf %841, %865 : vector<16x32xf32>
    %867 = vector.extract_strided_slice %825 {offsets = [0, 16], sizes = [16, 16], strides = [1, 1]} : vector<16x32xf32> to vector<16x16xf32>
    %868 = vector.shape_cast %867 : vector<16x16xf32> to vector<2x8x16xf32>
    %869 = vector.extract_strided_slice %833 {offsets = [0, 16], sizes = [16, 16], strides = [1, 1]} : vector<16x32xf32> to vector<16x16xf32>
    %870 = vector.shape_cast %869 : vector<16x16xf32> to vector<2x8x16xf32>
    %871 = vector.extract_strided_slice %834 {offsets = [0, 16], sizes = [16, 16], strides = [1, 1]} : vector<16x32xf32> to vector<16x16xf32>
    %872 = vector.shape_cast %871 : vector<16x16xf32> to vector<2x8x16xf32>
    "tpu.trace_start"() <{level = 10 : i32, message = "bqd,bkd->bqk"}> : () -> ()
    %cst_350 = arith.constant dense<0.000000e+00> : vector<2x8x8xf32>
    %873 = tpu.matmul %868, %870, %cst_350 {dimension_numbers = #tpu.dot_dimension_numbers<[2], [2], [1], [1], [0, 0, 0, 1, 1, 1], [0], [0]>} : vector<2x8x16xf32>, vector<2x8x16xf32>, vector<2x8x8xf32> -> vector<2x8x8xf32>
    "tpu.trace_stop"() : () -> ()
    %cst_351 = arith.constant 2.500000e-01 : f32
    %874 = vector.broadcast %cst_351 : f32 to vector<2x8x8xf32>
    %875 = arith.mulf %873, %874 : vector<2x8x8xf32>
    %876 = arith.addf %875, %2 : vector<2x8x8xf32>
    %cst_352 = arith.constant dense<0xFF800000> : vector<2x8xf32>
    %877 = vector.multi_reduction <maximumf>, %876, %cst_352 [2] : vector<2x8x8xf32> to vector<2x8xf32>
    %878 = vector.shape_cast %877 : vector<2x8xf32> to vector<2x8x1xf32>
    %879 = vector.broadcast %878 : vector<2x8x1xf32> to vector<2x8x8xf32>
    %880 = arith.subf %876, %879 : vector<2x8x8xf32>
    %881 = math.exp %880 : vector<2x8x8xf32>
    %cst_353 = arith.constant dense<0.000000e+00> : vector<2x8xf32>
    %882 = vector.multi_reduction <add>, %881, %cst_353 [2] : vector<2x8x8xf32> to vector<2x8xf32>
    %883 = vector.shape_cast %882 : vector<2x8xf32> to vector<2x8x1xf32>
    %884 = tpu.reciprocal %883 {approx = true} : vector<2x8x1xf32> -> vector<2x8x1xf32>
    %885 = vector.broadcast %884 : vector<2x8x1xf32> to vector<2x8x8xf32>
    %886 = arith.mulf %881, %885 : vector<2x8x8xf32>
    "tpu.trace_start"() <{level = 10 : i32, message = "bqk,bkd->bqd"}> : () -> ()
    %cst_354 = arith.constant dense<0.000000e+00> : vector<2x8x16xf32>
    %887 = tpu.matmul %886, %872, %cst_354 {dimension_numbers = #tpu.dot_dimension_numbers<[2], [1], [1], [2], [0, 0, 0, 1, 1, 2], [0], [0]>} : vector<2x8x8xf32>, vector<2x8x16xf32>, vector<2x8x16xf32> -> vector<2x8x16xf32>
    "tpu.trace_stop"() : () -> ()
    %888 = vector.shape_cast %887 : vector<2x8x16xf32> to vector<16x16xf32>
    %889 = vector.extract_strided_slice %836 {offsets = [16, 0], sizes = [16, 32], strides = [1, 1]} : vector<32x32xf32> to vector<16x32xf32>
    %cst_355 = arith.constant dense<0.000000e+00> : vector<16x32xf32>
    %890 = tpu.matmul %888, %889, %cst_355 {dimension_numbers = #tpu.dot_dimension_numbers<[1], [0], [0], [1], [0, 0, 1, 1], [], []>} : vector<16x16xf32>, vector<16x32xf32>, vector<16x32xf32> -> vector<16x32xf32>
    %891 = arith.addf %866, %890 : vector<16x32xf32>
    %892 = arith.addf %818, %891 : vector<16x32xf32>
    %cst_356 = arith.constant dense<0.000000e+00> : vector<16xf32>
    %893 = vector.multi_reduction <add>, %892, %cst_356 [1] : vector<16x32xf32> to vector<16xf32>
    %894 = vector.shape_cast %893 : vector<16xf32> to vector<16x1xf32>
    %cst_357 = arith.constant 3.200000e+01 : f32
    %895 = vector.broadcast %cst_357 : f32 to vector<16x1xf32>
    %896 = arith.divf %894, %895 : vector<16x1xf32>
    %897 = vector.broadcast %896 : vector<16x1xf32> to vector<16x32xf32>
    %898 = arith.subf %892, %897 : vector<16x32xf32>
    %899 = arith.mulf %898, %898 : vector<16x32xf32>
    %cst_358 = arith.constant dense<0.000000e+00> : vector<16xf32>
    %900 = vector.multi_reduction <add>, %899, %cst_358 [1] : vector<16x32xf32> to vector<16xf32>
    %901 = vector.shape_cast %900 : vector<16xf32> to vector<16x1xf32>
    %cst_359 = arith.constant 3.200000e+01 : f32
    %902 = vector.broadcast %cst_359 : f32 to vector<16x1xf32>
    %903 = arith.divf %901, %902 : vector<16x1xf32>
    %904 = vector.broadcast %896 : vector<16x1xf32> to vector<16x32xf32>
    %905 = arith.subf %892, %904 : vector<16x32xf32>
    %cst_360 = arith.constant 9.99999974E-6 : f32
    %906 = vector.broadcast %cst_360 : f32 to vector<16x1xf32>
    %907 = arith.addf %903, %906 : vector<16x1xf32>
    %908 = math.rsqrt %907 : vector<16x1xf32>
    %909 = vector.broadcast %908 : vector<16x1xf32> to vector<16x32xf32>
    %910 = arith.mulf %905, %909 : vector<16x32xf32>
    %911 = vector.broadcast %726 : vector<1x32xf32> to vector<16x32xf32>
    %912 = arith.mulf %910, %911 : vector<16x32xf32>
    %913 = vector.broadcast %728 : vector<1x32xf32> to vector<16x32xf32>
    %914 = arith.addf %912, %913 : vector<16x32xf32>
    %c1_361 = arith.constant 1 : index
    %c0_362 = arith.constant 0 : index
    %c0_363 = arith.constant 0 : index
    %915 = vector.load %arg35[%c1_361, %c0_362, %c0_363] : memref<2x32x64xf32, #tpu.memory_space<vmem>>, vector<1x32x64xf32>
    %916 = vector.shape_cast %915 : vector<1x32x64xf32> to vector<32x64xf32>
    %cst_364 = arith.constant dense<0.000000e+00> : vector<16x64xf32>
    %917 = tpu.matmul %914, %916, %cst_364 {dimension_numbers = #tpu.dot_dimension_numbers<[1], [0], [0], [1], [0, 0, 1, 1], [], []>} : vector<16x32xf32>, vector<32x64xf32>, vector<16x64xf32> -> vector<16x64xf32>
    %c1_365 = arith.constant 1 : index
    %c0_366 = arith.constant 0 : index
    %c0_367 = arith.constant 0 : index
    %918 = vector.load %arg36[%c1_365, %c0_366, %c0_367] : memref<2x1x64xf32, #tpu.memory_space<vmem>>, vector<1x1x64xf32>
    %919 = vector.shape_cast %918 : vector<1x1x64xf32> to vector<1x64xf32>
    %920 = vector.broadcast %919 : vector<1x64xf32> to vector<16x64xf32>
    %921 = arith.addf %917, %920 : vector<16x64xf32>
    %cst_368 = arith.constant 0.000000e+00 : f32
    %922 = vector.broadcast %cst_368 : f32 to vector<16x64xf32>
    %923 = arith.maximumf %921, %922 : vector<16x64xf32>
    %c1_369 = arith.constant 1 : index
    %c0_370 = arith.constant 0 : index
    %c0_371 = arith.constant 0 : index
    %924 = vector.load %arg37[%c1_369, %c0_370, %c0_371] : memref<2x64x32xf32, #tpu.memory_space<vmem>>, vector<1x64x32xf32>
    %925 = vector.shape_cast %924 : vector<1x64x32xf32> to vector<64x32xf32>
    %cst_372 = arith.constant dense<0.000000e+00> : vector<16x32xf32>
    %926 = tpu.matmul %923, %925, %cst_372 {dimension_numbers = #tpu.dot_dimension_numbers<[1], [0], [0], [1], [0, 0, 1, 1], [], []>} : vector<16x64xf32>, vector<64x32xf32>, vector<16x32xf32> -> vector<16x32xf32>
    %c1_373 = arith.constant 1 : index
    %c0_374 = arith.constant 0 : index
    %c0_375 = arith.constant 0 : index
    %927 = vector.load %arg38[%c1_373, %c0_374, %c0_375] : memref<2x1x32xf32, #tpu.memory_space<vmem>>, vector<1x1x32xf32>
    %928 = vector.shape_cast %927 : vector<1x1x32xf32> to vector<1x32xf32>
    %929 = vector.broadcast %928 : vector<1x32xf32> to vector<16x32xf32>
    %930 = arith.addf %926, %929 : vector<16x32xf32>
    %931 = arith.addf %914, %930 : vector<16x32xf32>
    %cst_376 = arith.constant dense<0.000000e+00> : vector<16xf32>
    %932 = vector.multi_reduction <add>, %931, %cst_376 [1] : vector<16x32xf32> to vector<16xf32>
    %933 = vector.shape_cast %932 : vector<16xf32> to vector<16x1xf32>
    %cst_377 = arith.constant 3.200000e+01 : f32
    %934 = vector.broadcast %cst_377 : f32 to vector<16x1xf32>
    %935 = arith.divf %933, %934 : vector<16x1xf32>
    %936 = vector.broadcast %935 : vector<16x1xf32> to vector<16x32xf32>
    %937 = arith.subf %931, %936 : vector<16x32xf32>
    %938 = arith.mulf %937, %937 : vector<16x32xf32>
    %cst_378 = arith.constant dense<0.000000e+00> : vector<16xf32>
    %939 = vector.multi_reduction <add>, %938, %cst_378 [1] : vector<16x32xf32> to vector<16xf32>
    %940 = vector.shape_cast %939 : vector<16xf32> to vector<16x1xf32>
    %cst_379 = arith.constant 3.200000e+01 : f32
    %941 = vector.broadcast %cst_379 : f32 to vector<16x1xf32>
    %942 = arith.divf %940, %941 : vector<16x1xf32>
    %943 = vector.broadcast %935 : vector<16x1xf32> to vector<16x32xf32>
    %944 = arith.subf %931, %943 : vector<16x32xf32>
    %cst_380 = arith.constant 9.99999974E-6 : f32
    %945 = vector.broadcast %cst_380 : f32 to vector<16x1xf32>
    %946 = arith.addf %942, %945 : vector<16x1xf32>
    %947 = math.rsqrt %946 : vector<16x1xf32>
    %948 = vector.broadcast %947 : vector<16x1xf32> to vector<16x32xf32>
    %949 = arith.mulf %944, %948 : vector<16x32xf32>
    %950 = vector.broadcast %726 : vector<1x32xf32> to vector<16x32xf32>
    %951 = arith.mulf %949, %950 : vector<16x32xf32>
    %952 = vector.broadcast %728 : vector<1x32xf32> to vector<16x32xf32>
    %953 = arith.addf %951, %952 : vector<16x32xf32>
    %954 = vector.extract_strided_slice %271 {offsets = [0, 7, 0], sizes = [2, 1, 32], strides = [1, 1, 1]} : vector<2x8x32xf32> to vector<2x1x32xf32>
    %955 = vector.shape_cast %954 : vector<2x1x32xf32> to vector<2x32xf32>
    %c0_381 = arith.constant 0 : index
    %c0_382 = arith.constant 0 : index
    %956 = vector.load %arg39[%c0_381, %c0_382] : memref<32x128xf32, #tpu.memory_space<vmem>>, vector<32x128xf32>
    %cst_383 = arith.constant dense<0.000000e+00> : vector<16x128xf32>
    %957 = tpu.matmul %953, %956, %cst_383 {dimension_numbers = #tpu.dot_dimension_numbers<[1], [0], [0], [1], [0, 0, 1, 1], [], []>} : vector<16x32xf32>, vector<32x128xf32>, vector<16x128xf32> -> vector<16x128xf32>
    %c0_384 = arith.constant 0 : index
    %c0_385 = arith.constant 0 : index
    %958 = vector.load %arg40[%c0_384, %c0_385] : memref<1x128xf32, #tpu.memory_space<vmem>>, vector<1x128xf32>
    %959 = vector.broadcast %958 : vector<1x128xf32> to vector<16x128xf32>
    %960 = arith.addf %957, %959 : vector<16x128xf32>
    %c0_386 = arith.constant 0 : index
    %c0_387 = arith.constant 0 : index
    %961 = vector.load %arg41[%c0_386, %c0_387] : memref<32x128xf32, #tpu.memory_space<vmem>>, vector<32x128xf32>
    %cst_388 = arith.constant dense<0.000000e+00> : vector<2x128xf32>
    %962 = tpu.matmul %955, %961, %cst_388 {dimension_numbers = #tpu.dot_dimension_numbers<[1], [0], [0], [1], [0, 0, 1, 1], [], []>} : vector<2x32xf32>, vector<32x128xf32>, vector<2x128xf32> -> vector<2x128xf32>
    %c0_389 = arith.constant 0 : index
    %c0_390 = arith.constant 0 : index
    %963 = vector.load %arg42[%c0_389, %c0_390] : memref<1x128xf32, #tpu.memory_space<vmem>>, vector<1x128xf32>
    %964 = vector.broadcast %963 : vector<1x128xf32> to vector<2x128xf32>
    %965 = arith.addf %962, %964 : vector<2x128xf32>
    %c0_391 = arith.constant 0 : index
    %c0_392 = arith.constant 0 : index
    %966 = vector.load %arg43[%c0_391, %c0_392] : memref<64x32xf32, #tpu.memory_space<vmem>>, vector<64x32xf32>
    %967 = vector.extract_strided_slice %966 {offsets = [0, 0], sizes = [32, 32], strides = [1, 1]} : vector<64x32xf32> to vector<32x32xf32>
    %cst_393 = arith.constant dense<0.000000e+00> : vector<2x32xf32>
    %968 = tpu.matmul %955, %967, %cst_393 {dimension_numbers = #tpu.dot_dimension_numbers<[1], [0], [0], [1], [0, 0, 1, 1], [], []>} : vector<2x32xf32>, vector<32x32xf32>, vector<2x32xf32> -> vector<2x32xf32>
    %969 = vector.shape_cast %968 : vector<2x32xf32> to vector<2x1x32xf32>
    %970 = vector.shape_cast %969 : vector<2x1x32xf32> to vector<2x1x32xf32>
    %971 = vector.broadcast %970 : vector<2x1x32xf32> to vector<2x8x32xf32>
    %972 = vector.shape_cast %971 : vector<2x8x32xf32> to vector<16x32xf32>
    %973 = vector.extract_strided_slice %966 {offsets = [32, 0], sizes = [32, 32], strides = [1, 1]} : vector<64x32xf32> to vector<32x32xf32>
    %cst_394 = arith.constant dense<0.000000e+00> : vector<16x32xf32>
    %974 = tpu.matmul %953, %973, %cst_394 {dimension_numbers = #tpu.dot_dimension_numbers<[1], [0], [0], [1], [0, 0, 1, 1], [], []>} : vector<16x32xf32>, vector<32x32xf32>, vector<16x32xf32> -> vector<16x32xf32>
    %975 = arith.addf %974, %972 : vector<16x32xf32>
    %c0_395 = arith.constant 0 : index
    %c0_396 = arith.constant 0 : index
    %976 = vector.load %arg44[%c0_395, %c0_396] : memref<1x32xf32, #tpu.memory_space<vmem>>, vector<1x32xf32>
    %977 = vector.broadcast %976 : vector<1x32xf32> to vector<16x32xf32>
    %978 = arith.addf %975, %977 : vector<16x32xf32>
    %cst_397 = arith.constant 0.000000e+00 : f32
    %979 = vector.broadcast %cst_397 : f32 to vector<16x32xf32>
    %980 = arith.cmpf ogt, %978, %979 : vector<16x32xf32>
    %cst_398 = arith.constant 0.00999999977 : f32
    %981 = vector.broadcast %cst_398 : f32 to vector<16x32xf32>
    %982 = arith.mulf %981, %978 : vector<16x32xf32>
    %983 = arith.select %980, %978, %982 : vector<16x32xi1>, vector<16x32xf32>
    %c0_399 = arith.constant 0 : index
    %c0_400 = arith.constant 0 : index
    %984 = vector.load %arg45[%c0_399, %c0_400] : memref<32x128xf32, #tpu.memory_space<vmem>>, vector<32x128xf32>
    %cst_401 = arith.constant dense<0.000000e+00> : vector<16x128xf32>
    %985 = tpu.matmul %983, %984, %cst_401 {dimension_numbers = #tpu.dot_dimension_numbers<[1], [0], [0], [1], [0, 0, 1, 1], [], []>} : vector<16x32xf32>, vector<32x128xf32>, vector<16x128xf32> -> vector<16x128xf32>
    %c0_402 = arith.constant 0 : index
    %c0_403 = arith.constant 0 : index
    %986 = vector.load %arg46[%c0_402, %c0_403] : memref<1x128xf32, #tpu.memory_space<vmem>>, vector<1x128xf32>
    %987 = vector.broadcast %986 : vector<1x128xf32> to vector<16x128xf32>
    %988 = arith.addf %985, %987 : vector<16x128xf32>
    %989 = vector.shape_cast %965 : vector<2x128xf32> to vector<2x1x128xf32>
    %990 = vector.shape_cast %989 : vector<2x1x128xf32> to vector<2x1x128xf32>
    %991 = vector.broadcast %990 : vector<2x1x128xf32> to vector<2x8x128xf32>
    %992 = vector.shape_cast %991 : vector<2x8x128xf32> to vector<16x128xf32>
    %993 = arith.mulf %988, %992 : vector<16x128xf32>
    %994 = arith.addf %960, %993 : vector<16x128xf32>
    %c0_404 = arith.constant 0 : index
    %c0_405 = arith.constant 0 : index
    %995 = vector.load %arg48[%c0_404, %c0_405] : memref<16x128xf32, #tpu.memory_space<vmem>>, vector<16x128xf32>
    tpu.vector_store %arg48[%c0_404, %c0_405], %994 {strides = array<i32>} : memref<16x128xf32, #tpu.memory_space<vmem>>, vector<16x128xf32>,
    return
  }
}

</mosaic_0001>

<llo_original>
// kernel: lasagne_forward.1
$region0: #{lasagne_forward.1}
  #allocation0 [shape = 'u32[]', space=smem, size = 0x4, offset = 0x4, fixed_abs, tag = 'smem constant byte address 0x4 - core index']
  #allocation1 [shape = 'u32[144,128]{1,0:T(1,128)}', space=vmem, size = 0x12000, scoped, tag = 'internal scratch']
  #allocation2 [shape = 'f32[16,32]{1,0:T(8,128)}', space=vmem, size = 0x2000, scoped, tag = 'scratch operand']
  %s0 = inlined_call_operand.smem [shape: u32[49], index: -1, kind: input, shape index: {}]
  %s1 = sld [smem:[%s0]]
  %s2 = scalar_lea.smem %s0, 1
  %s3 = sld [smem:[%s2]]
  %s4 = scalar_lea.smem %s0, 2
  %s5 = sld [smem:[%s4]]
  %s6 = scalar_lea.smem %s0, 3
  %s7 = sld [smem:[%s6]]
  %s8 = scalar_lea.smem %s0, 4
  %s9 = sld [smem:[%s8]]
  %s10 = scalar_lea.smem %s0, 5
  %s11 = sld [smem:[%s10]]
  %s12 = scalar_lea.smem %s0, 6
  %s13 = sld [smem:[%s12]]
  %s14 = scalar_lea.smem %s0, 7
  %s15 = sld [smem:[%s14]]
  %s16 = scalar_lea.smem %s0, 8
  %s17 = sld [smem:[%s16]]
  %s18 = scalar_lea.smem %s0, 9
  %s19 = sld [smem:[%s18]]
  %s20 = scalar_lea.smem %s0, 10
  %s21 = sld [smem:[%s20]]
  %s22 = scalar_lea.smem %s0, 11
  %s23 = sld [smem:[%s22]]
  %s24 = scalar_lea.smem %s0, 12
  %s25 = sld [smem:[%s24]]
  %s26 = scalar_lea.smem %s0, 13
  %s27 = sld [smem:[%s26]]
  %s28 = scalar_lea.smem %s0, 14
  %s29 = sld [smem:[%s28]]
  %s30 = scalar_lea.smem %s0, 15
  %s31 = sld [smem:[%s30]]
  %s32 = scalar_lea.smem %s0, 16
  %s33 = sld [smem:[%s32]]
  %s34 = scalar_lea.smem %s0, 17
  %s35 = sld [smem:[%s34]]
  %s36 = scalar_lea.smem %s0, 18
  %s37 = sld [smem:[%s36]]
  %s38 = scalar_lea.smem %s0, 19
  %s39 = sld [smem:[%s38]]
  %s40 = scalar_lea.smem %s0, 20
  %s41 = sld [smem:[%s40]]
  %s42 = scalar_lea.smem %s0, 21
  %s43 = sld [smem:[%s42]]
  %s44 = scalar_lea.smem %s0, 22
  %s45 = sld [smem:[%s44]]
  %s46 = scalar_lea.smem %s0, 23
  %s47 = sld [smem:[%s46]]
  %s48 = scalar_lea.smem %s0, 24
  %s49 = sld [smem:[%s48]]
  %s50 = scalar_lea.smem %s0, 25
  %s51 = sld [smem:[%s50]]
  %s52 = scalar_lea.smem %s0, 26
  %s53 = sld [smem:[%s52]]
  %s54 = scalar_lea.smem %s0, 27
  %s55 = sld [smem:[%s54]]
  %s56 = scalar_lea.smem %s0, 28
  %s57 = sld [smem:[%s56]]
  %s58 = scalar_lea.smem %s0, 29
  %s59 = sld [smem:[%s58]]
  %s60 = scalar_lea.smem %s0, 30
  %s61 = sld [smem:[%s60]]
  %s62 = scalar_lea.smem %s0, 31
  %s63 = sld [smem:[%s62]]
  %s64 = scalar_lea.smem %s0, 32
  %s65 = sld [smem:[%s64]]
  %s66 = scalar_lea.smem %s0, 33
  %s67 = sld [smem:[%s66]]
  %s68 = scalar_lea.smem %s0, 34
  %s69 = sld [smem:[%s68]]
  %s70 = scalar_lea.smem %s0, 35
  %s71 = sld [smem:[%s70]]
  %s72 = scalar_lea.smem %s0, 36
  %s73 = sld [smem:[%s72]]
  %s74 = scalar_lea.smem %s0, 37
  %s75 = sld [smem:[%s74]]
  %s76 = scalar_lea.smem %s0, 38
  %s77 = sld [smem:[%s76]]
  %s78 = scalar_lea.smem %s0, 39
  %s79 = sld [smem:[%s78]]
  %s80 = scalar_lea.smem %s0, 40
  %s81 = sld [smem:[%s80]]
  %s82 = scalar_lea.smem %s0, 41
  %s83 = sld [smem:[%s82]]
  %s84 = scalar_lea.smem %s0, 42
  %s85 = sld [smem:[%s84]]
  %s86 = scalar_lea.smem %s0, 43
  %s87 = sld [smem:[%s86]]
  %s88 = scalar_lea.smem %s0, 44
  %s89 = sld [smem:[%s88]]
  %s90 = scalar_lea.smem %s0, 45
  %s91 = sld [smem:[%s90]]
  %s92 = scalar_lea.smem %s0, 46
  %s93 = sld [smem:[%s92]]
  %s94 = scalar_lea.smem %s0, 47
  %s95 = sld [smem:[%s94]]
  %s96 = scalar_lea.smem %s0, 48
  %s97 = sld [smem:[%s96]]
  %98 = xla_tuple %s95, %s97
  %s99 = sld [smem:[#allocation0]]
  $region214: #{lasagne_forward.1} parent=0
    _
  %s101 = ssub.s32 1, %s99
  %s102 = scalar_select 0, %s101, %s99
  $region1: #{lasagne_forward.1} parent=0
    #allocation3 [shape = 'u8[512]{0}', space=vmem, size = 0x400, scoped, tag = 'input window, operand 44, single buffered']
    #allocation4 [shape = 's32[1]{0}', space=sflag, size = 0x4, scoped, tag = 'scoped memory for lasagne_forward.1']
    #allocation5 [shape = 'u8[512]{0}', space=vmem, size = 0x400, scoped, tag = 'input window, operand 46, single buffered']
    #allocation6 [shape = 's32[1]{0}', space=sflag, size = 0x4, scoped, tag = 'scoped memory for lasagne_forward.1']
    %103 = vsyncpa [#allocation4], 0
    %104 = vsyncpa [#allocation6], 0
    // Predicated region
    $region2: #{lasagne_forward.1} parent=1 // pred_check
      _
    $region3: #{lasagne_forward.1} parent=1 // pred_check_branch
      %106 = sbr.rel (0) target = $region5
    $region4: #{lasagne_forward.1} parent=1 // pred_region
      _
    $region5: #{lasagne_forward.1} parent=1 // pred_fallthru
      _
    // Predicated region
    $region6: #{lasagne_forward.1} parent=1 // pred_check
      _
    $region7: #{lasagne_forward.1} parent=1 // pred_check_branch
      %108 = sbr.rel (0) target = $region9
    $region8: #{lasagne_forward.1} parent=1 // pred_region
      _
    $region9: #{lasagne_forward.1} parent=1 // pred_fallthru
      _
    // Predicated region
    $region10: #{lasagne_forward.1} parent=1 // pred_check
      _
    $region11: #{lasagne_forward.1} parent=1 // pred_check_branch
      %110 = sbr.rel (0) target = $region13
    $region12: #{lasagne_forward.1} parent=1 // pred_region
      _
    $region13: #{lasagne_forward.1} parent=1 // pred_fallthru
      _
    // Predicated region
    $region14: #{lasagne_forward.1} parent=1 // pred_check
      _
    $region15: #{lasagne_forward.1} parent=1 // pred_check_branch
      %112 = sbr.rel (0) target = $region17
    $region16: #{lasagne_forward.1} parent=1 // pred_region
      _
    $region17: #{lasagne_forward.1} parent=1 // pred_fallthru
      _
    // Predicated region
    $region18: #{lasagne_forward.1} parent=1 // pred_check
      _
    $region19: #{lasagne_forward.1} parent=1 // pred_check_branch
      %114 = sbr.rel (0) target = $region21
    $region20: #{lasagne_forward.1} parent=1 // pred_region
      _
    $region21: #{lasagne_forward.1} parent=1 // pred_fallthru
      _
    // Predicated region
    $region22: #{lasagne_forward.1} parent=1 // pred_check
      _
    $region23: #{lasagne_forward.1} parent=1 // pred_check_branch
      %116 = sbr.rel (0) target = $region25
    $region24: #{lasagne_forward.1} parent=1 // pred_region
      _
    $region25: #{lasagne_forward.1} parent=1 // pred_fallthru
      _
    // Predicated region
    $region26: #{lasagne_forward.1} parent=1 // pred_check
      _
    $region27: #{lasagne_forward.1} parent=1 // pred_check_branch
      %118 = sbr.rel (0) target = $region29
    $region28: #{lasagne_forward.1} parent=1 // pred_region
      _
    $region29: #{lasagne_forward.1} parent=1 // pred_fallthru
      _
    // Predicated region
    $region30: #{lasagne_forward.1} parent=1 // pred_check
      _
    $region31: #{lasagne_forward.1} parent=1 // pred_check_branch
      %120 = sbr.rel (0) target = $region33
    $region32: #{lasagne_forward.1} parent=1 // pred_region
      _
    $region33: #{lasagne_forward.1} parent=1 // pred_fallthru
      _
    // Predicated region
    $region34: #{lasagne_forward.1} parent=1 // pred_check
      _
    $region35: #{lasagne_forward.1} parent=1 // pred_check_branch
      %122 = sbr.rel (0) target = $region37
    $region36: #{lasagne_forward.1} parent=1 // pred_region
      _
    $region37: #{lasagne_forward.1} parent=1 // pred_fallthru
      _
    // Predicated region
    $region38: #{lasagne_forward.1} parent=1 // pred_check
      _
    $region39: #{lasagne_forward.1} parent=1 // pred_check_branch
      %124 = sbr.rel (0) target = $region41
    $region40: #{lasagne_forward.1} parent=1 // pred_region
      _
    $region41: #{lasagne_forward.1} parent=1 // pred_fallthru
      _
    // Predicated region
    $region42: #{lasagne_forward.1} parent=1 // pred_check
      _
    $region43: #{lasagne_forward.1} parent=1 // pred_check_branch
      %126 = sbr.rel (0) target = $region45
    $region44: #{lasagne_forward.1} parent=1 // pred_region
      _
    $region45: #{lasagne_forward.1} parent=1 // pred_fallthru
      _
    // Predicated region
    $region46: #{lasagne_forward.1} parent=1 // pred_check
      _
    $region47: #{lasagne_forward.1} parent=1 // pred_check_branch
      %128 = sbr.rel (0) target = $region49
    $region48: #{lasagne_forward.1} parent=1 // pred_region
      _
    $region49: #{lasagne_forward.1} parent=1 // pred_fallthru
      _
    // Predicated region
    $region50: #{lasagne_forward.1} parent=1 // pred_check
      _
    $region51: #{lasagne_forward.1} parent=1 // pred_check_branch
      %130 = sbr.rel (0) target = $region53
    $region52: #{lasagne_forward.1} parent=1 // pred_region
      _
    $region53: #{lasagne_forward.1} parent=1 // pred_fallthru
      _
    // Predicated region
    $region54: #{lasagne_forward.1} parent=1 // pred_check
      _
    $region55: #{lasagne_forward.1} parent=1 // pred_check_branch
      %132 = sbr.rel (0) target = $region57
    $region56: #{lasagne_forward.1} parent=1 // pred_region
      _
    $region57: #{lasagne_forward.1} parent=1 // pred_fallthru
      _
    // Predicated region
    $region58: #{lasagne_forward.1} parent=1 // pred_check
      _
    $region59: #{lasagne_forward.1} parent=1 // pred_check_branch
      %134 = sbr.rel (0) target = $region61
    $region60: #{lasagne_forward.1} parent=1 // pred_region
      _
    $region61: #{lasagne_forward.1} parent=1 // pred_fallthru
      _
    // Predicated region
    $region62: #{lasagne_forward.1} parent=1 // pred_check
      _
    $region63: #{lasagne_forward.1} parent=1 // pred_check_branch
      %136 = sbr.rel (0) target = $region65
    $region64: #{lasagne_forward.1} parent=1 // pred_region
      _
    $region65: #{lasagne_forward.1} parent=1 // pred_fallthru
      _
    // Predicated region
    $region66: #{lasagne_forward.1} parent=1 // pred_check
      _
    $region67: #{lasagne_forward.1} parent=1 // pred_check_branch
      %138 = sbr.rel (0) target = $region69
    $region68: #{lasagne_forward.1} parent=1 // pred_region
      _
    $region69: #{lasagne_forward.1} parent=1 // pred_fallthru
      _
    // Predicated region
    $region70: #{lasagne_forward.1} parent=1 // pred_check
      _
    $region71: #{lasagne_forward.1} parent=1 // pred_check_branch
      %140 = sbr.rel (0) target = $region73
    $region72: #{lasagne_forward.1} parent=1 // pred_region
      _
    $region73: #{lasagne_forward.1} parent=1 // pred_fallthru
      _
    // Predicated region
    $region74: #{lasagne_forward.1} parent=1 // pred_check
      _
    $region75: #{lasagne_forward.1} parent=1 // pred_check_branch
      %142 = sbr.rel (0) target = $region77
    $region76: #{lasagne_forward.1} parent=1 // pred_region
      _
    $region77: #{lasagne_forward.1} parent=1 // pred_fallthru
      _
    // Predicated region
    $region78: #{lasagne_forward.1} parent=1 // pred_check
      _
    $region79: #{lasagne_forward.1} parent=1 // pred_check_branch
      %144 = sbr.rel (0) target = $region81
    $region80: #{lasagne_forward.1} parent=1 // pred_region
      _
    $region81: #{lasagne_forward.1} parent=1 // pred_fallthru
      _
    // Predicated region
    $region82: #{lasagne_forward.1} parent=1 // pred_check
      _
    $region83: #{lasagne_forward.1} parent=1 // pred_check_branch
      %146 = sbr.rel (0) target = $region85
    $region84: #{lasagne_forward.1} parent=1 // pred_region
      _
    $region85: #{lasagne_forward.1} parent=1 // pred_fallthru
      _
    // Predicated region
    $region86: #{lasagne_forward.1} parent=1 // pred_check
      _
    $region87: #{lasagne_forward.1} parent=1 // pred_check_branch
      %148 = sbr.rel (0) target = $region89
    $region88: #{lasagne_forward.1} parent=1 // pred_region
      _
    $region89: #{lasagne_forward.1} parent=1 // pred_fallthru
      _
    // Predicated region
    $region90: #{lasagne_forward.1} parent=1 // pred_check
      _
    $region91: #{lasagne_forward.1} parent=1 // pred_check_branch
      %150 = sbr.rel (0) target = $region93
    $region92: #{lasagne_forward.1} parent=1 // pred_region
      _
    $region93: #{lasagne_forward.1} parent=1 // pred_fallthru
      _
    // Predicated region
    $region94: #{lasagne_forward.1} parent=1 // pred_check
      _
    $region95: #{lasagne_forward.1} parent=1 // pred_check_branch
      %152 = sbr.rel (0) target = $region97
    $region96: #{lasagne_forward.1} parent=1 // pred_region
      _
    $region97: #{lasagne_forward.1} parent=1 // pred_fallthru
      _
    // Predicated region
    $region98: #{lasagne_forward.1} parent=1 // pred_check
      _
    $region99: #{lasagne_forward.1} parent=1 // pred_check_branch
      %154 = sbr.rel (0) target = $region101
    $region100: #{lasagne_forward.1} parent=1 // pred_region
      _
    $region101: #{lasagne_forward.1} parent=1 // pred_fallthru
      _
    // Predicated region
    $region102: #{lasagne_forward.1} parent=1 // pred_check
      _
    $region103: #{lasagne_forward.1} parent=1 // pred_check_branch
      %156 = sbr.rel (0) target = $region105
    $region104: #{lasagne_forward.1} parent=1 // pred_region
      _
    $region105: #{lasagne_forward.1} parent=1 // pred_fallthru
      _
    // Predicated region
    $region106: #{lasagne_forward.1} parent=1 // pred_check
      _
    $region107: #{lasagne_forward.1} parent=1 // pred_check_branch
      %158 = sbr.rel (0) target = $region109
    $region108: #{lasagne_forward.1} parent=1 // pred_region
      _
    $region109: #{lasagne_forward.1} parent=1 // pred_fallthru
      _
    // Predicated region
    $region110: #{lasagne_forward.1} parent=1 // pred_check
      _
    $region111: #{lasagne_forward.1} parent=1 // pred_check_branch
      %160 = sbr.rel (0) target = $region113
    $region112: #{lasagne_forward.1} parent=1 // pred_region
      _
    $region113: #{lasagne_forward.1} parent=1 // pred_fallthru
      _
    // Predicated region
    $region114: #{lasagne_forward.1} parent=1 // pred_check
      _
    $region115: #{lasagne_forward.1} parent=1 // pred_check_branch
      %162 = sbr.rel (0) target = $region117
    $region116: #{lasagne_forward.1} parent=1 // pred_region
      _
    $region117: #{lasagne_forward.1} parent=1 // pred_fallthru
      _
    // Predicated region
    $region118: #{lasagne_forward.1} parent=1 // pred_check
      _
    $region119: #{lasagne_forward.1} parent=1 // pred_check_branch
      %164 = sbr.rel (0) target = $region121
    $region120: #{lasagne_forward.1} parent=1 // pred_region
      _
    $region121: #{lasagne_forward.1} parent=1 // pred_fallthru
      _
    // Predicated region
    $region122: #{lasagne_forward.1} parent=1 // pred_check
      _
    $region123: #{lasagne_forward.1} parent=1 // pred_check_branch
      %166 = sbr.rel (0) target = $region125
    $region124: #{lasagne_forward.1} parent=1 // pred_region
      _
    $region125: #{lasagne_forward.1} parent=1 // pred_fallthru
      _
    // Predicated region
    $region126: #{lasagne_forward.1} parent=1 // pred_check
      _
    $region127: #{lasagne_forward.1} parent=1 // pred_check_branch
      %168 = sbr.rel (0) target = $region129
    $region128: #{lasagne_forward.1} parent=1 // pred_region
      _
    $region129: #{lasagne_forward.1} parent=1 // pred_fallthru
      _
    // Predicated region
    $region130: #{lasagne_forward.1} parent=1 // pred_check
      _
    $region131: #{lasagne_forward.1} parent=1 // pred_check_branch
      %170 = sbr.rel (0) target = $region133
    $region132: #{lasagne_forward.1} parent=1 // pred_region
      _
    $region133: #{lasagne_forward.1} parent=1 // pred_fallthru
      _
    // Predicated region
    $region134: #{lasagne_forward.1} parent=1 // pred_check
      _
    $region135: #{lasagne_forward.1} parent=1 // pred_check_branch
      %172 = sbr.rel (0) target = $region137
    $region136: #{lasagne_forward.1} parent=1 // pred_region
      _
    $region137: #{lasagne_forward.1} parent=1 // pred_fallthru
      _
    // Predicated region
    $region138: #{lasagne_forward.1} parent=1 // pred_check
      _
    $region139: #{lasagne_forward.1} parent=1 // pred_check_branch
      %174 = sbr.rel (0) target = $region141
    $region140: #{lasagne_forward.1} parent=1 // pred_region
      _
    $region141: #{lasagne_forward.1} parent=1 // pred_fallthru
      _
    // Predicated region
    $region142: #{lasagne_forward.1} parent=1 // pred_check
      _
    $region143: #{lasagne_forward.1} parent=1 // pred_check_branch
      %176 = sbr.rel (0) target = $region145
    $region144: #{lasagne_forward.1} parent=1 // pred_region
      _
    $region145: #{lasagne_forward.1} parent=1 // pred_fallthru
      _
    // Predicated region
    $region146: #{lasagne_forward.1} parent=1 // pred_check
      _
    $region147: #{lasagne_forward.1} parent=1 // pred_check_branch
      %178 = sbr.rel (0) target = $region149
    $region148: #{lasagne_forward.1} parent=1 // pred_region
      _
    $region149: #{lasagne_forward.1} parent=1 // pred_fallthru
      _
    // Predicated region
    $region150: #{lasagne_forward.1} parent=1 // pred_check
      _
    $region151: #{lasagne_forward.1} parent=1 // pred_check_branch
      %180 = sbr.rel (0) target = $region153
    $region152: #{lasagne_forward.1} parent=1 // pred_region
      _
    $region153: #{lasagne_forward.1} parent=1 // pred_fallthru
      _
    // Predicated region
    $region154: #{lasagne_forward.1} parent=1 // pred_check
      _
    $region155: #{lasagne_forward.1} parent=1 // pred_check_branch
      %182 = sbr.rel (0) target = $region157
    $region156: #{lasagne_forward.1} parent=1 // pred_region
      _
    $region157: #{lasagne_forward.1} parent=1 // pred_fallthru
      _
    // Predicated region
    $region158: #{lasagne_forward.1} parent=1 // pred_check
      _
    $region159: #{lasagne_forward.1} parent=1 // pred_check_branch
      %184 = sbr.rel (0) target = $region161
    $region160: #{lasagne_forward.1} parent=1 // pred_region
      _
    $region161: #{lasagne_forward.1} parent=1 // pred_fallthru
      _
    // Predicated region
    $region162: #{lasagne_forward.1} parent=1 // pred_check
      _
    $region163: #{lasagne_forward.1} parent=1 // pred_check_branch
      %186 = sbr.rel (0) target = $region165
    $region164: #{lasagne_forward.1} parent=1 // pred_region
      _
    $region165: #{lasagne_forward.1} parent=1 // pred_fallthru
      _
    // Predicated region
    $region166: #{lasagne_forward.1} parent=1 // pred_check
      _
    $region167: #{lasagne_forward.1} parent=1 // pred_check_branch
      %188 = sbr.rel (0) target = $region169
    $region168: #{lasagne_forward.1} parent=1 // pred_region
      _
    $region169: #{lasagne_forward.1} parent=1 // pred_fallthru
      _
    // Predicated region
    $region170: #{lasagne_forward.1} parent=1 // pred_check
      _
    $region171: #{lasagne_forward.1} parent=1 // pred_check_branch
      %190 = sbr.rel (0) target = $region173
    $region172: #{lasagne_forward.1} parent=1 // pred_region
      _
    $region173: #{lasagne_forward.1} parent=1 // pred_fallthru
      _
    // Predicated region
    $region174: #{lasagne_forward.1} parent=1 // pred_check
      _
    $region175: #{lasagne_forward.1} parent=1 // pred_check_branch
      %192 = sbr.rel (0) target = $region177
    $region176: #{lasagne_forward.1} parent=1 // pred_region
      _
    $region177: #{lasagne_forward.1} parent=1 // pred_fallthru
      _
    // Predicated region
    $region178: #{lasagne_forward.1} parent=1 // pred_check
      _
    $region179: #{lasagne_forward.1} parent=1 // pred_check_branch
      %194 = sbr.rel (0) target = $region181
    $region180: #{lasagne_forward.1} parent=1 // pred_region
      %s196 = ssub.s32 16, 16
      %197 = vsyncadd [#allocation4], %s196
      %s199 = sshll.u32 [#allocation3], 4
      %s200 = int_to_ptr.vmem [resolvable:$true] %s199
      %202 = dma.hbm_to_vmem [thread:$0]  %s89, 16, %s200, [#allocation4]
    $region181: #{lasagne_forward.1} parent=1 // pred_fallthru
      _
    // Predicated region
    $region182: #{lasagne_forward.1} parent=1 // pred_check
      _
    $region183: #{lasagne_forward.1} parent=1 // pred_check_branch
      %204 = sbr.rel (0) target = $region185
    $region184: #{lasagne_forward.1} parent=1 // pred_region
      _
    $region185: #{lasagne_forward.1} parent=1 // pred_fallthru
      _
    // Predicated region
    $region186: #{lasagne_forward.1} parent=1 // pred_check
      _
    $region187: #{lasagne_forward.1} parent=1 // pred_check_branch
      %206 = sbr.rel (0) target = $region189
    $region188: #{lasagne_forward.1} parent=1 // pred_region
      %s208 = ssub.s32 16, 16
      %209 = vsyncadd [#allocation6], %s208
      %s211 = sshll.u32 [#allocation5], 4
      %s212 = int_to_ptr.vmem [resolvable:$true] %s211
      %214 = dma.hbm_to_vmem [thread:$0]  %s93, 16, %s212, [#allocation6]
    $region189: #{lasagne_forward.1} parent=1 // pred_fallthru
      _
    // Predicated region
    $region190: #{lasagne_forward.1} parent=1 // pred_check
      _
    $region191: #{lasagne_forward.1} parent=1 // pred_check_branch
      %216 = sbr.rel (0) target = $region193
    $region192: #{lasagne_forward.1} parent=1 // pred_region
      %217 = dma.done [#allocation4], 16
    $region193: #{lasagne_forward.1} parent=1 // pred_fallthru
      _
    // Predicated region
    $region194: #{lasagne_forward.1} parent=1 // pred_check
      _
    $region195: #{lasagne_forward.1} parent=1 // pred_check_branch
      %219 = sbr.rel (0) target = $region197
    $region196: #{lasagne_forward.1} parent=1 // pred_region
      %220 = dma.done [#allocation6], 16
    $region197: #{lasagne_forward.1} parent=1 // pred_fallthru
      _
    %v221 = vld [vmem:[%s5] sm:$0xff]
    %v222 = vld [vmem:[%s5 + $0x8] sm:$0xff]
    %v223 = vld [vmem:[%s7] sm:$0xff]
    %v224 = vld [vmem:[%s7 + $0x8] sm:$0xff]
    %v225 = vld [vmem:[%s9] sm:$0xff]
    %v226 = vld [vmem:[%s9 + $0x8] sm:$0xff]
    %v227 = vld [vmem:[%s1] sm:$0xff]
    %v228 = vld [vmem:[%s1 + $0x8] sm:$0xff]
    %v229 = vld [vmem:[%s19] sm:$0x1]
    %v230 = vld [vmem:[%s21] sm:$0x1]
    %v231 = vld [vmem:[%s11] sm:$0xff]
    %v232 = vld [vmem:[%s11 + $0x8] sm:$0xff]
    %v233 = vld [vmem:[%s11 + $0x10] sm:$0xff]
    %v234 = vld [vmem:[%s11 + $0x18] sm:$0xff]
    %v235 = vld [vmem:[%s13] sm:$0x1]
    %v237 = vlaneseq
    %v238 = vshrl.u32 %v237, 7
    %v239 = vsub.s32 0, %v238
    %v240 = vrot.slane %v235, %v239
    %vm242 = vcmask 261120
    %v244 = vsel %vm242, %v227, 0
    %v247 = vsel %vm242, %v228, 0
    %249 = vmatprep.subr.mxu0 0.0
    %250 = vmatpush1.msra.mxu0 %v231
    %251 = vmatprep.subr.mxu0 0.0
    %252 = vmatpush1.msra.mxu0 %v232
    %253 = vmatprep.subr.mxu0 0.0
    %254 = vmatpush1.msra.mxu0 %v233
    %255 = vmatprep.subr.mxu0 0.0
    %256 = vmatpush1.msra.mxu0 %v234
    %257 = vmatprep.subr.mxu0 0.0
    %258 = vmatpush1.msra.mxu0 0.0
    %259 = vmatprep.subr.mxu0 0.0
    %260 = vmatpush1.msra.mxu0 0.0
    %261 = vmatprep.subr.mxu0 0.0
    %262 = vmatpush1.msra.mxu0 0.0
    %263 = vmatprep.subr.mxu0 0.0
    %264 = vmatpush1.msra.mxu0 0.0
    %265 = vmatprep.subr.mxu0 0.0
    %266 = vmatpush1.msra.mxu0 0.0
    %267 = vmatprep.subr.mxu0 0.0
    %268 = vmatpush1.msra.mxu0 0.0
    %269 = vmatprep.subr.mxu0 0.0
    %270 = vmatpush1.msra.mxu0 0.0
    %271 = vmatprep.subr.mxu0 0.0
    %272 = vmatpush1.msra.mxu0 0.0
    %273 = vmatprep.subr.mxu0 0.0
    %274 = vmatpush1.msra.mxu0 0.0
    %275 = vmatprep.subr.mxu0 0.0
    %276 = vmatpush1.msra.mxu0 0.0
    %277 = vmatprep.subr.mxu0 0.0
    %278 = vmatpush1.msra.mxu0 0.0
    %279 = vmatprep.subr.mxu0 0.0
    %280 = vmatpush1.msra.mxu0 0.0
    %281 = vmatprep.subr.mxu0 0.0
    %282 = vmatpush1.msra.mxu0 0.0
    %283 = vmatprep.subr.mxu0 0.0
    %284 = vmatpush1.msra.mxu0 0.0
    %285 = vmatprep.subr.mxu0 0.0
    %286 = vmatpush1.msra.mxu0 0.0
    %287 = vmatprep.subr.mxu0 0.0
    %288 = vmatpush1.msra.mxu0 0.0
    %289 = vmatprep.subr.mxu0 0.0
    %290 = vmatpush1.msra.mxu0 0.0
    %291 = vmatprep.subr.mxu0 0.0
    %292 = vmatpush1.msra.mxu0 0.0
    %293 = vmatprep.subr.mxu0 0.0
    %294 = vmatpush1.msra.mxu0 0.0
    %295 = vmatprep.subr.mxu0 0.0
    %296 = vmatpush1.msra.mxu0 0.0
    %297 = vmatprep.subr.mxu0 0.0
    %298 = vmatpush1.msra.mxu0 0.0
    %299 = vmatprep.subr.mxu0 0.0
    %300 = vmatpush1.msra.mxu0 0.0
    %301 = vmatprep.subr.mxu0 0.0
    %302 = vmatpush1.msra.mxu0 0.0
    %303 = vmatprep.subr.mxu0 0.0
    %304 = vmatpush1.msra.mxu0 0.0
    %305 = vmatprep.subr.mxu0 0.0
    %306 = vmatpush1.msra.mxu0 0.0
    %307 = vmatprep.subr.mxu0 0.0
    %308 = vmatpush1.msra.mxu0 0.0
    %309 = vmatprep.subr.mxu0 0.0
    %310 = vmatpush1.msra.mxu0 0.0
    %311 = vmatprep.subr.mxu0 0.0
    %312 = vmatpush1.msra.mxu0 0.0
    %313 = vmatprep.mubr.f32.mxu0 0.0
    %314 = vmatmul.mubr.f32.gmra.mrb[0].mxu0 %v244
    %v315 = vpop.f32.mrb[0].mxu0
    %v316 = vadd.f32 %v240, %v315
    %v317 = vpop.f32.mrb[0].mxu0
    %318 = vmatprep.mubr.f32.mxu0 0.0
    %319 = vmatmul.mubr.f32.gmra.mrb[0].mxu0 %v247
    %v320 = vpop.f32.mrb[0].mxu0
    %v321 = vadd.f32 %v240, %v320
    %v322 = vpop.f32.mrb[0].mxu0
    %323 = vdwg.mxu0
    %v324 = vld [vmem:[%s15] sm:$0xff]
    %v325 = vld [vmem:[%s15 + $0x8] sm:$0xff]
    %v326 = vld [vmem:[%s15 + $0x10] sm:$0xff]
    %v327 = vld [vmem:[%s15 + $0x18] sm:$0xff]
    %v328 = vld [vmem:[%s17] sm:$0x1]
    %v330 = vlaneseq
    %v331 = vshrl.u32 %v330, 7
    %v332 = vsub.s32 0, %v331
    %v333 = vrot.slane %v328, %v332
    %v335 = vadd.f32 %v333, 0.0
    %337 = vrot.lane.b32.xlu0 %v316, 96
    %v338 = vpop.permute.xlu0 %337
    %vm339 = vcmask 130048
    %v340 = vsel %vm339, %v316, 0
    %v342 = vsel %vm339, %v338, 0
    %344 = vmatprep.subr.mxu0 0.0
    %345 = vmatpush1.xpose.msra.mxu0 %v342
    %346 = vmatprep.subr.mxu0 0.0
    %347 = vmatpush1.xpose.msra.mxu0 0.0
    %348 = vmatprep.subr.mxu0 0.0
    %349 = vmatpush1.xpose.msra.mxu0 0.0
    %350 = vmatprep.subr.mxu0 0.0
    %351 = vmatpush1.xpose.msra.mxu0 0.0
    %352 = vmatprep.subr.mxu0 0.0
    %353 = vmatpush1.xpose.msra.mxu0 0.0
    %354 = vmatprep.subr.mxu0 0.0
    %355 = vmatpush1.xpose.msra.mxu0 0.0
    %356 = vmatprep.subr.mxu0 0.0
    %357 = vmatpush1.xpose.msra.mxu0 0.0
    %358 = vmatprep.subr.mxu0 0.0
    %359 = vmatpush1.xpose.msra.mxu0 0.0
    %360 = vmatprep.subr.mxu0 0.0
    %361 = vmatpush1.xpose.msra.mxu0 0.0
    %362 = vmatprep.subr.mxu0 0.0
    %363 = vmatpush1.xpose.msra.mxu0 0.0
    %364 = vmatprep.subr.mxu0 0.0
    %365 = vmatpush1.xpose.msra.mxu0 0.0
    %366 = vmatprep.subr.mxu0 0.0
    %367 = vmatpush1.xpose.msra.mxu0 0.0
    %368 = vmatprep.subr.mxu0 0.0
    %369 = vmatpush1.xpose.msra.mxu0 0.0
    %370 = vmatprep.subr.mxu0 0.0
    %371 = vmatpush1.xpose.msra.mxu0 0.0
    %372 = vmatprep.subr.mxu0 0.0
    %373 = vmatpush1.xpose.msra.mxu0 0.0
    %374 = vmatprep.subr.mxu0 0.0
    %375 = vmatpush1.xpose.msra.mxu0 0.0
    %376 = vmatprep.subr.mxu0 0.0
    %377 = vmatpush1.xpose.msra.mxu0 0.0
    %378 = vmatprep.subr.mxu0 0.0
    %379 = vmatpush1.xpose.msra.mxu0 0.0
    %380 = vmatprep.subr.mxu0 0.0
    %381 = vmatpush1.xpose.msra.mxu0 0.0
    %382 = vmatprep.subr.mxu0 0.0
    %383 = vmatpush1.xpose.msra.mxu0 0.0
    %384 = vmatprep.subr.mxu0 0.0
    %385 = vmatpush1.xpose.msra.mxu0 0.0
    %386 = vmatprep.subr.mxu0 0.0
    %387 = vmatpush1.xpose.msra.mxu0 0.0
    %388 = vmatprep.subr.mxu0 0.0
    %389 = vmatpush1.xpose.msra.mxu0 0.0
    %390 = vmatprep.subr.mxu0 0.0
    %391 = vmatpush1.xpose.msra.mxu0 0.0
    %392 = vmatprep.subr.mxu0 0.0
    %393 = vmatpush1.xpose.msra.mxu0 0.0
    %394 = vmatprep.subr.mxu0 0.0
    %395 = vmatpush1.xpose.msra.mxu0 0.0
    %396 = vmatprep.subr.mxu0 0.0
    %397 = vmatpush1.xpose.msra.mxu0 0.0
    %398 = vmatprep.subr.mxu0 0.0
    %399 = vmatpush1.xpose.msra.mxu0 0.0
    %400 = vmatprep.subr.mxu0 0.0
    %401 = vmatpush1.xpose.msra.mxu0 0.0
    %402 = vmatprep.subr.mxu0 0.0
    %403 = vmatpush1.xpose.msra.mxu0 0.0
    %404 = vmatprep.subr.mxu0 0.0
    %405 = vmatpush1.xpose.msra.mxu0 0.0
    %406 = vmatprep.subr.mxu0 0.0
    %407 = vmatpush1.xpose.msra.mxu0 0.0
    %408 = vmatprep.mubr.f32.mxu0 0.0
    %409 = vmatmul.mubr.f32.gmra.mrb[0].mxu0 %v340
    %v410 = vpop.f32.mrb[0].mxu0
    %v411 = vadd.f32 0.0, %v410
    %v412 = vpop.f32.mrb[0].mxu0
    %413 = vdwg.mxu0
    %415 = vrot.lane.b32.xlu0 %v321, 96
    %v416 = vpop.permute.xlu0 %415
    %v417 = vsel %vm339, %v321, 0
    %v419 = vsel %vm339, %v416, 0
    %421 = vmatprep.subr.mxu0 0.0
    %422 = vmatpush1.xpose.msra.mxu0 %v419
    %423 = vmatprep.subr.mxu0 0.0
    %424 = vmatpush1.xpose.msra.mxu0 0.0
    %425 = vmatprep.subr.mxu0 0.0
    %426 = vmatpush1.xpose.msra.mxu0 0.0
    %427 = vmatprep.subr.mxu0 0.0
    %428 = vmatpush1.xpose.msra.mxu0 0.0
    %429 = vmatprep.subr.mxu0 0.0
    %430 = vmatpush1.xpose.msra.mxu0 0.0
    %431 = vmatprep.subr.mxu0 0.0
    %432 = vmatpush1.xpose.msra.mxu0 0.0
    %433 = vmatprep.subr.mxu0 0.0
    %434 = vmatpush1.xpose.msra.mxu0 0.0
    %435 = vmatprep.subr.mxu0 0.0
    %436 = vmatpush1.xpose.msra.mxu0 0.0
    %437 = vmatprep.subr.mxu0 0.0
    %438 = vmatpush1.xpose.msra.mxu0 0.0
    %439 = vmatprep.subr.mxu0 0.0
    %440 = vmatpush1.xpose.msra.mxu0 0.0
    %441 = vmatprep.subr.mxu0 0.0
    %442 = vmatpush1.xpose.msra.mxu0 0.0
    %443 = vmatprep.subr.mxu0 0.0
    %444 = vmatpush1.xpose.msra.mxu0 0.0
    %445 = vmatprep.subr.mxu0 0.0
    %446 = vmatpush1.xpose.msra.mxu0 0.0
    %447 = vmatprep.subr.mxu0 0.0
    %448 = vmatpush1.xpose.msra.mxu0 0.0
    %449 = vmatprep.subr.mxu0 0.0
    %450 = vmatpush1.xpose.msra.mxu0 0.0
    %451 = vmatprep.subr.mxu0 0.0
    %452 = vmatpush1.xpose.msra.mxu0 0.0
    %453 = vmatprep.subr.mxu0 0.0
    %454 = vmatpush1.xpose.msra.mxu0 0.0
    %455 = vmatprep.subr.mxu0 0.0
    %456 = vmatpush1.xpose.msra.mxu0 0.0
    %457 = vmatprep.subr.mxu0 0.0
    %458 = vmatpush1.xpose.msra.mxu0 0.0
    %459 = vmatprep.subr.mxu0 0.0
    %460 = vmatpush1.xpose.msra.mxu0 0.0
    %461 = vmatprep.subr.mxu0 0.0
    %462 = vmatpush1.xpose.msra.mxu0 0.0
    %463 = vmatprep.subr.mxu0 0.0
    %464 = vmatpush1.xpose.msra.mxu0 0.0
    %465 = vmatprep.subr.mxu0 0.0
    %466 = vmatpush1.xpose.msra.mxu0 0.0
    %467 = vmatprep.subr.mxu0 0.0
    %468 = vmatpush1.xpose.msra.mxu0 0.0
    %469 = vmatprep.subr.mxu0 0.0
    %470 = vmatpush1.xpose.msra.mxu0 0.0
    %471 = vmatprep.subr.mxu0 0.0
    %472 = vmatpush1.xpose.msra.mxu0 0.0
    %473 = vmatprep.subr.mxu0 0.0
    %474 = vmatpush1.xpose.msra.mxu0 0.0
    %475 = vmatprep.subr.mxu0 0.0
    %476 = vmatpush1.xpose.msra.mxu0 0.0
    %477 = vmatprep.subr.mxu0 0.0
    %478 = vmatpush1.xpose.msra.mxu0 0.0
    %479 = vmatprep.subr.mxu0 0.0
    %480 = vmatpush1.xpose.msra.mxu0 0.0
    %481 = vmatprep.subr.mxu0 0.0
    %482 = vmatpush1.xpose.msra.mxu0 0.0
    %483 = vmatprep.subr.mxu0 0.0
    %484 = vmatpush1.xpose.msra.mxu0 0.0
    %485 = vmatprep.mubr.f32.mxu0 0.0
    %486 = vmatmul.mubr.f32.gmra.mrb[0].mxu0 %v417
    %v487 = vpop.f32.mrb[0].mxu0
    %v488 = vadd.f32 0.0, %v487
    %v489 = vpop.f32.mrb[0].mxu0
    %490 = vdwg.mxu0
    %v491 = vmul.f32 %v411, 0.25
    %v492 = vmul.f32 %v488, 0.25
    %v493 = vadd.f32 %v491, %v221
    %v494 = vadd.f32 %v492, %v222
    %vm495 = vcmask 64512
    %v496 = vsel %vm495, %v493, -inf
    %497 = vmax.xlane.f32.xlu0 %v496
    %v498 = vpop.xlane.xlu0 %497
    %v499 = vsel %vm495, %v494, -inf
    %500 = vmax.xlane.f32.xlu0 %v499
    %v501 = vpop.xlane.xlu0 %500
    %v502 = vsub.f32 %v493, %v498
    %v503 = vsub.f32 %v494, %v501
    %v504 = vmul.f32 %v502, 1.442695
    %v505 = vpow.pop %v504
    %v506 = vmul.f32 %v503, 1.442695
    %v507 = vpow.pop %v506
    %v508 = vsel %vm495, %v505, 0.0
    %509 = vadd.xlane.f32.xlu0 %v508
    %v510 = vpop.xlane.xlu0 %509
    %v511 = vsel %vm495, %v507, 0.0
    %512 = vadd.xlane.f32.xlu0 %v511
    %v513 = vpop.xlane.xlu0 %512
    %v514 = vrcp.pop %v510
    %v515 = vrcp.pop %v513
    %v516 = vmul.f32 %v505, %v514
    %v517 = vmul.f32 %v507, %v515
    %518 = vrot.lane.b32.xlu0 %v316, 64
    %v519 = vpop.permute.xlu0 %518
    %v522 = vsel %vm495, %v516, 0
    %524 = vmatprep.subr.mxu0 0.0
    %525 = vmatpush1.msra.mxu0 %v519
    %526 = vmatprep.subr.mxu0 0.0
    %527 = vmatpush1.msra.mxu0 0.0
    %528 = vmatprep.subr.mxu0 0.0
    %529 = vmatpush1.msra.mxu0 0.0
    %530 = vmatprep.subr.mxu0 0.0
    %531 = vmatpush1.msra.mxu0 0.0
    %532 = vmatprep.subr.mxu0 0.0
    %533 = vmatpush1.msra.mxu0 0.0
    %534 = vmatprep.subr.mxu0 0.0
    %535 = vmatpush1.msra.mxu0 0.0
    %536 = vmatprep.subr.mxu0 0.0
    %537 = vmatpush1.msra.mxu0 0.0
    %538 = vmatprep.subr.mxu0 0.0
    %539 = vmatpush1.msra.mxu0 0.0
    %540 = vmatprep.subr.mxu0 0.0
    %541 = vmatpush1.msra.mxu0 0.0
    %542 = vmatprep.subr.mxu0 0.0
    %543 = vmatpush1.msra.mxu0 0.0
    %544 = vmatprep.subr.mxu0 0.0
    %545 = vmatpush1.msra.mxu0 0.0
    %546 = vmatprep.subr.mxu0 0.0
    %547 = vmatpush1.msra.mxu0 0.0
    %548 = vmatprep.subr.mxu0 0.0
    %549 = vmatpush1.msra.mxu0 0.0
    %550 = vmatprep.subr.mxu0 0.0
    %551 = vmatpush1.msra.mxu0 0.0
    %552 = vmatprep.subr.mxu0 0.0
    %553 = vmatpush1.msra.mxu0 0.0
    %554 = vmatprep.subr.mxu0 0.0
    %555 = vmatpush1.msra.mxu0 0.0
    %556 = vmatprep.subr.mxu0 0.0
    %557 = vmatpush1.msra.mxu0 0.0
    %558 = vmatprep.subr.mxu0 0.0
    %559 = vmatpush1.msra.mxu0 0.0
    %560 = vmatprep.subr.mxu0 0.0
    %561 = vmatpush1.msra.mxu0 0.0
    %562 = vmatprep.subr.mxu0 0.0
    %563 = vmatpush1.msra.mxu0 0.0
    %564 = vmatprep.subr.mxu0 0.0
    %565 = vmatpush1.msra.mxu0 0.0
    %566 = vmatprep.subr.mxu0 0.0
    %567 = vmatpush1.msra.mxu0 0.0
    %568 = vmatprep.subr.mxu0 0.0
    %569 = vmatpush1.msra.mxu0 0.0
    %570 = vmatprep.subr.mxu0 0.0
    %571 = vmatpush1.msra.mxu0 0.0
    %572 = vmatprep.subr.mxu0 0.0
    %573 = vmatpush1.msra.mxu0 0.0
    %574 = vmatprep.subr.mxu0 0.0
    %575 = vmatpush1.msra.mxu0 0.0
    %576 = vmatprep.subr.mxu0 0.0
    %577 = vmatpush1.msra.mxu0 0.0
    %578 = vmatprep.subr.mxu0 0.0
    %579 = vmatpush1.msra.mxu0 0.0
    %580 = vmatprep.subr.mxu0 0.0
    %581 = vmatpush1.msra.mxu0 0.0
    %582 = vmatprep.subr.mxu0 0.0
    %583 = vmatpush1.msra.mxu0 0.0
    %584 = vmatprep.subr.mxu0 0.0
    %585 = vmatpush1.msra.mxu0 0.0
    %586 = vmatprep.subr.mxu0 0.0
    %587 = vmatpush1.msra.mxu0 0.0
    %588 = vmatprep.mubr.f32.mxu0 0.0
    %589 = vmatmul.mubr.f32.gmra.mrb[0].mxu0 %v522
    %v590 = vpop.f32.mrb[0].mxu0
    %v591 = vadd.f32 0.0, %v590
    %v592 = vpop.f32.mrb[0].mxu0
    %593 = vdwg.mxu0
    %594 = vrot.lane.b32.xlu0 %v321, 64
    %v595 = vpop.permute.xlu0 %594
    %v598 = vsel %vm495, %v517, 0
    %600 = vmatprep.subr.mxu0 0.0
    %601 = vmatpush1.msra.mxu0 %v595
    %602 = vmatprep.subr.mxu0 0.0
    %603 = vmatpush1.msra.mxu0 0.0
    %604 = vmatprep.subr.mxu0 0.0
    %605 = vmatpush1.msra.mxu0 0.0
    %606 = vmatprep.subr.mxu0 0.0
    %607 = vmatpush1.msra.mxu0 0.0
    %608 = vmatprep.subr.mxu0 0.0
    %609 = vmatpush1.msra.mxu0 0.0
    %610 = vmatprep.subr.mxu0 0.0
    %611 = vmatpush1.msra.mxu0 0.0
    %612 = vmatprep.subr.mxu0 0.0
    %613 = vmatpush1.msra.mxu0 0.0
    %614 = vmatprep.subr.mxu0 0.0
    %615 = vmatpush1.msra.mxu0 0.0
    %616 = vmatprep.subr.mxu0 0.0
    %617 = vmatpush1.msra.mxu0 0.0
    %618 = vmatprep.subr.mxu0 0.0
    %619 = vmatpush1.msra.mxu0 0.0
    %620 = vmatprep.subr.mxu0 0.0
    %621 = vmatpush1.msra.mxu0 0.0
    %622 = vmatprep.subr.mxu0 0.0
    %623 = vmatpush1.msra.mxu0 0.0
    %624 = vmatprep.subr.mxu0 0.0
    %625 = vmatpush1.msra.mxu0 0.0
    %626 = vmatprep.subr.mxu0 0.0
    %627 = vmatpush1.msra.mxu0 0.0
    %628 = vmatprep.subr.mxu0 0.0
    %629 = vmatpush1.msra.mxu0 0.0
    %630 = vmatprep.subr.mxu0 0.0
    %631 = vmatpush1.msra.mxu0 0.0
    %632 = vmatprep.subr.mxu0 0.0
    %633 = vmatpush1.msra.mxu0 0.0
    %634 = vmatprep.subr.mxu0 0.0
    %635 = vmatpush1.msra.mxu0 0.0
    %636 = vmatprep.subr.mxu0 0.0
    %637 = vmatpush1.msra.mxu0 0.0
    %638 = vmatprep.subr.mxu0 0.0
    %639 = vmatpush1.msra.mxu0 0.0
    %640 = vmatprep.subr.mxu0 0.0
    %641 = vmatpush1.msra.mxu0 0.0
    %642 = vmatprep.subr.mxu0 0.0
    %643 = vmatpush1.msra.mxu0 0.0
    %644 = vmatprep.subr.mxu0 0.0
    %645 = vmatpush1.msra.mxu0 0.0
    %646 = vmatprep.subr.mxu0 0.0
    %647 = vmatpush1.msra.mxu0 0.0
    %648 = vmatprep.subr.mxu0 0.0
    %649 = vmatpush1.msra.mxu0 0.0
    %650 = vmatprep.subr.mxu0 0.0
    %651 = vmatpush1.msra.mxu0 0.0
    %652 = vmatprep.subr.mxu0 0.0
    %653 = vmatpush1.msra.mxu0 0.0
    %654 = vmatprep.subr.mxu0 0.0
    %655 = vmatpush1.msra.mxu0 0.0
    %656 = vmatprep.subr.mxu0 0.0
    %657 = vmatpush1.msra.mxu0 0.0
    %658 = vmatprep.subr.mxu0 0.0
    %659 = vmatpush1.msra.mxu0 0.0
    %660 = vmatprep.subr.mxu0 0.0
    %661 = vmatpush1.msra.mxu0 0.0
    %662 = vmatprep.subr.mxu0 0.0
    %663 = vmatpush1.msra.mxu0 0.0
    %664 = vmatprep.mubr.f32.mxu0 0.0
    %665 = vmatmul.mubr.f32.gmra.mrb[0].mxu0 %v598
    %v666 = vpop.f32.mrb[0].mxu0
    %v667 = vadd.f32 0.0, %v666
    %v668 = vpop.f32.mrb[0].mxu0
    %669 = vdwg.mxu0
    %v671 = vsel %vm339, %v591, 0
    %v674 = vsel %vm339, %v667, 0
    %676 = vmatprep.subr.mxu0 0.0
    %677 = vmatpush1.msra.mxu0 %v324
    %678 = vmatprep.subr.mxu0 0.0
    %679 = vmatpush1.msra.mxu0 %v325
    %680 = vmatprep.subr.mxu0 0.0
    %681 = vmatpush1.msra.mxu0 0.0
    %682 = vmatprep.subr.mxu0 0.0
    %683 = vmatpush1.msra.mxu0 0.0
    %684 = vmatprep.subr.mxu0 0.0
    %685 = vmatpush1.msra.mxu0 0.0
    %686 = vmatprep.subr.mxu0 0.0
    %687 = vmatpush1.msra.mxu0 0.0
    %688 = vmatprep.subr.mxu0 0.0
    %689 = vmatpush1.msra.mxu0 0.0
    %690 = vmatprep.subr.mxu0 0.0
    %691 = vmatpush1.msra.mxu0 0.0
    %692 = vmatprep.subr.mxu0 0.0
    %693 = vmatpush1.msra.mxu0 0.0
    %694 = vmatprep.subr.mxu0 0.0
    %695 = vmatpush1.msra.mxu0 0.0
    %696 = vmatprep.subr.mxu0 0.0
    %697 = vmatpush1.msra.mxu0 0.0
    %698 = vmatprep.subr.mxu0 0.0
    %699 = vmatpush1.msra.mxu0 0.0
    %700 = vmatprep.subr.mxu0 0.0
    %701 = vmatpush1.msra.mxu0 0.0
    %702 = vmatprep.subr.mxu0 0.0
    %703 = vmatpush1.msra.mxu0 0.0
    %704 = vmatprep.subr.mxu0 0.0
    %705 = vmatpush1.msra.mxu0 0.0
    %706 = vmatprep.subr.mxu0 0.0
    %707 = vmatpush1.msra.mxu0 0.0
    %708 = vmatprep.subr.mxu0 0.0
    %709 = vmatpush1.msra.mxu0 0.0
    %710 = vmatprep.subr.mxu0 0.0
    %711 = vmatpush1.msra.mxu0 0.0
    %712 = vmatprep.subr.mxu0 0.0
    %713 = vmatpush1.msra.mxu0 0.0
    %714 = vmatprep.subr.mxu0 0.0
    %715 = vmatpush1.msra.mxu0 0.0
    %716 = vmatprep.subr.mxu0 0.0
    %717 = vmatpush1.msra.mxu0 0.0
    %718 = vmatprep.subr.mxu0 0.0
    %719 = vmatpush1.msra.mxu0 0.0
    %720 = vmatprep.subr.mxu0 0.0
    %721 = vmatpush1.msra.mxu0 0.0
    %722 = vmatprep.subr.mxu0 0.0
    %723 = vmatpush1.msra.mxu0 0.0
    %724 = vmatprep.subr.mxu0 0.0
    %725 = vmatpush1.msra.mxu0 0.0
    %726 = vmatprep.subr.mxu0 0.0
    %727 = vmatpush1.msra.mxu0 0.0
    %728 = vmatprep.subr.mxu0 0.0
    %729 = vmatpush1.msra.mxu0 0.0
    %730 = vmatprep.subr.mxu0 0.0
    %731 = vmatpush1.msra.mxu0 0.0
    %732 = vmatprep.subr.mxu0 0.0
    %733 = vmatpush1.msra.mxu0 0.0
    %734 = vmatprep.subr.mxu0 0.0
    %735 = vmatpush1.msra.mxu0 0.0
    %736 = vmatprep.subr.mxu0 0.0
    %737 = vmatpush1.msra.mxu0 0.0
    %738 = vmatprep.subr.mxu0 0.0
    %739 = vmatpush1.msra.mxu0 0.0
    %740 = vmatprep.mubr.f32.mxu0 0.0
    %741 = vmatmul.mubr.f32.gmra.mrb[0].mxu0 %v671
    %v742 = vpop.f32.mrb[0].mxu0
    %v743 = vadd.f32 0.0, %v742
    %v744 = vpop.f32.mrb[0].mxu0
    %745 = vmatprep.mubr.f32.mxu0 0.0
    %746 = vmatmul.mubr.f32.gmra.mrb[0].mxu0 %v674
    %v747 = vpop.f32.mrb[0].mxu0
    %v748 = vadd.f32 0.0, %v747
    %v749 = vpop.f32.mrb[0].mxu0
    %750 = vdwg.mxu0
    %v751 = vadd.f32 %v335, %v743
    %v752 = vadd.f32 %v335, %v748
    %753 = vrot.lane.b32.xlu0 %v316, 112
    %v754 = vpop.permute.xlu0 %753
    %755 = vrot.lane.b32.xlu0 %v316, 80
    %v756 = vpop.permute.xlu0 %755
    %v757 = vsel %vm339, %v754, 0
    %v759 = vsel %vm339, %v756, 0
    %761 = vmatprep.subr.mxu0 0.0
    %762 = vmatpush1.xpose.msra.mxu0 %v759
    %763 = vmatprep.subr.mxu0 0.0
    %764 = vmatpush1.xpose.msra.mxu0 0.0
    %765 = vmatprep.subr.mxu0 0.0
    %766 = vmatpush1.xpose.msra.mxu0 0.0
    %767 = vmatprep.subr.mxu0 0.0
    %768 = vmatpush1.xpose.msra.mxu0 0.0
    %769 = vmatprep.subr.mxu0 0.0
    %770 = vmatpush1.xpose.msra.mxu0 0.0
    %771 = vmatprep.subr.mxu0 0.0
    %772 = vmatpush1.xpose.msra.mxu0 0.0
    %773 = vmatprep.subr.mxu0 0.0
    %774 = vmatpush1.xpose.msra.mxu0 0.0
    %775 = vmatprep.subr.mxu0 0.0
    %776 = vmatpush1.xpose.msra.mxu0 0.0
    %777 = vmatprep.subr.mxu0 0.0
    %778 = vmatpush1.xpose.msra.mxu0 0.0
    %779 = vmatprep.subr.mxu0 0.0
    %780 = vmatpush1.xpose.msra.mxu0 0.0
    %781 = vmatprep.subr.mxu0 0.0
    %782 = vmatpush1.xpose.msra.mxu0 0.0
    %783 = vmatprep.subr.mxu0 0.0
    %784 = vmatpush1.xpose.msra.mxu0 0.0
    %785 = vmatprep.subr.mxu0 0.0
    %786 = vmatpush1.xpose.msra.mxu0 0.0
    %787 = vmatprep.subr.mxu0 0.0
    %788 = vmatpush1.xpose.msra.mxu0 0.0
    %789 = vmatprep.subr.mxu0 0.0
    %790 = vmatpush1.xpose.msra.mxu0 0.0
    %791 = vmatprep.subr.mxu0 0.0
    %792 = vmatpush1.xpose.msra.mxu0 0.0
    %793 = vmatprep.subr.mxu0 0.0
    %794 = vmatpush1.xpose.msra.mxu0 0.0
    %795 = vmatprep.subr.mxu0 0.0
    %796 = vmatpush1.xpose.msra.mxu0 0.0
    %797 = vmatprep.subr.mxu0 0.0
    %798 = vmatpush1.xpose.msra.mxu0 0.0
    %799 = vmatprep.subr.mxu0 0.0
    %800 = vmatpush1.xpose.msra.mxu0 0.0
    %801 = vmatprep.subr.mxu0 0.0
    %802 = vmatpush1.xpose.msra.mxu0 0.0
    %803 = vmatprep.subr.mxu0 0.0
    %804 = vmatpush1.xpose.msra.mxu0 0.0
    %805 = vmatprep.subr.mxu0 0.0
    %806 = vmatpush1.xpose.msra.mxu0 0.0
    %807 = vmatprep.subr.mxu0 0.0
    %808 = vmatpush1.xpose.msra.mxu0 0.0
    %809 = vmatprep.subr.mxu0 0.0
    %810 = vmatpush1.xpose.msra.mxu0 0.0
    %811 = vmatprep.subr.mxu0 0.0
    %812 = vmatpush1.xpose.msra.mxu0 0.0
    %813 = vmatprep.subr.mxu0 0.0
    %814 = vmatpush1.xpose.msra.mxu0 0.0
    %815 = vmatprep.subr.mxu0 0.0
    %816 = vmatpush1.xpose.msra.mxu0 0.0
    %817 = vmatprep.subr.mxu0 0.0
    %818 = vmatpush1.xpose.msra.mxu0 0.0
    %819 = vmatprep.subr.mxu0 0.0
    %820 = vmatpush1.xpose.msra.mxu0 0.0
    %821 = vmatprep.subr.mxu0 0.0
    %822 = vmatpush1.xpose.msra.mxu0 0.0
    %823 = vmatprep.subr.mxu0 0.0
    %824 = vmatpush1.xpose.msra.mxu0 0.0
    %825 = vmatprep.mubr.f32.mxu0 0.0
    %826 = vmatmul.mubr.f32.gmra.mrb[0].mxu0 %v757
    %v827 = vpop.f32.mrb[0].mxu0
    %v828 = vadd.f32 0.0, %v827
    %v829 = vpop.f32.mrb[0].mxu0
    %830 = vdwg.mxu0
    %831 = vrot.lane.b32.xlu0 %v321, 112
    %v832 = vpop.permute.xlu0 %831
    %833 = vrot.lane.b32.xlu0 %v321, 80
    %v834 = vpop.permute.xlu0 %833
    %v835 = vsel %vm339, %v832, 0
    %v837 = vsel %vm339, %v834, 0
    %839 = vmatprep.subr.mxu0 0.0
    %840 = vmatpush1.xpose.msra.mxu0 %v837
    %841 = vmatprep.subr.mxu0 0.0
    %842 = vmatpush1.xpose.msra.mxu0 0.0
    %843 = vmatprep.subr.mxu0 0.0
    %844 = vmatpush1.xpose.msra.mxu0 0.0
    %845 = vmatprep.subr.mxu0 0.0
    %846 = vmatpush1.xpose.msra.mxu0 0.0
    %847 = vmatprep.subr.mxu0 0.0
    %848 = vmatpush1.xpose.msra.mxu0 0.0
    %849 = vmatprep.subr.mxu0 0.0
    %850 = vmatpush1.xpose.msra.mxu0 0.0
    %851 = vmatprep.subr.mxu0 0.0
    %852 = vmatpush1.xpose.msra.mxu0 0.0
    %853 = vmatprep.subr.mxu0 0.0
    %854 = vmatpush1.xpose.msra.mxu0 0.0
    %855 = vmatprep.subr.mxu0 0.0
    %856 = vmatpush1.xpose.msra.mxu0 0.0
    %857 = vmatprep.subr.mxu0 0.0
    %858 = vmatpush1.xpose.msra.mxu0 0.0
    %859 = vmatprep.subr.mxu0 0.0
    %860 = vmatpush1.xpose.msra.mxu0 0.0
    %861 = vmatprep.subr.mxu0 0.0
    %862 = vmatpush1.xpose.msra.mxu0 0.0
    %863 = vmatprep.subr.mxu0 0.0
    %864 = vmatpush1.xpose.msra.mxu0 0.0
    %865 = vmatprep.subr.mxu0 0.0
    %866 = vmatpush1.xpose.msra.mxu0 0.0
    %867 = vmatprep.subr.mxu0 0.0
    %868 = vmatpush1.xpose.msra.mxu0 0.0
    %869 = vmatprep.subr.mxu0 0.0
    %870 = vmatpush1.xpose.msra.mxu0 0.0
    %871 = vmatprep.subr.mxu0 0.0
    %872 = vmatpush1.xpose.msra.mxu0 0.0
    %873 = vmatprep.subr.mxu0 0.0
    %874 = vmatpush1.xpose.msra.mxu0 0.0
    %875 = vmatprep.subr.mxu0 0.0
    %876 = vmatpush1.xpose.msra.mxu0 0.0
    %877 = vmatprep.subr.mxu0 0.0
    %878 = vmatpush1.xpose.msra.mxu0 0.0
    %879 = vmatprep.subr.mxu0 0.0
    %880 = vmatpush1.xpose.msra.mxu0 0.0
    %881 = vmatprep.subr.mxu0 0.0
    %882 = vmatpush1.xpose.msra.mxu0 0.0
    %883 = vmatprep.subr.mxu0 0.0
    %884 = vmatpush1.xpose.msra.mxu0 0.0
    %885 = vmatprep.subr.mxu0 0.0
    %886 = vmatpush1.xpose.msra.mxu0 0.0
    %887 = vmatprep.subr.mxu0 0.0
    %888 = vmatpush1.xpose.msra.mxu0 0.0
    %889 = vmatprep.subr.mxu0 0.0
    %890 = vmatpush1.xpose.msra.mxu0 0.0
    %891 = vmatprep.subr.mxu0 0.0
    %892 = vmatpush1.xpose.msra.mxu0 0.0
    %893 = vmatprep.subr.mxu0 0.0
    %894 = vmatpush1.xpose.msra.mxu0 0.0
    %895 = vmatprep.subr.mxu0 0.0
    %896 = vmatpush1.xpose.msra.mxu0 0.0
    %897 = vmatprep.subr.mxu0 0.0
    %898 = vmatpush1.xpose.msra.mxu0 0.0
    %899 = vmatprep.subr.mxu0 0.0
    %900 = vmatpush1.xpose.msra.mxu0 0.0
    %901 = vmatprep.subr.mxu0 0.0
    %902 = vmatpush1.xpose.msra.mxu0 0.0
    %903 = vmatprep.mubr.f32.mxu0 0.0
    %904 = vmatmul.mubr.f32.gmra.mrb[0].mxu0 %v835
    %v905 = vpop.f32.mrb[0].mxu0
    %v906 = vadd.f32 0.0, %v905
    %v907 = vpop.f32.mrb[0].mxu0
    %908 = vdwg.mxu0
    %v909 = vmul.f32 %v828, 0.25
    %v910 = vmul.f32 %v906, 0.25
    %v911 = vadd.f32 %v909, %v221
    %v912 = vadd.f32 %v910, %v222
    %v913 = vsel %vm495, %v911, -inf
    %914 = vmax.xlane.f32.xlu0 %v913
    %v915 = vpop.xlane.xlu0 %914
    %v916 = vsel %vm495, %v912, -inf
    %917 = vmax.xlane.f32.xlu0 %v916
    %v918 = vpop.xlane.xlu0 %917
    %v919 = vsub.f32 %v911, %v915
    %v920 = vsub.f32 %v912, %v918
    %v921 = vmul.f32 %v919, 1.442695
    %v922 = vpow.pop %v921
    %v923 = vmul.f32 %v920, 1.442695
    %v924 = vpow.pop %v923
    %v925 = vsel %vm495, %v922, 0.0
    %926 = vadd.xlane.f32.xlu0 %v925
    %v927 = vpop.xlane.xlu0 %926
    %v928 = vsel %vm495, %v924, 0.0
    %929 = vadd.xlane.f32.xlu0 %v928
    %v930 = vpop.xlane.xlu0 %929
    %v931 = vrcp.pop %v927
    %v932 = vrcp.pop %v930
    %v933 = vmul.f32 %v922, %v931
    %v934 = vmul.f32 %v924, %v932
    %935 = vrot.lane.b32.xlu0 %v316, 48
    %v936 = vpop.permute.xlu0 %935
    %v939 = vsel %vm495, %v933, 0
    %941 = vmatprep.subr.mxu0 0.0
    %942 = vmatpush1.msra.mxu0 %v936
    %943 = vmatprep.subr.mxu0 0.0
    %944 = vmatpush1.msra.mxu0 0.0
    %945 = vmatprep.subr.mxu0 0.0
    %946 = vmatpush1.msra.mxu0 0.0
    %947 = vmatprep.subr.mxu0 0.0
    %948 = vmatpush1.msra.mxu0 0.0
    %949 = vmatprep.subr.mxu0 0.0
    %950 = vmatpush1.msra.mxu0 0.0
    %951 = vmatprep.subr.mxu0 0.0
    %952 = vmatpush1.msra.mxu0 0.0
    %953 = vmatprep.subr.mxu0 0.0
    %954 = vmatpush1.msra.mxu0 0.0
    %955 = vmatprep.subr.mxu0 0.0
    %956 = vmatpush1.msra.mxu0 0.0
    %957 = vmatprep.subr.mxu0 0.0
    %958 = vmatpush1.msra.mxu0 0.0
    %959 = vmatprep.subr.mxu0 0.0
    %960 = vmatpush1.msra.mxu0 0.0
    %961 = vmatprep.subr.mxu0 0.0
    %962 = vmatpush1.msra.mxu0 0.0
    %963 = vmatprep.subr.mxu0 0.0
    %964 = vmatpush1.msra.mxu0 0.0
    %965 = vmatprep.subr.mxu0 0.0
    %966 = vmatpush1.msra.mxu0 0.0
    %967 = vmatprep.subr.mxu0 0.0
    %968 = vmatpush1.msra.mxu0 0.0
    %969 = vmatprep.subr.mxu0 0.0
    %970 = vmatpush1.msra.mxu0 0.0
    %971 = vmatprep.subr.mxu0 0.0
    %972 = vmatpush1.msra.mxu0 0.0
    %973 = vmatprep.subr.mxu0 0.0
    %974 = vmatpush1.msra.mxu0 0.0
    %975 = vmatprep.subr.mxu0 0.0
    %976 = vmatpush1.msra.mxu0 0.0
    %977 = vmatprep.subr.mxu0 0.0
    %978 = vmatpush1.msra.mxu0 0.0
    %979 = vmatprep.subr.mxu0 0.0
    %980 = vmatpush1.msra.mxu0 0.0
    %981 = vmatprep.subr.mxu0 0.0
    %982 = vmatpush1.msra.mxu0 0.0
    %983 = vmatprep.subr.mxu0 0.0
    %984 = vmatpush1.msra.mxu0 0.0
    %985 = vmatprep.subr.mxu0 0.0
    %986 = vmatpush1.msra.mxu0 0.0
    %987 = vmatprep.subr.mxu0 0.0
    %988 = vmatpush1.msra.mxu0 0.0
    %989 = vmatprep.subr.mxu0 0.0
    %990 = vmatpush1.msra.mxu0 0.0
    %991 = vmatprep.subr.mxu0 0.0
    %992 = vmatpush1.msra.mxu0 0.0
    %993 = vmatprep.subr.mxu0 0.0
    %994 = vmatpush1.msra.mxu0 0.0
    %995 = vmatprep.subr.mxu0 0.0
    %996 = vmatpush1.msra.mxu0 0.0
    %997 = vmatprep.subr.mxu0 0.0
    %998 = vmatpush1.msra.mxu0 0.0
    %999 = vmatprep.subr.mxu0 0.0
    %1000 = vmatpush1.msra.mxu0 0.0
    %1001 = vmatprep.subr.mxu0 0.0
    %1002 = vmatpush1.msra.mxu0 0.0
    %1003 = vmatprep.subr.mxu0 0.0
    %1004 = vmatpush1.msra.mxu0 0.0
    %1005 = vmatprep.mubr.f32.mxu0 0.0
    %1006 = vmatmul.mubr.f32.gmra.mrb[0].mxu0 %v939
    %v1007 = vpop.f32.mrb[0].mxu0
    %v1008 = vadd.f32 0.0, %v1007
    %v1009 = vpop.f32.mrb[0].mxu0
    %1010 = vdwg.mxu0
    %1011 = vrot.lane.b32.xlu0 %v321, 48
    %v1012 = vpop.permute.xlu0 %1011
    %v1015 = vsel %vm495, %v934, 0
    %1017 = vmatprep.subr.mxu0 0.0
    %1018 = vmatpush1.msra.mxu0 %v1012
    %1019 = vmatprep.subr.mxu0 0.0
    %1020 = vmatpush1.msra.mxu0 0.0
    %1021 = vmatprep.subr.mxu0 0.0
    %1022 = vmatpush1.msra.mxu0 0.0
    %1023 = vmatprep.subr.mxu0 0.0
    %1024 = vmatpush1.msra.mxu0 0.0
    %1025 = vmatprep.subr.mxu0 0.0
    %1026 = vmatpush1.msra.mxu0 0.0
    %1027 = vmatprep.subr.mxu0 0.0
    %1028 = vmatpush1.msra.mxu0 0.0
    %1029 = vmatprep.subr.mxu0 0.0
    %1030 = vmatpush1.msra.mxu0 0.0
    %1031 = vmatprep.subr.mxu0 0.0
    %1032 = vmatpush1.msra.mxu0 0.0
    %1033 = vmatprep.subr.mxu0 0.0
    %1034 = vmatpush1.msra.mxu0 0.0
    %1035 = vmatprep.subr.mxu0 0.0
    %1036 = vmatpush1.msra.mxu0 0.0
    %1037 = vmatprep.subr.mxu0 0.0
    %1038 = vmatpush1.msra.mxu0 0.0
    %1039 = vmatprep.subr.mxu0 0.0
    %1040 = vmatpush1.msra.mxu0 0.0
    %1041 = vmatprep.subr.mxu0 0.0
    %1042 = vmatpush1.msra.mxu0 0.0
    %1043 = vmatprep.subr.mxu0 0.0
    %1044 = vmatpush1.msra.mxu0 0.0
    %1045 = vmatprep.subr.mxu0 0.0
    %1046 = vmatpush1.msra.mxu0 0.0
    %1047 = vmatprep.subr.mxu0 0.0
    %1048 = vmatpush1.msra.mxu0 0.0
    %1049 = vmatprep.subr.mxu0 0.0
    %1050 = vmatpush1.msra.mxu0 0.0
    %1051 = vmatprep.subr.mxu0 0.0
    %1052 = vmatpush1.msra.mxu0 0.0
    %1053 = vmatprep.subr.mxu0 0.0
    %1054 = vmatpush1.msra.mxu0 0.0
    %1055 = vmatprep.subr.mxu0 0.0
    %1056 = vmatpush1.msra.mxu0 0.0
    %1057 = vmatprep.subr.mxu0 0.0
    %1058 = vmatpush1.msra.mxu0 0.0
    %1059 = vmatprep.subr.mxu0 0.0
    %1060 = vmatpush1.msra.mxu0 0.0
    %1061 = vmatprep.subr.mxu0 0.0
    %1062 = vmatpush1.msra.mxu0 0.0
    %1063 = vmatprep.subr.mxu0 0.0
    %1064 = vmatpush1.msra.mxu0 0.0
    %1065 = vmatprep.subr.mxu0 0.0
    %1066 = vmatpush1.msra.mxu0 0.0
    %1067 = vmatprep.subr.mxu0 0.0
    %1068 = vmatpush1.msra.mxu0 0.0
    %1069 = vmatprep.subr.mxu0 0.0
    %1070 = vmatpush1.msra.mxu0 0.0
    %1071 = vmatprep.subr.mxu0 0.0
    %1072 = vmatpush1.msra.mxu0 0.0
    %1073 = vmatprep.subr.mxu0 0.0
    %1074 = vmatpush1.msra.mxu0 0.0
    %1075 = vmatprep.subr.mxu0 0.0
    %1076 = vmatpush1.msra.mxu0 0.0
    %1077 = vmatprep.subr.mxu0 0.0
    %1078 = vmatpush1.msra.mxu0 0.0
    %1079 = vmatprep.subr.mxu0 0.0
    %1080 = vmatpush1.msra.mxu0 0.0
    %1081 = vmatprep.mubr.f32.mxu0 0.0
    %1082 = vmatmul.mubr.f32.gmra.mrb[0].mxu0 %v1015
    %v1083 = vpop.f32.mrb[0].mxu0
    %v1084 = vadd.f32 0.0, %v1083
    %v1085 = vpop.f32.mrb[0].mxu0
    %1086 = vdwg.mxu0
    %v1088 = vsel %vm339, %v1008, 0
    %v1091 = vsel %vm339, %v1084, 0
    %1093 = vmatprep.subr.mxu0 0.0
    %1094 = vmatpush1.msra.mxu0 %v326
    %1095 = vmatprep.subr.mxu0 0.0
    %1096 = vmatpush1.msra.mxu0 %v327
    %1097 = vmatprep.subr.mxu0 0.0
    %1098 = vmatpush1.msra.mxu0 0.0
    %1099 = vmatprep.subr.mxu0 0.0
    %1100 = vmatpush1.msra.mxu0 0.0
    %1101 = vmatprep.subr.mxu0 0.0
    %1102 = vmatpush1.msra.mxu0 0.0
    %1103 = vmatprep.subr.mxu0 0.0
    %1104 = vmatpush1.msra.mxu0 0.0
    %1105 = vmatprep.subr.mxu0 0.0
    %1106 = vmatpush1.msra.mxu0 0.0
    %1107 = vmatprep.subr.mxu0 0.0
    %1108 = vmatpush1.msra.mxu0 0.0
    %1109 = vmatprep.subr.mxu0 0.0
    %1110 = vmatpush1.msra.mxu0 0.0
    %1111 = vmatprep.subr.mxu0 0.0
    %1112 = vmatpush1.msra.mxu0 0.0
    %1113 = vmatprep.subr.mxu0 0.0
    %1114 = vmatpush1.msra.mxu0 0.0
    %1115 = vmatprep.subr.mxu0 0.0
    %1116 = vmatpush1.msra.mxu0 0.0
    %1117 = vmatprep.subr.mxu0 0.0
    %1118 = vmatpush1.msra.mxu0 0.0
    %1119 = vmatprep.subr.mxu0 0.0
    %1120 = vmatpush1.msra.mxu0 0.0
    %1121 = vmatprep.subr.mxu0 0.0
    %1122 = vmatpush1.msra.mxu0 0.0
    %1123 = vmatprep.subr.mxu0 0.0
    %1124 = vmatpush1.msra.mxu0 0.0
    %1125 = vmatprep.subr.mxu0 0.0
    %1126 = vmatpush1.msra.mxu0 0.0
    %1127 = vmatprep.subr.mxu0 0.0
    %1128 = vmatpush1.msra.mxu0 0.0
    %1129 = vmatprep.subr.mxu0 0.0
    %1130 = vmatpush1.msra.mxu0 0.0
    %1131 = vmatprep.subr.mxu0 0.0
    %1132 = vmatpush1.msra.mxu0 0.0
    %1133 = vmatprep.subr.mxu0 0.0
    %1134 = vmatpush1.msra.mxu0 0.0
    %1135 = vmatprep.subr.mxu0 0.0
    %1136 = vmatpush1.msra.mxu0 0.0
    %1137 = vmatprep.subr.mxu0 0.0
    %1138 = vmatpush1.msra.mxu0 0.0
    %1139 = vmatprep.subr.mxu0 0.0
    %1140 = vmatpush1.msra.mxu0 0.0
    %1141 = vmatprep.subr.mxu0 0.0
    %1142 = vmatpush1.msra.mxu0 0.0
    %1143 = vmatprep.subr.mxu0 0.0
    %1144 = vmatpush1.msra.mxu0 0.0
    %1145 = vmatprep.subr.mxu0 0.0
    %1146 = vmatpush1.msra.mxu0 0.0
    %1147 = vmatprep.subr.mxu0 0.0
    %1148 = vmatpush1.msra.mxu0 0.0
    %1149 = vmatprep.subr.mxu0 0.0
    %1150 = vmatpush1.msra.mxu0 0.0
    %1151 = vmatprep.subr.mxu0 0.0
    %1152 = vmatpush1.msra.mxu0 0.0
    %1153 = vmatprep.subr.mxu0 0.0
    %1154 = vmatpush1.msra.mxu0 0.0
    %1155 = vmatprep.subr.mxu0 0.0
    %1156 = vmatpush1.msra.mxu0 0.0
    %1157 = vmatprep.mubr.f32.mxu0 0.0
    %1158 = vmatmul.mubr.f32.gmra.mrb[0].mxu0 %v1088
    %v1159 = vpop.f32.mrb[0].mxu0
    %v1160 = vadd.f32 0.0, %v1159
    %v1161 = vpop.f32.mrb[0].mxu0
    %1162 = vmatprep.mubr.f32.mxu0 0.0
    %1163 = vmatmul.mubr.f32.gmra.mrb[0].mxu0 %v1091
    %v1164 = vpop.f32.mrb[0].mxu0
    %v1165 = vadd.f32 0.0, %v1164
    %v1166 = vpop.f32.mrb[0].mxu0
    %1167 = vdwg.mxu0
    %v1168 = vadd.f32 %v751, %v1160
    %v1169 = vadd.f32 %v752, %v1165
    %v1170 = vadd.f32 %v227, %v1168
    %v1171 = vadd.f32 %v228, %v1169
    %v1172 = vsel %vm242, %v1170, 0.0
    %1173 = vadd.xlane.f32.xlu0 %v1172
    %v1174 = vpop.xlane.xlu0 %1173
    %v1175 = vsel %vm242, %v1171, 0.0
    %1176 = vadd.xlane.f32.xlu0 %v1175
    %v1177 = vpop.xlane.xlu0 %1176
    %v1178 = vrcp.pop 32.0
    %v1179 = vmul.f32 %v1174, %v1178
    %v1180 = vmul.f32 %v1177, %v1178
    %v1181 = vsub.f32 %v1170, %v1179
    %v1182 = vsub.f32 %v1171, %v1180
    %v1183 = vmul.f32 %v1181, %v1181
    %v1184 = vmul.f32 %v1182, %v1182
    %v1185 = vsel %vm242, %v1183, 0.0
    %1186 = vadd.xlane.f32.xlu0 %v1185
    %v1187 = vpop.xlane.xlu0 %1186
    %v1188 = vsel %vm242, %v1184, 0.0
    %1189 = vadd.xlane.f32.xlu0 %v1188
    %v1190 = vpop.xlane.xlu0 %1189
    %v1191 = vmul.f32 %v1187, %v1178
    %v1192 = vmul.f32 %v1190, %v1178
    %v1193 = vadd.f32 %v1191, 1e-05
    %v1194 = vadd.f32 %v1192, 1e-05
    %v1195 = vrsqrt.pop %v1193
    %v1196 = vrsqrt.pop %v1194
    %v1197 = vmul.f32 %v1181, %v1195
    %v1198 = vmul.f32 %v1182, %v1196
    %v1200 = vlaneseq
    %v1201 = vshrl.u32 %v1200, 7
    %v1202 = vsub.s32 0, %v1201
    %v1203 = vrot.slane %v229, %v1202
    %v1205 = vmul.f32 %v1197, %v1203
    %v1206 = vmul.f32 %v1198, %v1203
    %v1208 = vlaneseq
    %v1209 = vshrl.u32 %v1208, 7
    %v1210 = vsub.s32 0, %v1209
    %v1211 = vrot.slane %v230, %v1210
    %v1213 = vadd.f32 %v1205, %v1211
    %v1214 = vadd.f32 %v1206, %v1211
    %v1215 = vld [vmem:[%s23] sm:$0xff]
    %v1216 = vld [vmem:[%s23 + $0x8] sm:$0xff]
    %v1217 = vld [vmem:[%s23 + $0x10] sm:$0xff]
    %v1218 = vld [vmem:[%s23 + $0x18] sm:$0xff]
    %v1219 = vld [vmem:[%s25] sm:$0x1]
    %v1221 = vlaneseq
    %v1222 = vshrl.u32 %v1221, 7
    %v1223 = vsub.s32 0, %v1222
    %v1224 = vrot.slane %v1219, %v1223
    %v1227 = vsel %vm242, %v1213, 0
    %v1230 = vsel %vm242, %v1214, 0
    %1232 = vmatprep.subr.mxu0 0.0
    %1233 = vmatpush1.msra.mxu0 %v1215
    %1234 = vmatprep.subr.mxu0 0.0
    %1235 = vmatpush1.msra.mxu0 %v1216
    %1236 = vmatprep.subr.mxu0 0.0
    %1237 = vmatpush1.msra.mxu0 %v1217
    %1238 = vmatprep.subr.mxu0 0.0
    %1239 = vmatpush1.msra.mxu0 %v1218
    %1240 = vmatprep.subr.mxu0 0.0
    %1241 = vmatpush1.msra.mxu0 0.0
    %1242 = vmatprep.subr.mxu0 0.0
    %1243 = vmatpush1.msra.mxu0 0.0
    %1244 = vmatprep.subr.mxu0 0.0
    %1245 = vmatpush1.msra.mxu0 0.0
    %1246 = vmatprep.subr.mxu0 0.0
    %1247 = vmatpush1.msra.mxu0 0.0
    %1248 = vmatprep.subr.mxu0 0.0
    %1249 = vmatpush1.msra.mxu0 0.0
    %1250 = vmatprep.subr.mxu0 0.0
    %1251 = vmatpush1.msra.mxu0 0.0
    %1252 = vmatprep.subr.mxu0 0.0
    %1253 = vmatpush1.msra.mxu0 0.0
    %1254 = vmatprep.subr.mxu0 0.0
    %1255 = vmatpush1.msra.mxu0 0.0
    %1256 = vmatprep.subr.mxu0 0.0
    %1257 = vmatpush1.msra.mxu0 0.0
    %1258 = vmatprep.subr.mxu0 0.0
    %1259 = vmatpush1.msra.mxu0 0.0
    %1260 = vmatprep.subr.mxu0 0.0
    %1261 = vmatpush1.msra.mxu0 0.0
    %1262 = vmatprep.subr.mxu0 0.0
    %1263 = vmatpush1.msra.mxu0 0.0
    %1264 = vmatprep.subr.mxu0 0.0
    %1265 = vmatpush1.msra.mxu0 0.0
    %1266 = vmatprep.subr.mxu0 0.0
    %1267 = vmatpush1.msra.mxu0 0.0
    %1268 = vmatprep.subr.mxu0 0.0
    %1269 = vmatpush1.msra.mxu0 0.0
    %1270 = vmatprep.subr.mxu0 0.0
    %1271 = vmatpush1.msra.mxu0 0.0
    %1272 = vmatprep.subr.mxu0 0.0
    %1273 = vmatpush1.msra.mxu0 0.0
    %1274 = vmatprep.subr.mxu0 0.0
    %1275 = vmatpush1.msra.mxu0 0.0
    %1276 = vmatprep.subr.mxu0 0.0
    %1277 = vmatpush1.msra.mxu0 0.0
    %1278 = vmatprep.subr.mxu0 0.0
    %1279 = vmatpush1.msra.mxu0 0.0
    %1280 = vmatprep.subr.mxu0 0.0
    %1281 = vmatpush1.msra.mxu0 0.0
    %1282 = vmatprep.subr.mxu0 0.0
    %1283 = vmatpush1.msra.mxu0 0.0
    %1284 = vmatprep.subr.mxu0 0.0
    %1285 = vmatpush1.msra.mxu0 0.0
    %1286 = vmatprep.subr.mxu0 0.0
    %1287 = vmatpush1.msra.mxu0 0.0
    %1288 = vmatprep.subr.mxu0 0.0
    %1289 = vmatpush1.msra.mxu0 0.0
    %1290 = vmatprep.subr.mxu0 0.0
    %1291 = vmatpush1.msra.mxu0 0.0
    %1292 = vmatprep.subr.mxu0 0.0
    %1293 = vmatpush1.msra.mxu0 0.0
    %1294 = vmatprep.subr.mxu0 0.0
    %1295 = vmatpush1.msra.mxu0 0.0
    %1296 = vmatprep.mubr.f32.mxu0 0.0
    %1297 = vmatmul.mubr.f32.gmra.mrb[0].mxu0 %v1227
    %v1298 = vpop.f32.mrb[0].mxu0
    %v1299 = vadd.f32 %v1224, %v1298
    %v1300 = vpop.f32.mrb[0].mxu0
    %1301 = vmatprep.mubr.f32.mxu0 0.0
    %1302 = vmatmul.mubr.f32.gmra.mrb[0].mxu0 %v1230
    %v1303 = vpop.f32.mrb[0].mxu0
    %v1304 = vadd.f32 %v1224, %v1303
    %v1305 = vpop.f32.mrb[0].mxu0
    %1306 = vdwg.mxu0
    %v1307 = vmax.f32 %v1299, 0.0
    %v1308 = vmax.f32 %v1304, 0.0
    %v1309 = vld [vmem:[%s27] sm:$0xff]
    %v1310 = vld [vmem:[%s27 + $0x8] sm:$0xff]
    %v1311 = vld [vmem:[%s27 + $0x10] sm:$0xff]
    %v1312 = vld [vmem:[%s27 + $0x18] sm:$0xff]
    %v1313 = vld [vmem:[%s27 + $0x20] sm:$0xff]
    %v1314 = vld [vmem:[%s27 + $0x28] sm:$0xff]
    %v1315 = vld [vmem:[%s27 + $0x30] sm:$0xff]
    %v1316 = vld [vmem:[%s27 + $0x38] sm:$0xff]
    %v1317 = vld [vmem:[%s29] sm:$0x1]
    %v1319 = vlaneseq
    %v1320 = vshrl.u32 %v1319, 7
    %v1321 = vsub.s32 0, %v1320
    %v1322 = vrot.slane %v1317, %v1321
    %vm1324 = vcmask 523264
    %v1326 = vsel %vm1324, %v1307, 0
    %v1329 = vsel %vm1324, %v1308, 0
    %1331 = vmatprep.subr.mxu0 0.0
    %1332 = vmatpush1.msra.mxu0 %v1309
    %1333 = vmatprep.subr.mxu0 0.0
    %1334 = vmatpush1.msra.mxu0 %v1310
    %1335 = vmatprep.subr.mxu0 0.0
    %1336 = vmatpush1.msra.mxu0 %v1311
    %1337 = vmatprep.subr.mxu0 0.0
    %1338 = vmatpush1.msra.mxu0 %v1312
    %1339 = vmatprep.subr.mxu0 0.0
    %1340 = vmatpush1.msra.mxu0 %v1313
    %1341 = vmatprep.subr.mxu0 0.0
    %1342 = vmatpush1.msra.mxu0 %v1314
    %1343 = vmatprep.subr.mxu0 0.0
    %1344 = vmatpush1.msra.mxu0 %v1315
    %1345 = vmatprep.subr.mxu0 0.0
    %1346 = vmatpush1.msra.mxu0 %v1316
    %1347 = vmatprep.subr.mxu0 0.0
    %1348 = vmatpush1.msra.mxu0 0.0
    %1349 = vmatprep.subr.mxu0 0.0
    %1350 = vmatpush1.msra.mxu0 0.0
    %1351 = vmatprep.subr.mxu0 0.0
    %1352 = vmatpush1.msra.mxu0 0.0
    %1353 = vmatprep.subr.mxu0 0.0
    %1354 = vmatpush1.msra.mxu0 0.0
    %1355 = vmatprep.subr.mxu0 0.0
    %1356 = vmatpush1.msra.mxu0 0.0
    %1357 = vmatprep.subr.mxu0 0.0
    %1358 = vmatpush1.msra.mxu0 0.0
    %1359 = vmatprep.subr.mxu0 0.0
    %1360 = vmatpush1.msra.mxu0 0.0
    %1361 = vmatprep.subr.mxu0 0.0
    %1362 = vmatpush1.msra.mxu0 0.0
    %1363 = vmatprep.subr.mxu0 0.0
    %1364 = vmatpush1.msra.mxu0 0.0
    %1365 = vmatprep.subr.mxu0 0.0
    %1366 = vmatpush1.msra.mxu0 0.0
    %1367 = vmatprep.subr.mxu0 0.0
    %1368 = vmatpush1.msra.mxu0 0.0
    %1369 = vmatprep.subr.mxu0 0.0
    %1370 = vmatpush1.msra.mxu0 0.0
    %1371 = vmatprep.subr.mxu0 0.0
    %1372 = vmatpush1.msra.mxu0 0.0
    %1373 = vmatprep.subr.mxu0 0.0
    %1374 = vmatpush1.msra.mxu0 0.0
    %1375 = vmatprep.subr.mxu0 0.0
    %1376 = vmatpush1.msra.mxu0 0.0
    %1377 = vmatprep.subr.mxu0 0.0
    %1378 = vmatpush1.msra.mxu0 0.0
    %1379 = vmatprep.subr.mxu0 0.0
    %1380 = vmatpush1.msra.mxu0 0.0
    %1381 = vmatprep.subr.mxu0 0.0
    %1382 = vmatpush1.msra.mxu0 0.0
    %1383 = vmatprep.subr.mxu0 0.0
    %1384 = vmatpush1.msra.mxu0 0.0
    %1385 = vmatprep.subr.mxu0 0.0
    %1386 = vmatpush1.msra.mxu0 0.0
    %1387 = vmatprep.subr.mxu0 0.0
    %1388 = vmatpush1.msra.mxu0 0.0
    %1389 = vmatprep.subr.mxu0 0.0
    %1390 = vmatpush1.msra.mxu0 0.0
    %1391 = vmatprep.subr.mxu0 0.0
    %1392 = vmatpush1.msra.mxu0 0.0
    %1393 = vmatprep.subr.mxu0 0.0
    %1394 = vmatpush1.msra.mxu0 0.0
    %1395 = vmatprep.mubr.f32.mxu0 0.0
    %1396 = vmatmul.mubr.f32.gmra.mrb[0].mxu0 %v1326
    %v1397 = vpop.f32.mrb[0].mxu0
    %v1398 = vadd.f32 %v1322, %v1397
    %v1399 = vpop.f32.mrb[0].mxu0
    %1400 = vmatprep.mubr.f32.mxu0 0.0
    %1401 = vmatmul.mubr.f32.gmra.mrb[0].mxu0 %v1329
    %v1402 = vpop.f32.mrb[0].mxu0
    %v1403 = vadd.f32 %v1322, %v1402
    %v1404 = vpop.f32.mrb[0].mxu0
    %1405 = vdwg.mxu0
    %v1406 = vadd.f32 %v1213, %v1398
    %v1407 = vadd.f32 %v1214, %v1403
    %v1408 = vsel %vm242, %v1406, 0.0
    %1409 = vadd.xlane.f32.xlu0 %v1408
    %v1410 = vpop.xlane.xlu0 %1409
    %v1411 = vsel %vm242, %v1407, 0.0
    %1412 = vadd.xlane.f32.xlu0 %v1411
    %v1413 = vpop.xlane.xlu0 %1412
    %v1414 = vmul.f32 %v1410, %v1178
    %v1415 = vmul.f32 %v1413, %v1178
    %v1416 = vsub.f32 %v1406, %v1414
    %v1417 = vsub.f32 %v1407, %v1415
    %v1418 = vmul.f32 %v1416, %v1416
    %v1419 = vmul.f32 %v1417, %v1417
    %v1420 = vsel %vm242, %v1418, 0.0
    %1421 = vadd.xlane.f32.xlu0 %v1420
    %v1422 = vpop.xlane.xlu0 %1421
    %v1423 = vsel %vm242, %v1419, 0.0
    %1424 = vadd.xlane.f32.xlu0 %v1423
    %v1425 = vpop.xlane.xlu0 %1424
    %v1426 = vmul.f32 %v1422, %v1178
    %v1427 = vmul.f32 %v1425, %v1178
    %v1428 = vadd.f32 %v1426, 1e-05
    %v1429 = vadd.f32 %v1427, 1e-05
    %v1430 = vrsqrt.pop %v1428
    %v1431 = vrsqrt.pop %v1429
    %v1432 = vmul.f32 %v1416, %v1430
    %v1433 = vmul.f32 %v1417, %v1431
    %v1434 = vmul.f32 %v1432, %v1203
    %v1435 = vmul.f32 %v1433, %v1203
    %v1436 = vadd.f32 %v1434, %v1211
    %v1437 = vadd.f32 %v1435, %v1211
    %s1438 = scalar_lea.vmem %s19, 1
    %v1439 = vld [vmem:[%s1438] sm:$0x1]
    %s1440 = scalar_lea.vmem %s21, 1
    %v1441 = vld [vmem:[%s1440] sm:$0x1]
    %s1442 = scalar_lea.vmem %s11, 32
    %v1443 = vld [vmem:[%s1442] sm:$0xff]
    %v1444 = vld [vmem:[%s1442 + $0x8] sm:$0xff]
    %v1445 = vld [vmem:[%s1442 + $0x10] sm:$0xff]
    %v1446 = vld [vmem:[%s1442 + $0x18] sm:$0xff]
    %s1447 = scalar_lea.vmem %s13, 1
    %v1448 = vld [vmem:[%s1447] sm:$0x1]
    %v1450 = vlaneseq
    %v1451 = vshrl.u32 %v1450, 7
    %v1452 = vsub.s32 0, %v1451
    %v1453 = vrot.slane %v1448, %v1452
    %v1456 = vsel %vm242, %v1436, 0
    %v1459 = vsel %vm242, %v1437, 0
    %1461 = vmatprep.subr.mxu0 0.0
    %1462 = vmatpush1.msra.mxu0 %v1443
    %1463 = vmatprep.subr.mxu0 0.0
    %1464 = vmatpush1.msra.mxu0 %v1444
    %1465 = vmatprep.subr.mxu0 0.0
    %1466 = vmatpush1.msra.mxu0 %v1445
    %1467 = vmatprep.subr.mxu0 0.0
    %1468 = vmatpush1.msra.mxu0 %v1446
    %1469 = vmatprep.subr.mxu0 0.0
    %1470 = vmatpush1.msra.mxu0 0.0
    %1471 = vmatprep.subr.mxu0 0.0
    %1472 = vmatpush1.msra.mxu0 0.0
    %1473 = vmatprep.subr.mxu0 0.0
    %1474 = vmatpush1.msra.mxu0 0.0
    %1475 = vmatprep.subr.mxu0 0.0
    %1476 = vmatpush1.msra.mxu0 0.0
    %1477 = vmatprep.subr.mxu0 0.0
    %1478 = vmatpush1.msra.mxu0 0.0
    %1479 = vmatprep.subr.mxu0 0.0
    %1480 = vmatpush1.msra.mxu0 0.0
    %1481 = vmatprep.subr.mxu0 0.0
    %1482 = vmatpush1.msra.mxu0 0.0
    %1483 = vmatprep.subr.mxu0 0.0
    %1484 = vmatpush1.msra.mxu0 0.0
    %1485 = vmatprep.subr.mxu0 0.0
    %1486 = vmatpush1.msra.mxu0 0.0
    %1487 = vmatprep.subr.mxu0 0.0
    %1488 = vmatpush1.msra.mxu0 0.0
    %1489 = vmatprep.subr.mxu0 0.0
    %1490 = vmatpush1.msra.mxu0 0.0
    %1491 = vmatprep.subr.mxu0 0.0
    %1492 = vmatpush1.msra.mxu0 0.0
    %1493 = vmatprep.subr.mxu0 0.0
    %1494 = vmatpush1.msra.mxu0 0.0
    %1495 = vmatprep.subr.mxu0 0.0
    %1496 = vmatpush1.msra.mxu0 0.0
    %1497 = vmatprep.subr.mxu0 0.0
    %1498 = vmatpush1.msra.mxu0 0.0
    %1499 = vmatprep.subr.mxu0 0.0
    %1500 = vmatpush1.msra.mxu0 0.0
    %1501 = vmatprep.subr.mxu0 0.0
    %1502 = vmatpush1.msra.mxu0 0.0
    %1503 = vmatprep.subr.mxu0 0.0
    %1504 = vmatpush1.msra.mxu0 0.0
    %1505 = vmatprep.subr.mxu0 0.0
    %1506 = vmatpush1.msra.mxu0 0.0
    %1507 = vmatprep.subr.mxu0 0.0
    %1508 = vmatpush1.msra.mxu0 0.0
    %1509 = vmatprep.subr.mxu0 0.0
    %1510 = vmatpush1.msra.mxu0 0.0
    %1511 = vmatprep.subr.mxu0 0.0
    %1512 = vmatpush1.msra.mxu0 0.0
    %1513 = vmatprep.subr.mxu0 0.0
    %1514 = vmatpush1.msra.mxu0 0.0
    %1515 = vmatprep.subr.mxu0 0.0
    %1516 = vmatpush1.msra.mxu0 0.0
    %1517 = vmatprep.subr.mxu0 0.0
    %1518 = vmatpush1.msra.mxu0 0.0
    %1519 = vmatprep.subr.mxu0 0.0
    %1520 = vmatpush1.msra.mxu0 0.0
    %1521 = vmatprep.subr.mxu0 0.0
    %1522 = vmatpush1.msra.mxu0 0.0
    %1523 = vmatprep.subr.mxu0 0.0
    %1524 = vmatpush1.msra.mxu0 0.0
    %1525 = vmatprep.mubr.f32.mxu0 0.0
    %1526 = vmatmul.mubr.f32.gmra.mrb[0].mxu0 %v1456
    %v1527 = vpop.f32.mrb[0].mxu0
    %v1528 = vadd.f32 %v1453, %v1527
    %v1529 = vpop.f32.mrb[0].mxu0
    %1530 = vmatprep.mubr.f32.mxu0 0.0
    %1531 = vmatmul.mubr.f32.gmra.mrb[0].mxu0 %v1459
    %v1532 = vpop.f32.mrb[0].mxu0
    %v1533 = vadd.f32 %v1453, %v1532
    %v1534 = vpop.f32.mrb[0].mxu0
    %1535 = vdwg.mxu0
    %s1536 = scalar_lea.vmem %s15, 32
    %v1537 = vld [vmem:[%s1536] sm:$0xff]
    %v1538 = vld [vmem:[%s1536 + $0x8] sm:$0xff]
    %v1539 = vld [vmem:[%s1536 + $0x10] sm:$0xff]
    %v1540 = vld [vmem:[%s1536 + $0x18] sm:$0xff]
    %s1541 = scalar_lea.vmem %s17, 1
    %v1542 = vld [vmem:[%s1541] sm:$0x1]
    %v1544 = vlaneseq
    %v1545 = vshrl.u32 %v1544, 7
    %v1546 = vsub.s32 0, %v1545
    %v1547 = vrot.slane %v1542, %v1546
    %v1549 = vadd.f32 %v1547, 0.0
    %1551 = vrot.lane.b32.xlu0 %v1528, 96
    %v1552 = vpop.permute.xlu0 %1551
    %v1553 = vsel %vm339, %v1528, 0
    %v1555 = vsel %vm339, %v1552, 0
    %1557 = vmatprep.subr.mxu0 0.0
    %1558 = vmatpush1.xpose.msra.mxu0 %v1555
    %1559 = vmatprep.subr.mxu0 0.0
    %1560 = vmatpush1.xpose.msra.mxu0 0.0
    %1561 = vmatprep.subr.mxu0 0.0
    %1562 = vmatpush1.xpose.msra.mxu0 0.0
    %1563 = vmatprep.subr.mxu0 0.0
    %1564 = vmatpush1.xpose.msra.mxu0 0.0
    %1565 = vmatprep.subr.mxu0 0.0
    %1566 = vmatpush1.xpose.msra.mxu0 0.0
    %1567 = vmatprep.subr.mxu0 0.0
    %1568 = vmatpush1.xpose.msra.mxu0 0.0
    %1569 = vmatprep.subr.mxu0 0.0
    %1570 = vmatpush1.xpose.msra.mxu0 0.0
    %1571 = vmatprep.subr.mxu0 0.0
    %1572 = vmatpush1.xpose.msra.mxu0 0.0
    %1573 = vmatprep.subr.mxu0 0.0
    %1574 = vmatpush1.xpose.msra.mxu0 0.0
    %1575 = vmatprep.subr.mxu0 0.0
    %1576 = vmatpush1.xpose.msra.mxu0 0.0
    %1577 = vmatprep.subr.mxu0 0.0
    %1578 = vmatpush1.xpose.msra.mxu0 0.0
    %1579 = vmatprep.subr.mxu0 0.0
    %1580 = vmatpush1.xpose.msra.mxu0 0.0
    %1581 = vmatprep.subr.mxu0 0.0
    %1582 = vmatpush1.xpose.msra.mxu0 0.0
    %1583 = vmatprep.subr.mxu0 0.0
    %1584 = vmatpush1.xpose.msra.mxu0 0.0
    %1585 = vmatprep.subr.mxu0 0.0
    %1586 = vmatpush1.xpose.msra.mxu0 0.0
    %1587 = vmatprep.subr.mxu0 0.0
    %1588 = vmatpush1.xpose.msra.mxu0 0.0
    %1589 = vmatprep.subr.mxu0 0.0
    %1590 = vmatpush1.xpose.msra.mxu0 0.0
    %1591 = vmatprep.subr.mxu0 0.0
    %1592 = vmatpush1.xpose.msra.mxu0 0.0
    %1593 = vmatprep.subr.mxu0 0.0
    %1594 = vmatpush1.xpose.msra.mxu0 0.0
    %1595 = vmatprep.subr.mxu0 0.0
    %1596 = vmatpush1.xpose.msra.mxu0 0.0
    %1597 = vmatprep.subr.mxu0 0.0
    %1598 = vmatpush1.xpose.msra.mxu0 0.0
    %1599 = vmatprep.subr.mxu0 0.0
    %1600 = vmatpush1.xpose.msra.mxu0 0.0
    %1601 = vmatprep.subr.mxu0 0.0
    %1602 = vmatpush1.xpose.msra.mxu0 0.0
    %1603 = vmatprep.subr.mxu0 0.0
    %1604 = vmatpush1.xpose.msra.mxu0 0.0
    %1605 = vmatprep.subr.mxu0 0.0
    %1606 = vmatpush1.xpose.msra.mxu0 0.0
    %1607 = vmatprep.subr.mxu0 0.0
    %1608 = vmatpush1.xpose.msra.mxu0 0.0
    %1609 = vmatprep.subr.mxu0 0.0
    %1610 = vmatpush1.xpose.msra.mxu0 0.0
    %1611 = vmatprep.subr.mxu0 0.0
    %1612 = vmatpush1.xpose.msra.mxu0 0.0
    %1613 = vmatprep.subr.mxu0 0.0
    %1614 = vmatpush1.xpose.msra.mxu0 0.0
    %1615 = vmatprep.subr.mxu0 0.0
    %1616 = vmatpush1.xpose.msra.mxu0 0.0
    %1617 = vmatprep.subr.mxu0 0.0
    %1618 = vmatpush1.xpose.msra.mxu0 0.0
    %1619 = vmatprep.subr.mxu0 0.0
    %1620 = vmatpush1.xpose.msra.mxu0 0.0
    %1621 = vmatprep.mubr.f32.mxu0 0.0
    %1622 = vmatmul.mubr.f32.gmra.mrb[0].mxu0 %v1553
    %v1623 = vpop.f32.mrb[0].mxu0
    %v1624 = vadd.f32 0.0, %v1623
    %v1625 = vpop.f32.mrb[0].mxu0
    %1626 = vdwg.mxu0
    %1628 = vrot.lane.b32.xlu0 %v1533, 96
    %v1629 = vpop.permute.xlu0 %1628
    %v1630 = vsel %vm339, %v1533, 0
    %v1632 = vsel %vm339, %v1629, 0
    %1634 = vmatprep.subr.mxu0 0.0
    %1635 = vmatpush1.xpose.msra.mxu0 %v1632
    %1636 = vmatprep.subr.mxu0 0.0
    %1637 = vmatpush1.xpose.msra.mxu0 0.0
    %1638 = vmatprep.subr.mxu0 0.0
    %1639 = vmatpush1.xpose.msra.mxu0 0.0
    %1640 = vmatprep.subr.mxu0 0.0
    %1641 = vmatpush1.xpose.msra.mxu0 0.0
    %1642 = vmatprep.subr.mxu0 0.0
    %1643 = vmatpush1.xpose.msra.mxu0 0.0
    %1644 = vmatprep.subr.mxu0 0.0
    %1645 = vmatpush1.xpose.msra.mxu0 0.0
    %1646 = vmatprep.subr.mxu0 0.0
    %1647 = vmatpush1.xpose.msra.mxu0 0.0
    %1648 = vmatprep.subr.mxu0 0.0
    %1649 = vmatpush1.xpose.msra.mxu0 0.0
    %1650 = vmatprep.subr.mxu0 0.0
    %1651 = vmatpush1.xpose.msra.mxu0 0.0
    %1652 = vmatprep.subr.mxu0 0.0
    %1653 = vmatpush1.xpose.msra.mxu0 0.0
    %1654 = vmatprep.subr.mxu0 0.0
    %1655 = vmatpush1.xpose.msra.mxu0 0.0
    %1656 = vmatprep.subr.mxu0 0.0
    %1657 = vmatpush1.xpose.msra.mxu0 0.0
    %1658 = vmatprep.subr.mxu0 0.0
    %1659 = vmatpush1.xpose.msra.mxu0 0.0
    %1660 = vmatprep.subr.mxu0 0.0
    %1661 = vmatpush1.xpose.msra.mxu0 0.0
    %1662 = vmatprep.subr.mxu0 0.0
    %1663 = vmatpush1.xpose.msra.mxu0 0.0
    %1664 = vmatprep.subr.mxu0 0.0
    %1665 = vmatpush1.xpose.msra.mxu0 0.0
    %1666 = vmatprep.subr.mxu0 0.0
    %1667 = vmatpush1.xpose.msra.mxu0 0.0
    %1668 = vmatprep.subr.mxu0 0.0
    %1669 = vmatpush1.xpose.msra.mxu0 0.0
    %1670 = vmatprep.subr.mxu0 0.0
    %1671 = vmatpush1.xpose.msra.mxu0 0.0
    %1672 = vmatprep.subr.mxu0 0.0
    %1673 = vmatpush1.xpose.msra.mxu0 0.0
    %1674 = vmatprep.subr.mxu0 0.0
    %1675 = vmatpush1.xpose.msra.mxu0 0.0
    %1676 = vmatprep.subr.mxu0 0.0
    %1677 = vmatpush1.xpose.msra.mxu0 0.0
    %1678 = vmatprep.subr.mxu0 0.0
    %1679 = vmatpush1.xpose.msra.mxu0 0.0
    %1680 = vmatprep.subr.mxu0 0.0
    %1681 = vmatpush1.xpose.msra.mxu0 0.0
    %1682 = vmatprep.subr.mxu0 0.0
    %1683 = vmatpush1.xpose.msra.mxu0 0.0
    %1684 = vmatprep.subr.mxu0 0.0
    %1685 = vmatpush1.xpose.msra.mxu0 0.0
    %1686 = vmatprep.subr.mxu0 0.0
    %1687 = vmatpush1.xpose.msra.mxu0 0.0
    %1688 = vmatprep.subr.mxu0 0.0
    %1689 = vmatpush1.xpose.msra.mxu0 0.0
    %1690 = vmatprep.subr.mxu0 0.0
    %1691 = vmatpush1.xpose.msra.mxu0 0.0
    %1692 = vmatprep.subr.mxu0 0.0
    %1693 = vmatpush1.xpose.msra.mxu0 0.0
    %1694 = vmatprep.subr.mxu0 0.0
    %1695 = vmatpush1.xpose.msra.mxu0 0.0
    %1696 = vmatprep.subr.mxu0 0.0
    %1697 = vmatpush1.xpose.msra.mxu0 0.0
    %1698 = vmatprep.mubr.f32.mxu0 0.0
    %1699 = vmatmul.mubr.f32.gmra.mrb[0].mxu0 %v1630
    %v1700 = vpop.f32.mrb[0].mxu0
    %v1701 = vadd.f32 0.0, %v1700
    %v1702 = vpop.f32.mrb[0].mxu0
    %1703 = vdwg.mxu0
    %v1704 = vmul.f32 %v1624, 0.25
    %v1705 = vmul.f32 %v1701, 0.25
    %v1706 = vadd.f32 %v1704, %v221
    %v1707 = vadd.f32 %v1705, %v222
    %v1708 = vsel %vm495, %v1706, -inf
    %1709 = vmax.xlane.f32.xlu0 %v1708
    %v1710 = vpop.xlane.xlu0 %1709
    %v1711 = vsel %vm495, %v1707, -inf
    %1712 = vmax.xlane.f32.xlu0 %v1711
    %v1713 = vpop.xlane.xlu0 %1712
    %v1714 = vsub.f32 %v1706, %v1710
    %v1715 = vsub.f32 %v1707, %v1713
    %v1716 = vmul.f32 %v1714, 1.442695
    %v1717 = vpow.pop %v1716
    %v1718 = vmul.f32 %v1715, 1.442695
    %v1719 = vpow.pop %v1718
    %v1720 = vsel %vm495, %v1717, 0.0
    %1721 = vadd.xlane.f32.xlu0 %v1720
    %v1722 = vpop.xlane.xlu0 %1721
    %v1723 = vsel %vm495, %v1719, 0.0
    %1724 = vadd.xlane.f32.xlu0 %v1723
    %v1725 = vpop.xlane.xlu0 %1724
    %v1726 = vrcp.pop %v1722
    %v1727 = vrcp.pop %v1725
    %v1728 = vmul.f32 %v1717, %v1726
    %v1729 = vmul.f32 %v1719, %v1727
    %1730 = vrot.lane.b32.xlu0 %v1528, 64
    %v1731 = vpop.permute.xlu0 %1730
    %v1734 = vsel %vm495, %v1728, 0
    %1736 = vmatprep.subr.mxu0 0.0
    %1737 = vmatpush1.msra.mxu0 %v1731
    %1738 = vmatprep.subr.mxu0 0.0
    %1739 = vmatpush1.msra.mxu0 0.0
    %1740 = vmatprep.subr.mxu0 0.0
    %1741 = vmatpush1.msra.mxu0 0.0
    %1742 = vmatprep.subr.mxu0 0.0
    %1743 = vmatpush1.msra.mxu0 0.0
    %1744 = vmatprep.subr.mxu0 0.0
    %1745 = vmatpush1.msra.mxu0 0.0
    %1746 = vmatprep.subr.mxu0 0.0
    %1747 = vmatpush1.msra.mxu0 0.0
    %1748 = vmatprep.subr.mxu0 0.0
    %1749 = vmatpush1.msra.mxu0 0.0
    %1750 = vmatprep.subr.mxu0 0.0
    %1751 = vmatpush1.msra.mxu0 0.0
    %1752 = vmatprep.subr.mxu0 0.0
    %1753 = vmatpush1.msra.mxu0 0.0
    %1754 = vmatprep.subr.mxu0 0.0
    %1755 = vmatpush1.msra.mxu0 0.0
    %1756 = vmatprep.subr.mxu0 0.0
    %1757 = vmatpush1.msra.mxu0 0.0
    %1758 = vmatprep.subr.mxu0 0.0
    %1759 = vmatpush1.msra.mxu0 0.0
    %1760 = vmatprep.subr.mxu0 0.0
    %1761 = vmatpush1.msra.mxu0 0.0
    %1762 = vmatprep.subr.mxu0 0.0
    %1763 = vmatpush1.msra.mxu0 0.0
    %1764 = vmatprep.subr.mxu0 0.0
    %1765 = vmatpush1.msra.mxu0 0.0
    %1766 = vmatprep.subr.mxu0 0.0
    %1767 = vmatpush1.msra.mxu0 0.0
    %1768 = vmatprep.subr.mxu0 0.0
    %1769 = vmatpush1.msra.mxu0 0.0
    %1770 = vmatprep.subr.mxu0 0.0
    %1771 = vmatpush1.msra.mxu0 0.0
    %1772 = vmatprep.subr.mxu0 0.0
    %1773 = vmatpush1.msra.mxu0 0.0
    %1774 = vmatprep.subr.mxu0 0.0
    %1775 = vmatpush1.msra.mxu0 0.0
    %1776 = vmatprep.subr.mxu0 0.0
    %1777 = vmatpush1.msra.mxu0 0.0
    %1778 = vmatprep.subr.mxu0 0.0
    %1779 = vmatpush1.msra.mxu0 0.0
    %1780 = vmatprep.subr.mxu0 0.0
    %1781 = vmatpush1.msra.mxu0 0.0
    %1782 = vmatprep.subr.mxu0 0.0
    %1783 = vmatpush1.msra.mxu0 0.0
    %1784 = vmatprep.subr.mxu0 0.0
    %1785 = vmatpush1.msra.mxu0 0.0
    %1786 = vmatprep.subr.mxu0 0.0
    %1787 = vmatpush1.msra.mxu0 0.0
    %1788 = vmatprep.subr.mxu0 0.0
    %1789 = vmatpush1.msra.mxu0 0.0
    %1790 = vmatprep.subr.mxu0 0.0
    %1791 = vmatpush1.msra.mxu0 0.0
    %1792 = vmatprep.subr.mxu0 0.0
    %1793 = vmatpush1.msra.mxu0 0.0
    %1794 = vmatprep.subr.mxu0 0.0
    %1795 = vmatpush1.msra.mxu0 0.0
    %1796 = vmatprep.subr.mxu0 0.0
    %1797 = vmatpush1.msra.mxu0 0.0
    %1798 = vmatprep.subr.mxu0 0.0
    %1799 = vmatpush1.msra.mxu0 0.0
    %1800 = vmatprep.mubr.f32.mxu0 0.0
    %1801 = vmatmul.mubr.f32.gmra.mrb[0].mxu0 %v1734
    %v1802 = vpop.f32.mrb[0].mxu0
    %v1803 = vadd.f32 0.0, %v1802
    %v1804 = vpop.f32.mrb[0].mxu0
    %1805 = vdwg.mxu0
    %1806 = vrot.lane.b32.xlu0 %v1533, 64
    %v1807 = vpop.permute.xlu0 %1806
    %v1810 = vsel %vm495, %v1729, 0
    %1812 = vmatprep.subr.mxu0 0.0
    %1813 = vmatpush1.msra.mxu0 %v1807
    %1814 = vmatprep.subr.mxu0 0.0
    %1815 = vmatpush1.msra.mxu0 0.0
    %1816 = vmatprep.subr.mxu0 0.0
    %1817 = vmatpush1.msra.mxu0 0.0
    %1818 = vmatprep.subr.mxu0 0.0
    %1819 = vmatpush1.msra.mxu0 0.0
    %1820 = vmatprep.subr.mxu0 0.0
    %1821 = vmatpush1.msra.mxu0 0.0
    %1822 = vmatprep.subr.mxu0 0.0
    %1823 = vmatpush1.msra.mxu0 0.0
    %1824 = vmatprep.subr.mxu0 0.0
    %1825 = vmatpush1.msra.mxu0 0.0
    %1826 = vmatprep.subr.mxu0 0.0
    %1827 = vmatpush1.msra.mxu0 0.0
    %1828 = vmatprep.subr.mxu0 0.0
    %1829 = vmatpush1.msra.mxu0 0.0
    %1830 = vmatprep.subr.mxu0 0.0
    %1831 = vmatpush1.msra.mxu0 0.0
    %1832 = vmatprep.subr.mxu0 0.0
    %1833 = vmatpush1.msra.mxu0 0.0
    %1834 = vmatprep.subr.mxu0 0.0
    %1835 = vmatpush1.msra.mxu0 0.0
    %1836 = vmatprep.subr.mxu0 0.0
    %1837 = vmatpush1.msra.mxu0 0.0
    %1838 = vmatprep.subr.mxu0 0.0
    %1839 = vmatpush1.msra.mxu0 0.0
    %1840 = vmatprep.subr.mxu0 0.0
    %1841 = vmatpush1.msra.mxu0 0.0
    %1842 = vmatprep.subr.mxu0 0.0
    %1843 = vmatpush1.msra.mxu0 0.0
    %1844 = vmatprep.subr.mxu0 0.0
    %1845 = vmatpush1.msra.mxu0 0.0
    %1846 = vmatprep.subr.mxu0 0.0
    %1847 = vmatpush1.msra.mxu0 0.0
    %1848 = vmatprep.subr.mxu0 0.0
    %1849 = vmatpush1.msra.mxu0 0.0
    %1850 = vmatprep.subr.mxu0 0.0
    %1851 = vmatpush1.msra.mxu0 0.0
    %1852 = vmatprep.subr.mxu0 0.0
    %1853 = vmatpush1.msra.mxu0 0.0
    %1854 = vmatprep.subr.mxu0 0.0
    %1855 = vmatpush1.msra.mxu0 0.0
    %1856 = vmatprep.subr.mxu0 0.0
    %1857 = vmatpush1.msra.mxu0 0.0
    %1858 = vmatprep.subr.mxu0 0.0
    %1859 = vmatpush1.msra.mxu0 0.0
    %1860 = vmatprep.subr.mxu0 0.0
    %1861 = vmatpush1.msra.mxu0 0.0
    %1862 = vmatprep.subr.mxu0 0.0
    %1863 = vmatpush1.msra.mxu0 0.0
    %1864 = vmatprep.subr.mxu0 0.0
    %1865 = vmatpush1.msra.mxu0 0.0
    %1866 = vmatprep.subr.mxu0 0.0
    %1867 = vmatpush1.msra.mxu0 0.0
    %1868 = vmatprep.subr.mxu0 0.0
    %1869 = vmatpush1.msra.mxu0 0.0
    %1870 = vmatprep.subr.mxu0 0.0
    %1871 = vmatpush1.msra.mxu0 0.0
    %1872 = vmatprep.subr.mxu0 0.0
    %1873 = vmatpush1.msra.mxu0 0.0
    %1874 = vmatprep.subr.mxu0 0.0
    %1875 = vmatpush1.msra.mxu0 0.0
    %1876 = vmatprep.mubr.f32.mxu0 0.0
    %1877 = vmatmul.mubr.f32.gmra.mrb[0].mxu0 %v1810
    %v1878 = vpop.f32.mrb[0].mxu0
    %v1879 = vadd.f32 0.0, %v1878
    %v1880 = vpop.f32.mrb[0].mxu0
    %1881 = vdwg.mxu0
    %v1883 = vsel %vm339, %v1803, 0
    %v1886 = vsel %vm339, %v1879, 0
    %1888 = vmatprep.subr.mxu0 0.0
    %1889 = vmatpush1.msra.mxu0 %v1537
    %1890 = vmatprep.subr.mxu0 0.0
    %1891 = vmatpush1.msra.mxu0 %v1538
    %1892 = vmatprep.subr.mxu0 0.0
    %1893 = vmatpush1.msra.mxu0 0.0
    %1894 = vmatprep.subr.mxu0 0.0
    %1895 = vmatpush1.msra.mxu0 0.0
    %1896 = vmatprep.subr.mxu0 0.0
    %1897 = vmatpush1.msra.mxu0 0.0
    %1898 = vmatprep.subr.mxu0 0.0
    %1899 = vmatpush1.msra.mxu0 0.0
    %1900 = vmatprep.subr.mxu0 0.0
    %1901 = vmatpush1.msra.mxu0 0.0
    %1902 = vmatprep.subr.mxu0 0.0
    %1903 = vmatpush1.msra.mxu0 0.0
    %1904 = vmatprep.subr.mxu0 0.0
    %1905 = vmatpush1.msra.mxu0 0.0
    %1906 = vmatprep.subr.mxu0 0.0
    %1907 = vmatpush1.msra.mxu0 0.0
    %1908 = vmatprep.subr.mxu0 0.0
    %1909 = vmatpush1.msra.mxu0 0.0
    %1910 = vmatprep.subr.mxu0 0.0
    %1911 = vmatpush1.msra.mxu0 0.0
    %1912 = vmatprep.subr.mxu0 0.0
    %1913 = vmatpush1.msra.mxu0 0.0
    %1914 = vmatprep.subr.mxu0 0.0
    %1915 = vmatpush1.msra.mxu0 0.0
    %1916 = vmatprep.subr.mxu0 0.0
    %1917 = vmatpush1.msra.mxu0 0.0
    %1918 = vmatprep.subr.mxu0 0.0
    %1919 = vmatpush1.msra.mxu0 0.0
    %1920 = vmatprep.subr.mxu0 0.0
    %1921 = vmatpush1.msra.mxu0 0.0
    %1922 = vmatprep.subr.mxu0 0.0
    %1923 = vmatpush1.msra.mxu0 0.0
    %1924 = vmatprep.subr.mxu0 0.0
    %1925 = vmatpush1.msra.mxu0 0.0
    %1926 = vmatprep.subr.mxu0 0.0
    %1927 = vmatpush1.msra.mxu0 0.0
    %1928 = vmatprep.subr.mxu0 0.0
    %1929 = vmatpush1.msra.mxu0 0.0
    %1930 = vmatprep.subr.mxu0 0.0
    %1931 = vmatpush1.msra.mxu0 0.0
    %1932 = vmatprep.subr.mxu0 0.0
    %1933 = vmatpush1.msra.mxu0 0.0
    %1934 = vmatprep.subr.mxu0 0.0
    %1935 = vmatpush1.msra.mxu0 0.0
    %1936 = vmatprep.subr.mxu0 0.0
    %1937 = vmatpush1.msra.mxu0 0.0
    %1938 = vmatprep.subr.mxu0 0.0
    %1939 = vmatpush1.msra.mxu0 0.0
    %1940 = vmatprep.subr.mxu0 0.0
    %1941 = vmatpush1.msra.mxu0 0.0
    %1942 = vmatprep.subr.mxu0 0.0
    %1943 = vmatpush1.msra.mxu0 0.0
    %1944 = vmatprep.subr.mxu0 0.0
    %1945 = vmatpush1.msra.mxu0 0.0
    %1946 = vmatprep.subr.mxu0 0.0
    %1947 = vmatpush1.msra.mxu0 0.0
    %1948 = vmatprep.subr.mxu0 0.0
    %1949 = vmatpush1.msra.mxu0 0.0
    %1950 = vmatprep.subr.mxu0 0.0
    %1951 = vmatpush1.msra.mxu0 0.0
    %1952 = vmatprep.mubr.f32.mxu0 0.0
    %1953 = vmatmul.mubr.f32.gmra.mrb[0].mxu0 %v1883
    %v1954 = vpop.f32.mrb[0].mxu0
    %v1955 = vadd.f32 0.0, %v1954
    %v1956 = vpop.f32.mrb[0].mxu0
    %1957 = vmatprep.mubr.f32.mxu0 0.0
    %1958 = vmatmul.mubr.f32.gmra.mrb[0].mxu0 %v1886
    %v1959 = vpop.f32.mrb[0].mxu0
    %v1960 = vadd.f32 0.0, %v1959
    %v1961 = vpop.f32.mrb[0].mxu0
    %1962 = vdwg.mxu0
    %v1963 = vadd.f32 %v1549, %v1955
    %v1964 = vadd.f32 %v1549, %v1960
    %1965 = vrot.lane.b32.xlu0 %v1528, 112
    %v1966 = vpop.permute.xlu0 %1965
    %1967 = vrot.lane.b32.xlu0 %v1528, 80
    %v1968 = vpop.permute.xlu0 %1967
    %v1969 = vsel %vm339, %v1966, 0
    %v1971 = vsel %vm339, %v1968, 0
    %1973 = vmatprep.subr.mxu0 0.0
    %1974 = vmatpush1.xpose.msra.mxu0 %v1971
    %1975 = vmatprep.subr.mxu0 0.0
    %1976 = vmatpush1.xpose.msra.mxu0 0.0
    %1977 = vmatprep.subr.mxu0 0.0
    %1978 = vmatpush1.xpose.msra.mxu0 0.0
    %1979 = vmatprep.subr.mxu0 0.0
    %1980 = vmatpush1.xpose.msra.mxu0 0.0
    %1981 = vmatprep.subr.mxu0 0.0
    %1982 = vmatpush1.xpose.msra.mxu0 0.0
    %1983 = vmatprep.subr.mxu0 0.0
    %1984 = vmatpush1.xpose.msra.mxu0 0.0
    %1985 = vmatprep.subr.mxu0 0.0
    %1986 = vmatpush1.xpose.msra.mxu0 0.0
    %1987 = vmatprep.subr.mxu0 0.0
    %1988 = vmatpush1.xpose.msra.mxu0 0.0
    %1989 = vmatprep.subr.mxu0 0.0
    %1990 = vmatpush1.xpose.msra.mxu0 0.0
    %1991 = vmatprep.subr.mxu0 0.0
    %1992 = vmatpush1.xpose.msra.mxu0 0.0
    %1993 = vmatprep.subr.mxu0 0.0
    %1994 = vmatpush1.xpose.msra.mxu0 0.0
    %1995 = vmatprep.subr.mxu0 0.0
    %1996 = vmatpush1.xpose.msra.mxu0 0.0
    %1997 = vmatprep.subr.mxu0 0.0
    %1998 = vmatpush1.xpose.msra.mxu0 0.0
    %1999 = vmatprep.subr.mxu0 0.0
    %2000 = vmatpush1.xpose.msra.mxu0 0.0
    %2001 = vmatprep.subr.mxu0 0.0
    %2002 = vmatpush1.xpose.msra.mxu0 0.0
    %2003 = vmatprep.subr.mxu0 0.0
    %2004 = vmatpush1.xpose.msra.mxu0 0.0
    %2005 = vmatprep.subr.mxu0 0.0
    %2006 = vmatpush1.xpose.msra.mxu0 0.0
    %2007 = vmatprep.subr.mxu0 0.0
    %2008 = vmatpush1.xpose.msra.mxu0 0.0
    %2009 = vmatprep.subr.mxu0 0.0
    %2010 = vmatpush1.xpose.msra.mxu0 0.0
    %2011 = vmatprep.subr.mxu0 0.0
    %2012 = vmatpush1.xpose.msra.mxu0 0.0
    %2013 = vmatprep.subr.mxu0 0.0
    %2014 = vmatpush1.xpose.msra.mxu0 0.0
    %2015 = vmatprep.subr.mxu0 0.0
    %2016 = vmatpush1.xpose.msra.mxu0 0.0
    %2017 = vmatprep.subr.mxu0 0.0
    %2018 = vmatpush1.xpose.msra.mxu0 0.0
    %2019 = vmatprep.subr.mxu0 0.0
    %2020 = vmatpush1.xpose.msra.mxu0 0.0
    %2021 = vmatprep.subr.mxu0 0.0
    %2022 = vmatpush1.xpose.msra.mxu0 0.0
    %2023 = vmatprep.subr.mxu0 0.0
    %2024 = vmatpush1.xpose.msra.mxu0 0.0
    %2025 = vmatprep.subr.mxu0 0.0
    %2026 = vmatpush1.xpose.msra.mxu0 0.0
    %2027 = vmatprep.subr.mxu0 0.0
    %2028 = vmatpush1.xpose.msra.mxu0 0.0
    %2029 = vmatprep.subr.mxu0 0.0
    %2030 = vmatpush1.xpose.msra.mxu0 0.0
    %2031 = vmatprep.subr.mxu0 0.0
    %2032 = vmatpush1.xpose.msra.mxu0 0.0
    %2033 = vmatprep.subr.mxu0 0.0
    %2034 = vmatpush1.xpose.msra.mxu0 0.0
    %2035 = vmatprep.subr.mxu0 0.0
    %2036 = vmatpush1.xpose.msra.mxu0 0.0
    %2037 = vmatprep.mubr.f32.mxu0 0.0
    %2038 = vmatmul.mubr.f32.gmra.mrb[0].mxu0 %v1969
    %v2039 = vpop.f32.mrb[0].mxu0
    %v2040 = vadd.f32 0.0, %v2039
    %v2041 = vpop.f32.mrb[0].mxu0
    %2042 = vdwg.mxu0
    %2043 = vrot.lane.b32.xlu0 %v1533, 112
    %v2044 = vpop.permute.xlu0 %2043
    %2045 = vrot.lane.b32.xlu0 %v1533, 80
    %v2046 = vpop.permute.xlu0 %2045
    %v2047 = vsel %vm339, %v2044, 0
    %v2049 = vsel %vm339, %v2046, 0
    %2051 = vmatprep.subr.mxu0 0.0
    %2052 = vmatpush1.xpose.msra.mxu0 %v2049
    %2053 = vmatprep.subr.mxu0 0.0
    %2054 = vmatpush1.xpose.msra.mxu0 0.0
    %2055 = vmatprep.subr.mxu0 0.0
    %2056 = vmatpush1.xpose.msra.mxu0 0.0
    %2057 = vmatprep.subr.mxu0 0.0
    %2058 = vmatpush1.xpose.msra.mxu0 0.0
    %2059 = vmatprep.subr.mxu0 0.0
    %2060 = vmatpush1.xpose.msra.mxu0 0.0
    %2061 = vmatprep.subr.mxu0 0.0
    %2062 = vmatpush1.xpose.msra.mxu0 0.0
    %2063 = vmatprep.subr.mxu0 0.0
    %2064 = vmatpush1.xpose.msra.mxu0 0.0
    %2065 = vmatprep.subr.mxu0 0.0
    %2066 = vmatpush1.xpose.msra.mxu0 0.0
    %2067 = vmatprep.subr.mxu0 0.0
    %2068 = vmatpush1.xpose.msra.mxu0 0.0
    %2069 = vmatprep.subr.mxu0 0.0
    %2070 = vmatpush1.xpose.msra.mxu0 0.0
    %2071 = vmatprep.subr.mxu0 0.0
    %2072 = vmatpush1.xpose.msra.mxu0 0.0
    %2073 = vmatprep.subr.mxu0 0.0
    %2074 = vmatpush1.xpose.msra.mxu0 0.0
    %2075 = vmatprep.subr.mxu0 0.0
    %2076 = vmatpush1.xpose.msra.mxu0 0.0
    %2077 = vmatprep.subr.mxu0 0.0
    %2078 = vmatpush1.xpose.msra.mxu0 0.0
    %2079 = vmatprep.subr.mxu0 0.0
    %2080 = vmatpush1.xpose.msra.mxu0 0.0
    %2081 = vmatprep.subr.mxu0 0.0
    %2082 = vmatpush1.xpose.msra.mxu0 0.0
    %2083 = vmatprep.subr.mxu0 0.0
    %2084 = vmatpush1.xpose.msra.mxu0 0.0
    %2085 = vmatprep.subr.mxu0 0.0
    %2086 = vmatpush1.xpose.msra.mxu0 0.0
    %2087 = vmatprep.subr.mxu0 0.0
    %2088 = vmatpush1.xpose.msra.mxu0 0.0
    %2089 = vmatprep.subr.mxu0 0.0
    %2090 = vmatpush1.xpose.msra.mxu0 0.0
    %2091 = vmatprep.subr.mxu0 0.0
    %2092 = vmatpush1.xpose.msra.mxu0 0.0
    %2093 = vmatprep.subr.mxu0 0.0
    %2094 = vmatpush1.xpose.msra.mxu0 0.0
    %2095 = vmatprep.subr.mxu0 0.0
    %2096 = vmatpush1.xpose.msra.mxu0 0.0
    %2097 = vmatprep.subr.mxu0 0.0
    %2098 = vmatpush1.xpose.msra.mxu0 0.0
    %2099 = vmatprep.subr.mxu0 0.0
    %2100 = vmatpush1.xpose.msra.mxu0 0.0
    %2101 = vmatprep.subr.mxu0 0.0
    %2102 = vmatpush1.xpose.msra.mxu0 0.0
    %2103 = vmatprep.subr.mxu0 0.0
    %2104 = vmatpush1.xpose.msra.mxu0 0.0
    %2105 = vmatprep.subr.mxu0 0.0
    %2106 = vmatpush1.xpose.msra.mxu0 0.0
    %2107 = vmatprep.subr.mxu0 0.0
    %2108 = vmatpush1.xpose.msra.mxu0 0.0
    %2109 = vmatprep.subr.mxu0 0.0
    %2110 = vmatpush1.xpose.msra.mxu0 0.0
    %2111 = vmatprep.subr.mxu0 0.0
    %2112 = vmatpush1.xpose.msra.mxu0 0.0
    %2113 = vmatprep.subr.mxu0 0.0
    %2114 = vmatpush1.xpose.msra.mxu0 0.0
    %2115 = vmatprep.mubr.f32.mxu0 0.0
    %2116 = vmatmul.mubr.f32.gmra.mrb[0].mxu0 %v2047
    %v2117 = vpop.f32.mrb[0].mxu0
    %v2118 = vadd.f32 0.0, %v2117
    %v2119 = vpop.f32.mrb[0].mxu0
    %2120 = vdwg.mxu0
    %v2121 = vmul.f32 %v2040, 0.25
    %v2122 = vmul.f32 %v2118, 0.25
    %v2123 = vadd.f32 %v2121, %v221
    %v2124 = vadd.f32 %v2122, %v222
    %v2125 = vsel %vm495, %v2123, -inf
    %2126 = vmax.xlane.f32.xlu0 %v2125
    %v2127 = vpop.xlane.xlu0 %2126
    %v2128 = vsel %vm495, %v2124, -inf
    %2129 = vmax.xlane.f32.xlu0 %v2128
    %v2130 = vpop.xlane.xlu0 %2129
    %v2131 = vsub.f32 %v2123, %v2127
    %v2132 = vsub.f32 %v2124, %v2130
    %v2133 = vmul.f32 %v2131, 1.442695
    %v2134 = vpow.pop %v2133
    %v2135 = vmul.f32 %v2132, 1.442695
    %v2136 = vpow.pop %v2135
    %v2137 = vsel %vm495, %v2134, 0.0
    %2138 = vadd.xlane.f32.xlu0 %v2137
    %v2139 = vpop.xlane.xlu0 %2138
    %v2140 = vsel %vm495, %v2136, 0.0
    %2141 = vadd.xlane.f32.xlu0 %v2140
    %v2142 = vpop.xlane.xlu0 %2141
    %v2143 = vrcp.pop %v2139
    %v2144 = vrcp.pop %v2142
    %v2145 = vmul.f32 %v2134, %v2143
    %v2146 = vmul.f32 %v2136, %v2144
    %2147 = vrot.lane.b32.xlu0 %v1528, 48
    %v2148 = vpop.permute.xlu0 %2147
    %v2151 = vsel %vm495, %v2145, 0
    %2153 = vmatprep.subr.mxu0 0.0
    %2154 = vmatpush1.msra.mxu0 %v2148
    %2155 = vmatprep.subr.mxu0 0.0
    %2156 = vmatpush1.msra.mxu0 0.0
    %2157 = vmatprep.subr.mxu0 0.0
    %2158 = vmatpush1.msra.mxu0 0.0
    %2159 = vmatprep.subr.mxu0 0.0
    %2160 = vmatpush1.msra.mxu0 0.0
    %2161 = vmatprep.subr.mxu0 0.0
    %2162 = vmatpush1.msra.mxu0 0.0
    %2163 = vmatprep.subr.mxu0 0.0
    %2164 = vmatpush1.msra.mxu0 0.0
    %2165 = vmatprep.subr.mxu0 0.0
    %2166 = vmatpush1.msra.mxu0 0.0
    %2167 = vmatprep.subr.mxu0 0.0
    %2168 = vmatpush1.msra.mxu0 0.0
    %2169 = vmatprep.subr.mxu0 0.0
    %2170 = vmatpush1.msra.mxu0 0.0
    %2171 = vmatprep.subr.mxu0 0.0
    %2172 = vmatpush1.msra.mxu0 0.0
    %2173 = vmatprep.subr.mxu0 0.0
    %2174 = vmatpush1.msra.mxu0 0.0
    %2175 = vmatprep.subr.mxu0 0.0
    %2176 = vmatpush1.msra.mxu0 0.0
    %2177 = vmatprep.subr.mxu0 0.0
    %2178 = vmatpush1.msra.mxu0 0.0
    %2179 = vmatprep.subr.mxu0 0.0
    %2180 = vmatpush1.msra.mxu0 0.0
    %2181 = vmatprep.subr.mxu0 0.0
    %2182 = vmatpush1.msra.mxu0 0.0
    %2183 = vmatprep.subr.mxu0 0.0
    %2184 = vmatpush1.msra.mxu0 0.0
    %2185 = vmatprep.subr.mxu0 0.0
    %2186 = vmatpush1.msra.mxu0 0.0
    %2187 = vmatprep.subr.mxu0 0.0
    %2188 = vmatpush1.msra.mxu0 0.0
    %2189 = vmatprep.subr.mxu0 0.0
    %2190 = vmatpush1.msra.mxu0 0.0
    %2191 = vmatprep.subr.mxu0 0.0
    %2192 = vmatpush1.msra.mxu0 0.0
    %2193 = vmatprep.subr.mxu0 0.0
    %2194 = vmatpush1.msra.mxu0 0.0
    %2195 = vmatprep.subr.mxu0 0.0
    %2196 = vmatpush1.msra.mxu0 0.0
    %2197 = vmatprep.subr.mxu0 0.0
    %2198 = vmatpush1.msra.mxu0 0.0
    %2199 = vmatprep.subr.mxu0 0.0
    %2200 = vmatpush1.msra.mxu0 0.0
    %2201 = vmatprep.subr.mxu0 0.0
    %2202 = vmatpush1.msra.mxu0 0.0
    %2203 = vmatprep.subr.mxu0 0.0
    %2204 = vmatpush1.msra.mxu0 0.0
    %2205 = vmatprep.subr.mxu0 0.0
    %2206 = vmatpush1.msra.mxu0 0.0
    %2207 = vmatprep.subr.mxu0 0.0
    %2208 = vmatpush1.msra.mxu0 0.0
    %2209 = vmatprep.subr.mxu0 0.0
    %2210 = vmatpush1.msra.mxu0 0.0
    %2211 = vmatprep.subr.mxu0 0.0
    %2212 = vmatpush1.msra.mxu0 0.0
    %2213 = vmatprep.subr.mxu0 0.0
    %2214 = vmatpush1.msra.mxu0 0.0
    %2215 = vmatprep.subr.mxu0 0.0
    %2216 = vmatpush1.msra.mxu0 0.0
    %2217 = vmatprep.mubr.f32.mxu0 0.0
    %2218 = vmatmul.mubr.f32.gmra.mrb[0].mxu0 %v2151
    %v2219 = vpop.f32.mrb[0].mxu0
    %v2220 = vadd.f32 0.0, %v2219
    %v2221 = vpop.f32.mrb[0].mxu0
    %2222 = vdwg.mxu0
    %2223 = vrot.lane.b32.xlu0 %v1533, 48
    %v2224 = vpop.permute.xlu0 %2223
    %v2227 = vsel %vm495, %v2146, 0
    %2229 = vmatprep.subr.mxu0 0.0
    %2230 = vmatpush1.msra.mxu0 %v2224
    %2231 = vmatprep.subr.mxu0 0.0
    %2232 = vmatpush1.msra.mxu0 0.0
    %2233 = vmatprep.subr.mxu0 0.0
    %2234 = vmatpush1.msra.mxu0 0.0
    %2235 = vmatprep.subr.mxu0 0.0
    %2236 = vmatpush1.msra.mxu0 0.0
    %2237 = vmatprep.subr.mxu0 0.0
    %2238 = vmatpush1.msra.mxu0 0.0
    %2239 = vmatprep.subr.mxu0 0.0
    %2240 = vmatpush1.msra.mxu0 0.0
    %2241 = vmatprep.subr.mxu0 0.0
    %2242 = vmatpush1.msra.mxu0 0.0
    %2243 = vmatprep.subr.mxu0 0.0
    %2244 = vmatpush1.msra.mxu0 0.0
    %2245 = vmatprep.subr.mxu0 0.0
    %2246 = vmatpush1.msra.mxu0 0.0
    %2247 = vmatprep.subr.mxu0 0.0
    %2248 = vmatpush1.msra.mxu0 0.0
    %2249 = vmatprep.subr.mxu0 0.0
    %2250 = vmatpush1.msra.mxu0 0.0
    %2251 = vmatprep.subr.mxu0 0.0
    %2252 = vmatpush1.msra.mxu0 0.0
    %2253 = vmatprep.subr.mxu0 0.0
    %2254 = vmatpush1.msra.mxu0 0.0
    %2255 = vmatprep.subr.mxu0 0.0
    %2256 = vmatpush1.msra.mxu0 0.0
    %2257 = vmatprep.subr.mxu0 0.0
    %2258 = vmatpush1.msra.mxu0 0.0
    %2259 = vmatprep.subr.mxu0 0.0
    %2260 = vmatpush1.msra.mxu0 0.0
    %2261 = vmatprep.subr.mxu0 0.0
    %2262 = vmatpush1.msra.mxu0 0.0
    %2263 = vmatprep.subr.mxu0 0.0
    %2264 = vmatpush1.msra.mxu0 0.0
    %2265 = vmatprep.subr.mxu0 0.0
    %2266 = vmatpush1.msra.mxu0 0.0
    %2267 = vmatprep.subr.mxu0 0.0
    %2268 = vmatpush1.msra.mxu0 0.0
    %2269 = vmatprep.subr.mxu0 0.0
    %2270 = vmatpush1.msra.mxu0 0.0
    %2271 = vmatprep.subr.mxu0 0.0
    %2272 = vmatpush1.msra.mxu0 0.0
    %2273 = vmatprep.subr.mxu0 0.0
    %2274 = vmatpush1.msra.mxu0 0.0
    %2275 = vmatprep.subr.mxu0 0.0
    %2276 = vmatpush1.msra.mxu0 0.0
    %2277 = vmatprep.subr.mxu0 0.0
    %2278 = vmatpush1.msra.mxu0 0.0
    %2279 = vmatprep.subr.mxu0 0.0
    %2280 = vmatpush1.msra.mxu0 0.0
    %2281 = vmatprep.subr.mxu0 0.0
    %2282 = vmatpush1.msra.mxu0 0.0
    %2283 = vmatprep.subr.mxu0 0.0
    %2284 = vmatpush1.msra.mxu0 0.0
    %2285 = vmatprep.subr.mxu0 0.0
    %2286 = vmatpush1.msra.mxu0 0.0
    %2287 = vmatprep.subr.mxu0 0.0
    %2288 = vmatpush1.msra.mxu0 0.0
    %2289 = vmatprep.subr.mxu0 0.0
    %2290 = vmatpush1.msra.mxu0 0.0
    %2291 = vmatprep.subr.mxu0 0.0
    %2292 = vmatpush1.msra.mxu0 0.0
    %2293 = vmatprep.mubr.f32.mxu0 0.0
    %2294 = vmatmul.mubr.f32.gmra.mrb[0].mxu0 %v2227
    %v2295 = vpop.f32.mrb[0].mxu0
    %v2296 = vadd.f32 0.0, %v2295
    %v2297 = vpop.f32.mrb[0].mxu0
    %2298 = vdwg.mxu0
    %v2300 = vsel %vm339, %v2220, 0
    %v2303 = vsel %vm339, %v2296, 0
    %2305 = vmatprep.subr.mxu0 0.0
    %2306 = vmatpush1.msra.mxu0 %v1539
    %2307 = vmatprep.subr.mxu0 0.0
    %2308 = vmatpush1.msra.mxu0 %v1540
    %2309 = vmatprep.subr.mxu0 0.0
    %2310 = vmatpush1.msra.mxu0 0.0
    %2311 = vmatprep.subr.mxu0 0.0
    %2312 = vmatpush1.msra.mxu0 0.0
    %2313 = vmatprep.subr.mxu0 0.0
    %2314 = vmatpush1.msra.mxu0 0.0
    %2315 = vmatprep.subr.mxu0 0.0
    %2316 = vmatpush1.msra.mxu0 0.0
    %2317 = vmatprep.subr.mxu0 0.0
    %2318 = vmatpush1.msra.mxu0 0.0
    %2319 = vmatprep.subr.mxu0 0.0
    %2320 = vmatpush1.msra.mxu0 0.0
    %2321 = vmatprep.subr.mxu0 0.0
    %2322 = vmatpush1.msra.mxu0 0.0
    %2323 = vmatprep.subr.mxu0 0.0
    %2324 = vmatpush1.msra.mxu0 0.0
    %2325 = vmatprep.subr.mxu0 0.0
    %2326 = vmatpush1.msra.mxu0 0.0
    %2327 = vmatprep.subr.mxu0 0.0
    %2328 = vmatpush1.msra.mxu0 0.0
    %2329 = vmatprep.subr.mxu0 0.0
    %2330 = vmatpush1.msra.mxu0 0.0
    %2331 = vmatprep.subr.mxu0 0.0
    %2332 = vmatpush1.msra.mxu0 0.0
    %2333 = vmatprep.subr.mxu0 0.0
    %2334 = vmatpush1.msra.mxu0 0.0
    %2335 = vmatprep.subr.mxu0 0.0
    %2336 = vmatpush1.msra.mxu0 0.0
    %2337 = vmatprep.subr.mxu0 0.0
    %2338 = vmatpush1.msra.mxu0 0.0
    %2339 = vmatprep.subr.mxu0 0.0
    %2340 = vmatpush1.msra.mxu0 0.0
    %2341 = vmatprep.subr.mxu0 0.0
    %2342 = vmatpush1.msra.mxu0 0.0
    %2343 = vmatprep.subr.mxu0 0.0
    %2344 = vmatpush1.msra.mxu0 0.0
    %2345 = vmatprep.subr.mxu0 0.0
    %2346 = vmatpush1.msra.mxu0 0.0
    %2347 = vmatprep.subr.mxu0 0.0
    %2348 = vmatpush1.msra.mxu0 0.0
    %2349 = vmatprep.subr.mxu0 0.0
    %2350 = vmatpush1.msra.mxu0 0.0
    %2351 = vmatprep.subr.mxu0 0.0
    %2352 = vmatpush1.msra.mxu0 0.0
    %2353 = vmatprep.subr.mxu0 0.0
    %2354 = vmatpush1.msra.mxu0 0.0
    %2355 = vmatprep.subr.mxu0 0.0
    %2356 = vmatpush1.msra.mxu0 0.0
    %2357 = vmatprep.subr.mxu0 0.0
    %2358 = vmatpush1.msra.mxu0 0.0
    %2359 = vmatprep.subr.mxu0 0.0
    %2360 = vmatpush1.msra.mxu0 0.0
    %2361 = vmatprep.subr.mxu0 0.0
    %2362 = vmatpush1.msra.mxu0 0.0
    %2363 = vmatprep.subr.mxu0 0.0
    %2364 = vmatpush1.msra.mxu0 0.0
    %2365 = vmatprep.subr.mxu0 0.0
    %2366 = vmatpush1.msra.mxu0 0.0
    %2367 = vmatprep.subr.mxu0 0.0
    %2368 = vmatpush1.msra.mxu0 0.0
    %2369 = vmatprep.mubr.f32.mxu0 0.0
    %2370 = vmatmul.mubr.f32.gmra.mrb[0].mxu0 %v2300
    %v2371 = vpop.f32.mrb[0].mxu0
    %v2372 = vadd.f32 0.0, %v2371
    %v2373 = vpop.f32.mrb[0].mxu0
    %2374 = vmatprep.mubr.f32.mxu0 0.0
    %2375 = vmatmul.mubr.f32.gmra.mrb[0].mxu0 %v2303
    %v2376 = vpop.f32.mrb[0].mxu0
    %v2377 = vadd.f32 0.0, %v2376
    %v2378 = vpop.f32.mrb[0].mxu0
    %2379 = vdwg.mxu0
    %v2380 = vadd.f32 %v1963, %v2372
    %v2381 = vadd.f32 %v1964, %v2377
    %v2382 = vadd.f32 %v1436, %v2380
    %v2383 = vadd.f32 %v1437, %v2381
    %v2384 = vsel %vm242, %v2382, 0.0
    %2385 = vadd.xlane.f32.xlu0 %v2384
    %v2386 = vpop.xlane.xlu0 %2385
    %v2387 = vsel %vm242, %v2383, 0.0
    %2388 = vadd.xlane.f32.xlu0 %v2387
    %v2389 = vpop.xlane.xlu0 %2388
    %v2390 = vmul.f32 %v2386, %v1178
    %v2391 = vmul.f32 %v2389, %v1178
    %v2392 = vsub.f32 %v2382, %v2390
    %v2393 = vsub.f32 %v2383, %v2391
    %v2394 = vmul.f32 %v2392, %v2392
    %v2395 = vmul.f32 %v2393, %v2393
    %v2396 = vsel %vm242, %v2394, 0.0
    %2397 = vadd.xlane.f32.xlu0 %v2396
    %v2398 = vpop.xlane.xlu0 %2397
    %v2399 = vsel %vm242, %v2395, 0.0
    %2400 = vadd.xlane.f32.xlu0 %v2399
    %v2401 = vpop.xlane.xlu0 %2400
    %v2402 = vmul.f32 %v2398, %v1178
    %v2403 = vmul.f32 %v2401, %v1178
    %v2404 = vadd.f32 %v2402, 1e-05
    %v2405 = vadd.f32 %v2403, 1e-05
    %v2406 = vrsqrt.pop %v2404
    %v2407 = vrsqrt.pop %v2405
    %v2408 = vmul.f32 %v2392, %v2406
    %v2409 = vmul.f32 %v2393, %v2407
    %v2411 = vlaneseq
    %v2412 = vshrl.u32 %v2411, 7
    %v2413 = vsub.s32 0, %v2412
    %v2414 = vrot.slane %v1439, %v2413
    %v2416 = vmul.f32 %v2408, %v2414
    %v2417 = vmul.f32 %v2409, %v2414
    %v2419 = vlaneseq
    %v2420 = vshrl.u32 %v2419, 7
    %v2421 = vsub.s32 0, %v2420
    %v2422 = vrot.slane %v1441, %v2421
    %v2424 = vadd.f32 %v2416, %v2422
    %v2425 = vadd.f32 %v2417, %v2422
    %s2426 = scalar_lea.vmem %s23, 32
    %v2427 = vld [vmem:[%s2426] sm:$0xff]
    %v2428 = vld [vmem:[%s2426 + $0x8] sm:$0xff]
    %v2429 = vld [vmem:[%s2426 + $0x10] sm:$0xff]
    %v2430 = vld [vmem:[%s2426 + $0x18] sm:$0xff]
    %s2431 = scalar_lea.vmem %s25, 1
    %v2432 = vld [vmem:[%s2431] sm:$0x1]
    %v2434 = vlaneseq
    %v2435 = vshrl.u32 %v2434, 7
    %v2436 = vsub.s32 0, %v2435
    %v2437 = vrot.slane %v2432, %v2436
    %v2440 = vsel %vm242, %v2424, 0
    %v2443 = vsel %vm242, %v2425, 0
    %2445 = vmatprep.subr.mxu0 0.0
    %2446 = vmatpush1.msra.mxu0 %v2427
    %2447 = vmatprep.subr.mxu0 0.0
    %2448 = vmatpush1.msra.mxu0 %v2428
    %2449 = vmatprep.subr.mxu0 0.0
    %2450 = vmatpush1.msra.mxu0 %v2429
    %2451 = vmatprep.subr.mxu0 0.0
    %2452 = vmatpush1.msra.mxu0 %v2430
    %2453 = vmatprep.subr.mxu0 0.0
    %2454 = vmatpush1.msra.mxu0 0.0
    %2455 = vmatprep.subr.mxu0 0.0
    %2456 = vmatpush1.msra.mxu0 0.0
    %2457 = vmatprep.subr.mxu0 0.0
    %2458 = vmatpush1.msra.mxu0 0.0
    %2459 = vmatprep.subr.mxu0 0.0
    %2460 = vmatpush1.msra.mxu0 0.0
    %2461 = vmatprep.subr.mxu0 0.0
    %2462 = vmatpush1.msra.mxu0 0.0
    %2463 = vmatprep.subr.mxu0 0.0
    %2464 = vmatpush1.msra.mxu0 0.0
    %2465 = vmatprep.subr.mxu0 0.0
    %2466 = vmatpush1.msra.mxu0 0.0
    %2467 = vmatprep.subr.mxu0 0.0
    %2468 = vmatpush1.msra.mxu0 0.0
    %2469 = vmatprep.subr.mxu0 0.0
    %2470 = vmatpush1.msra.mxu0 0.0
    %2471 = vmatprep.subr.mxu0 0.0
    %2472 = vmatpush1.msra.mxu0 0.0
    %2473 = vmatprep.subr.mxu0 0.0
    %2474 = vmatpush1.msra.mxu0 0.0
    %2475 = vmatprep.subr.mxu0 0.0
    %2476 = vmatpush1.msra.mxu0 0.0
    %2477 = vmatprep.subr.mxu0 0.0
    %2478 = vmatpush1.msra.mxu0 0.0
    %2479 = vmatprep.subr.mxu0 0.0
    %2480 = vmatpush1.msra.mxu0 0.0
    %2481 = vmatprep.subr.mxu0 0.0
    %2482 = vmatpush1.msra.mxu0 0.0
    %2483 = vmatprep.subr.mxu0 0.0
    %2484 = vmatpush1.msra.mxu0 0.0
    %2485 = vmatprep.subr.mxu0 0.0
    %2486 = vmatpush1.msra.mxu0 0.0
    %2487 = vmatprep.subr.mxu0 0.0
    %2488 = vmatpush1.msra.mxu0 0.0
    %2489 = vmatprep.subr.mxu0 0.0
    %2490 = vmatpush1.msra.mxu0 0.0
    %2491 = vmatprep.subr.mxu0 0.0
    %2492 = vmatpush1.msra.mxu0 0.0
    %2493 = vmatprep.subr.mxu0 0.0
    %2494 = vmatpush1.msra.mxu0 0.0
    %2495 = vmatprep.subr.mxu0 0.0
    %2496 = vmatpush1.msra.mxu0 0.0
    %2497 = vmatprep.subr.mxu0 0.0
    %2498 = vmatpush1.msra.mxu0 0.0
    %2499 = vmatprep.subr.mxu0 0.0
    %2500 = vmatpush1.msra.mxu0 0.0
    %2501 = vmatprep.subr.mxu0 0.0
    %2502 = vmatpush1.msra.mxu0 0.0
    %2503 = vmatprep.subr.mxu0 0.0
    %2504 = vmatpush1.msra.mxu0 0.0
    %2505 = vmatprep.subr.mxu0 0.0
    %2506 = vmatpush1.msra.mxu0 0.0
    %2507 = vmatprep.subr.mxu0 0.0
    %2508 = vmatpush1.msra.mxu0 0.0
    %2509 = vmatprep.mubr.f32.mxu0 0.0
    %2510 = vmatmul.mubr.f32.gmra.mrb[0].mxu0 %v2440
    %v2511 = vpop.f32.mrb[0].mxu0
    %v2512 = vadd.f32 %v2437, %v2511
    %v2513 = vpop.f32.mrb[0].mxu0
    %2514 = vmatprep.mubr.f32.mxu0 0.0
    %2515 = vmatmul.mubr.f32.gmra.mrb[0].mxu0 %v2443
    %v2516 = vpop.f32.mrb[0].mxu0
    %v2517 = vadd.f32 %v2437, %v2516
    %v2518 = vpop.f32.mrb[0].mxu0
    %2519 = vdwg.mxu0
    %v2520 = vmax.f32 %v2512, 0.0
    %v2521 = vmax.f32 %v2517, 0.0
    %s2522 = scalar_lea.vmem %s27, 64
    %v2523 = vld [vmem:[%s2522] sm:$0xff]
    %v2524 = vld [vmem:[%s2522 + $0x8] sm:$0xff]
    %v2525 = vld [vmem:[%s2522 + $0x10] sm:$0xff]
    %v2526 = vld [vmem:[%s2522 + $0x18] sm:$0xff]
    %v2527 = vld [vmem:[%s2522 + $0x20] sm:$0xff]
    %v2528 = vld [vmem:[%s2522 + $0x28] sm:$0xff]
    %v2529 = vld [vmem:[%s2522 + $0x30] sm:$0xff]
    %v2530 = vld [vmem:[%s2522 + $0x38] sm:$0xff]
    %s2531 = scalar_lea.vmem %s29, 1
    %v2532 = vld [vmem:[%s2531] sm:$0x1]
    %v2534 = vlaneseq
    %v2535 = vshrl.u32 %v2534, 7
    %v2536 = vsub.s32 0, %v2535
    %v2537 = vrot.slane %v2532, %v2536
    %v2540 = vsel %vm1324, %v2520, 0
    %v2543 = vsel %vm1324, %v2521, 0
    %2545 = vmatprep.subr.mxu0 0.0
    %2546 = vmatpush1.msra.mxu0 %v2523
    %2547 = vmatprep.subr.mxu0 0.0
    %2548 = vmatpush1.msra.mxu0 %v2524
    %2549 = vmatprep.subr.mxu0 0.0
    %2550 = vmatpush1.msra.mxu0 %v2525
    %2551 = vmatprep.subr.mxu0 0.0
    %2552 = vmatpush1.msra.mxu0 %v2526
    %2553 = vmatprep.subr.mxu0 0.0
    %2554 = vmatpush1.msra.mxu0 %v2527
    %2555 = vmatprep.subr.mxu0 0.0
    %2556 = vmatpush1.msra.mxu0 %v2528
    %2557 = vmatprep.subr.mxu0 0.0
    %2558 = vmatpush1.msra.mxu0 %v2529
    %2559 = vmatprep.subr.mxu0 0.0
    %2560 = vmatpush1.msra.mxu0 %v2530
    %2561 = vmatprep.subr.mxu0 0.0
    %2562 = vmatpush1.msra.mxu0 0.0
    %2563 = vmatprep.subr.mxu0 0.0
    %2564 = vmatpush1.msra.mxu0 0.0
    %2565 = vmatprep.subr.mxu0 0.0
    %2566 = vmatpush1.msra.mxu0 0.0
    %2567 = vmatprep.subr.mxu0 0.0
    %2568 = vmatpush1.msra.mxu0 0.0
    %2569 = vmatprep.subr.mxu0 0.0
    %2570 = vmatpush1.msra.mxu0 0.0
    %2571 = vmatprep.subr.mxu0 0.0
    %2572 = vmatpush1.msra.mxu0 0.0
    %2573 = vmatprep.subr.mxu0 0.0
    %2574 = vmatpush1.msra.mxu0 0.0
    %2575 = vmatprep.subr.mxu0 0.0
    %2576 = vmatpush1.msra.mxu0 0.0
    %2577 = vmatprep.subr.mxu0 0.0
    %2578 = vmatpush1.msra.mxu0 0.0
    %2579 = vmatprep.subr.mxu0 0.0
    %2580 = vmatpush1.msra.mxu0 0.0
    %2581 = vmatprep.subr.mxu0 0.0
    %2582 = vmatpush1.msra.mxu0 0.0
    %2583 = vmatprep.subr.mxu0 0.0
    %2584 = vmatpush1.msra.mxu0 0.0
    %2585 = vmatprep.subr.mxu0 0.0
    %2586 = vmatpush1.msra.mxu0 0.0
    %2587 = vmatprep.subr.mxu0 0.0
    %2588 = vmatpush1.msra.mxu0 0.0
    %2589 = vmatprep.subr.mxu0 0.0
    %2590 = vmatpush1.msra.mxu0 0.0
    %2591 = vmatprep.subr.mxu0 0.0
    %2592 = vmatpush1.msra.mxu0 0.0
    %2593 = vmatprep.subr.mxu0 0.0
    %2594 = vmatpush1.msra.mxu0 0.0
    %2595 = vmatprep.subr.mxu0 0.0
    %2596 = vmatpush1.msra.mxu0 0.0
    %2597 = vmatprep.subr.mxu0 0.0
    %2598 = vmatpush1.msra.mxu0 0.0
    %2599 = vmatprep.subr.mxu0 0.0
    %2600 = vmatpush1.msra.mxu0 0.0
    %2601 = vmatprep.subr.mxu0 0.0
    %2602 = vmatpush1.msra.mxu0 0.0
    %2603 = vmatprep.subr.mxu0 0.0
    %2604 = vmatpush1.msra.mxu0 0.0
    %2605 = vmatprep.subr.mxu0 0.0
    %2606 = vmatpush1.msra.mxu0 0.0
    %2607 = vmatprep.subr.mxu0 0.0
    %2608 = vmatpush1.msra.mxu0 0.0
    %2609 = vmatprep.mubr.f32.mxu0 0.0
    %2610 = vmatmul.mubr.f32.gmra.mrb[0].mxu0 %v2540
    %v2611 = vpop.f32.mrb[0].mxu0
    %v2612 = vadd.f32 %v2537, %v2611
    %v2613 = vpop.f32.mrb[0].mxu0
    %2614 = vmatprep.mubr.f32.mxu0 0.0
    %2615 = vmatmul.mubr.f32.gmra.mrb[0].mxu0 %v2543
    %v2616 = vpop.f32.mrb[0].mxu0
    %v2617 = vadd.f32 %v2537, %v2616
    %v2618 = vpop.f32.mrb[0].mxu0
    %2619 = vdwg.mxu0
    %v2620 = vadd.f32 %v2424, %v2612
    %v2621 = vadd.f32 %v2425, %v2617
    %v2622 = vsel %vm242, %v2620, 0.0
    %2623 = vadd.xlane.f32.xlu0 %v2622
    %v2624 = vpop.xlane.xlu0 %2623
    %v2625 = vsel %vm242, %v2621, 0.0
    %2626 = vadd.xlane.f32.xlu0 %v2625
    %v2627 = vpop.xlane.xlu0 %2626
    %v2628 = vmul.f32 %v2624, %v1178
    %v2629 = vmul.f32 %v2627, %v1178
    %v2630 = vsub.f32 %v2620, %v2628
    %v2631 = vsub.f32 %v2621, %v2629
    %v2632 = vmul.f32 %v2630, %v2630
    %v2633 = vmul.f32 %v2631, %v2631
    %v2634 = vsel %vm242, %v2632, 0.0
    %2635 = vadd.xlane.f32.xlu0 %v2634
    %v2636 = vpop.xlane.xlu0 %2635
    %v2637 = vsel %vm242, %v2633, 0.0
    %2638 = vadd.xlane.f32.xlu0 %v2637
    %v2639 = vpop.xlane.xlu0 %2638
    %v2640 = vmul.f32 %v2636, %v1178
    %v2641 = vmul.f32 %v2639, %v1178
    %v2642 = vadd.f32 %v2640, 1e-05
    %v2643 = vadd.f32 %v2641, 1e-05
    %v2644 = vrsqrt.pop %v2642
    %v2645 = vrsqrt.pop %v2643
    %v2646 = vmul.f32 %v2630, %v2644
    %v2647 = vmul.f32 %v2631, %v2645
    %v2648 = vmul.f32 %v2646, %v2414
    %v2649 = vmul.f32 %v2647, %v2414
    %v2650 = vadd.f32 %v2648, %v2422
    %v2651 = vadd.f32 %v2649, %v2422
    %v2652 = vld [vmem:[%s31] sm:$0xff]
    %v2653 = vld [vmem:[%s31 + $0x8] sm:$0xff]
    %v2654 = vld [vmem:[%s31 + $0x10] sm:$0xff]
    %v2655 = vld [vmem:[%s31 + $0x18] sm:$0xff]
    %v2656 = vld [vmem:[%s35] sm:$0x1]
    %v2658 = vlaneseq
    %v2659 = vshrl.u32 %v2658, 7
    %v2660 = vsub.s32 0, %v2659
    %v2661 = vrot.slane %v2656, %v2660
    %v2664 = vsel %vm242, %v2650, 0
    %v2667 = vsel %vm242, %v2651, 0
    %2669 = vmatprep.subr.mxu0 0.0
    %2670 = vmatpush1.msra.mxu0 %v2652
    %2671 = vmatprep.subr.mxu0 0.0
    %2672 = vmatpush1.msra.mxu0 %v2653
    %2673 = vmatprep.subr.mxu0 0.0
    %2674 = vmatpush1.msra.mxu0 %v2654
    %2675 = vmatprep.subr.mxu0 0.0
    %2676 = vmatpush1.msra.mxu0 %v2655
    %2677 = vmatprep.subr.mxu0 0.0
    %2678 = vmatpush1.msra.mxu0 0.0
    %2679 = vmatprep.subr.mxu0 0.0
    %2680 = vmatpush1.msra.mxu0 0.0
    %2681 = vmatprep.subr.mxu0 0.0
    %2682 = vmatpush1.msra.mxu0 0.0
    %2683 = vmatprep.subr.mxu0 0.0
    %2684 = vmatpush1.msra.mxu0 0.0
    %2685 = vmatprep.subr.mxu0 0.0
    %2686 = vmatpush1.msra.mxu0 0.0
    %2687 = vmatprep.subr.mxu0 0.0
    %2688 = vmatpush1.msra.mxu0 0.0
    %2689 = vmatprep.subr.mxu0 0.0
    %2690 = vmatpush1.msra.mxu0 0.0
    %2691 = vmatprep.subr.mxu0 0.0
    %2692 = vmatpush1.msra.mxu0 0.0
    %2693 = vmatprep.subr.mxu0 0.0
    %2694 = vmatpush1.msra.mxu0 0.0
    %2695 = vmatprep.subr.mxu0 0.0
    %2696 = vmatpush1.msra.mxu0 0.0
    %2697 = vmatprep.subr.mxu0 0.0
    %2698 = vmatpush1.msra.mxu0 0.0
    %2699 = vmatprep.subr.mxu0 0.0
    %2700 = vmatpush1.msra.mxu0 0.0
    %2701 = vmatprep.subr.mxu0 0.0
    %2702 = vmatpush1.msra.mxu0 0.0
    %2703 = vmatprep.subr.mxu0 0.0
    %2704 = vmatpush1.msra.mxu0 0.0
    %2705 = vmatprep.subr.mxu0 0.0
    %2706 = vmatpush1.msra.mxu0 0.0
    %2707 = vmatprep.subr.mxu0 0.0
    %2708 = vmatpush1.msra.mxu0 0.0
    %2709 = vmatprep.subr.mxu0 0.0
    %2710 = vmatpush1.msra.mxu0 0.0
    %2711 = vmatprep.subr.mxu0 0.0
    %2712 = vmatpush1.msra.mxu0 0.0
    %2713 = vmatprep.subr.mxu0 0.0
    %2714 = vmatpush1.msra.mxu0 0.0
    %2715 = vmatprep.subr.mxu0 0.0
    %2716 = vmatpush1.msra.mxu0 0.0
    %2717 = vmatprep.subr.mxu0 0.0
    %2718 = vmatpush1.msra.mxu0 0.0
    %2719 = vmatprep.subr.mxu0 0.0
    %2720 = vmatpush1.msra.mxu0 0.0
    %2721 = vmatprep.subr.mxu0 0.0
    %2722 = vmatpush1.msra.mxu0 0.0
    %2723 = vmatprep.subr.mxu0 0.0
    %2724 = vmatpush1.msra.mxu0 0.0
    %2725 = vmatprep.subr.mxu0 0.0
    %2726 = vmatpush1.msra.mxu0 0.0
    %2727 = vmatprep.subr.mxu0 0.0
    %2728 = vmatpush1.msra.mxu0 0.0
    %2729 = vmatprep.subr.mxu0 0.0
    %2730 = vmatpush1.msra.mxu0 0.0
    %2731 = vmatprep.subr.mxu0 0.0
    %2732 = vmatpush1.msra.mxu0 0.0
    %2733 = vmatprep.mubr.f32.mxu0 0.0
    %2734 = vmatmul.mubr.f32.gmra.mrb[0].mxu0 %v2664
    %v2735 = vpop.f32.mrb[0].mxu0
    %v2736 = vadd.f32 %v2661, %v2735
    %v2737 = vpop.f32.mrb[0].mxu0
    %2738 = vmatprep.mubr.f32.mxu0 0.0
    %2739 = vmatmul.mubr.f32.gmra.mrb[0].mxu0 %v2667
    %v2740 = vpop.f32.mrb[0].mxu0
    %v2741 = vadd.f32 %v2661, %v2740
    %v2742 = vpop.f32.mrb[0].mxu0
    %2743 = vdwg.mxu0
    %v2744 = vld [vmem:[%s33] sm:$0xff]
    %v2745 = vld [vmem:[%s33 + $0x8] sm:$0xff]
    %v2746 = vld [vmem:[%s33 + $0x10] sm:$0xff]
    %v2747 = vld [vmem:[%s33 + $0x18] sm:$0xff]
    %v2749 = vsel %vm242, 0.0, 0
    %2751 = vmatprep.subr.mxu0 0.0
    %2752 = vmatpush1.msra.mxu0 %v2744
    %2753 = vmatprep.subr.mxu0 0.0
    %2754 = vmatpush1.msra.mxu0 %v2745
    %2755 = vmatprep.subr.mxu0 0.0
    %2756 = vmatpush1.msra.mxu0 %v2746
    %2757 = vmatprep.subr.mxu0 0.0
    %2758 = vmatpush1.msra.mxu0 %v2747
    %2759 = vmatprep.subr.mxu0 0.0
    %2760 = vmatpush1.msra.mxu0 0.0
    %2761 = vmatprep.subr.mxu0 0.0
    %2762 = vmatpush1.msra.mxu0 0.0
    %2763 = vmatprep.subr.mxu0 0.0
    %2764 = vmatpush1.msra.mxu0 0.0
    %2765 = vmatprep.subr.mxu0 0.0
    %2766 = vmatpush1.msra.mxu0 0.0
    %2767 = vmatprep.subr.mxu0 0.0
    %2768 = vmatpush1.msra.mxu0 0.0
    %2769 = vmatprep.subr.mxu0 0.0
    %2770 = vmatpush1.msra.mxu0 0.0
    %2771 = vmatprep.subr.mxu0 0.0
    %2772 = vmatpush1.msra.mxu0 0.0
    %2773 = vmatprep.subr.mxu0 0.0
    %2774 = vmatpush1.msra.mxu0 0.0
    %2775 = vmatprep.subr.mxu0 0.0
    %2776 = vmatpush1.msra.mxu0 0.0
    %2777 = vmatprep.subr.mxu0 0.0
    %2778 = vmatpush1.msra.mxu0 0.0
    %2779 = vmatprep.subr.mxu0 0.0
    %2780 = vmatpush1.msra.mxu0 0.0
    %2781 = vmatprep.subr.mxu0 0.0
    %2782 = vmatpush1.msra.mxu0 0.0
    %2783 = vmatprep.subr.mxu0 0.0
    %2784 = vmatpush1.msra.mxu0 0.0
    %2785 = vmatprep.subr.mxu0 0.0
    %2786 = vmatpush1.msra.mxu0 0.0
    %2787 = vmatprep.subr.mxu0 0.0
    %2788 = vmatpush1.msra.mxu0 0.0
    %2789 = vmatprep.subr.mxu0 0.0
    %2790 = vmatpush1.msra.mxu0 0.0
    %2791 = vmatprep.subr.mxu0 0.0
    %2792 = vmatpush1.msra.mxu0 0.0
    %2793 = vmatprep.subr.mxu0 0.0
    %2794 = vmatpush1.msra.mxu0 0.0
    %2795 = vmatprep.subr.mxu0 0.0
    %2796 = vmatpush1.msra.mxu0 0.0
    %2797 = vmatprep.subr.mxu0 0.0
    %2798 = vmatpush1.msra.mxu0 0.0
    %2799 = vmatprep.subr.mxu0 0.0
    %2800 = vmatpush1.msra.mxu0 0.0
    %2801 = vmatprep.subr.mxu0 0.0
    %2802 = vmatpush1.msra.mxu0 0.0
    %2803 = vmatprep.subr.mxu0 0.0
    %2804 = vmatpush1.msra.mxu0 0.0
    %2805 = vmatprep.subr.mxu0 0.0
    %2806 = vmatpush1.msra.mxu0 0.0
    %2807 = vmatprep.subr.mxu0 0.0
    %2808 = vmatpush1.msra.mxu0 0.0
    %2809 = vmatprep.subr.mxu0 0.0
    %2810 = vmatpush1.msra.mxu0 0.0
    %2811 = vmatprep.subr.mxu0 0.0
    %2812 = vmatpush1.msra.mxu0 0.0
    %2813 = vmatprep.subr.mxu0 0.0
    %2814 = vmatpush1.msra.mxu0 0.0
    %2815 = vmatprep.mubr.f32.mxu0 0.0
    %2816 = vmatmul.mubr.f32.gmra.mrb[0].mxu0 %v2749
    %v2817 = vpop.f32.mrb[0].mxu0
    %v2818 = vadd.f32 0.0, %v2817
    %v2819 = vpop.f32.mrb[0].mxu0
    %2820 = vdwg.mxu0
    %v2822 = vrot.slane %v2818, 1
    %v2825 = vadd.f32 %v2736, %v2818
    %v2826 = vadd.f32 %v2741, %v2822
    %v2827 = vxor.u32 %v2825, 2147483648
    %v2828 = vxor.u32 %v2826, 2147483648
    %v2829 = vmul.f32 %v2827, 1.442695
    %v2830 = vpow.pop %v2829
    %v2831 = vmul.f32 %v2828, 1.442695
    %v2832 = vpow.pop %v2831
    %v2833 = vadd.f32 %v2830, 1.0
    %v2834 = vadd.f32 %v2832, 1.0
    %v2835 = vrcp.pop %v2833
    %v2836 = vmul.f32 1.0, %v2835
    %v2837 = vrcp.pop %v2834
    %v2838 = vmul.f32 1.0, %v2837
    %v2839 = vtanh.pop %v2825
    %v2840 = vtanh.pop %v2826
    %v2841 = vmul.f32 %v2836, 0.0
    %v2842 = vmul.f32 %v2838, 0.0
    %2845 = vrot.lane.b32.xlu0 %v2839, 64
    %v2846 = vpop.permute.xlu0 %2845
    %2847 = vrot.lane.b32.xlu0 %v2840, 64
    %v2848 = vpop.permute.xlu0 %2847
    %v2851 = vmul.f32 %v2836, %v2846
    %v2852 = vmul.f32 %v2838, %v2848
    %2855 = vrot.lane.b32.xlu0 %v2851, 32
    %v2856 = vpop.permute.xlu0 %2855
    %2857 = vrot.lane.b32.xlu0 %v2852, 32
    %v2858 = vpop.permute.xlu0 %2857
    %v2861 = vadd.f32 %v2841, %v2856
    %v2862 = vadd.f32 %v2842, %v2858
    %v2863 = vtanh.pop %v2861
    %v2864 = vtanh.pop %v2862
    %2867 = vrot.lane.b32.xlu0 %v2863, 64
    %v2868 = vpop.permute.xlu0 %2867
    %2869 = vrot.lane.b32.xlu0 %v2864, 64
    %v2870 = vpop.permute.xlu0 %2869
    %v2873 = vmul.f32 %v2836, %v2868
    %v2874 = vmul.f32 %v2838, %v2870
    %2876 = vrot.lane.b32.xlu0 %v2873, 32
    %v2877 = vpop.permute.xlu0 %2876
    %vm2879 = vcmask 253952
    %2880 = vst.msk [vmem:[#allocation2] sm:$0x1] %vm2879, %v2877
    %2882 = vrot.lane.b32.xlu0 %v2874, 32
    %v2883 = vpop.permute.xlu0 %2882
    %2885 = vst.msk [vmem:[#allocation2 + $0x8] sm:$0x1] %vm2879, %v2883
    %v2886 = vrot.slane %v2874, 7
    %vm2887 = vcmask 1041409
    %v2888 = vsel %vm2887, %v2886, %v2873
    %2889 = vrot.lane.b32.xlu0 %v2888, 32
    %v2890 = vpop.permute.xlu0 %2889
    %v2891 = vsel %vm242, %v2890, 0
    %2893 = vmatprep.subr.mxu0 0.0
    %2894 = vmatpush1.msra.mxu0 %v2744
    %2895 = vmatprep.subr.mxu0 0.0
    %2896 = vmatpush1.msra.mxu0 %v2745
    %2897 = vmatprep.subr.mxu0 0.0
    %2898 = vmatpush1.msra.mxu0 %v2746
    %2899 = vmatprep.subr.mxu0 0.0
    %2900 = vmatpush1.msra.mxu0 %v2747
    %2901 = vmatprep.subr.mxu0 0.0
    %2902 = vmatpush1.msra.mxu0 0.0
    %2903 = vmatprep.subr.mxu0 0.0
    %2904 = vmatpush1.msra.mxu0 0.0
    %2905 = vmatprep.subr.mxu0 0.0
    %2906 = vmatpush1.msra.mxu0 0.0
    %2907 = vmatprep.subr.mxu0 0.0
    %2908 = vmatpush1.msra.mxu0 0.0
    %2909 = vmatprep.subr.mxu0 0.0
    %2910 = vmatpush1.msra.mxu0 0.0
    %2911 = vmatprep.subr.mxu0 0.0
    %2912 = vmatpush1.msra.mxu0 0.0
    %2913 = vmatprep.subr.mxu0 0.0
    %2914 = vmatpush1.msra.mxu0 0.0
    %2915 = vmatprep.subr.mxu0 0.0
    %2916 = vmatpush1.msra.mxu0 0.0
    %2917 = vmatprep.subr.mxu0 0.0
    %2918 = vmatpush1.msra.mxu0 0.0
    %2919 = vmatprep.subr.mxu0 0.0
    %2920 = vmatpush1.msra.mxu0 0.0
    %2921 = vmatprep.subr.mxu0 0.0
    %2922 = vmatpush1.msra.mxu0 0.0
    %2923 = vmatprep.subr.mxu0 0.0
    %2924 = vmatpush1.msra.mxu0 0.0
    %2925 = vmatprep.subr.mxu0 0.0
    %2926 = vmatpush1.msra.mxu0 0.0
    %2927 = vmatprep.subr.mxu0 0.0
    %2928 = vmatpush1.msra.mxu0 0.0
    %2929 = vmatprep.subr.mxu0 0.0
    %2930 = vmatpush1.msra.mxu0 0.0
    %2931 = vmatprep.subr.mxu0 0.0
    %2932 = vmatpush1.msra.mxu0 0.0
    %2933 = vmatprep.subr.mxu0 0.0
    %2934 = vmatpush1.msra.mxu0 0.0
    %2935 = vmatprep.subr.mxu0 0.0
    %2936 = vmatpush1.msra.mxu0 0.0
    %2937 = vmatprep.subr.mxu0 0.0
    %2938 = vmatpush1.msra.mxu0 0.0
    %2939 = vmatprep.subr.mxu0 0.0
    %2940 = vmatpush1.msra.mxu0 0.0
    %2941 = vmatprep.subr.mxu0 0.0
    %2942 = vmatpush1.msra.mxu0 0.0
    %2943 = vmatprep.subr.mxu0 0.0
    %2944 = vmatpush1.msra.mxu0 0.0
    %2945 = vmatprep.subr.mxu0 0.0
    %2946 = vmatpush1.msra.mxu0 0.0
    %2947 = vmatprep.subr.mxu0 0.0
    %2948 = vmatpush1.msra.mxu0 0.0
    %2949 = vmatprep.subr.mxu0 0.0
    %2950 = vmatpush1.msra.mxu0 0.0
    %2951 = vmatprep.subr.mxu0 0.0
    %2952 = vmatpush1.msra.mxu0 0.0
    %2953 = vmatprep.subr.mxu0 0.0
    %2954 = vmatpush1.msra.mxu0 0.0
    %2955 = vmatprep.subr.mxu0 0.0
    %2956 = vmatpush1.msra.mxu0 0.0
    %2957 = vmatprep.mubr.f32.mxu0 0.0
    %2958 = vmatmul.mubr.f32.gmra.mrb[0].mxu0 %v2891
    %v2959 = vpop.f32.mrb[0].mxu0
    %v2960 = vadd.f32 0.0, %v2959
    %v2961 = vpop.f32.mrb[0].mxu0
    %2962 = vdwg.mxu0
    %v2964 = vrot.slane %v2960, 7
    %v2967 = vadd.f32 %v2736, %v2964
    %v2968 = vadd.f32 %v2741, %v2960
    %v2969 = vxor.u32 %v2967, 2147483648
    %v2970 = vxor.u32 %v2968, 2147483648
    %v2971 = vmul.f32 %v2969, 1.442695
    %v2972 = vpow.pop %v2971
    %v2973 = vmul.f32 %v2970, 1.442695
    %v2974 = vpow.pop %v2973
    %v2975 = vadd.f32 %v2972, 1.0
    %v2976 = vadd.f32 %v2974, 1.0
    %v2977 = vrcp.pop %v2975
    %v2978 = vmul.f32 1.0, %v2977
    %v2979 = vrcp.pop %v2976
    %v2980 = vmul.f32 1.0, %v2979
    %v2981 = vtanh.pop %v2967
    %v2982 = vtanh.pop %v2968
    %v2985 = vrot.slane %v2861, 7
    %v2986 = vrot.slane %v2862, 7
    %v2989 = vmul.f32 %v2978, %v2985
    %v2990 = vmul.f32 %v2980, %v2986
    %2993 = vrot.lane.b32.xlu0 %v2981, 64
    %v2994 = vpop.permute.xlu0 %2993
    %2995 = vrot.lane.b32.xlu0 %v2982, 64
    %v2996 = vpop.permute.xlu0 %2995
    %v2999 = vmul.f32 %v2978, %v2994
    %v3000 = vmul.f32 %v2980, %v2996
    %3003 = vrot.lane.b32.xlu0 %v2999, 32
    %v3004 = vpop.permute.xlu0 %3003
    %3005 = vrot.lane.b32.xlu0 %v3000, 32
    %v3006 = vpop.permute.xlu0 %3005
    %v3009 = vadd.f32 %v2989, %v3004
    %v3010 = vadd.f32 %v2990, %v3006
    %v3011 = vtanh.pop %v3009
    %v3012 = vtanh.pop %v3010
    %3015 = vrot.lane.b32.xlu0 %v3011, 64
    %v3016 = vpop.permute.xlu0 %3015
    %3017 = vrot.lane.b32.xlu0 %v3012, 64
    %v3018 = vpop.permute.xlu0 %3017
    %v3021 = vmul.f32 %v2978, %v3016
    %v3022 = vmul.f32 %v2980, %v3018
    %3024 = vrot.lane.b32.xlu0 %v3021, 32
    %v3025 = vpop.permute.xlu0 %3024
    %vm3027 = vcmask 254977
    %3028 = vst.msk [vmem:[#allocation2] sm:$0x2] %vm3027, %v3025
    %3030 = vrot.lane.b32.xlu0 %v3022, 32
    %v3031 = vpop.permute.xlu0 %3030
    %3033 = vst.msk [vmem:[#allocation2 + $0x8] sm:$0x2] %vm3027, %v3031
    %v3034 = vrot.slane %v3021, 1
    %v3035 = vsel %vm2887, %v3022, %v3034
    %3036 = vrot.lane.b32.xlu0 %v3035, 32
    %v3037 = vpop.permute.xlu0 %3036
    %v3038 = vsel %vm242, %v3037, 0
    %3040 = vmatprep.subr.mxu0 0.0
    %3041 = vmatpush1.msra.mxu0 %v2744
    %3042 = vmatprep.subr.mxu0 0.0
    %3043 = vmatpush1.msra.mxu0 %v2745
    %3044 = vmatprep.subr.mxu0 0.0
    %3045 = vmatpush1.msra.mxu0 %v2746
    %3046 = vmatprep.subr.mxu0 0.0
    %3047 = vmatpush1.msra.mxu0 %v2747
    %3048 = vmatprep.subr.mxu0 0.0
    %3049 = vmatpush1.msra.mxu0 0.0
    %3050 = vmatprep.subr.mxu0 0.0
    %3051 = vmatpush1.msra.mxu0 0.0
    %3052 = vmatprep.subr.mxu0 0.0
    %3053 = vmatpush1.msra.mxu0 0.0
    %3054 = vmatprep.subr.mxu0 0.0
    %3055 = vmatpush1.msra.mxu0 0.0
    %3056 = vmatprep.subr.mxu0 0.0
    %3057 = vmatpush1.msra.mxu0 0.0
    %3058 = vmatprep.subr.mxu0 0.0
    %3059 = vmatpush1.msra.mxu0 0.0
    %3060 = vmatprep.subr.mxu0 0.0
    %3061 = vmatpush1.msra.mxu0 0.0
    %3062 = vmatprep.subr.mxu0 0.0
    %3063 = vmatpush1.msra.mxu0 0.0
    %3064 = vmatprep.subr.mxu0 0.0
    %3065 = vmatpush1.msra.mxu0 0.0
    %3066 = vmatprep.subr.mxu0 0.0
    %3067 = vmatpush1.msra.mxu0 0.0
    %3068 = vmatprep.subr.mxu0 0.0
    %3069 = vmatpush1.msra.mxu0 0.0
    %3070 = vmatprep.subr.mxu0 0.0
    %3071 = vmatpush1.msra.mxu0 0.0
    %3072 = vmatprep.subr.mxu0 0.0
    %3073 = vmatpush1.msra.mxu0 0.0
    %3074 = vmatprep.subr.mxu0 0.0
    %3075 = vmatpush1.msra.mxu0 0.0
    %3076 = vmatprep.subr.mxu0 0.0
    %3077 = vmatpush1.msra.mxu0 0.0
    %3078 = vmatprep.subr.mxu0 0.0
    %3079 = vmatpush1.msra.mxu0 0.0
    %3080 = vmatprep.subr.mxu0 0.0
    %3081 = vmatpush1.msra.mxu0 0.0
    %3082 = vmatprep.subr.mxu0 0.0
    %3083 = vmatpush1.msra.mxu0 0.0
    %3084 = vmatprep.subr.mxu0 0.0
    %3085 = vmatpush1.msra.mxu0 0.0
    %3086 = vmatprep.subr.mxu0 0.0
    %3087 = vmatpush1.msra.mxu0 0.0
    %3088 = vmatprep.subr.mxu0 0.0
    %3089 = vmatpush1.msra.mxu0 0.0
    %3090 = vmatprep.subr.mxu0 0.0
    %3091 = vmatpush1.msra.mxu0 0.0
    %3092 = vmatprep.subr.mxu0 0.0
    %3093 = vmatpush1.msra.mxu0 0.0
    %3094 = vmatprep.subr.mxu0 0.0
    %3095 = vmatpush1.msra.mxu0 0.0
    %3096 = vmatprep.subr.mxu0 0.0
    %3097 = vmatpush1.msra.mxu0 0.0
    %3098 = vmatprep.subr.mxu0 0.0
    %3099 = vmatpush1.msra.mxu0 0.0
    %3100 = vmatprep.subr.mxu0 0.0
    %3101 = vmatpush1.msra.mxu0 0.0
    %3102 = vmatprep.subr.mxu0 0.0
    %3103 = vmatpush1.msra.mxu0 0.0
    %3104 = vmatprep.mubr.f32.mxu0 0.0
    %3105 = vmatmul.mubr.f32.gmra.mrb[0].mxu0 %v3038
    %v3106 = vpop.f32.mrb[0].mxu0
    %v3107 = vadd.f32 0.0, %v3106
    %v3108 = vpop.f32.mrb[0].mxu0
    %3109 = vdwg.mxu0
    %v3111 = vrot.slane %v3107, 6
    %v3112 = vrot.slane %v3107, 7
    %v3115 = vadd.f32 %v2736, %v3111
    %v3116 = vadd.f32 %v2741, %v3112
    %v3117 = vxor.u32 %v3115, 2147483648
    %v3118 = vxor.u32 %v3116, 2147483648
    %v3119 = vmul.f32 %v3117, 1.442695
    %v3120 = vpow.pop %v3119
    %v3121 = vmul.f32 %v3118, 1.442695
    %v3122 = vpow.pop %v3121
    %v3123 = vadd.f32 %v3120, 1.0
    %v3124 = vadd.f32 %v3122, 1.0
    %v3125 = vrcp.pop %v3123
    %v3126 = vmul.f32 1.0, %v3125
    %v3127 = vrcp.pop %v3124
    %v3128 = vmul.f32 1.0, %v3127
    %v3129 = vtanh.pop %v3115
    %v3130 = vtanh.pop %v3116
    %v3133 = vrot.slane %v3009, 7
    %v3134 = vrot.slane %v3010, 7
    %v3137 = vmul.f32 %v3126, %v3133
    %v3138 = vmul.f32 %v3128, %v3134
    %3141 = vrot.lane.b32.xlu0 %v3129, 64
    %v3142 = vpop.permute.xlu0 %3141
    %3143 = vrot.lane.b32.xlu0 %v3130, 64
    %v3144 = vpop.permute.xlu0 %3143
    %v3147 = vmul.f32 %v3126, %v3142
    %v3148 = vmul.f32 %v3128, %v3144
    %3151 = vrot.lane.b32.xlu0 %v3147, 32
    %v3152 = vpop.permute.xlu0 %3151
    %3153 = vrot.lane.b32.xlu0 %v3148, 32
    %v3154 = vpop.permute.xlu0 %3153
    %v3157 = vadd.f32 %v3137, %v3152
    %v3158 = vadd.f32 %v3138, %v3154
    %v3159 = vtanh.pop %v3157
    %v3160 = vtanh.pop %v3158
    %3163 = vrot.lane.b32.xlu0 %v3159, 64
    %v3164 = vpop.permute.xlu0 %3163
    %3165 = vrot.lane.b32.xlu0 %v3160, 64
    %v3166 = vpop.permute.xlu0 %3165
    %v3169 = vmul.f32 %v3126, %v3164
    %v3170 = vmul.f32 %v3128, %v3166
    %3172 = vrot.lane.b32.xlu0 %v3169, 32
    %v3173 = vpop.permute.xlu0 %3172
    %vm3175 = vcmask 256002
    %3176 = vst.msk [vmem:[#allocation2] sm:$0x4] %vm3175, %v3173
    %3178 = vrot.lane.b32.xlu0 %v3170, 32
    %v3179 = vpop.permute.xlu0 %3178
    %3181 = vst.msk [vmem:[#allocation2 + $0x8] sm:$0x4] %vm3175, %v3179
    %v3182 = vrot.slane %v3169, 2
    %v3183 = vrot.slane %v3170, 1
    %v3184 = vsel %vm2887, %v3183, %v3182
    %3185 = vrot.lane.b32.xlu0 %v3184, 32
    %v3186 = vpop.permute.xlu0 %3185
    %v3187 = vsel %vm242, %v3186, 0
    %3189 = vmatprep.subr.mxu0 0.0
    %3190 = vmatpush1.msra.mxu0 %v2744
    %3191 = vmatprep.subr.mxu0 0.0
    %3192 = vmatpush1.msra.mxu0 %v2745
    %3193 = vmatprep.subr.mxu0 0.0
    %3194 = vmatpush1.msra.mxu0 %v2746
    %3195 = vmatprep.subr.mxu0 0.0
    %3196 = vmatpush1.msra.mxu0 %v2747
    %3197 = vmatprep.subr.mxu0 0.0
    %3198 = vmatpush1.msra.mxu0 0.0
    %3199 = vmatprep.subr.mxu0 0.0
    %3200 = vmatpush1.msra.mxu0 0.0
    %3201 = vmatprep.subr.mxu0 0.0
    %3202 = vmatpush1.msra.mxu0 0.0
    %3203 = vmatprep.subr.mxu0 0.0
    %3204 = vmatpush1.msra.mxu0 0.0
    %3205 = vmatprep.subr.mxu0 0.0
    %3206 = vmatpush1.msra.mxu0 0.0
    %3207 = vmatprep.subr.mxu0 0.0
    %3208 = vmatpush1.msra.mxu0 0.0
    %3209 = vmatprep.subr.mxu0 0.0
    %3210 = vmatpush1.msra.mxu0 0.0
    %3211 = vmatprep.subr.mxu0 0.0
    %3212 = vmatpush1.msra.mxu0 0.0
    %3213 = vmatprep.subr.mxu0 0.0
    %3214 = vmatpush1.msra.mxu0 0.0
    %3215 = vmatprep.subr.mxu0 0.0
    %3216 = vmatpush1.msra.mxu0 0.0
    %3217 = vmatprep.subr.mxu0 0.0
    %3218 = vmatpush1.msra.mxu0 0.0
    %3219 = vmatprep.subr.mxu0 0.0
    %3220 = vmatpush1.msra.mxu0 0.0
    %3221 = vmatprep.subr.mxu0 0.0
    %3222 = vmatpush1.msra.mxu0 0.0
    %3223 = vmatprep.subr.mxu0 0.0
    %3224 = vmatpush1.msra.mxu0 0.0
    %3225 = vmatprep.subr.mxu0 0.0
    %3226 = vmatpush1.msra.mxu0 0.0
    %3227 = vmatprep.subr.mxu0 0.0
    %3228 = vmatpush1.msra.mxu0 0.0
    %3229 = vmatprep.subr.mxu0 0.0
    %3230 = vmatpush1.msra.mxu0 0.0
    %3231 = vmatprep.subr.mxu0 0.0
    %3232 = vmatpush1.msra.mxu0 0.0
    %3233 = vmatprep.subr.mxu0 0.0
    %3234 = vmatpush1.msra.mxu0 0.0
    %3235 = vmatprep.subr.mxu0 0.0
    %3236 = vmatpush1.msra.mxu0 0.0
    %3237 = vmatprep.subr.mxu0 0.0
    %3238 = vmatpush1.msra.mxu0 0.0
    %3239 = vmatprep.subr.mxu0 0.0
    %3240 = vmatpush1.msra.mxu0 0.0
    %3241 = vmatprep.subr.mxu0 0.0
    %3242 = vmatpush1.msra.mxu0 0.0
    %3243 = vmatprep.subr.mxu0 0.0
    %3244 = vmatpush1.msra.mxu0 0.0
    %3245 = vmatprep.subr.mxu0 0.0
    %3246 = vmatpush1.msra.mxu0 0.0
    %3247 = vmatprep.subr.mxu0 0.0
    %3248 = vmatpush1.msra.mxu0 0.0
    %3249 = vmatprep.subr.mxu0 0.0
    %3250 = vmatpush1.msra.mxu0 0.0
    %3251 = vmatprep.subr.mxu0 0.0
    %3252 = vmatpush1.msra.mxu0 0.0
    %3253 = vmatprep.mubr.f32.mxu0 0.0
    %3254 = vmatmul.mubr.f32.gmra.mrb[0].mxu0 %v3187
    %v3255 = vpop.f32.mrb[0].mxu0
    %v3256 = vadd.f32 0.0, %v3255
    %v3257 = vpop.f32.mrb[0].mxu0
    %3258 = vdwg.mxu0
    %v3260 = vrot.slane %v3256, 5
    %v3261 = vrot.slane %v3256, 6
    %v3264 = vadd.f32 %v2736, %v3260
    %v3265 = vadd.f32 %v2741, %v3261
    %v3266 = vxor.u32 %v3264, 2147483648
    %v3267 = vxor.u32 %v3265, 2147483648
    %v3268 = vmul.f32 %v3266, 1.442695
    %v3269 = vpow.pop %v3268
    %v3270 = vmul.f32 %v3267, 1.442695
    %v3271 = vpow.pop %v3270
    %v3272 = vadd.f32 %v3269, 1.0
    %v3273 = vadd.f32 %v3271, 1.0
    %v3274 = vrcp.pop %v3272
    %v3275 = vmul.f32 1.0, %v3274
    %v3276 = vrcp.pop %v3273
    %v3277 = vmul.f32 1.0, %v3276
    %v3278 = vtanh.pop %v3264
    %v3279 = vtanh.pop %v3265
    %v3282 = vrot.slane %v3157, 7
    %v3283 = vrot.slane %v3158, 7
    %v3286 = vmul.f32 %v3275, %v3282
    %v3287 = vmul.f32 %v3277, %v3283
    %3290 = vrot.lane.b32.xlu0 %v3278, 64
    %v3291 = vpop.permute.xlu0 %3290
    %3292 = vrot.lane.b32.xlu0 %v3279, 64
    %v3293 = vpop.permute.xlu0 %3292
    %v3296 = vmul.f32 %v3275, %v3291
    %v3297 = vmul.f32 %v3277, %v3293
    %3300 = vrot.lane.b32.xlu0 %v3296, 32
    %v3301 = vpop.permute.xlu0 %3300
    %3302 = vrot.lane.b32.xlu0 %v3297, 32
    %v3303 = vpop.permute.xlu0 %3302
    %v3306 = vadd.f32 %v3286, %v3301
    %v3307 = vadd.f32 %v3287, %v3303
    %v3308 = vtanh.pop %v3306
    %v3309 = vtanh.pop %v3307
    %3312 = vrot.lane.b32.xlu0 %v3308, 64
    %v3313 = vpop.permute.xlu0 %3312
    %3314 = vrot.lane.b32.xlu0 %v3309, 64
    %v3315 = vpop.permute.xlu0 %3314
    %v3318 = vmul.f32 %v3275, %v3313
    %v3319 = vmul.f32 %v3277, %v3315
    %3321 = vrot.lane.b32.xlu0 %v3318, 32
    %v3322 = vpop.permute.xlu0 %3321
    %vm3324 = vcmask 257027
    %3325 = vst.msk [vmem:[#allocation2] sm:$0x8] %vm3324, %v3322
    %3327 = vrot.lane.b32.xlu0 %v3319, 32
    %v3328 = vpop.permute.xlu0 %3327
    %3330 = vst.msk [vmem:[#allocation2 + $0x8] sm:$0x8] %vm3324, %v3328
    %v3331 = vrot.slane %v3318, 3
    %v3332 = vrot.slane %v3319, 2
    %v3333 = vsel %vm2887, %v3332, %v3331
    %3334 = vrot.lane.b32.xlu0 %v3333, 32
    %v3335 = vpop.permute.xlu0 %3334
    %v3336 = vsel %vm242, %v3335, 0
    %3338 = vmatprep.subr.mxu0 0.0
    %3339 = vmatpush1.msra.mxu0 %v2744
    %3340 = vmatprep.subr.mxu0 0.0
    %3341 = vmatpush1.msra.mxu0 %v2745
    %3342 = vmatprep.subr.mxu0 0.0
    %3343 = vmatpush1.msra.mxu0 %v2746
    %3344 = vmatprep.subr.mxu0 0.0
    %3345 = vmatpush1.msra.mxu0 %v2747
    %3346 = vmatprep.subr.mxu0 0.0
    %3347 = vmatpush1.msra.mxu0 0.0
    %3348 = vmatprep.subr.mxu0 0.0
    %3349 = vmatpush1.msra.mxu0 0.0
    %3350 = vmatprep.subr.mxu0 0.0
    %3351 = vmatpush1.msra.mxu0 0.0
    %3352 = vmatprep.subr.mxu0 0.0
    %3353 = vmatpush1.msra.mxu0 0.0
    %3354 = vmatprep.subr.mxu0 0.0
    %3355 = vmatpush1.msra.mxu0 0.0
    %3356 = vmatprep.subr.mxu0 0.0
    %3357 = vmatpush1.msra.mxu0 0.0
    %3358 = vmatprep.subr.mxu0 0.0
    %3359 = vmatpush1.msra.mxu0 0.0
    %3360 = vmatprep.subr.mxu0 0.0
    %3361 = vmatpush1.msra.mxu0 0.0
    %3362 = vmatprep.subr.mxu0 0.0
    %3363 = vmatpush1.msra.mxu0 0.0
    %3364 = vmatprep.subr.mxu0 0.0
    %3365 = vmatpush1.msra.mxu0 0.0
    %3366 = vmatprep.subr.mxu0 0.0
    %3367 = vmatpush1.msra.mxu0 0.0
    %3368 = vmatprep.subr.mxu0 0.0
    %3369 = vmatpush1.msra.mxu0 0.0
    %3370 = vmatprep.subr.mxu0 0.0
    %3371 = vmatpush1.msra.mxu0 0.0
    %3372 = vmatprep.subr.mxu0 0.0
    %3373 = vmatpush1.msra.mxu0 0.0
    %3374 = vmatprep.subr.mxu0 0.0
    %3375 = vmatpush1.msra.mxu0 0.0
    %3376 = vmatprep.subr.mxu0 0.0
    %3377 = vmatpush1.msra.mxu0 0.0
    %3378 = vmatprep.subr.mxu0 0.0
    %3379 = vmatpush1.msra.mxu0 0.0
    %3380 = vmatprep.subr.mxu0 0.0
    %3381 = vmatpush1.msra.mxu0 0.0
    %3382 = vmatprep.subr.mxu0 0.0
    %3383 = vmatpush1.msra.mxu0 0.0
    %3384 = vmatprep.subr.mxu0 0.0
    %3385 = vmatpush1.msra.mxu0 0.0
    %3386 = vmatprep.subr.mxu0 0.0
    %3387 = vmatpush1.msra.mxu0 0.0
    %3388 = vmatprep.subr.mxu0 0.0
    %3389 = vmatpush1.msra.mxu0 0.0
    %3390 = vmatprep.subr.mxu0 0.0
    %3391 = vmatpush1.msra.mxu0 0.0
    %3392 = vmatprep.subr.mxu0 0.0
    %3393 = vmatpush1.msra.mxu0 0.0
    %3394 = vmatprep.subr.mxu0 0.0
    %3395 = vmatpush1.msra.mxu0 0.0
    %3396 = vmatprep.subr.mxu0 0.0
    %3397 = vmatpush1.msra.mxu0 0.0
    %3398 = vmatprep.subr.mxu0 0.0
    %3399 = vmatpush1.msra.mxu0 0.0
    %3400 = vmatprep.subr.mxu0 0.0
    %3401 = vmatpush1.msra.mxu0 0.0
    %3402 = vmatprep.mubr.f32.mxu0 0.0
    %3403 = vmatmul.mubr.f32.gmra.mrb[0].mxu0 %v3336
    %v3404 = vpop.f32.mrb[0].mxu0
    %v3405 = vadd.f32 0.0, %v3404
    %v3406 = vpop.f32.mrb[0].mxu0
    %3407 = vdwg.mxu0
    %v3409 = vrot.slane %v3405, 4
    %v3410 = vrot.slane %v3405, 5
    %v3413 = vadd.f32 %v2736, %v3409
    %v3414 = vadd.f32 %v2741, %v3410
    %v3415 = vxor.u32 %v3413, 2147483648
    %v3416 = vxor.u32 %v3414, 2147483648
    %v3417 = vmul.f32 %v3415, 1.442695
    %v3418 = vpow.pop %v3417
    %v3419 = vmul.f32 %v3416, 1.442695
    %v3420 = vpow.pop %v3419
    %v3421 = vadd.f32 %v3418, 1.0
    %v3422 = vadd.f32 %v3420, 1.0
    %v3423 = vrcp.pop %v3421
    %v3424 = vmul.f32 1.0, %v3423
    %v3425 = vrcp.pop %v3422
    %v3426 = vmul.f32 1.0, %v3425
    %v3427 = vtanh.pop %v3413
    %v3428 = vtanh.pop %v3414
    %v3431 = vrot.slane %v3306, 7
    %v3432 = vrot.slane %v3307, 7
    %v3435 = vmul.f32 %v3424, %v3431
    %v3436 = vmul.f32 %v3426, %v3432
    %3439 = vrot.lane.b32.xlu0 %v3427, 64
    %v3440 = vpop.permute.xlu0 %3439
    %3441 = vrot.lane.b32.xlu0 %v3428, 64
    %v3442 = vpop.permute.xlu0 %3441
    %v3445 = vmul.f32 %v3424, %v3440
    %v3446 = vmul.f32 %v3426, %v3442
    %3449 = vrot.lane.b32.xlu0 %v3445, 32
    %v3450 = vpop.permute.xlu0 %3449
    %3451 = vrot.lane.b32.xlu0 %v3446, 32
    %v3452 = vpop.permute.xlu0 %3451
    %v3455 = vadd.f32 %v3435, %v3450
    %v3456 = vadd.f32 %v3436, %v3452
    %v3457 = vtanh.pop %v3455
    %v3458 = vtanh.pop %v3456
    %3461 = vrot.lane.b32.xlu0 %v3457, 64
    %v3462 = vpop.permute.xlu0 %3461
    %3463 = vrot.lane.b32.xlu0 %v3458, 64
    %v3464 = vpop.permute.xlu0 %3463
    %v3467 = vmul.f32 %v3424, %v3462
    %v3468 = vmul.f32 %v3426, %v3464
    %3470 = vrot.lane.b32.xlu0 %v3467, 32
    %v3471 = vpop.permute.xlu0 %3470
    %vm3473 = vcmask 258052
    %3474 = vst.msk [vmem:[#allocation2] sm:$0x10] %vm3473, %v3471
    %3476 = vrot.lane.b32.xlu0 %v3468, 32
    %v3477 = vpop.permute.xlu0 %3476
    %3479 = vst.msk [vmem:[#allocation2 + $0x8] sm:$0x10] %vm3473, %v3477
    %v3480 = vrot.slane %v3467, 4
    %v3481 = vrot.slane %v3468, 3
    %v3482 = vsel %vm2887, %v3481, %v3480
    %3483 = vrot.lane.b32.xlu0 %v3482, 32
    %v3484 = vpop.permute.xlu0 %3483
    %v3485 = vsel %vm242, %v3484, 0
    %3487 = vmatprep.subr.mxu0 0.0
    %3488 = vmatpush1.msra.mxu0 %v2744
    %3489 = vmatprep.subr.mxu0 0.0
    %3490 = vmatpush1.msra.mxu0 %v2745
    %3491 = vmatprep.subr.mxu0 0.0
    %3492 = vmatpush1.msra.mxu0 %v2746
    %3493 = vmatprep.subr.mxu0 0.0
    %3494 = vmatpush1.msra.mxu0 %v2747
    %3495 = vmatprep.subr.mxu0 0.0
    %3496 = vmatpush1.msra.mxu0 0.0
    %3497 = vmatprep.subr.mxu0 0.0
    %3498 = vmatpush1.msra.mxu0 0.0
    %3499 = vmatprep.subr.mxu0 0.0
    %3500 = vmatpush1.msra.mxu0 0.0
    %3501 = vmatprep.subr.mxu0 0.0
    %3502 = vmatpush1.msra.mxu0 0.0
    %3503 = vmatprep.subr.mxu0 0.0
    %3504 = vmatpush1.msra.mxu0 0.0
    %3505 = vmatprep.subr.mxu0 0.0
    %3506 = vmatpush1.msra.mxu0 0.0
    %3507 = vmatprep.subr.mxu0 0.0
    %3508 = vmatpush1.msra.mxu0 0.0
    %3509 = vmatprep.subr.mxu0 0.0
    %3510 = vmatpush1.msra.mxu0 0.0
    %3511 = vmatprep.subr.mxu0 0.0
    %3512 = vmatpush1.msra.mxu0 0.0
    %3513 = vmatprep.subr.mxu0 0.0
    %3514 = vmatpush1.msra.mxu0 0.0
    %3515 = vmatprep.subr.mxu0 0.0
    %3516 = vmatpush1.msra.mxu0 0.0
    %3517 = vmatprep.subr.mxu0 0.0
    %3518 = vmatpush1.msra.mxu0 0.0
    %3519 = vmatprep.subr.mxu0 0.0
    %3520 = vmatpush1.msra.mxu0 0.0
    %3521 = vmatprep.subr.mxu0 0.0
    %3522 = vmatpush1.msra.mxu0 0.0
    %3523 = vmatprep.subr.mxu0 0.0
    %3524 = vmatpush1.msra.mxu0 0.0
    %3525 = vmatprep.subr.mxu0 0.0
    %3526 = vmatpush1.msra.mxu0 0.0
    %3527 = vmatprep.subr.mxu0 0.0
    %3528 = vmatpush1.msra.mxu0 0.0
    %3529 = vmatprep.subr.mxu0 0.0
    %3530 = vmatpush1.msra.mxu0 0.0
    %3531 = vmatprep.subr.mxu0 0.0
    %3532 = vmatpush1.msra.mxu0 0.0
    %3533 = vmatprep.subr.mxu0 0.0
    %3534 = vmatpush1.msra.mxu0 0.0
    %3535 = vmatprep.subr.mxu0 0.0
    %3536 = vmatpush1.msra.mxu0 0.0
    %3537 = vmatprep.subr.mxu0 0.0
    %3538 = vmatpush1.msra.mxu0 0.0
    %3539 = vmatprep.subr.mxu0 0.0
    %3540 = vmatpush1.msra.mxu0 0.0
    %3541 = vmatprep.subr.mxu0 0.0
    %3542 = vmatpush1.msra.mxu0 0.0
    %3543 = vmatprep.subr.mxu0 0.0
    %3544 = vmatpush1.msra.mxu0 0.0
    %3545 = vmatprep.subr.mxu0 0.0
    %3546 = vmatpush1.msra.mxu0 0.0
    %3547 = vmatprep.subr.mxu0 0.0
    %3548 = vmatpush1.msra.mxu0 0.0
    %3549 = vmatprep.subr.mxu0 0.0
    %3550 = vmatpush1.msra.mxu0 0.0
    %3551 = vmatprep.mubr.f32.mxu0 0.0
    %3552 = vmatmul.mubr.f32.gmra.mrb[0].mxu0 %v3485
    %v3553 = vpop.f32.mrb[0].mxu0
    %v3554 = vadd.f32 0.0, %v3553
    %v3555 = vpop.f32.mrb[0].mxu0
    %3556 = vdwg.mxu0
    %v3558 = vrot.slane %v3554, 3
    %v3559 = vrot.slane %v3554, 4
    %v3562 = vadd.f32 %v2736, %v3558
    %v3563 = vadd.f32 %v2741, %v3559
    %v3564 = vxor.u32 %v3562, 2147483648
    %v3565 = vxor.u32 %v3563, 2147483648
    %v3566 = vmul.f32 %v3564, 1.442695
    %v3567 = vpow.pop %v3566
    %v3568 = vmul.f32 %v3565, 1.442695
    %v3569 = vpow.pop %v3568
    %v3570 = vadd.f32 %v3567, 1.0
    %v3571 = vadd.f32 %v3569, 1.0
    %v3572 = vrcp.pop %v3570
    %v3573 = vmul.f32 1.0, %v3572
    %v3574 = vrcp.pop %v3571
    %v3575 = vmul.f32 1.0, %v3574
    %v3576 = vtanh.pop %v3562
    %v3577 = vtanh.pop %v3563
    %v3580 = vrot.slane %v3455, 7
    %v3581 = vrot.slane %v3456, 7
    %v3584 = vmul.f32 %v3573, %v3580
    %v3585 = vmul.f32 %v3575, %v3581
    %3588 = vrot.lane.b32.xlu0 %v3576, 64
    %v3589 = vpop.permute.xlu0 %3588
    %3590 = vrot.lane.b32.xlu0 %v3577, 64
    %v3591 = vpop.permute.xlu0 %3590
    %v3594 = vmul.f32 %v3573, %v3589
    %v3595 = vmul.f32 %v3575, %v3591
    %3598 = vrot.lane.b32.xlu0 %v3594, 32
    %v3599 = vpop.permute.xlu0 %3598
    %3600 = vrot.lane.b32.xlu0 %v3595, 32
    %v3601 = vpop.permute.xlu0 %3600
    %v3604 = vadd.f32 %v3584, %v3599
    %v3605 = vadd.f32 %v3585, %v3601
    %v3606 = vtanh.pop %v3604
    %v3607 = vtanh.pop %v3605
    %3610 = vrot.lane.b32.xlu0 %v3606, 64
    %v3611 = vpop.permute.xlu0 %3610
    %3612 = vrot.lane.b32.xlu0 %v3607, 64
    %v3613 = vpop.permute.xlu0 %3612
    %v3616 = vmul.f32 %v3573, %v3611
    %v3617 = vmul.f32 %v3575, %v3613
    %3619 = vrot.lane.b32.xlu0 %v3616, 32
    %v3620 = vpop.permute.xlu0 %3619
    %vm3622 = vcmask 259077
    %3623 = vst.msk [vmem:[#allocation2] sm:$0x20] %vm3622, %v3620
    %3625 = vrot.lane.b32.xlu0 %v3617, 32
    %v3626 = vpop.permute.xlu0 %3625
    %3628 = vst.msk [vmem:[#allocation2 + $0x8] sm:$0x20] %vm3622, %v3626
    %v3629 = vrot.slane %v3616, 5
    %v3630 = vrot.slane %v3617, 4
    %v3631 = vsel %vm2887, %v3630, %v3629
    %3632 = vrot.lane.b32.xlu0 %v3631, 32
    %v3633 = vpop.permute.xlu0 %3632
    %v3634 = vsel %vm242, %v3633, 0
    %3636 = vmatprep.subr.mxu0 0.0
    %3637 = vmatpush1.msra.mxu0 %v2744
    %3638 = vmatprep.subr.mxu0 0.0
    %3639 = vmatpush1.msra.mxu0 %v2745
    %3640 = vmatprep.subr.mxu0 0.0
    %3641 = vmatpush1.msra.mxu0 %v2746
    %3642 = vmatprep.subr.mxu0 0.0
    %3643 = vmatpush1.msra.mxu0 %v2747
    %3644 = vmatprep.subr.mxu0 0.0
    %3645 = vmatpush1.msra.mxu0 0.0
    %3646 = vmatprep.subr.mxu0 0.0
    %3647 = vmatpush1.msra.mxu0 0.0
    %3648 = vmatprep.subr.mxu0 0.0
    %3649 = vmatpush1.msra.mxu0 0.0
    %3650 = vmatprep.subr.mxu0 0.0
    %3651 = vmatpush1.msra.mxu0 0.0
    %3652 = vmatprep.subr.mxu0 0.0
    %3653 = vmatpush1.msra.mxu0 0.0
    %3654 = vmatprep.subr.mxu0 0.0
    %3655 = vmatpush1.msra.mxu0 0.0
    %3656 = vmatprep.subr.mxu0 0.0
    %3657 = vmatpush1.msra.mxu0 0.0
    %3658 = vmatprep.subr.mxu0 0.0
    %3659 = vmatpush1.msra.mxu0 0.0
    %3660 = vmatprep.subr.mxu0 0.0
    %3661 = vmatpush1.msra.mxu0 0.0
    %3662 = vmatprep.subr.mxu0 0.0
    %3663 = vmatpush1.msra.mxu0 0.0
    %3664 = vmatprep.subr.mxu0 0.0
    %3665 = vmatpush1.msra.mxu0 0.0
    %3666 = vmatprep.subr.mxu0 0.0
    %3667 = vmatpush1.msra.mxu0 0.0
    %3668 = vmatprep.subr.mxu0 0.0
    %3669 = vmatpush1.msra.mxu0 0.0
    %3670 = vmatprep.subr.mxu0 0.0
    %3671 = vmatpush1.msra.mxu0 0.0
    %3672 = vmatprep.subr.mxu0 0.0
    %3673 = vmatpush1.msra.mxu0 0.0
    %3674 = vmatprep.subr.mxu0 0.0
    %3675 = vmatpush1.msra.mxu0 0.0
    %3676 = vmatprep.subr.mxu0 0.0
    %3677 = vmatpush1.msra.mxu0 0.0
    %3678 = vmatprep.subr.mxu0 0.0
    %3679 = vmatpush1.msra.mxu0 0.0
    %3680 = vmatprep.subr.mxu0 0.0
    %3681 = vmatpush1.msra.mxu0 0.0
    %3682 = vmatprep.subr.mxu0 0.0
    %3683 = vmatpush1.msra.mxu0 0.0
    %3684 = vmatprep.subr.mxu0 0.0
    %3685 = vmatpush1.msra.mxu0 0.0
    %3686 = vmatprep.subr.mxu0 0.0
    %3687 = vmatpush1.msra.mxu0 0.0
    %3688 = vmatprep.subr.mxu0 0.0
    %3689 = vmatpush1.msra.mxu0 0.0
    %3690 = vmatprep.subr.mxu0 0.0
    %3691 = vmatpush1.msra.mxu0 0.0
    %3692 = vmatprep.subr.mxu0 0.0
    %3693 = vmatpush1.msra.mxu0 0.0
    %3694 = vmatprep.subr.mxu0 0.0
    %3695 = vmatpush1.msra.mxu0 0.0
    %3696 = vmatprep.subr.mxu0 0.0
    %3697 = vmatpush1.msra.mxu0 0.0
    %3698 = vmatprep.subr.mxu0 0.0
    %3699 = vmatpush1.msra.mxu0 0.0
    %3700 = vmatprep.mubr.f32.mxu0 0.0
    %3701 = vmatmul.mubr.f32.gmra.mrb[0].mxu0 %v3634
    %v3702 = vpop.f32.mrb[0].mxu0
    %v3703 = vadd.f32 0.0, %v3702
    %v3704 = vpop.f32.mrb[0].mxu0
    %3705 = vdwg.mxu0
    %v3707 = vrot.slane %v3703, 2
    %v3708 = vrot.slane %v3703, 3
    %v3711 = vadd.f32 %v2736, %v3707
    %v3712 = vadd.f32 %v2741, %v3708
    %v3713 = vxor.u32 %v3711, 2147483648
    %v3714 = vxor.u32 %v3712, 2147483648
    %v3715 = vmul.f32 %v3713, 1.442695
    %v3716 = vpow.pop %v3715
    %v3717 = vmul.f32 %v3714, 1.442695
    %v3718 = vpow.pop %v3717
    %v3719 = vadd.f32 %v3716, 1.0
    %v3720 = vadd.f32 %v3718, 1.0
    %v3721 = vrcp.pop %v3719
    %v3722 = vmul.f32 1.0, %v3721
    %v3723 = vrcp.pop %v3720
    %v3724 = vmul.f32 1.0, %v3723
    %v3725 = vtanh.pop %v3711
    %v3726 = vtanh.pop %v3712
    %v3729 = vrot.slane %v3604, 7
    %v3730 = vrot.slane %v3605, 7
    %v3733 = vmul.f32 %v3722, %v3729
    %v3734 = vmul.f32 %v3724, %v3730
    %3737 = vrot.lane.b32.xlu0 %v3725, 64
    %v3738 = vpop.permute.xlu0 %3737
    %3739 = vrot.lane.b32.xlu0 %v3726, 64
    %v3740 = vpop.permute.xlu0 %3739
    %v3743 = vmul.f32 %v3722, %v3738
    %v3744 = vmul.f32 %v3724, %v3740
    %3747 = vrot.lane.b32.xlu0 %v3743, 32
    %v3748 = vpop.permute.xlu0 %3747
    %3749 = vrot.lane.b32.xlu0 %v3744, 32
    %v3750 = vpop.permute.xlu0 %3749
    %v3753 = vadd.f32 %v3733, %v3748
    %v3754 = vadd.f32 %v3734, %v3750
    %v3755 = vtanh.pop %v3753
    %v3756 = vtanh.pop %v3754
    %3759 = vrot.lane.b32.xlu0 %v3755, 64
    %v3760 = vpop.permute.xlu0 %3759
    %3761 = vrot.lane.b32.xlu0 %v3756, 64
    %v3762 = vpop.permute.xlu0 %3761
    %v3765 = vmul.f32 %v3722, %v3760
    %v3766 = vmul.f32 %v3724, %v3762
    %3768 = vrot.lane.b32.xlu0 %v3765, 32
    %v3769 = vpop.permute.xlu0 %3768
    %vm3771 = vcmask 260102
    %3772 = vst.msk [vmem:[#allocation2] sm:$0x40] %vm3771, %v3769
    %3774 = vrot.lane.b32.xlu0 %v3766, 32
    %v3775 = vpop.permute.xlu0 %3774
    %3777 = vst.msk [vmem:[#allocation2 + $0x8] sm:$0x40] %vm3771, %v3775
    %v3778 = vrot.slane %v3765, 6
    %v3779 = vrot.slane %v3766, 5
    %v3780 = vsel %vm2887, %v3779, %v3778
    %3781 = vrot.lane.b32.xlu0 %v3780, 32
    %v3782 = vpop.permute.xlu0 %3781
    %v3783 = vsel %vm242, %v3782, 0
    %3785 = vmatprep.subr.mxu0 0.0
    %3786 = vmatpush1.msra.mxu0 %v2744
    %3787 = vmatprep.subr.mxu0 0.0
    %3788 = vmatpush1.msra.mxu0 %v2745
    %3789 = vmatprep.subr.mxu0 0.0
    %3790 = vmatpush1.msra.mxu0 %v2746
    %3791 = vmatprep.subr.mxu0 0.0
    %3792 = vmatpush1.msra.mxu0 %v2747
    %3793 = vmatprep.subr.mxu0 0.0
    %3794 = vmatpush1.msra.mxu0 0.0
    %3795 = vmatprep.subr.mxu0 0.0
    %3796 = vmatpush1.msra.mxu0 0.0
    %3797 = vmatprep.subr.mxu0 0.0
    %3798 = vmatpush1.msra.mxu0 0.0
    %3799 = vmatprep.subr.mxu0 0.0
    %3800 = vmatpush1.msra.mxu0 0.0
    %3801 = vmatprep.subr.mxu0 0.0
    %3802 = vmatpush1.msra.mxu0 0.0
    %3803 = vmatprep.subr.mxu0 0.0
    %3804 = vmatpush1.msra.mxu0 0.0
    %3805 = vmatprep.subr.mxu0 0.0
    %3806 = vmatpush1.msra.mxu0 0.0
    %3807 = vmatprep.subr.mxu0 0.0
    %3808 = vmatpush1.msra.mxu0 0.0
    %3809 = vmatprep.subr.mxu0 0.0
    %3810 = vmatpush1.msra.mxu0 0.0
    %3811 = vmatprep.subr.mxu0 0.0
    %3812 = vmatpush1.msra.mxu0 0.0
    %3813 = vmatprep.subr.mxu0 0.0
    %3814 = vmatpush1.msra.mxu0 0.0
    %3815 = vmatprep.subr.mxu0 0.0
    %3816 = vmatpush1.msra.mxu0 0.0
    %3817 = vmatprep.subr.mxu0 0.0
    %3818 = vmatpush1.msra.mxu0 0.0
    %3819 = vmatprep.subr.mxu0 0.0
    %3820 = vmatpush1.msra.mxu0 0.0
    %3821 = vmatprep.subr.mxu0 0.0
    %3822 = vmatpush1.msra.mxu0 0.0
    %3823 = vmatprep.subr.mxu0 0.0
    %3824 = vmatpush1.msra.mxu0 0.0
    %3825 = vmatprep.subr.mxu0 0.0
    %3826 = vmatpush1.msra.mxu0 0.0
    %3827 = vmatprep.subr.mxu0 0.0
    %3828 = vmatpush1.msra.mxu0 0.0
    %3829 = vmatprep.subr.mxu0 0.0
    %3830 = vmatpush1.msra.mxu0 0.0
    %3831 = vmatprep.subr.mxu0 0.0
    %3832 = vmatpush1.msra.mxu0 0.0
    %3833 = vmatprep.subr.mxu0 0.0
    %3834 = vmatpush1.msra.mxu0 0.0
    %3835 = vmatprep.subr.mxu0 0.0
    %3836 = vmatpush1.msra.mxu0 0.0
    %3837 = vmatprep.subr.mxu0 0.0
    %3838 = vmatpush1.msra.mxu0 0.0
    %3839 = vmatprep.subr.mxu0 0.0
    %3840 = vmatpush1.msra.mxu0 0.0
    %3841 = vmatprep.subr.mxu0 0.0
    %3842 = vmatpush1.msra.mxu0 0.0
    %3843 = vmatprep.subr.mxu0 0.0
    %3844 = vmatpush1.msra.mxu0 0.0
    %3845 = vmatprep.subr.mxu0 0.0
    %3846 = vmatpush1.msra.mxu0 0.0
    %3847 = vmatprep.subr.mxu0 0.0
    %3848 = vmatpush1.msra.mxu0 0.0
    %3849 = vmatprep.mubr.f32.mxu0 0.0
    %3850 = vmatmul.mubr.f32.gmra.mrb[0].mxu0 %v3783
    %v3851 = vpop.f32.mrb[0].mxu0
    %v3852 = vadd.f32 0.0, %v3851
    %v3853 = vpop.f32.mrb[0].mxu0
    %3854 = vdwg.mxu0
    %v3856 = vrot.slane %v3852, 1
    %v3857 = vrot.slane %v3852, 2
    %v3860 = vadd.f32 %v2736, %v3856
    %v3861 = vadd.f32 %v2741, %v3857
    %v3862 = vxor.u32 %v3860, 2147483648
    %v3863 = vxor.u32 %v3861, 2147483648
    %v3864 = vmul.f32 %v3862, 1.442695
    %v3865 = vpow.pop %v3864
    %v3866 = vmul.f32 %v3863, 1.442695
    %v3867 = vpow.pop %v3866
    %v3868 = vadd.f32 %v3865, 1.0
    %v3869 = vadd.f32 %v3867, 1.0
    %v3870 = vrcp.pop %v3868
    %v3871 = vmul.f32 1.0, %v3870
    %v3872 = vrcp.pop %v3869
    %v3873 = vmul.f32 1.0, %v3872
    %v3874 = vtanh.pop %v3860
    %v3875 = vtanh.pop %v3861
    %v3878 = vrot.slane %v3753, 7
    %v3879 = vrot.slane %v3754, 7
    %v3882 = vmul.f32 %v3871, %v3878
    %v3883 = vmul.f32 %v3873, %v3879
    %3886 = vrot.lane.b32.xlu0 %v3874, 64
    %v3887 = vpop.permute.xlu0 %3886
    %3888 = vrot.lane.b32.xlu0 %v3875, 64
    %v3889 = vpop.permute.xlu0 %3888
    %v3892 = vmul.f32 %v3871, %v3887
    %v3893 = vmul.f32 %v3873, %v3889
    %3896 = vrot.lane.b32.xlu0 %v3892, 32
    %v3897 = vpop.permute.xlu0 %3896
    %3898 = vrot.lane.b32.xlu0 %v3893, 32
    %v3899 = vpop.permute.xlu0 %3898
    %v3902 = vadd.f32 %v3882, %v3897
    %v3903 = vadd.f32 %v3883, %v3899
    %v3904 = vtanh.pop %v3902
    %v3905 = vtanh.pop %v3903
    %3908 = vrot.lane.b32.xlu0 %v3904, 64
    %v3909 = vpop.permute.xlu0 %3908
    %3910 = vrot.lane.b32.xlu0 %v3905, 64
    %v3911 = vpop.permute.xlu0 %3910
    %v3914 = vmul.f32 %v3871, %v3909
    %v3915 = vmul.f32 %v3873, %v3911
    %3917 = vrot.lane.b32.xlu0 %v3914, 32
    %v3918 = vpop.permute.xlu0 %3917
    %vm3920 = vcmask 261127
    %3921 = vst.msk [vmem:[#allocation2] sm:$0x80] %vm3920, %v3918
    %3923 = vrot.lane.b32.xlu0 %v3915, 32
    %v3924 = vpop.permute.xlu0 %3923
    %3926 = vst.msk [vmem:[#allocation2 + $0x8] sm:$0x80] %vm3920, %v3924
    %v3927 = vld [vmem:[#allocation2] sm:$0xff]
    %v3928 = vld [vmem:[#allocation2 + $0x8] sm:$0xff]
    %vm3929 = vcmp.gt.f32.partialorder %v3927, 0.0
    %vm3930 = vcmp.gt.f32.partialorder %v3928, 0.0
    %v3931 = vmul.f32 %v3927, 0.01
    %v3932 = vmul.f32 %v3928, 0.01
    %v3933 = vsel %vm3929, %v3927, %v3931
    %v3934 = vsel %vm3930, %v3928, %v3932
    %v3935 = vld [vmem:[%s37] sm:$0xff]
    %v3936 = vld [vmem:[%s37 + $0x8] sm:$0xff]
    %v3937 = vld [vmem:[%s37 + $0x10] sm:$0xff]
    %v3938 = vld [vmem:[%s37 + $0x18] sm:$0xff]
    %v3939 = vld [vmem:[%s37 + $0x20] sm:$0xff]
    %v3940 = vld [vmem:[%s37 + $0x28] sm:$0xff]
    %v3941 = vld [vmem:[%s37 + $0x30] sm:$0xff]
    %v3942 = vld [vmem:[%s37 + $0x38] sm:$0xff]
    %v3944 = vsel %vm242, %v3933, 0
    %v3947 = vsel %vm242, %v3934, 0
    %3949 = vmatprep.subr.mxu0 0.0
    %3950 = vmatpush1.msra.mxu0 %v3939
    %3951 = vmatprep.subr.mxu0 0.0
    %3952 = vmatpush1.msra.mxu0 %v3940
    %3953 = vmatprep.subr.mxu0 0.0
    %3954 = vmatpush1.msra.mxu0 %v3941
    %3955 = vmatprep.subr.mxu0 0.0
    %3956 = vmatpush1.msra.mxu0 %v3942
    %3957 = vmatprep.subr.mxu0 0.0
    %3958 = vmatpush1.msra.mxu0 0.0
    %3959 = vmatprep.subr.mxu0 0.0
    %3960 = vmatpush1.msra.mxu0 0.0
    %3961 = vmatprep.subr.mxu0 0.0
    %3962 = vmatpush1.msra.mxu0 0.0
    %3963 = vmatprep.subr.mxu0 0.0
    %3964 = vmatpush1.msra.mxu0 0.0
    %3965 = vmatprep.subr.mxu0 0.0
    %3966 = vmatpush1.msra.mxu0 0.0
    %3967 = vmatprep.subr.mxu0 0.0
    %3968 = vmatpush1.msra.mxu0 0.0
    %3969 = vmatprep.subr.mxu0 0.0
    %3970 = vmatpush1.msra.mxu0 0.0
    %3971 = vmatprep.subr.mxu0 0.0
    %3972 = vmatpush1.msra.mxu0 0.0
    %3973 = vmatprep.subr.mxu0 0.0
    %3974 = vmatpush1.msra.mxu0 0.0
    %3975 = vmatprep.subr.mxu0 0.0
    %3976 = vmatpush1.msra.mxu0 0.0
    %3977 = vmatprep.subr.mxu0 0.0
    %3978 = vmatpush1.msra.mxu0 0.0
    %3979 = vmatprep.subr.mxu0 0.0
    %3980 = vmatpush1.msra.mxu0 0.0
    %3981 = vmatprep.subr.mxu0 0.0
    %3982 = vmatpush1.msra.mxu0 0.0
    %3983 = vmatprep.subr.mxu0 0.0
    %3984 = vmatpush1.msra.mxu0 0.0
    %3985 = vmatprep.subr.mxu0 0.0
    %3986 = vmatpush1.msra.mxu0 0.0
    %3987 = vmatprep.subr.mxu0 0.0
    %3988 = vmatpush1.msra.mxu0 0.0
    %3989 = vmatprep.subr.mxu0 0.0
    %3990 = vmatpush1.msra.mxu0 0.0
    %3991 = vmatprep.subr.mxu0 0.0
    %3992 = vmatpush1.msra.mxu0 0.0
    %3993 = vmatprep.subr.mxu0 0.0
    %3994 = vmatpush1.msra.mxu0 0.0
    %3995 = vmatprep.subr.mxu0 0.0
    %3996 = vmatpush1.msra.mxu0 0.0
    %3997 = vmatprep.subr.mxu0 0.0
    %3998 = vmatpush1.msra.mxu0 0.0
    %3999 = vmatprep.subr.mxu0 0.0
    %4000 = vmatpush1.msra.mxu0 0.0
    %4001 = vmatprep.subr.mxu0 0.0
    %4002 = vmatpush1.msra.mxu0 0.0
    %4003 = vmatprep.subr.mxu0 0.0
    %4004 = vmatpush1.msra.mxu0 0.0
    %4005 = vmatprep.subr.mxu0 0.0
    %4006 = vmatpush1.msra.mxu0 0.0
    %4007 = vmatprep.subr.mxu0 0.0
    %4008 = vmatpush1.msra.mxu0 0.0
    %4009 = vmatprep.subr.mxu0 0.0
    %4010 = vmatpush1.msra.mxu0 0.0
    %4011 = vmatprep.subr.mxu0 0.0
    %4012 = vmatpush1.msra.mxu0 0.0
    %4013 = vmatprep.mubr.f32.mxu0 0.0
    %4014 = vmatmul.mubr.f32.gmra.mrb[0].mxu0 %v3944
    %v4015 = vpop.f32.mrb[0].mxu0
    %v4016 = vadd.f32 0.0, %v4015
    %v4017 = vpop.f32.mrb[0].mxu0
    %4018 = vmatprep.mubr.f32.mxu0 0.0
    %4019 = vmatmul.mubr.f32.gmra.mrb[0].mxu0 %v3947
    %v4020 = vpop.f32.mrb[0].mxu0
    %v4021 = vadd.f32 0.0, %v4020
    %v4022 = vpop.f32.mrb[0].mxu0
    %4023 = vdwg.mxu0
    %4024 = vmatprep.subr.mxu0 0.0
    %4025 = vmatpush1.msra.mxu0 %v3935
    %4026 = vmatprep.subr.mxu0 0.0
    %4027 = vmatpush1.msra.mxu0 %v3936
    %4028 = vmatprep.subr.mxu0 0.0
    %4029 = vmatpush1.msra.mxu0 %v3937
    %4030 = vmatprep.subr.mxu0 0.0
    %4031 = vmatpush1.msra.mxu0 %v3938
    %4032 = vmatprep.subr.mxu0 0.0
    %4033 = vmatpush1.msra.mxu0 0.0
    %4034 = vmatprep.subr.mxu0 0.0
    %4035 = vmatpush1.msra.mxu0 0.0
    %4036 = vmatprep.subr.mxu0 0.0
    %4037 = vmatpush1.msra.mxu0 0.0
    %4038 = vmatprep.subr.mxu0 0.0
    %4039 = vmatpush1.msra.mxu0 0.0
    %4040 = vmatprep.subr.mxu0 0.0
    %4041 = vmatpush1.msra.mxu0 0.0
    %4042 = vmatprep.subr.mxu0 0.0
    %4043 = vmatpush1.msra.mxu0 0.0
    %4044 = vmatprep.subr.mxu0 0.0
    %4045 = vmatpush1.msra.mxu0 0.0
    %4046 = vmatprep.subr.mxu0 0.0
    %4047 = vmatpush1.msra.mxu0 0.0
    %4048 = vmatprep.subr.mxu0 0.0
    %4049 = vmatpush1.msra.mxu0 0.0
    %4050 = vmatprep.subr.mxu0 0.0
    %4051 = vmatpush1.msra.mxu0 0.0
    %4052 = vmatprep.subr.mxu0 0.0
    %4053 = vmatpush1.msra.mxu0 0.0
    %4054 = vmatprep.subr.mxu0 0.0
    %4055 = vmatpush1.msra.mxu0 0.0
    %4056 = vmatprep.subr.mxu0 0.0
    %4057 = vmatpush1.msra.mxu0 0.0
    %4058 = vmatprep.subr.mxu0 0.0
    %4059 = vmatpush1.msra.mxu0 0.0
    %4060 = vmatprep.subr.mxu0 0.0
    %4061 = vmatpush1.msra.mxu0 0.0
    %4062 = vmatprep.subr.mxu0 0.0
    %4063 = vmatpush1.msra.mxu0 0.0
    %4064 = vmatprep.subr.mxu0 0.0
    %4065 = vmatpush1.msra.mxu0 0.0
    %4066 = vmatprep.subr.mxu0 0.0
    %4067 = vmatpush1.msra.mxu0 0.0
    %4068 = vmatprep.subr.mxu0 0.0
    %4069 = vmatpush1.msra.mxu0 0.0
    %4070 = vmatprep.subr.mxu0 0.0
    %4071 = vmatpush1.msra.mxu0 0.0
    %4072 = vmatprep.subr.mxu0 0.0
    %4073 = vmatpush1.msra.mxu0 0.0
    %4074 = vmatprep.subr.mxu0 0.0
    %4075 = vmatpush1.msra.mxu0 0.0
    %4076 = vmatprep.subr.mxu0 0.0
    %4077 = vmatpush1.msra.mxu0 0.0
    %4078 = vmatprep.subr.mxu0 0.0
    %4079 = vmatpush1.msra.mxu0 0.0
    %4080 = vmatprep.subr.mxu0 0.0
    %4081 = vmatpush1.msra.mxu0 0.0
    %4082 = vmatprep.subr.mxu0 0.0
    %4083 = vmatpush1.msra.mxu0 0.0
    %4084 = vmatprep.subr.mxu0 0.0
    %4085 = vmatpush1.msra.mxu0 0.0
    %4086 = vmatprep.subr.mxu0 0.0
    %4087 = vmatpush1.msra.mxu0 0.0
    %4088 = vmatprep.mubr.f32.mxu0 0.0
    %4089 = vmatmul.mubr.f32.gmra.mrb[0].mxu0 %v2664
    %v4090 = vpop.f32.mrb[0].mxu0
    %v4091 = vadd.f32 %v4016, %v4090
    %v4092 = vpop.f32.mrb[0].mxu0
    %4093 = vmatprep.mubr.f32.mxu0 0.0
    %4094 = vmatmul.mubr.f32.gmra.mrb[0].mxu0 %v2667
    %v4095 = vpop.f32.mrb[0].mxu0
    %v4096 = vadd.f32 %v4021, %v4095
    %v4097 = vpop.f32.mrb[0].mxu0
    %4098 = vdwg.mxu0
    %v4099 = vld [vmem:[%s39] sm:$0x1]
    %v4101 = vlaneseq
    %v4102 = vshrl.u32 %v4101, 7
    %v4103 = vsub.s32 0, %v4102
    %v4104 = vrot.slane %v4099, %v4103
    %v4106 = vadd.f32 %v4091, %v4104
    %v4107 = vadd.f32 %v4096, %v4104
    %vm4108 = vcmp.gt.f32.partialorder %v4106, 0.0
    %vm4109 = vcmp.gt.f32.partialorder %v4107, 0.0
    %v4110 = vmul.f32 %v4106, 0.01
    %v4111 = vmul.f32 %v4107, 0.01
    %v4112 = vsel %vm4108, %v4106, %v4110
    %v4113 = vsel %vm4109, %v4107, %v4111
    %v4114 = vld [vmem:[%s41] sm:$0xff]
    %v4115 = vld [vmem:[%s41 + $0x8] sm:$0xff]
    %v4116 = vld [vmem:[%s41 + $0x10] sm:$0xff]
    %v4117 = vld [vmem:[%s41 + $0x18] sm:$0xff]
    %v4118 = vld [vmem:[%s43] sm:$0xff]
    %v4119 = vld [vmem:[%s43 + $0x8] sm:$0xff]
    %v4120 = vld [vmem:[%s43 + $0x10] sm:$0xff]
    %v4121 = vld [vmem:[%s43 + $0x18] sm:$0xff]
    %v4123 = vsel %vm242, %v4112, 0
    %v4126 = vsel %vm242, %v4113, 0
    %4128 = vmatprep.subr.mxu0 0.0
    %4129 = vmatpush1.msra.mxu0 %v4118
    %4130 = vmatprep.subr.mxu0 0.0
    %4131 = vmatpush1.msra.mxu0 %v4119
    %4132 = vmatprep.subr.mxu0 0.0
    %4133 = vmatpush1.msra.mxu0 %v4120
    %4134 = vmatprep.subr.mxu0 0.0
    %4135 = vmatpush1.msra.mxu0 %v4121
    %4136 = vmatprep.subr.mxu0 0.0
    %4137 = vmatpush1.msra.mxu0 0.0
    %4138 = vmatprep.subr.mxu0 0.0
    %4139 = vmatpush1.msra.mxu0 0.0
    %4140 = vmatprep.subr.mxu0 0.0
    %4141 = vmatpush1.msra.mxu0 0.0
    %4142 = vmatprep.subr.mxu0 0.0
    %4143 = vmatpush1.msra.mxu0 0.0
    %4144 = vmatprep.subr.mxu0 0.0
    %4145 = vmatpush1.msra.mxu0 0.0
    %4146 = vmatprep.subr.mxu0 0.0
    %4147 = vmatpush1.msra.mxu0 0.0
    %4148 = vmatprep.subr.mxu0 0.0
    %4149 = vmatpush1.msra.mxu0 0.0
    %4150 = vmatprep.subr.mxu0 0.0
    %4151 = vmatpush1.msra.mxu0 0.0
    %4152 = vmatprep.subr.mxu0 0.0
    %4153 = vmatpush1.msra.mxu0 0.0
    %4154 = vmatprep.subr.mxu0 0.0
    %4155 = vmatpush1.msra.mxu0 0.0
    %4156 = vmatprep.subr.mxu0 0.0
    %4157 = vmatpush1.msra.mxu0 0.0
    %4158 = vmatprep.subr.mxu0 0.0
    %4159 = vmatpush1.msra.mxu0 0.0
    %4160 = vmatprep.subr.mxu0 0.0
    %4161 = vmatpush1.msra.mxu0 0.0
    %4162 = vmatprep.subr.mxu0 0.0
    %4163 = vmatpush1.msra.mxu0 0.0
    %4164 = vmatprep.subr.mxu0 0.0
    %4165 = vmatpush1.msra.mxu0 0.0
    %4166 = vmatprep.subr.mxu0 0.0
    %4167 = vmatpush1.msra.mxu0 0.0
    %4168 = vmatprep.subr.mxu0 0.0
    %4169 = vmatpush1.msra.mxu0 0.0
    %4170 = vmatprep.subr.mxu0 0.0
    %4171 = vmatpush1.msra.mxu0 0.0
    %4172 = vmatprep.subr.mxu0 0.0
    %4173 = vmatpush1.msra.mxu0 0.0
    %4174 = vmatprep.subr.mxu0 0.0
    %4175 = vmatpush1.msra.mxu0 0.0
    %4176 = vmatprep.subr.mxu0 0.0
    %4177 = vmatpush1.msra.mxu0 0.0
    %4178 = vmatprep.subr.mxu0 0.0
    %4179 = vmatpush1.msra.mxu0 0.0
    %4180 = vmatprep.subr.mxu0 0.0
    %4181 = vmatpush1.msra.mxu0 0.0
    %4182 = vmatprep.subr.mxu0 0.0
    %4183 = vmatpush1.msra.mxu0 0.0
    %4184 = vmatprep.subr.mxu0 0.0
    %4185 = vmatpush1.msra.mxu0 0.0
    %4186 = vmatprep.subr.mxu0 0.0
    %4187 = vmatpush1.msra.mxu0 0.0
    %4188 = vmatprep.subr.mxu0 0.0
    %4189 = vmatpush1.msra.mxu0 0.0
    %4190 = vmatprep.subr.mxu0 0.0
    %4191 = vmatpush1.msra.mxu0 0.0
    %4192 = vmatprep.mubr.f32.mxu0 0.0
    %4193 = vmatmul.mubr.f32.gmra.mrb[0].mxu0 %v4123
    %v4194 = vpop.f32.mrb[0].mxu0
    %v4195 = vadd.f32 0.0, %v4194
    %v4196 = vpop.f32.mrb[0].mxu0
    %4197 = vmatprep.mubr.f32.mxu0 0.0
    %4198 = vmatmul.mubr.f32.gmra.mrb[0].mxu0 %v4126
    %v4199 = vpop.f32.mrb[0].mxu0
    %v4200 = vadd.f32 0.0, %v4199
    %v4201 = vpop.f32.mrb[0].mxu0
    %4202 = vdwg.mxu0
    %4203 = vmatprep.subr.mxu0 0.0
    %4204 = vmatpush1.msra.mxu0 %v4114
    %4205 = vmatprep.subr.mxu0 0.0
    %4206 = vmatpush1.msra.mxu0 %v4115
    %4207 = vmatprep.subr.mxu0 0.0
    %4208 = vmatpush1.msra.mxu0 %v4116
    %4209 = vmatprep.subr.mxu0 0.0
    %4210 = vmatpush1.msra.mxu0 %v4117
    %4211 = vmatprep.subr.mxu0 0.0
    %4212 = vmatpush1.msra.mxu0 0.0
    %4213 = vmatprep.subr.mxu0 0.0
    %4214 = vmatpush1.msra.mxu0 0.0
    %4215 = vmatprep.subr.mxu0 0.0
    %4216 = vmatpush1.msra.mxu0 0.0
    %4217 = vmatprep.subr.mxu0 0.0
    %4218 = vmatpush1.msra.mxu0 0.0
    %4219 = vmatprep.subr.mxu0 0.0
    %4220 = vmatpush1.msra.mxu0 0.0
    %4221 = vmatprep.subr.mxu0 0.0
    %4222 = vmatpush1.msra.mxu0 0.0
    %4223 = vmatprep.subr.mxu0 0.0
    %4224 = vmatpush1.msra.mxu0 0.0
    %4225 = vmatprep.subr.mxu0 0.0
    %4226 = vmatpush1.msra.mxu0 0.0
    %4227 = vmatprep.subr.mxu0 0.0
    %4228 = vmatpush1.msra.mxu0 0.0
    %4229 = vmatprep.subr.mxu0 0.0
    %4230 = vmatpush1.msra.mxu0 0.0
    %4231 = vmatprep.subr.mxu0 0.0
    %4232 = vmatpush1.msra.mxu0 0.0
    %4233 = vmatprep.subr.mxu0 0.0
    %4234 = vmatpush1.msra.mxu0 0.0
    %4235 = vmatprep.subr.mxu0 0.0
    %4236 = vmatpush1.msra.mxu0 0.0
    %4237 = vmatprep.subr.mxu0 0.0
    %4238 = vmatpush1.msra.mxu0 0.0
    %4239 = vmatprep.subr.mxu0 0.0
    %4240 = vmatpush1.msra.mxu0 0.0
    %4241 = vmatprep.subr.mxu0 0.0
    %4242 = vmatpush1.msra.mxu0 0.0
    %4243 = vmatprep.subr.mxu0 0.0
    %4244 = vmatpush1.msra.mxu0 0.0
    %4245 = vmatprep.subr.mxu0 0.0
    %4246 = vmatpush1.msra.mxu0 0.0
    %4247 = vmatprep.subr.mxu0 0.0
    %4248 = vmatpush1.msra.mxu0 0.0
    %4249 = vmatprep.subr.mxu0 0.0
    %4250 = vmatpush1.msra.mxu0 0.0
    %4251 = vmatprep.subr.mxu0 0.0
    %4252 = vmatpush1.msra.mxu0 0.0
    %4253 = vmatprep.subr.mxu0 0.0
    %4254 = vmatpush1.msra.mxu0 0.0
    %4255 = vmatprep.subr.mxu0 0.0
    %4256 = vmatpush1.msra.mxu0 0.0
    %4257 = vmatprep.subr.mxu0 0.0
    %4258 = vmatpush1.msra.mxu0 0.0
    %4259 = vmatprep.subr.mxu0 0.0
    %4260 = vmatpush1.msra.mxu0 0.0
    %4261 = vmatprep.subr.mxu0 0.0
    %4262 = vmatpush1.msra.mxu0 0.0
    %4263 = vmatprep.subr.mxu0 0.0
    %4264 = vmatpush1.msra.mxu0 0.0
    %4265 = vmatprep.subr.mxu0 0.0
    %4266 = vmatpush1.msra.mxu0 0.0
    %4267 = vmatprep.mubr.f32.mxu0 0.0
    %4268 = vmatmul.mubr.f32.gmra.mrb[0].mxu0 %v3944
    %v4269 = vpop.f32.mrb[0].mxu0
    %v4270 = vadd.f32 %v4195, %v4269
    %v4271 = vpop.f32.mrb[0].mxu0
    %4272 = vmatprep.mubr.f32.mxu0 0.0
    %4273 = vmatmul.mubr.f32.gmra.mrb[0].mxu0 %v3947
    %v4274 = vpop.f32.mrb[0].mxu0
    %v4275 = vadd.f32 %v4200, %v4274
    %v4276 = vpop.f32.mrb[0].mxu0
    %4277 = vdwg.mxu0
    %v4278 = vld [vmem:[%s45] sm:$0x1]
    %v4280 = vlaneseq
    %v4281 = vshrl.u32 %v4280, 7
    %v4282 = vsub.s32 0, %v4281
    %v4283 = vrot.slane %v4278, %v4282
    %v4285 = vadd.f32 %v4270, %v4283
    %v4286 = vadd.f32 %v4275, %v4283
    %4287 = vst [vmem:[%s95] sm:$0xff] %v4285
    %4288 = vst [vmem:[%s95 + $0x8] sm:$0xff] %v4286
    %v4289 = vld [vmem:[%s3] sm:$0xff]
    %v4290 = vld [vmem:[%s3 + $0x8] sm:$0xff]
    %v4291 = vld [vmem:[%s67] sm:$0x1]
    %v4292 = vld [vmem:[%s69] sm:$0x1]
    %v4293 = vld [vmem:[%s47] sm:$0xff]
    %v4294 = vld [vmem:[%s47 + $0x8] sm:$0xff]
    %v4295 = vld [vmem:[%s47 + $0x10] sm:$0xff]
    %v4296 = vld [vmem:[%s47 + $0x18] sm:$0xff]
    %v4297 = vld [vmem:[%s49] sm:$0x1]
    %v4299 = vlaneseq
    %v4300 = vshrl.u32 %v4299, 7
    %v4301 = vsub.s32 0, %v4300
    %v4302 = vrot.slane %v4297, %v4301
    %v4305 = vsel %vm242, %v4289, 0
    %v4308 = vsel %vm242, %v4290, 0
    %4310 = vmatprep.subr.mxu0 0.0
    %4311 = vmatpush1.msra.mxu0 %v4293
    %4312 = vmatprep.subr.mxu0 0.0
    %4313 = vmatpush1.msra.mxu0 %v4294
    %4314 = vmatprep.subr.mxu0 0.0
    %4315 = vmatpush1.msra.mxu0 %v4295
    %4316 = vmatprep.subr.mxu0 0.0
    %4317 = vmatpush1.msra.mxu0 %v4296
    %4318 = vmatprep.subr.mxu0 0.0
    %4319 = vmatpush1.msra.mxu0 0.0
    %4320 = vmatprep.subr.mxu0 0.0
    %4321 = vmatpush1.msra.mxu0 0.0
    %4322 = vmatprep.subr.mxu0 0.0
    %4323 = vmatpush1.msra.mxu0 0.0
    %4324 = vmatprep.subr.mxu0 0.0
    %4325 = vmatpush1.msra.mxu0 0.0
    %4326 = vmatprep.subr.mxu0 0.0
    %4327 = vmatpush1.msra.mxu0 0.0
    %4328 = vmatprep.subr.mxu0 0.0
    %4329 = vmatpush1.msra.mxu0 0.0
    %4330 = vmatprep.subr.mxu0 0.0
    %4331 = vmatpush1.msra.mxu0 0.0
    %4332 = vmatprep.subr.mxu0 0.0
    %4333 = vmatpush1.msra.mxu0 0.0
    %4334 = vmatprep.subr.mxu0 0.0
    %4335 = vmatpush1.msra.mxu0 0.0
    %4336 = vmatprep.subr.mxu0 0.0
    %4337 = vmatpush1.msra.mxu0 0.0
    %4338 = vmatprep.subr.mxu0 0.0
    %4339 = vmatpush1.msra.mxu0 0.0
    %4340 = vmatprep.subr.mxu0 0.0
    %4341 = vmatpush1.msra.mxu0 0.0
    %4342 = vmatprep.subr.mxu0 0.0
    %4343 = vmatpush1.msra.mxu0 0.0
    %4344 = vmatprep.subr.mxu0 0.0
    %4345 = vmatpush1.msra.mxu0 0.0
    %4346 = vmatprep.subr.mxu0 0.0
    %4347 = vmatpush1.msra.mxu0 0.0
    %4348 = vmatprep.subr.mxu0 0.0
    %4349 = vmatpush1.msra.mxu0 0.0
    %4350 = vmatprep.subr.mxu0 0.0
    %4351 = vmatpush1.msra.mxu0 0.0
    %4352 = vmatprep.subr.mxu0 0.0
    %4353 = vmatpush1.msra.mxu0 0.0
    %4354 = vmatprep.subr.mxu0 0.0
    %4355 = vmatpush1.msra.mxu0 0.0
    %4356 = vmatprep.subr.mxu0 0.0
    %4357 = vmatpush1.msra.mxu0 0.0
    %4358 = vmatprep.subr.mxu0 0.0
    %4359 = vmatpush1.msra.mxu0 0.0
    %4360 = vmatprep.subr.mxu0 0.0
    %4361 = vmatpush1.msra.mxu0 0.0
    %4362 = vmatprep.subr.mxu0 0.0
    %4363 = vmatpush1.msra.mxu0 0.0
    %4364 = vmatprep.subr.mxu0 0.0
    %4365 = vmatpush1.msra.mxu0 0.0
    %4366 = vmatprep.subr.mxu0 0.0
    %4367 = vmatpush1.msra.mxu0 0.0
    %4368 = vmatprep.subr.mxu0 0.0
    %4369 = vmatpush1.msra.mxu0 0.0
    %4370 = vmatprep.subr.mxu0 0.0
    %4371 = vmatpush1.msra.mxu0 0.0
    %4372 = vmatprep.subr.mxu0 0.0
    %4373 = vmatpush1.msra.mxu0 0.0
    %4374 = vmatprep.mubr.f32.mxu0 0.0
    %4375 = vmatmul.mubr.f32.gmra.mrb[0].mxu0 %v4305
    %v4376 = vpop.f32.mrb[0].mxu0
    %v4377 = vadd.f32 %v4302, %v4376
    %v4378 = vpop.f32.mrb[0].mxu0
    %4379 = vmatprep.mubr.f32.mxu0 0.0
    %4380 = vmatmul.mubr.f32.gmra.mrb[0].mxu0 %v4308
    %v4381 = vpop.f32.mrb[0].mxu0
    %v4382 = vadd.f32 %v4302, %v4381
    %v4383 = vpop.f32.mrb[0].mxu0
    %4384 = vdwg.mxu0
    %v4385 = vld [vmem:[%s51] sm:$0xff]
    %v4386 = vld [vmem:[%s51 + $0x8] sm:$0xff]
    %v4387 = vld [vmem:[%s51 + $0x10] sm:$0xff]
    %v4388 = vld [vmem:[%s51 + $0x18] sm:$0xff]
    %v4389 = vld [vmem:[%s53] sm:$0x1]
    %v4391 = vlaneseq
    %v4392 = vshrl.u32 %v4391, 7
    %v4393 = vsub.s32 0, %v4392
    %v4394 = vrot.slane %v4389, %v4393
    %v4396 = vadd.f32 %v4394, 0.0
    %4398 = vrot.lane.b32.xlu0 %v4377, 96
    %v4399 = vpop.permute.xlu0 %4398
    %v4400 = vsel %vm339, %v4377, 0
    %v4402 = vsel %vm339, %v4399, 0
    %4404 = vmatprep.subr.mxu0 0.0
    %4405 = vmatpush1.xpose.msra.mxu0 %v4402
    %4406 = vmatprep.subr.mxu0 0.0
    %4407 = vmatpush1.xpose.msra.mxu0 0.0
    %4408 = vmatprep.subr.mxu0 0.0
    %4409 = vmatpush1.xpose.msra.mxu0 0.0
    %4410 = vmatprep.subr.mxu0 0.0
    %4411 = vmatpush1.xpose.msra.mxu0 0.0
    %4412 = vmatprep.subr.mxu0 0.0
    %4413 = vmatpush1.xpose.msra.mxu0 0.0
    %4414 = vmatprep.subr.mxu0 0.0
    %4415 = vmatpush1.xpose.msra.mxu0 0.0
    %4416 = vmatprep.subr.mxu0 0.0
    %4417 = vmatpush1.xpose.msra.mxu0 0.0
    %4418 = vmatprep.subr.mxu0 0.0
    %4419 = vmatpush1.xpose.msra.mxu0 0.0
    %4420 = vmatprep.subr.mxu0 0.0
    %4421 = vmatpush1.xpose.msra.mxu0 0.0
    %4422 = vmatprep.subr.mxu0 0.0
    %4423 = vmatpush1.xpose.msra.mxu0 0.0
    %4424 = vmatprep.subr.mxu0 0.0
    %4425 = vmatpush1.xpose.msra.mxu0 0.0
    %4426 = vmatprep.subr.mxu0 0.0
    %4427 = vmatpush1.xpose.msra.mxu0 0.0
    %4428 = vmatprep.subr.mxu0 0.0
    %4429 = vmatpush1.xpose.msra.mxu0 0.0
    %4430 = vmatprep.subr.mxu0 0.0
    %4431 = vmatpush1.xpose.msra.mxu0 0.0
    %4432 = vmatprep.subr.mxu0 0.0
    %4433 = vmatpush1.xpose.msra.mxu0 0.0
    %4434 = vmatprep.subr.mxu0 0.0
    %4435 = vmatpush1.xpose.msra.mxu0 0.0
    %4436 = vmatprep.subr.mxu0 0.0
    %4437 = vmatpush1.xpose.msra.mxu0 0.0
    %4438 = vmatprep.subr.mxu0 0.0
    %4439 = vmatpush1.xpose.msra.mxu0 0.0
    %4440 = vmatprep.subr.mxu0 0.0
    %4441 = vmatpush1.xpose.msra.mxu0 0.0
    %4442 = vmatprep.subr.mxu0 0.0
    %4443 = vmatpush1.xpose.msra.mxu0 0.0
    %4444 = vmatprep.subr.mxu0 0.0
    %4445 = vmatpush1.xpose.msra.mxu0 0.0
    %4446 = vmatprep.subr.mxu0 0.0
    %4447 = vmatpush1.xpose.msra.mxu0 0.0
    %4448 = vmatprep.subr.mxu0 0.0
    %4449 = vmatpush1.xpose.msra.mxu0 0.0
    %4450 = vmatprep.subr.mxu0 0.0
    %4451 = vmatpush1.xpose.msra.mxu0 0.0
    %4452 = vmatprep.subr.mxu0 0.0
    %4453 = vmatpush1.xpose.msra.mxu0 0.0
    %4454 = vmatprep.subr.mxu0 0.0
    %4455 = vmatpush1.xpose.msra.mxu0 0.0
    %4456 = vmatprep.subr.mxu0 0.0
    %4457 = vmatpush1.xpose.msra.mxu0 0.0
    %4458 = vmatprep.subr.mxu0 0.0
    %4459 = vmatpush1.xpose.msra.mxu0 0.0
    %4460 = vmatprep.subr.mxu0 0.0
    %4461 = vmatpush1.xpose.msra.mxu0 0.0
    %4462 = vmatprep.subr.mxu0 0.0
    %4463 = vmatpush1.xpose.msra.mxu0 0.0
    %4464 = vmatprep.subr.mxu0 0.0
    %4465 = vmatpush1.xpose.msra.mxu0 0.0
    %4466 = vmatprep.subr.mxu0 0.0
    %4467 = vmatpush1.xpose.msra.mxu0 0.0
    %4468 = vmatprep.mubr.f32.mxu0 0.0
    %4469 = vmatmul.mubr.f32.gmra.mrb[0].mxu0 %v4400
    %v4470 = vpop.f32.mrb[0].mxu0
    %v4471 = vadd.f32 0.0, %v4470
    %v4472 = vpop.f32.mrb[0].mxu0
    %4473 = vdwg.mxu0
    %4475 = vrot.lane.b32.xlu0 %v4382, 96
    %v4476 = vpop.permute.xlu0 %4475
    %v4477 = vsel %vm339, %v4382, 0
    %v4479 = vsel %vm339, %v4476, 0
    %4481 = vmatprep.subr.mxu0 0.0
    %4482 = vmatpush1.xpose.msra.mxu0 %v4479
    %4483 = vmatprep.subr.mxu0 0.0
    %4484 = vmatpush1.xpose.msra.mxu0 0.0
    %4485 = vmatprep.subr.mxu0 0.0
    %4486 = vmatpush1.xpose.msra.mxu0 0.0
    %4487 = vmatprep.subr.mxu0 0.0
    %4488 = vmatpush1.xpose.msra.mxu0 0.0
    %4489 = vmatprep.subr.mxu0 0.0
    %4490 = vmatpush1.xpose.msra.mxu0 0.0
    %4491 = vmatprep.subr.mxu0 0.0
    %4492 = vmatpush1.xpose.msra.mxu0 0.0
    %4493 = vmatprep.subr.mxu0 0.0
    %4494 = vmatpush1.xpose.msra.mxu0 0.0
    %4495 = vmatprep.subr.mxu0 0.0
    %4496 = vmatpush1.xpose.msra.mxu0 0.0
    %4497 = vmatprep.subr.mxu0 0.0
    %4498 = vmatpush1.xpose.msra.mxu0 0.0
    %4499 = vmatprep.subr.mxu0 0.0
    %4500 = vmatpush1.xpose.msra.mxu0 0.0
    %4501 = vmatprep.subr.mxu0 0.0
    %4502 = vmatpush1.xpose.msra.mxu0 0.0
    %4503 = vmatprep.subr.mxu0 0.0
    %4504 = vmatpush1.xpose.msra.mxu0 0.0
    %4505 = vmatprep.subr.mxu0 0.0
    %4506 = vmatpush1.xpose.msra.mxu0 0.0
    %4507 = vmatprep.subr.mxu0 0.0
    %4508 = vmatpush1.xpose.msra.mxu0 0.0
    %4509 = vmatprep.subr.mxu0 0.0
    %4510 = vmatpush1.xpose.msra.mxu0 0.0
    %4511 = vmatprep.subr.mxu0 0.0
    %4512 = vmatpush1.xpose.msra.mxu0 0.0
    %4513 = vmatprep.subr.mxu0 0.0
    %4514 = vmatpush1.xpose.msra.mxu0 0.0
    %4515 = vmatprep.subr.mxu0 0.0
    %4516 = vmatpush1.xpose.msra.mxu0 0.0
    %4517 = vmatprep.subr.mxu0 0.0
    %4518 = vmatpush1.xpose.msra.mxu0 0.0
    %4519 = vmatprep.subr.mxu0 0.0
    %4520 = vmatpush1.xpose.msra.mxu0 0.0
    %4521 = vmatprep.subr.mxu0 0.0
    %4522 = vmatpush1.xpose.msra.mxu0 0.0
    %4523 = vmatprep.subr.mxu0 0.0
    %4524 = vmatpush1.xpose.msra.mxu0 0.0
    %4525 = vmatprep.subr.mxu0 0.0
    %4526 = vmatpush1.xpose.msra.mxu0 0.0
    %4527 = vmatprep.subr.mxu0 0.0
    %4528 = vmatpush1.xpose.msra.mxu0 0.0
    %4529 = vmatprep.subr.mxu0 0.0
    %4530 = vmatpush1.xpose.msra.mxu0 0.0
    %4531 = vmatprep.subr.mxu0 0.0
    %4532 = vmatpush1.xpose.msra.mxu0 0.0
    %4533 = vmatprep.subr.mxu0 0.0
    %4534 = vmatpush1.xpose.msra.mxu0 0.0
    %4535 = vmatprep.subr.mxu0 0.0
    %4536 = vmatpush1.xpose.msra.mxu0 0.0
    %4537 = vmatprep.subr.mxu0 0.0
    %4538 = vmatpush1.xpose.msra.mxu0 0.0
    %4539 = vmatprep.subr.mxu0 0.0
    %4540 = vmatpush1.xpose.msra.mxu0 0.0
    %4541 = vmatprep.subr.mxu0 0.0
    %4542 = vmatpush1.xpose.msra.mxu0 0.0
    %4543 = vmatprep.subr.mxu0 0.0
    %4544 = vmatpush1.xpose.msra.mxu0 0.0
    %4545 = vmatprep.mubr.f32.mxu0 0.0
    %4546 = vmatmul.mubr.f32.gmra.mrb[0].mxu0 %v4477
    %v4547 = vpop.f32.mrb[0].mxu0
    %v4548 = vadd.f32 0.0, %v4547
    %v4549 = vpop.f32.mrb[0].mxu0
    %4550 = vdwg.mxu0
    %v4551 = vmul.f32 %v4471, 0.25
    %v4552 = vmul.f32 %v4548, 0.25
    %v4553 = vadd.f32 %v4551, %v223
    %v4554 = vadd.f32 %v4552, %v224
    %v4555 = vsel %vm495, %v4553, -inf
    %4556 = vmax.xlane.f32.xlu0 %v4555
    %v4557 = vpop.xlane.xlu0 %4556
    %v4558 = vsel %vm495, %v4554, -inf
    %4559 = vmax.xlane.f32.xlu0 %v4558
    %v4560 = vpop.xlane.xlu0 %4559
    %v4561 = vsub.f32 %v4553, %v4557
    %v4562 = vsub.f32 %v4554, %v4560
    %v4563 = vmul.f32 %v4561, 1.442695
    %v4564 = vpow.pop %v4563
    %v4565 = vmul.f32 %v4562, 1.442695
    %v4566 = vpow.pop %v4565
    %v4567 = vsel %vm495, %v4564, 0.0
    %4568 = vadd.xlane.f32.xlu0 %v4567
    %v4569 = vpop.xlane.xlu0 %4568
    %v4570 = vsel %vm495, %v4566, 0.0
    %4571 = vadd.xlane.f32.xlu0 %v4570
    %v4572 = vpop.xlane.xlu0 %4571
    %v4573 = vrcp.pop %v4569
    %v4574 = vrcp.pop %v4572
    %v4575 = vmul.f32 %v4564, %v4573
    %v4576 = vmul.f32 %v4566, %v4574
    %4577 = vrot.lane.b32.xlu0 %v4377, 64
    %v4578 = vpop.permute.xlu0 %4577
    %v4581 = vsel %vm495, %v4575, 0
    %4583 = vmatprep.subr.mxu0 0.0
    %4584 = vmatpush1.msra.mxu0 %v4578
    %4585 = vmatprep.subr.mxu0 0.0
    %4586 = vmatpush1.msra.mxu0 0.0
    %4587 = vmatprep.subr.mxu0 0.0
    %4588 = vmatpush1.msra.mxu0 0.0
    %4589 = vmatprep.subr.mxu0 0.0
    %4590 = vmatpush1.msra.mxu0 0.0
    %4591 = vmatprep.subr.mxu0 0.0
    %4592 = vmatpush1.msra.mxu0 0.0
    %4593 = vmatprep.subr.mxu0 0.0
    %4594 = vmatpush1.msra.mxu0 0.0
    %4595 = vmatprep.subr.mxu0 0.0
    %4596 = vmatpush1.msra.mxu0 0.0
    %4597 = vmatprep.subr.mxu0 0.0
    %4598 = vmatpush1.msra.mxu0 0.0
    %4599 = vmatprep.subr.mxu0 0.0
    %4600 = vmatpush1.msra.mxu0 0.0
    %4601 = vmatprep.subr.mxu0 0.0
    %4602 = vmatpush1.msra.mxu0 0.0
    %4603 = vmatprep.subr.mxu0 0.0
    %4604 = vmatpush1.msra.mxu0 0.0
    %4605 = vmatprep.subr.mxu0 0.0
    %4606 = vmatpush1.msra.mxu0 0.0
    %4607 = vmatprep.subr.mxu0 0.0
    %4608 = vmatpush1.msra.mxu0 0.0
    %4609 = vmatprep.subr.mxu0 0.0
    %4610 = vmatpush1.msra.mxu0 0.0
    %4611 = vmatprep.subr.mxu0 0.0
    %4612 = vmatpush1.msra.mxu0 0.0
    %4613 = vmatprep.subr.mxu0 0.0
    %4614 = vmatpush1.msra.mxu0 0.0
    %4615 = vmatprep.subr.mxu0 0.0
    %4616 = vmatpush1.msra.mxu0 0.0
    %4617 = vmatprep.subr.mxu0 0.0
    %4618 = vmatpush1.msra.mxu0 0.0
    %4619 = vmatprep.subr.mxu0 0.0
    %4620 = vmatpush1.msra.mxu0 0.0
    %4621 = vmatprep.subr.mxu0 0.0
    %4622 = vmatpush1.msra.mxu0 0.0
    %4623 = vmatprep.subr.mxu0 0.0
    %4624 = vmatpush1.msra.mxu0 0.0
    %4625 = vmatprep.subr.mxu0 0.0
    %4626 = vmatpush1.msra.mxu0 0.0
    %4627 = vmatprep.subr.mxu0 0.0
    %4628 = vmatpush1.msra.mxu0 0.0
    %4629 = vmatprep.subr.mxu0 0.0
    %4630 = vmatpush1.msra.mxu0 0.0
    %4631 = vmatprep.subr.mxu0 0.0
    %4632 = vmatpush1.msra.mxu0 0.0
    %4633 = vmatprep.subr.mxu0 0.0
    %4634 = vmatpush1.msra.mxu0 0.0
    %4635 = vmatprep.subr.mxu0 0.0
    %4636 = vmatpush1.msra.mxu0 0.0
    %4637 = vmatprep.subr.mxu0 0.0
    %4638 = vmatpush1.msra.mxu0 0.0
    %4639 = vmatprep.subr.mxu0 0.0
    %4640 = vmatpush1.msra.mxu0 0.0
    %4641 = vmatprep.subr.mxu0 0.0
    %4642 = vmatpush1.msra.mxu0 0.0
    %4643 = vmatprep.subr.mxu0 0.0
    %4644 = vmatpush1.msra.mxu0 0.0
    %4645 = vmatprep.subr.mxu0 0.0
    %4646 = vmatpush1.msra.mxu0 0.0
    %4647 = vmatprep.mubr.f32.mxu0 0.0
    %4648 = vmatmul.mubr.f32.gmra.mrb[0].mxu0 %v4581
    %v4649 = vpop.f32.mrb[0].mxu0
    %v4650 = vadd.f32 0.0, %v4649
    %v4651 = vpop.f32.mrb[0].mxu0
    %4652 = vdwg.mxu0
    %4653 = vrot.lane.b32.xlu0 %v4382, 64
    %v4654 = vpop.permute.xlu0 %4653
    %v4657 = vsel %vm495, %v4576, 0
    %4659 = vmatprep.subr.mxu0 0.0
    %4660 = vmatpush1.msra.mxu0 %v4654
    %4661 = vmatprep.subr.mxu0 0.0
    %4662 = vmatpush1.msra.mxu0 0.0
    %4663 = vmatprep.subr.mxu0 0.0
    %4664 = vmatpush1.msra.mxu0 0.0
    %4665 = vmatprep.subr.mxu0 0.0
    %4666 = vmatpush1.msra.mxu0 0.0
    %4667 = vmatprep.subr.mxu0 0.0
    %4668 = vmatpush1.msra.mxu0 0.0
    %4669 = vmatprep.subr.mxu0 0.0
    %4670 = vmatpush1.msra.mxu0 0.0
    %4671 = vmatprep.subr.mxu0 0.0
    %4672 = vmatpush1.msra.mxu0 0.0
    %4673 = vmatprep.subr.mxu0 0.0
    %4674 = vmatpush1.msra.mxu0 0.0
    %4675 = vmatprep.subr.mxu0 0.0
    %4676 = vmatpush1.msra.mxu0 0.0
    %4677 = vmatprep.subr.mxu0 0.0
    %4678 = vmatpush1.msra.mxu0 0.0
    %4679 = vmatprep.subr.mxu0 0.0
    %4680 = vmatpush1.msra.mxu0 0.0
    %4681 = vmatprep.subr.mxu0 0.0
    %4682 = vmatpush1.msra.mxu0 0.0
    %4683 = vmatprep.subr.mxu0 0.0
    %4684 = vmatpush1.msra.mxu0 0.0
    %4685 = vmatprep.subr.mxu0 0.0
    %4686 = vmatpush1.msra.mxu0 0.0
    %4687 = vmatprep.subr.mxu0 0.0
    %4688 = vmatpush1.msra.mxu0 0.0
    %4689 = vmatprep.subr.mxu0 0.0
    %4690 = vmatpush1.msra.mxu0 0.0
    %4691 = vmatprep.subr.mxu0 0.0
    %4692 = vmatpush1.msra.mxu0 0.0
    %4693 = vmatprep.subr.mxu0 0.0
    %4694 = vmatpush1.msra.mxu0 0.0
    %4695 = vmatprep.subr.mxu0 0.0
    %4696 = vmatpush1.msra.mxu0 0.0
    %4697 = vmatprep.subr.mxu0 0.0
    %4698 = vmatpush1.msra.mxu0 0.0
    %4699 = vmatprep.subr.mxu0 0.0
    %4700 = vmatpush1.msra.mxu0 0.0
    %4701 = vmatprep.subr.mxu0 0.0
    %4702 = vmatpush1.msra.mxu0 0.0
    %4703 = vmatprep.subr.mxu0 0.0
    %4704 = vmatpush1.msra.mxu0 0.0
    %4705 = vmatprep.subr.mxu0 0.0
    %4706 = vmatpush1.msra.mxu0 0.0
    %4707 = vmatprep.subr.mxu0 0.0
    %4708 = vmatpush1.msra.mxu0 0.0
    %4709 = vmatprep.subr.mxu0 0.0
    %4710 = vmatpush1.msra.mxu0 0.0
    %4711 = vmatprep.subr.mxu0 0.0
    %4712 = vmatpush1.msra.mxu0 0.0
    %4713 = vmatprep.subr.mxu0 0.0
    %4714 = vmatpush1.msra.mxu0 0.0
    %4715 = vmatprep.subr.mxu0 0.0
    %4716 = vmatpush1.msra.mxu0 0.0
    %4717 = vmatprep.subr.mxu0 0.0
    %4718 = vmatpush1.msra.mxu0 0.0
    %4719 = vmatprep.subr.mxu0 0.0
    %4720 = vmatpush1.msra.mxu0 0.0
    %4721 = vmatprep.subr.mxu0 0.0
    %4722 = vmatpush1.msra.mxu0 0.0
    %4723 = vmatprep.mubr.f32.mxu0 0.0
    %4724 = vmatmul.mubr.f32.gmra.mrb[0].mxu0 %v4657
    %v4725 = vpop.f32.mrb[0].mxu0
    %v4726 = vadd.f32 0.0, %v4725
    %v4727 = vpop.f32.mrb[0].mxu0
    %4728 = vdwg.mxu0
    %v4730 = vsel %vm339, %v4650, 0
    %v4733 = vsel %vm339, %v4726, 0
    %4735 = vmatprep.subr.mxu0 0.0
    %4736 = vmatpush1.msra.mxu0 %v4385
    %4737 = vmatprep.subr.mxu0 0.0
    %4738 = vmatpush1.msra.mxu0 %v4386
    %4739 = vmatprep.subr.mxu0 0.0
    %4740 = vmatpush1.msra.mxu0 0.0
    %4741 = vmatprep.subr.mxu0 0.0
    %4742 = vmatpush1.msra.mxu0 0.0
    %4743 = vmatprep.subr.mxu0 0.0
    %4744 = vmatpush1.msra.mxu0 0.0
    %4745 = vmatprep.subr.mxu0 0.0
    %4746 = vmatpush1.msra.mxu0 0.0
    %4747 = vmatprep.subr.mxu0 0.0
    %4748 = vmatpush1.msra.mxu0 0.0
    %4749 = vmatprep.subr.mxu0 0.0
    %4750 = vmatpush1.msra.mxu0 0.0
    %4751 = vmatprep.subr.mxu0 0.0
    %4752 = vmatpush1.msra.mxu0 0.0
    %4753 = vmatprep.subr.mxu0 0.0
    %4754 = vmatpush1.msra.mxu0 0.0
    %4755 = vmatprep.subr.mxu0 0.0
    %4756 = vmatpush1.msra.mxu0 0.0
    %4757 = vmatprep.subr.mxu0 0.0
    %4758 = vmatpush1.msra.mxu0 0.0
    %4759 = vmatprep.subr.mxu0 0.0
    %4760 = vmatpush1.msra.mxu0 0.0
    %4761 = vmatprep.subr.mxu0 0.0
    %4762 = vmatpush1.msra.mxu0 0.0
    %4763 = vmatprep.subr.mxu0 0.0
    %4764 = vmatpush1.msra.mxu0 0.0
    %4765 = vmatprep.subr.mxu0 0.0
    %4766 = vmatpush1.msra.mxu0 0.0
    %4767 = vmatprep.subr.mxu0 0.0
    %4768 = vmatpush1.msra.mxu0 0.0
    %4769 = vmatprep.subr.mxu0 0.0
    %4770 = vmatpush1.msra.mxu0 0.0
    %4771 = vmatprep.subr.mxu0 0.0
    %4772 = vmatpush1.msra.mxu0 0.0
    %4773 = vmatprep.subr.mxu0 0.0
    %4774 = vmatpush1.msra.mxu0 0.0
    %4775 = vmatprep.subr.mxu0 0.0
    %4776 = vmatpush1.msra.mxu0 0.0
    %4777 = vmatprep.subr.mxu0 0.0
    %4778 = vmatpush1.msra.mxu0 0.0
    %4779 = vmatprep.subr.mxu0 0.0
    %4780 = vmatpush1.msra.mxu0 0.0
    %4781 = vmatprep.subr.mxu0 0.0
    %4782 = vmatpush1.msra.mxu0 0.0
    %4783 = vmatprep.subr.mxu0 0.0
    %4784 = vmatpush1.msra.mxu0 0.0
    %4785 = vmatprep.subr.mxu0 0.0
    %4786 = vmatpush1.msra.mxu0 0.0
    %4787 = vmatprep.subr.mxu0 0.0
    %4788 = vmatpush1.msra.mxu0 0.0
    %4789 = vmatprep.subr.mxu0 0.0
    %4790 = vmatpush1.msra.mxu0 0.0
    %4791 = vmatprep.subr.mxu0 0.0
    %4792 = vmatpush1.msra.mxu0 0.0
    %4793 = vmatprep.subr.mxu0 0.0
    %4794 = vmatpush1.msra.mxu0 0.0
    %4795 = vmatprep.subr.mxu0 0.0
    %4796 = vmatpush1.msra.mxu0 0.0
    %4797 = vmatprep.subr.mxu0 0.0
    %4798 = vmatpush1.msra.mxu0 0.0
    %4799 = vmatprep.mubr.f32.mxu0 0.0
    %4800 = vmatmul.mubr.f32.gmra.mrb[0].mxu0 %v4730
    %v4801 = vpop.f32.mrb[0].mxu0
    %v4802 = vadd.f32 0.0, %v4801
    %v4803 = vpop.f32.mrb[0].mxu0
    %4804 = vmatprep.mubr.f32.mxu0 0.0
    %4805 = vmatmul.mubr.f32.gmra.mrb[0].mxu0 %v4733
    %v4806 = vpop.f32.mrb[0].mxu0
    %v4807 = vadd.f32 0.0, %v4806
    %v4808 = vpop.f32.mrb[0].mxu0
    %4809 = vdwg.mxu0
    %v4810 = vadd.f32 %v4396, %v4802
    %v4811 = vadd.f32 %v4396, %v4807
    %4812 = vrot.lane.b32.xlu0 %v4377, 112
    %v4813 = vpop.permute.xlu0 %4812
    %4814 = vrot.lane.b32.xlu0 %v4377, 80
    %v4815 = vpop.permute.xlu0 %4814
    %v4816 = vsel %vm339, %v4813, 0
    %v4818 = vsel %vm339, %v4815, 0
    %4820 = vmatprep.subr.mxu0 0.0
    %4821 = vmatpush1.xpose.msra.mxu0 %v4818
    %4822 = vmatprep.subr.mxu0 0.0
    %4823 = vmatpush1.xpose.msra.mxu0 0.0
    %4824 = vmatprep.subr.mxu0 0.0
    %4825 = vmatpush1.xpose.msra.mxu0 0.0
    %4826 = vmatprep.subr.mxu0 0.0
    %4827 = vmatpush1.xpose.msra.mxu0 0.0
    %4828 = vmatprep.subr.mxu0 0.0
    %4829 = vmatpush1.xpose.msra.mxu0 0.0
    %4830 = vmatprep.subr.mxu0 0.0
    %4831 = vmatpush1.xpose.msra.mxu0 0.0
    %4832 = vmatprep.subr.mxu0 0.0
    %4833 = vmatpush1.xpose.msra.mxu0 0.0
    %4834 = vmatprep.subr.mxu0 0.0
    %4835 = vmatpush1.xpose.msra.mxu0 0.0
    %4836 = vmatprep.subr.mxu0 0.0
    %4837 = vmatpush1.xpose.msra.mxu0 0.0
    %4838 = vmatprep.subr.mxu0 0.0
    %4839 = vmatpush1.xpose.msra.mxu0 0.0
    %4840 = vmatprep.subr.mxu0 0.0
    %4841 = vmatpush1.xpose.msra.mxu0 0.0
    %4842 = vmatprep.subr.mxu0 0.0
    %4843 = vmatpush1.xpose.msra.mxu0 0.0
    %4844 = vmatprep.subr.mxu0 0.0
    %4845 = vmatpush1.xpose.msra.mxu0 0.0
    %4846 = vmatprep.subr.mxu0 0.0
    %4847 = vmatpush1.xpose.msra.mxu0 0.0
    %4848 = vmatprep.subr.mxu0 0.0
    %4849 = vmatpush1.xpose.msra.mxu0 0.0
    %4850 = vmatprep.subr.mxu0 0.0
    %4851 = vmatpush1.xpose.msra.mxu0 0.0
    %4852 = vmatprep.subr.mxu0 0.0
    %4853 = vmatpush1.xpose.msra.mxu0 0.0
    %4854 = vmatprep.subr.mxu0 0.0
    %4855 = vmatpush1.xpose.msra.mxu0 0.0
    %4856 = vmatprep.subr.mxu0 0.0
    %4857 = vmatpush1.xpose.msra.mxu0 0.0
    %4858 = vmatprep.subr.mxu0 0.0
    %4859 = vmatpush1.xpose.msra.mxu0 0.0
    %4860 = vmatprep.subr.mxu0 0.0
    %4861 = vmatpush1.xpose.msra.mxu0 0.0
    %4862 = vmatprep.subr.mxu0 0.0
    %4863 = vmatpush1.xpose.msra.mxu0 0.0
    %4864 = vmatprep.subr.mxu0 0.0
    %4865 = vmatpush1.xpose.msra.mxu0 0.0
    %4866 = vmatprep.subr.mxu0 0.0
    %4867 = vmatpush1.xpose.msra.mxu0 0.0
    %4868 = vmatprep.subr.mxu0 0.0
    %4869 = vmatpush1.xpose.msra.mxu0 0.0
    %4870 = vmatprep.subr.mxu0 0.0
    %4871 = vmatpush1.xpose.msra.mxu0 0.0
    %4872 = vmatprep.subr.mxu0 0.0
    %4873 = vmatpush1.xpose.msra.mxu0 0.0
    %4874 = vmatprep.subr.mxu0 0.0
    %4875 = vmatpush1.xpose.msra.mxu0 0.0
    %4876 = vmatprep.subr.mxu0 0.0
    %4877 = vmatpush1.xpose.msra.mxu0 0.0
    %4878 = vmatprep.subr.mxu0 0.0
    %4879 = vmatpush1.xpose.msra.mxu0 0.0
    %4880 = vmatprep.subr.mxu0 0.0
    %4881 = vmatpush1.xpose.msra.mxu0 0.0
    %4882 = vmatprep.subr.mxu0 0.0
    %4883 = vmatpush1.xpose.msra.mxu0 0.0
    %4884 = vmatprep.mubr.f32.mxu0 0.0
    %4885 = vmatmul.mubr.f32.gmra.mrb[0].mxu0 %v4816
    %v4886 = vpop.f32.mrb[0].mxu0
    %v4887 = vadd.f32 0.0, %v4886
    %v4888 = vpop.f32.mrb[0].mxu0
    %4889 = vdwg.mxu0
    %4890 = vrot.lane.b32.xlu0 %v4382, 112
    %v4891 = vpop.permute.xlu0 %4890
    %4892 = vrot.lane.b32.xlu0 %v4382, 80
    %v4893 = vpop.permute.xlu0 %4892
    %v4894 = vsel %vm339, %v4891, 0
    %v4896 = vsel %vm339, %v4893, 0
    %4898 = vmatprep.subr.mxu0 0.0
    %4899 = vmatpush1.xpose.msra.mxu0 %v4896
    %4900 = vmatprep.subr.mxu0 0.0
    %4901 = vmatpush1.xpose.msra.mxu0 0.0
    %4902 = vmatprep.subr.mxu0 0.0
    %4903 = vmatpush1.xpose.msra.mxu0 0.0
    %4904 = vmatprep.subr.mxu0 0.0
    %4905 = vmatpush1.xpose.msra.mxu0 0.0
    %4906 = vmatprep.subr.mxu0 0.0
    %4907 = vmatpush1.xpose.msra.mxu0 0.0
    %4908 = vmatprep.subr.mxu0 0.0
    %4909 = vmatpush1.xpose.msra.mxu0 0.0
    %4910 = vmatprep.subr.mxu0 0.0
    %4911 = vmatpush1.xpose.msra.mxu0 0.0
    %4912 = vmatprep.subr.mxu0 0.0
    %4913 = vmatpush1.xpose.msra.mxu0 0.0
    %4914 = vmatprep.subr.mxu0 0.0
    %4915 = vmatpush1.xpose.msra.mxu0 0.0
    %4916 = vmatprep.subr.mxu0 0.0
    %4917 = vmatpush1.xpose.msra.mxu0 0.0
    %4918 = vmatprep.subr.mxu0 0.0
    %4919 = vmatpush1.xpose.msra.mxu0 0.0
    %4920 = vmatprep.subr.mxu0 0.0
    %4921 = vmatpush1.xpose.msra.mxu0 0.0
    %4922 = vmatprep.subr.mxu0 0.0
    %4923 = vmatpush1.xpose.msra.mxu0 0.0
    %4924 = vmatprep.subr.mxu0 0.0
    %4925 = vmatpush1.xpose.msra.mxu0 0.0
    %4926 = vmatprep.subr.mxu0 0.0
    %4927 = vmatpush1.xpose.msra.mxu0 0.0
    %4928 = vmatprep.subr.mxu0 0.0
    %4929 = vmatpush1.xpose.msra.mxu0 0.0
    %4930 = vmatprep.subr.mxu0 0.0
    %4931 = vmatpush1.xpose.msra.mxu0 0.0
    %4932 = vmatprep.subr.mxu0 0.0
    %4933 = vmatpush1.xpose.msra.mxu0 0.0
    %4934 = vmatprep.subr.mxu0 0.0
    %4935 = vmatpush1.xpose.msra.mxu0 0.0
    %4936 = vmatprep.subr.mxu0 0.0
    %4937 = vmatpush1.xpose.msra.mxu0 0.0
    %4938 = vmatprep.subr.mxu0 0.0
    %4939 = vmatpush1.xpose.msra.mxu0 0.0
    %4940 = vmatprep.subr.mxu0 0.0
    %4941 = vmatpush1.xpose.msra.mxu0 0.0
    %4942 = vmatprep.subr.mxu0 0.0
    %4943 = vmatpush1.xpose.msra.mxu0 0.0
    %4944 = vmatprep.subr.mxu0 0.0
    %4945 = vmatpush1.xpose.msra.mxu0 0.0
    %4946 = vmatprep.subr.mxu0 0.0
    %4947 = vmatpush1.xpose.msra.mxu0 0.0
    %4948 = vmatprep.subr.mxu0 0.0
    %4949 = vmatpush1.xpose.msra.mxu0 0.0
    %4950 = vmatprep.subr.mxu0 0.0
    %4951 = vmatpush1.xpose.msra.mxu0 0.0
    %4952 = vmatprep.subr.mxu0 0.0
    %4953 = vmatpush1.xpose.msra.mxu0 0.0
    %4954 = vmatprep.subr.mxu0 0.0
    %4955 = vmatpush1.xpose.msra.mxu0 0.0
    %4956 = vmatprep.subr.mxu0 0.0
    %4957 = vmatpush1.xpose.msra.mxu0 0.0
    %4958 = vmatprep.subr.mxu0 0.0
    %4959 = vmatpush1.xpose.msra.mxu0 0.0
    %4960 = vmatprep.subr.mxu0 0.0
    %4961 = vmatpush1.xpose.msra.mxu0 0.0
    %4962 = vmatprep.mubr.f32.mxu0 0.0
    %4963 = vmatmul.mubr.f32.gmra.mrb[0].mxu0 %v4894
    %v4964 = vpop.f32.mrb[0].mxu0
    %v4965 = vadd.f32 0.0, %v4964
    %v4966 = vpop.f32.mrb[0].mxu0
    %4967 = vdwg.mxu0
    %v4968 = vmul.f32 %v4887, 0.25
    %v4969 = vmul.f32 %v4965, 0.25
    %v4970 = vadd.f32 %v4968, %v223
    %v4971 = vadd.f32 %v4969, %v224
    %v4972 = vsel %vm495, %v4970, -inf
    %4973 = vmax.xlane.f32.xlu0 %v4972
    %v4974 = vpop.xlane.xlu0 %4973
    %v4975 = vsel %vm495, %v4971, -inf
    %4976 = vmax.xlane.f32.xlu0 %v4975
    %v4977 = vpop.xlane.xlu0 %4976
    %v4978 = vsub.f32 %v4970, %v4974
    %v4979 = vsub.f32 %v4971, %v4977
    %v4980 = vmul.f32 %v4978, 1.442695
    %v4981 = vpow.pop %v4980
    %v4982 = vmul.f32 %v4979, 1.442695
    %v4983 = vpow.pop %v4982
    %v4984 = vsel %vm495, %v4981, 0.0
    %4985 = vadd.xlane.f32.xlu0 %v4984
    %v4986 = vpop.xlane.xlu0 %4985
    %v4987 = vsel %vm495, %v4983, 0.0
    %4988 = vadd.xlane.f32.xlu0 %v4987
    %v4989 = vpop.xlane.xlu0 %4988
    %v4990 = vrcp.pop %v4986
    %v4991 = vrcp.pop %v4989
    %v4992 = vmul.f32 %v4981, %v4990
    %v4993 = vmul.f32 %v4983, %v4991
    %4994 = vrot.lane.b32.xlu0 %v4377, 48
    %v4995 = vpop.permute.xlu0 %4994
    %v4998 = vsel %vm495, %v4992, 0
    %5000 = vmatprep.subr.mxu0 0.0
    %5001 = vmatpush1.msra.mxu0 %v4995
    %5002 = vmatprep.subr.mxu0 0.0
    %5003 = vmatpush1.msra.mxu0 0.0
    %5004 = vmatprep.subr.mxu0 0.0
    %5005 = vmatpush1.msra.mxu0 0.0
    %5006 = vmatprep.subr.mxu0 0.0
    %5007 = vmatpush1.msra.mxu0 0.0
    %5008 = vmatprep.subr.mxu0 0.0
    %5009 = vmatpush1.msra.mxu0 0.0
    %5010 = vmatprep.subr.mxu0 0.0
    %5011 = vmatpush1.msra.mxu0 0.0
    %5012 = vmatprep.subr.mxu0 0.0
    %5013 = vmatpush1.msra.mxu0 0.0
    %5014 = vmatprep.subr.mxu0 0.0
    %5015 = vmatpush1.msra.mxu0 0.0
    %5016 = vmatprep.subr.mxu0 0.0
    %5017 = vmatpush1.msra.mxu0 0.0
    %5018 = vmatprep.subr.mxu0 0.0
    %5019 = vmatpush1.msra.mxu0 0.0
    %5020 = vmatprep.subr.mxu0 0.0
    %5021 = vmatpush1.msra.mxu0 0.0
    %5022 = vmatprep.subr.mxu0 0.0
    %5023 = vmatpush1.msra.mxu0 0.0
    %5024 = vmatprep.subr.mxu0 0.0
    %5025 = vmatpush1.msra.mxu0 0.0
    %5026 = vmatprep.subr.mxu0 0.0
    %5027 = vmatpush1.msra.mxu0 0.0
    %5028 = vmatprep.subr.mxu0 0.0
    %5029 = vmatpush1.msra.mxu0 0.0
    %5030 = vmatprep.subr.mxu0 0.0
    %5031 = vmatpush1.msra.mxu0 0.0
    %5032 = vmatprep.subr.mxu0 0.0
    %5033 = vmatpush1.msra.mxu0 0.0
    %5034 = vmatprep.subr.mxu0 0.0
    %5035 = vmatpush1.msra.mxu0 0.0
    %5036 = vmatprep.subr.mxu0 0.0
    %5037 = vmatpush1.msra.mxu0 0.0
    %5038 = vmatprep.subr.mxu0 0.0
    %5039 = vmatpush1.msra.mxu0 0.0
    %5040 = vmatprep.subr.mxu0 0.0
    %5041 = vmatpush1.msra.mxu0 0.0
    %5042 = vmatprep.subr.mxu0 0.0
    %5043 = vmatpush1.msra.mxu0 0.0
    %5044 = vmatprep.subr.mxu0 0.0
    %5045 = vmatpush1.msra.mxu0 0.0
    %5046 = vmatprep.subr.mxu0 0.0
    %5047 = vmatpush1.msra.mxu0 0.0
    %5048 = vmatprep.subr.mxu0 0.0
    %5049 = vmatpush1.msra.mxu0 0.0
    %5050 = vmatprep.subr.mxu0 0.0
    %5051 = vmatpush1.msra.mxu0 0.0
    %5052 = vmatprep.subr.mxu0 0.0
    %5053 = vmatpush1.msra.mxu0 0.0
    %5054 = vmatprep.subr.mxu0 0.0
    %5055 = vmatpush1.msra.mxu0 0.0
    %5056 = vmatprep.subr.mxu0 0.0
    %5057 = vmatpush1.msra.mxu0 0.0
    %5058 = vmatprep.subr.mxu0 0.0
    %5059 = vmatpush1.msra.mxu0 0.0
    %5060 = vmatprep.subr.mxu0 0.0
    %5061 = vmatpush1.msra.mxu0 0.0
    %5062 = vmatprep.subr.mxu0 0.0
    %5063 = vmatpush1.msra.mxu0 0.0
    %5064 = vmatprep.mubr.f32.mxu0 0.0
    %5065 = vmatmul.mubr.f32.gmra.mrb[0].mxu0 %v4998
    %v5066 = vpop.f32.mrb[0].mxu0
    %v5067 = vadd.f32 0.0, %v5066
    %v5068 = vpop.f32.mrb[0].mxu0
    %5069 = vdwg.mxu0
    %5070 = vrot.lane.b32.xlu0 %v4382, 48
    %v5071 = vpop.permute.xlu0 %5070
    %v5074 = vsel %vm495, %v4993, 0
    %5076 = vmatprep.subr.mxu0 0.0
    %5077 = vmatpush1.msra.mxu0 %v5071
    %5078 = vmatprep.subr.mxu0 0.0
    %5079 = vmatpush1.msra.mxu0 0.0
    %5080 = vmatprep.subr.mxu0 0.0
    %5081 = vmatpush1.msra.mxu0 0.0
    %5082 = vmatprep.subr.mxu0 0.0
    %5083 = vmatpush1.msra.mxu0 0.0
    %5084 = vmatprep.subr.mxu0 0.0
    %5085 = vmatpush1.msra.mxu0 0.0
    %5086 = vmatprep.subr.mxu0 0.0
    %5087 = vmatpush1.msra.mxu0 0.0
    %5088 = vmatprep.subr.mxu0 0.0
    %5089 = vmatpush1.msra.mxu0 0.0
    %5090 = vmatprep.subr.mxu0 0.0
    %5091 = vmatpush1.msra.mxu0 0.0
    %5092 = vmatprep.subr.mxu0 0.0
    %5093 = vmatpush1.msra.mxu0 0.0
    %5094 = vmatprep.subr.mxu0 0.0
    %5095 = vmatpush1.msra.mxu0 0.0
    %5096 = vmatprep.subr.mxu0 0.0
    %5097 = vmatpush1.msra.mxu0 0.0
    %5098 = vmatprep.subr.mxu0 0.0
    %5099 = vmatpush1.msra.mxu0 0.0
    %5100 = vmatprep.subr.mxu0 0.0
    %5101 = vmatpush1.msra.mxu0 0.0
    %5102 = vmatprep.subr.mxu0 0.0
    %5103 = vmatpush1.msra.mxu0 0.0
    %5104 = vmatprep.subr.mxu0 0.0
    %5105 = vmatpush1.msra.mxu0 0.0
    %5106 = vmatprep.subr.mxu0 0.0
    %5107 = vmatpush1.msra.mxu0 0.0
    %5108 = vmatprep.subr.mxu0 0.0
    %5109 = vmatpush1.msra.mxu0 0.0
    %5110 = vmatprep.subr.mxu0 0.0
    %5111 = vmatpush1.msra.mxu0 0.0
    %5112 = vmatprep.subr.mxu0 0.0
    %5113 = vmatpush1.msra.mxu0 0.0
    %5114 = vmatprep.subr.mxu0 0.0
    %5115 = vmatpush1.msra.mxu0 0.0
    %5116 = vmatprep.subr.mxu0 0.0
    %5117 = vmatpush1.msra.mxu0 0.0
    %5118 = vmatprep.subr.mxu0 0.0
    %5119 = vmatpush1.msra.mxu0 0.0
    %5120 = vmatprep.subr.mxu0 0.0
    %5121 = vmatpush1.msra.mxu0 0.0
    %5122 = vmatprep.subr.mxu0 0.0
    %5123 = vmatpush1.msra.mxu0 0.0
    %5124 = vmatprep.subr.mxu0 0.0
    %5125 = vmatpush1.msra.mxu0 0.0
    %5126 = vmatprep.subr.mxu0 0.0
    %5127 = vmatpush1.msra.mxu0 0.0
    %5128 = vmatprep.subr.mxu0 0.0
    %5129 = vmatpush1.msra.mxu0 0.0
    %5130 = vmatprep.subr.mxu0 0.0
    %5131 = vmatpush1.msra.mxu0 0.0
    %5132 = vmatprep.subr.mxu0 0.0
    %5133 = vmatpush1.msra.mxu0 0.0
    %5134 = vmatprep.subr.mxu0 0.0
    %5135 = vmatpush1.msra.mxu0 0.0
    %5136 = vmatprep.subr.mxu0 0.0
    %5137 = vmatpush1.msra.mxu0 0.0
    %5138 = vmatprep.subr.mxu0 0.0
    %5139 = vmatpush1.msra.mxu0 0.0
    %5140 = vmatprep.mubr.f32.mxu0 0.0
    %5141 = vmatmul.mubr.f32.gmra.mrb[0].mxu0 %v5074
    %v5142 = vpop.f32.mrb[0].mxu0
    %v5143 = vadd.f32 0.0, %v5142
    %v5144 = vpop.f32.mrb[0].mxu0
    %5145 = vdwg.mxu0
    %v5147 = vsel %vm339, %v5067, 0
    %v5150 = vsel %vm339, %v5143, 0
    %5152 = vmatprep.subr.mxu0 0.0
    %5153 = vmatpush1.msra.mxu0 %v4387
    %5154 = vmatprep.subr.mxu0 0.0
    %5155 = vmatpush1.msra.mxu0 %v4388
    %5156 = vmatprep.subr.mxu0 0.0
    %5157 = vmatpush1.msra.mxu0 0.0
    %5158 = vmatprep.subr.mxu0 0.0
    %5159 = vmatpush1.msra.mxu0 0.0
    %5160 = vmatprep.subr.mxu0 0.0
    %5161 = vmatpush1.msra.mxu0 0.0
    %5162 = vmatprep.subr.mxu0 0.0
    %5163 = vmatpush1.msra.mxu0 0.0
    %5164 = vmatprep.subr.mxu0 0.0
    %5165 = vmatpush1.msra.mxu0 0.0
    %5166 = vmatprep.subr.mxu0 0.0
    %5167 = vmatpush1.msra.mxu0 0.0
    %5168 = vmatprep.subr.mxu0 0.0
    %5169 = vmatpush1.msra.mxu0 0.0
    %5170 = vmatprep.subr.mxu0 0.0
    %5171 = vmatpush1.msra.mxu0 0.0
    %5172 = vmatprep.subr.mxu0 0.0
    %5173 = vmatpush1.msra.mxu0 0.0
    %5174 = vmatprep.subr.mxu0 0.0
    %5175 = vmatpush1.msra.mxu0 0.0
    %5176 = vmatprep.subr.mxu0 0.0
    %5177 = vmatpush1.msra.mxu0 0.0
    %5178 = vmatprep.subr.mxu0 0.0
    %5179 = vmatpush1.msra.mxu0 0.0
    %5180 = vmatprep.subr.mxu0 0.0
    %5181 = vmatpush1.msra.mxu0 0.0
    %5182 = vmatprep.subr.mxu0 0.0
    %5183 = vmatpush1.msra.mxu0 0.0
    %5184 = vmatprep.subr.mxu0 0.0
    %5185 = vmatpush1.msra.mxu0 0.0
    %5186 = vmatprep.subr.mxu0 0.0
    %5187 = vmatpush1.msra.mxu0 0.0
    %5188 = vmatprep.subr.mxu0 0.0
    %5189 = vmatpush1.msra.mxu0 0.0
    %5190 = vmatprep.subr.mxu0 0.0
    %5191 = vmatpush1.msra.mxu0 0.0
    %5192 = vmatprep.subr.mxu0 0.0
    %5193 = vmatpush1.msra.mxu0 0.0
    %5194 = vmatprep.subr.mxu0 0.0
    %5195 = vmatpush1.msra.mxu0 0.0
    %5196 = vmatprep.subr.mxu0 0.0
    %5197 = vmatpush1.msra.mxu0 0.0
    %5198 = vmatprep.subr.mxu0 0.0
    %5199 = vmatpush1.msra.mxu0 0.0
    %5200 = vmatprep.subr.mxu0 0.0
    %5201 = vmatpush1.msra.mxu0 0.0
    %5202 = vmatprep.subr.mxu0 0.0
    %5203 = vmatpush1.msra.mxu0 0.0
    %5204 = vmatprep.subr.mxu0 0.0
    %5205 = vmatpush1.msra.mxu0 0.0
    %5206 = vmatprep.subr.mxu0 0.0
    %5207 = vmatpush1.msra.mxu0 0.0
    %5208 = vmatprep.subr.mxu0 0.0
    %5209 = vmatpush1.msra.mxu0 0.0
    %5210 = vmatprep.subr.mxu0 0.0
    %5211 = vmatpush1.msra.mxu0 0.0
    %5212 = vmatprep.subr.mxu0 0.0
    %5213 = vmatpush1.msra.mxu0 0.0
    %5214 = vmatprep.subr.mxu0 0.0
    %5215 = vmatpush1.msra.mxu0 0.0
    %5216 = vmatprep.mubr.f32.mxu0 0.0
    %5217 = vmatmul.mubr.f32.gmra.mrb[0].mxu0 %v5147
    %v5218 = vpop.f32.mrb[0].mxu0
    %v5219 = vadd.f32 0.0, %v5218
    %v5220 = vpop.f32.mrb[0].mxu0
    %5221 = vmatprep.mubr.f32.mxu0 0.0
    %5222 = vmatmul.mubr.f32.gmra.mrb[0].mxu0 %v5150
    %v5223 = vpop.f32.mrb[0].mxu0
    %v5224 = vadd.f32 0.0, %v5223
    %v5225 = vpop.f32.mrb[0].mxu0
    %5226 = vdwg.mxu0
    %v5227 = vadd.f32 %v4810, %v5219
    %v5228 = vadd.f32 %v4811, %v5224
    %v5229 = vadd.f32 %v4289, %v5227
    %v5230 = vadd.f32 %v4290, %v5228
    %v5231 = vsel %vm242, %v5229, 0.0
    %5232 = vadd.xlane.f32.xlu0 %v5231
    %v5233 = vpop.xlane.xlu0 %5232
    %v5234 = vsel %vm242, %v5230, 0.0
    %5235 = vadd.xlane.f32.xlu0 %v5234
    %v5236 = vpop.xlane.xlu0 %5235
    %v5237 = vmul.f32 %v5233, %v1178
    %v5238 = vmul.f32 %v5236, %v1178
    %v5239 = vsub.f32 %v5229, %v5237
    %v5240 = vsub.f32 %v5230, %v5238
    %v5241 = vmul.f32 %v5239, %v5239
    %v5242 = vmul.f32 %v5240, %v5240
    %v5243 = vsel %vm242, %v5241, 0.0
    %5244 = vadd.xlane.f32.xlu0 %v5243
    %v5245 = vpop.xlane.xlu0 %5244
    %v5246 = vsel %vm242, %v5242, 0.0
    %5247 = vadd.xlane.f32.xlu0 %v5246
    %v5248 = vpop.xlane.xlu0 %5247
    %v5249 = vmul.f32 %v5245, %v1178
    %v5250 = vmul.f32 %v5248, %v1178
    %v5251 = vadd.f32 %v5249, 1e-05
    %v5252 = vadd.f32 %v5250, 1e-05
    %v5253 = vrsqrt.pop %v5251
    %v5254 = vrsqrt.pop %v5252
    %v5255 = vmul.f32 %v5239, %v5253
    %v5256 = vmul.f32 %v5240, %v5254
    %v5258 = vlaneseq
    %v5259 = vshrl.u32 %v5258, 7
    %v5260 = vsub.s32 0, %v5259
    %v5261 = vrot.slane %v4291, %v5260
    %v5263 = vmul.f32 %v5255, %v5261
    %v5264 = vmul.f32 %v5256, %v5261
    %v5266 = vlaneseq
    %v5267 = vshrl.u32 %v5266, 7
    %v5268 = vsub.s32 0, %v5267
    %v5269 = vrot.slane %v4292, %v5268
    %v5271 = vadd.f32 %v5263, %v5269
    %v5272 = vadd.f32 %v5264, %v5269
    %v5273 = vld [vmem:[%s55] sm:$0xff]
    %v5274 = vld [vmem:[%s55 + $0x8] sm:$0xff]
    %v5275 = vld [vmem:[%s55 + $0x10] sm:$0xff]
    %v5276 = vld [vmem:[%s55 + $0x18] sm:$0xff]
    %v5277 = vld [vmem:[%s57] sm:$0x1]
    %v5279 = vlaneseq
    %v5280 = vshrl.u32 %v5279, 7
    %v5281 = vsub.s32 0, %v5280
    %v5282 = vrot.slane %v5277, %v5281
    %v5285 = vsel %vm242, %v5271, 0
    %v5288 = vsel %vm242, %v5272, 0
    %5290 = vmatprep.subr.mxu0 0.0
    %5291 = vmatpush1.msra.mxu0 %v5273
    %5292 = vmatprep.subr.mxu0 0.0
    %5293 = vmatpush1.msra.mxu0 %v5274
    %5294 = vmatprep.subr.mxu0 0.0
    %5295 = vmatpush1.msra.mxu0 %v5275
    %5296 = vmatprep.subr.mxu0 0.0
    %5297 = vmatpush1.msra.mxu0 %v5276
    %5298 = vmatprep.subr.mxu0 0.0
    %5299 = vmatpush1.msra.mxu0 0.0
    %5300 = vmatprep.subr.mxu0 0.0
    %5301 = vmatpush1.msra.mxu0 0.0
    %5302 = vmatprep.subr.mxu0 0.0
    %5303 = vmatpush1.msra.mxu0 0.0
    %5304 = vmatprep.subr.mxu0 0.0
    %5305 = vmatpush1.msra.mxu0 0.0
    %5306 = vmatprep.subr.mxu0 0.0
    %5307 = vmatpush1.msra.mxu0 0.0
    %5308 = vmatprep.subr.mxu0 0.0
    %5309 = vmatpush1.msra.mxu0 0.0
    %5310 = vmatprep.subr.mxu0 0.0
    %5311 = vmatpush1.msra.mxu0 0.0
    %5312 = vmatprep.subr.mxu0 0.0
    %5313 = vmatpush1.msra.mxu0 0.0
    %5314 = vmatprep.subr.mxu0 0.0
    %5315 = vmatpush1.msra.mxu0 0.0
    %5316 = vmatprep.subr.mxu0 0.0
    %5317 = vmatpush1.msra.mxu0 0.0
    %5318 = vmatprep.subr.mxu0 0.0
    %5319 = vmatpush1.msra.mxu0 0.0
    %5320 = vmatprep.subr.mxu0 0.0
    %5321 = vmatpush1.msra.mxu0 0.0
    %5322 = vmatprep.subr.mxu0 0.0
    %5323 = vmatpush1.msra.mxu0 0.0
    %5324 = vmatprep.subr.mxu0 0.0
    %5325 = vmatpush1.msra.mxu0 0.0
    %5326 = vmatprep.subr.mxu0 0.0
    %5327 = vmatpush1.msra.mxu0 0.0
    %5328 = vmatprep.subr.mxu0 0.0
    %5329 = vmatpush1.msra.mxu0 0.0
    %5330 = vmatprep.subr.mxu0 0.0
    %5331 = vmatpush1.msra.mxu0 0.0
    %5332 = vmatprep.subr.mxu0 0.0
    %5333 = vmatpush1.msra.mxu0 0.0
    %5334 = vmatprep.subr.mxu0 0.0
    %5335 = vmatpush1.msra.mxu0 0.0
    %5336 = vmatprep.subr.mxu0 0.0
    %5337 = vmatpush1.msra.mxu0 0.0
    %5338 = vmatprep.subr.mxu0 0.0
    %5339 = vmatpush1.msra.mxu0 0.0
    %5340 = vmatprep.subr.mxu0 0.0
    %5341 = vmatpush1.msra.mxu0 0.0
    %5342 = vmatprep.subr.mxu0 0.0
    %5343 = vmatpush1.msra.mxu0 0.0
    %5344 = vmatprep.subr.mxu0 0.0
    %5345 = vmatpush1.msra.mxu0 0.0
    %5346 = vmatprep.subr.mxu0 0.0
    %5347 = vmatpush1.msra.mxu0 0.0
    %5348 = vmatprep.subr.mxu0 0.0
    %5349 = vmatpush1.msra.mxu0 0.0
    %5350 = vmatprep.subr.mxu0 0.0
    %5351 = vmatpush1.msra.mxu0 0.0
    %5352 = vmatprep.subr.mxu0 0.0
    %5353 = vmatpush1.msra.mxu0 0.0
    %5354 = vmatprep.mubr.f32.mxu0 0.0
    %5355 = vmatmul.mubr.f32.gmra.mrb[0].mxu0 %v5285
    %v5356 = vpop.f32.mrb[0].mxu0
    %v5357 = vadd.f32 %v5282, %v5356
    %v5358 = vpop.f32.mrb[0].mxu0
    %5359 = vmatprep.mubr.f32.mxu0 0.0
    %5360 = vmatmul.mubr.f32.gmra.mrb[0].mxu0 %v5288
    %v5361 = vpop.f32.mrb[0].mxu0
    %v5362 = vadd.f32 %v5282, %v5361
    %v5363 = vpop.f32.mrb[0].mxu0
    %5364 = vdwg.mxu0
    %v5365 = vld [vmem:[%s59] sm:$0xff]
    %v5366 = vld [vmem:[%s59 + $0x8] sm:$0xff]
    %v5367 = vld [vmem:[%s59 + $0x10] sm:$0xff]
    %v5368 = vld [vmem:[%s59 + $0x18] sm:$0xff]
    %v5369 = vld [vmem:[%s61] sm:$0x1]
    %v5371 = vlaneseq
    %v5372 = vshrl.u32 %v5371, 7
    %v5373 = vsub.s32 0, %v5372
    %v5374 = vrot.slane %v5369, %v5373
    %5376 = vmatprep.subr.mxu0 0.0
    %5377 = vmatpush1.msra.mxu0 %v5365
    %5378 = vmatprep.subr.mxu0 0.0
    %5379 = vmatpush1.msra.mxu0 %v5366
    %5380 = vmatprep.subr.mxu0 0.0
    %5381 = vmatpush1.msra.mxu0 %v5367
    %5382 = vmatprep.subr.mxu0 0.0
    %5383 = vmatpush1.msra.mxu0 %v5368
    %5384 = vmatprep.subr.mxu0 0.0
    %5385 = vmatpush1.msra.mxu0 0.0
    %5386 = vmatprep.subr.mxu0 0.0
    %5387 = vmatpush1.msra.mxu0 0.0
    %5388 = vmatprep.subr.mxu0 0.0
    %5389 = vmatpush1.msra.mxu0 0.0
    %5390 = vmatprep.subr.mxu0 0.0
    %5391 = vmatpush1.msra.mxu0 0.0
    %5392 = vmatprep.subr.mxu0 0.0
    %5393 = vmatpush1.msra.mxu0 0.0
    %5394 = vmatprep.subr.mxu0 0.0
    %5395 = vmatpush1.msra.mxu0 0.0
    %5396 = vmatprep.subr.mxu0 0.0
    %5397 = vmatpush1.msra.mxu0 0.0
    %5398 = vmatprep.subr.mxu0 0.0
    %5399 = vmatpush1.msra.mxu0 0.0
    %5400 = vmatprep.subr.mxu0 0.0
    %5401 = vmatpush1.msra.mxu0 0.0
    %5402 = vmatprep.subr.mxu0 0.0
    %5403 = vmatpush1.msra.mxu0 0.0
    %5404 = vmatprep.subr.mxu0 0.0
    %5405 = vmatpush1.msra.mxu0 0.0
    %5406 = vmatprep.subr.mxu0 0.0
    %5407 = vmatpush1.msra.mxu0 0.0
    %5408 = vmatprep.subr.mxu0 0.0
    %5409 = vmatpush1.msra.mxu0 0.0
    %5410 = vmatprep.subr.mxu0 0.0
    %5411 = vmatpush1.msra.mxu0 0.0
    %5412 = vmatprep.subr.mxu0 0.0
    %5413 = vmatpush1.msra.mxu0 0.0
    %5414 = vmatprep.subr.mxu0 0.0
    %5415 = vmatpush1.msra.mxu0 0.0
    %5416 = vmatprep.subr.mxu0 0.0
    %5417 = vmatpush1.msra.mxu0 0.0
    %5418 = vmatprep.subr.mxu0 0.0
    %5419 = vmatpush1.msra.mxu0 0.0
    %5420 = vmatprep.subr.mxu0 0.0
    %5421 = vmatpush1.msra.mxu0 0.0
    %5422 = vmatprep.subr.mxu0 0.0
    %5423 = vmatpush1.msra.mxu0 0.0
    %5424 = vmatprep.subr.mxu0 0.0
    %5425 = vmatpush1.msra.mxu0 0.0
    %5426 = vmatprep.subr.mxu0 0.0
    %5427 = vmatpush1.msra.mxu0 0.0
    %5428 = vmatprep.subr.mxu0 0.0
    %5429 = vmatpush1.msra.mxu0 0.0
    %5430 = vmatprep.subr.mxu0 0.0
    %5431 = vmatpush1.msra.mxu0 0.0
    %5432 = vmatprep.subr.mxu0 0.0
    %5433 = vmatpush1.msra.mxu0 0.0
    %5434 = vmatprep.subr.mxu0 0.0
    %5435 = vmatpush1.msra.mxu0 0.0
    %5436 = vmatprep.subr.mxu0 0.0
    %5437 = vmatpush1.msra.mxu0 0.0
    %5438 = vmatprep.subr.mxu0 0.0
    %5439 = vmatpush1.msra.mxu0 0.0
    %5440 = vmatprep.mubr.f32.mxu0 0.0
    %5441 = vmatmul.mubr.f32.gmra.mrb[0].mxu0 %v2664
    %v5442 = vpop.f32.mrb[0].mxu0
    %v5443 = vadd.f32 %v5374, %v5442
    %v5444 = vpop.f32.mrb[0].mxu0
    %5445 = vmatprep.mubr.f32.mxu0 0.0
    %5446 = vmatmul.mubr.f32.gmra.mrb[0].mxu0 %v2667
    %v5447 = vpop.f32.mrb[0].mxu0
    %v5448 = vadd.f32 %v5374, %v5447
    %v5449 = vpop.f32.mrb[0].mxu0
    %5450 = vdwg.mxu0
    %v5451 = vld [vmem:[%s63] sm:$0xff]
    %v5452 = vld [vmem:[%s63 + $0x8] sm:$0xff]
    %v5453 = vld [vmem:[%s63 + $0x10] sm:$0xff]
    %v5454 = vld [vmem:[%s63 + $0x18] sm:$0xff]
    %v5455 = vld [vmem:[%s65] sm:$0x1]
    %v5457 = vlaneseq
    %v5458 = vshrl.u32 %v5457, 7
    %v5459 = vsub.s32 0, %v5458
    %v5460 = vrot.slane %v5455, %v5459
    %v5462 = vadd.f32 %v5460, 0.0
    %v5464 = vsel %vm339, %v5357, 0
    %v5467 = vsel %vm339, %v5443, 0
    %5469 = vmatprep.subr.mxu0 0.0
    %5470 = vmatpush1.xpose.msra.mxu0 %v5467
    %5471 = vmatprep.subr.mxu0 0.0
    %5472 = vmatpush1.xpose.msra.mxu0 0.0
    %5473 = vmatprep.subr.mxu0 0.0
    %5474 = vmatpush1.xpose.msra.mxu0 0.0
    %5475 = vmatprep.subr.mxu0 0.0
    %5476 = vmatpush1.xpose.msra.mxu0 0.0
    %5477 = vmatprep.subr.mxu0 0.0
    %5478 = vmatpush1.xpose.msra.mxu0 0.0
    %5479 = vmatprep.subr.mxu0 0.0
    %5480 = vmatpush1.xpose.msra.mxu0 0.0
    %5481 = vmatprep.subr.mxu0 0.0
    %5482 = vmatpush1.xpose.msra.mxu0 0.0
    %5483 = vmatprep.subr.mxu0 0.0
    %5484 = vmatpush1.xpose.msra.mxu0 0.0
    %5485 = vmatprep.subr.mxu0 0.0
    %5486 = vmatpush1.xpose.msra.mxu0 0.0
    %5487 = vmatprep.subr.mxu0 0.0
    %5488 = vmatpush1.xpose.msra.mxu0 0.0
    %5489 = vmatprep.subr.mxu0 0.0
    %5490 = vmatpush1.xpose.msra.mxu0 0.0
    %5491 = vmatprep.subr.mxu0 0.0
    %5492 = vmatpush1.xpose.msra.mxu0 0.0
    %5493 = vmatprep.subr.mxu0 0.0
    %5494 = vmatpush1.xpose.msra.mxu0 0.0
    %5495 = vmatprep.subr.mxu0 0.0
    %5496 = vmatpush1.xpose.msra.mxu0 0.0
    %5497 = vmatprep.subr.mxu0 0.0
    %5498 = vmatpush1.xpose.msra.mxu0 0.0
    %5499 = vmatprep.subr.mxu0 0.0
    %5500 = vmatpush1.xpose.msra.mxu0 0.0
    %5501 = vmatprep.subr.mxu0 0.0
    %5502 = vmatpush1.xpose.msra.mxu0 0.0
    %5503 = vmatprep.subr.mxu0 0.0
    %5504 = vmatpush1.xpose.msra.mxu0 0.0
    %5505 = vmatprep.subr.mxu0 0.0
    %5506 = vmatpush1.xpose.msra.mxu0 0.0
    %5507 = vmatprep.subr.mxu0 0.0
    %5508 = vmatpush1.xpose.msra.mxu0 0.0
    %5509 = vmatprep.subr.mxu0 0.0
    %5510 = vmatpush1.xpose.msra.mxu0 0.0
    %5511 = vmatprep.subr.mxu0 0.0
    %5512 = vmatpush1.xpose.msra.mxu0 0.0
    %5513 = vmatprep.subr.mxu0 0.0
    %5514 = vmatpush1.xpose.msra.mxu0 0.0
    %5515 = vmatprep.subr.mxu0 0.0
    %5516 = vmatpush1.xpose.msra.mxu0 0.0
    %5517 = vmatprep.subr.mxu0 0.0
    %5518 = vmatpush1.xpose.msra.mxu0 0.0
    %5519 = vmatprep.subr.mxu0 0.0
    %5520 = vmatpush1.xpose.msra.mxu0 0.0
    %5521 = vmatprep.subr.mxu0 0.0
    %5522 = vmatpush1.xpose.msra.mxu0 0.0
    %5523 = vmatprep.subr.mxu0 0.0
    %5524 = vmatpush1.xpose.msra.mxu0 0.0
    %5525 = vmatprep.subr.mxu0 0.0
    %5526 = vmatpush1.xpose.msra.mxu0 0.0
    %5527 = vmatprep.subr.mxu0 0.0
    %5528 = vmatpush1.xpose.msra.mxu0 0.0
    %5529 = vmatprep.subr.mxu0 0.0
    %5530 = vmatpush1.xpose.msra.mxu0 0.0
    %5531 = vmatprep.subr.mxu0 0.0
    %5532 = vmatpush1.xpose.msra.mxu0 0.0
    %5533 = vmatprep.mubr.f32.mxu0 0.0
    %5534 = vmatmul.mubr.f32.gmra.mrb[0].mxu0 %v5464
    %v5535 = vpop.f32.mrb[0].mxu0
    %v5536 = vadd.f32 0.0, %v5535
    %v5537 = vpop.f32.mrb[0].mxu0
    %5538 = vdwg.mxu0
    %v5540 = vsel %vm339, %v5362, 0
    %v5543 = vsel %vm339, %v5448, 0
    %5545 = vmatprep.subr.mxu0 0.0
    %5546 = vmatpush1.xpose.msra.mxu0 %v5543
    %5547 = vmatprep.subr.mxu0 0.0
    %5548 = vmatpush1.xpose.msra.mxu0 0.0
    %5549 = vmatprep.subr.mxu0 0.0
    %5550 = vmatpush1.xpose.msra.mxu0 0.0
    %5551 = vmatprep.subr.mxu0 0.0
    %5552 = vmatpush1.xpose.msra.mxu0 0.0
    %5553 = vmatprep.subr.mxu0 0.0
    %5554 = vmatpush1.xpose.msra.mxu0 0.0
    %5555 = vmatprep.subr.mxu0 0.0
    %5556 = vmatpush1.xpose.msra.mxu0 0.0
    %5557 = vmatprep.subr.mxu0 0.0
    %5558 = vmatpush1.xpose.msra.mxu0 0.0
    %5559 = vmatprep.subr.mxu0 0.0
    %5560 = vmatpush1.xpose.msra.mxu0 0.0
    %5561 = vmatprep.subr.mxu0 0.0
    %5562 = vmatpush1.xpose.msra.mxu0 0.0
    %5563 = vmatprep.subr.mxu0 0.0
    %5564 = vmatpush1.xpose.msra.mxu0 0.0
    %5565 = vmatprep.subr.mxu0 0.0
    %5566 = vmatpush1.xpose.msra.mxu0 0.0
    %5567 = vmatprep.subr.mxu0 0.0
    %5568 = vmatpush1.xpose.msra.mxu0 0.0
    %5569 = vmatprep.subr.mxu0 0.0
    %5570 = vmatpush1.xpose.msra.mxu0 0.0
    %5571 = vmatprep.subr.mxu0 0.0
    %5572 = vmatpush1.xpose.msra.mxu0 0.0
    %5573 = vmatprep.subr.mxu0 0.0
    %5574 = vmatpush1.xpose.msra.mxu0 0.0
    %5575 = vmatprep.subr.mxu0 0.0
    %5576 = vmatpush1.xpose.msra.mxu0 0.0
    %5577 = vmatprep.subr.mxu0 0.0
    %5578 = vmatpush1.xpose.msra.mxu0 0.0
    %5579 = vmatprep.subr.mxu0 0.0
    %5580 = vmatpush1.xpose.msra.mxu0 0.0
    %5581 = vmatprep.subr.mxu0 0.0
    %5582 = vmatpush1.xpose.msra.mxu0 0.0
    %5583 = vmatprep.subr.mxu0 0.0
    %5584 = vmatpush1.xpose.msra.mxu0 0.0
    %5585 = vmatprep.subr.mxu0 0.0
    %5586 = vmatpush1.xpose.msra.mxu0 0.0
    %5587 = vmatprep.subr.mxu0 0.0
    %5588 = vmatpush1.xpose.msra.mxu0 0.0
    %5589 = vmatprep.subr.mxu0 0.0
    %5590 = vmatpush1.xpose.msra.mxu0 0.0
    %5591 = vmatprep.subr.mxu0 0.0
    %5592 = vmatpush1.xpose.msra.mxu0 0.0
    %5593 = vmatprep.subr.mxu0 0.0
    %5594 = vmatpush1.xpose.msra.mxu0 0.0
    %5595 = vmatprep.subr.mxu0 0.0
    %5596 = vmatpush1.xpose.msra.mxu0 0.0
    %5597 = vmatprep.subr.mxu0 0.0
    %5598 = vmatpush1.xpose.msra.mxu0 0.0
    %5599 = vmatprep.subr.mxu0 0.0
    %5600 = vmatpush1.xpose.msra.mxu0 0.0
    %5601 = vmatprep.subr.mxu0 0.0
    %5602 = vmatpush1.xpose.msra.mxu0 0.0
    %5603 = vmatprep.subr.mxu0 0.0
    %5604 = vmatpush1.xpose.msra.mxu0 0.0
    %5605 = vmatprep.subr.mxu0 0.0
    %5606 = vmatpush1.xpose.msra.mxu0 0.0
    %5607 = vmatprep.subr.mxu0 0.0
    %5608 = vmatpush1.xpose.msra.mxu0 0.0
    %5609 = vmatprep.mubr.f32.mxu0 0.0
    %5610 = vmatmul.mubr.f32.gmra.mrb[0].mxu0 %v5540
    %v5611 = vpop.f32.mrb[0].mxu0
    %v5612 = vadd.f32 0.0, %v5611
    %v5613 = vpop.f32.mrb[0].mxu0
    %5614 = vdwg.mxu0
    %v5615 = vmul.f32 %v5536, 0.25
    %v5616 = vmul.f32 %v5612, 0.25
    %v5617 = vadd.f32 %v5615, %v225
    %v5618 = vadd.f32 %v5616, %v226
    %v5619 = vsel %vm495, %v5617, -inf
    %5620 = vmax.xlane.f32.xlu0 %v5619
    %v5621 = vpop.xlane.xlu0 %5620
    %v5622 = vsel %vm495, %v5618, -inf
    %5623 = vmax.xlane.f32.xlu0 %v5622
    %v5624 = vpop.xlane.xlu0 %5623
    %v5625 = vsub.f32 %v5617, %v5621
    %v5626 = vsub.f32 %v5618, %v5624
    %v5627 = vmul.f32 %v5625, 1.442695
    %v5628 = vpow.pop %v5627
    %v5629 = vmul.f32 %v5626, 1.442695
    %v5630 = vpow.pop %v5629
    %v5631 = vsel %vm495, %v5628, 0.0
    %5632 = vadd.xlane.f32.xlu0 %v5631
    %v5633 = vpop.xlane.xlu0 %5632
    %v5634 = vsel %vm495, %v5630, 0.0
    %5635 = vadd.xlane.f32.xlu0 %v5634
    %v5636 = vpop.xlane.xlu0 %5635
    %v5637 = vrcp.pop %v5633
    %v5638 = vrcp.pop %v5636
    %v5639 = vmul.f32 %v5628, %v5637
    %v5640 = vmul.f32 %v5630, %v5638
    %5641 = vrot.lane.b32.xlu0 %v5443, 96
    %v5642 = vpop.permute.xlu0 %5641
    %v5645 = vsel %vm495, %v5639, 0
    %5647 = vmatprep.subr.mxu0 0.0
    %5648 = vmatpush1.msra.mxu0 %v5642
    %5649 = vmatprep.subr.mxu0 0.0
    %5650 = vmatpush1.msra.mxu0 0.0
    %5651 = vmatprep.subr.mxu0 0.0
    %5652 = vmatpush1.msra.mxu0 0.0
    %5653 = vmatprep.subr.mxu0 0.0
    %5654 = vmatpush1.msra.mxu0 0.0
    %5655 = vmatprep.subr.mxu0 0.0
    %5656 = vmatpush1.msra.mxu0 0.0
    %5657 = vmatprep.subr.mxu0 0.0
    %5658 = vmatpush1.msra.mxu0 0.0
    %5659 = vmatprep.subr.mxu0 0.0
    %5660 = vmatpush1.msra.mxu0 0.0
    %5661 = vmatprep.subr.mxu0 0.0
    %5662 = vmatpush1.msra.mxu0 0.0
    %5663 = vmatprep.subr.mxu0 0.0
    %5664 = vmatpush1.msra.mxu0 0.0
    %5665 = vmatprep.subr.mxu0 0.0
    %5666 = vmatpush1.msra.mxu0 0.0
    %5667 = vmatprep.subr.mxu0 0.0
    %5668 = vmatpush1.msra.mxu0 0.0
    %5669 = vmatprep.subr.mxu0 0.0
    %5670 = vmatpush1.msra.mxu0 0.0
    %5671 = vmatprep.subr.mxu0 0.0
    %5672 = vmatpush1.msra.mxu0 0.0
    %5673 = vmatprep.subr.mxu0 0.0
    %5674 = vmatpush1.msra.mxu0 0.0
    %5675 = vmatprep.subr.mxu0 0.0
    %5676 = vmatpush1.msra.mxu0 0.0
    %5677 = vmatprep.subr.mxu0 0.0
    %5678 = vmatpush1.msra.mxu0 0.0
    %5679 = vmatprep.subr.mxu0 0.0
    %5680 = vmatpush1.msra.mxu0 0.0
    %5681 = vmatprep.subr.mxu0 0.0
    %5682 = vmatpush1.msra.mxu0 0.0
    %5683 = vmatprep.subr.mxu0 0.0
    %5684 = vmatpush1.msra.mxu0 0.0
    %5685 = vmatprep.subr.mxu0 0.0
    %5686 = vmatpush1.msra.mxu0 0.0
    %5687 = vmatprep.subr.mxu0 0.0
    %5688 = vmatpush1.msra.mxu0 0.0
    %5689 = vmatprep.subr.mxu0 0.0
    %5690 = vmatpush1.msra.mxu0 0.0
    %5691 = vmatprep.subr.mxu0 0.0
    %5692 = vmatpush1.msra.mxu0 0.0
    %5693 = vmatprep.subr.mxu0 0.0
    %5694 = vmatpush1.msra.mxu0 0.0
    %5695 = vmatprep.subr.mxu0 0.0
    %5696 = vmatpush1.msra.mxu0 0.0
    %5697 = vmatprep.subr.mxu0 0.0
    %5698 = vmatpush1.msra.mxu0 0.0
    %5699 = vmatprep.subr.mxu0 0.0
    %5700 = vmatpush1.msra.mxu0 0.0
    %5701 = vmatprep.subr.mxu0 0.0
    %5702 = vmatpush1.msra.mxu0 0.0
    %5703 = vmatprep.subr.mxu0 0.0
    %5704 = vmatpush1.msra.mxu0 0.0
    %5705 = vmatprep.subr.mxu0 0.0
    %5706 = vmatpush1.msra.mxu0 0.0
    %5707 = vmatprep.subr.mxu0 0.0
    %5708 = vmatpush1.msra.mxu0 0.0
    %5709 = vmatprep.subr.mxu0 0.0
    %5710 = vmatpush1.msra.mxu0 0.0
    %5711 = vmatprep.mubr.f32.mxu0 0.0
    %5712 = vmatmul.mubr.f32.gmra.mrb[0].mxu0 %v5645
    %v5713 = vpop.f32.mrb[0].mxu0
    %v5714 = vadd.f32 0.0, %v5713
    %v5715 = vpop.f32.mrb[0].mxu0
    %5716 = vdwg.mxu0
    %5717 = vrot.lane.b32.xlu0 %v5448, 96
    %v5718 = vpop.permute.xlu0 %5717
    %v5721 = vsel %vm495, %v5640, 0
    %5723 = vmatprep.subr.mxu0 0.0
    %5724 = vmatpush1.msra.mxu0 %v5718
    %5725 = vmatprep.subr.mxu0 0.0
    %5726 = vmatpush1.msra.mxu0 0.0
    %5727 = vmatprep.subr.mxu0 0.0
    %5728 = vmatpush1.msra.mxu0 0.0
    %5729 = vmatprep.subr.mxu0 0.0
    %5730 = vmatpush1.msra.mxu0 0.0
    %5731 = vmatprep.subr.mxu0 0.0
    %5732 = vmatpush1.msra.mxu0 0.0
    %5733 = vmatprep.subr.mxu0 0.0
    %5734 = vmatpush1.msra.mxu0 0.0
    %5735 = vmatprep.subr.mxu0 0.0
    %5736 = vmatpush1.msra.mxu0 0.0
    %5737 = vmatprep.subr.mxu0 0.0
    %5738 = vmatpush1.msra.mxu0 0.0
    %5739 = vmatprep.subr.mxu0 0.0
    %5740 = vmatpush1.msra.mxu0 0.0
    %5741 = vmatprep.subr.mxu0 0.0
    %5742 = vmatpush1.msra.mxu0 0.0
    %5743 = vmatprep.subr.mxu0 0.0
    %5744 = vmatpush1.msra.mxu0 0.0
    %5745 = vmatprep.subr.mxu0 0.0
    %5746 = vmatpush1.msra.mxu0 0.0
    %5747 = vmatprep.subr.mxu0 0.0
    %5748 = vmatpush1.msra.mxu0 0.0
    %5749 = vmatprep.subr.mxu0 0.0
    %5750 = vmatpush1.msra.mxu0 0.0
    %5751 = vmatprep.subr.mxu0 0.0
    %5752 = vmatpush1.msra.mxu0 0.0
    %5753 = vmatprep.subr.mxu0 0.0
    %5754 = vmatpush1.msra.mxu0 0.0
    %5755 = vmatprep.subr.mxu0 0.0
    %5756 = vmatpush1.msra.mxu0 0.0
    %5757 = vmatprep.subr.mxu0 0.0
    %5758 = vmatpush1.msra.mxu0 0.0
    %5759 = vmatprep.subr.mxu0 0.0
    %5760 = vmatpush1.msra.mxu0 0.0
    %5761 = vmatprep.subr.mxu0 0.0
    %5762 = vmatpush1.msra.mxu0 0.0
    %5763 = vmatprep.subr.mxu0 0.0
    %5764 = vmatpush1.msra.mxu0 0.0
    %5765 = vmatprep.subr.mxu0 0.0
    %5766 = vmatpush1.msra.mxu0 0.0
    %5767 = vmatprep.subr.mxu0 0.0
    %5768 = vmatpush1.msra.mxu0 0.0
    %5769 = vmatprep.subr.mxu0 0.0
    %5770 = vmatpush1.msra.mxu0 0.0
    %5771 = vmatprep.subr.mxu0 0.0
    %5772 = vmatpush1.msra.mxu0 0.0
    %5773 = vmatprep.subr.mxu0 0.0
    %5774 = vmatpush1.msra.mxu0 0.0
    %5775 = vmatprep.subr.mxu0 0.0
    %5776 = vmatpush1.msra.mxu0 0.0
    %5777 = vmatprep.subr.mxu0 0.0
    %5778 = vmatpush1.msra.mxu0 0.0
    %5779 = vmatprep.subr.mxu0 0.0
    %5780 = vmatpush1.msra.mxu0 0.0
    %5781 = vmatprep.subr.mxu0 0.0
    %5782 = vmatpush1.msra.mxu0 0.0
    %5783 = vmatprep.subr.mxu0 0.0
    %5784 = vmatpush1.msra.mxu0 0.0
    %5785 = vmatprep.subr.mxu0 0.0
    %5786 = vmatpush1.msra.mxu0 0.0
    %5787 = vmatprep.mubr.f32.mxu0 0.0
    %5788 = vmatmul.mubr.f32.gmra.mrb[0].mxu0 %v5721
    %v5789 = vpop.f32.mrb[0].mxu0
    %v5790 = vadd.f32 0.0, %v5789
    %v5791 = vpop.f32.mrb[0].mxu0
    %5792 = vdwg.mxu0
    %v5794 = vsel %vm339, %v5714, 0
    %v5797 = vsel %vm339, %v5790, 0
    %5799 = vmatprep.subr.mxu0 0.0
    %5800 = vmatpush1.msra.mxu0 %v5451
    %5801 = vmatprep.subr.mxu0 0.0
    %5802 = vmatpush1.msra.mxu0 %v5452
    %5803 = vmatprep.subr.mxu0 0.0
    %5804 = vmatpush1.msra.mxu0 0.0
    %5805 = vmatprep.subr.mxu0 0.0
    %5806 = vmatpush1.msra.mxu0 0.0
    %5807 = vmatprep.subr.mxu0 0.0
    %5808 = vmatpush1.msra.mxu0 0.0
    %5809 = vmatprep.subr.mxu0 0.0
    %5810 = vmatpush1.msra.mxu0 0.0
    %5811 = vmatprep.subr.mxu0 0.0
    %5812 = vmatpush1.msra.mxu0 0.0
    %5813 = vmatprep.subr.mxu0 0.0
    %5814 = vmatpush1.msra.mxu0 0.0
    %5815 = vmatprep.subr.mxu0 0.0
    %5816 = vmatpush1.msra.mxu0 0.0
    %5817 = vmatprep.subr.mxu0 0.0
    %5818 = vmatpush1.msra.mxu0 0.0
    %5819 = vmatprep.subr.mxu0 0.0
    %5820 = vmatpush1.msra.mxu0 0.0
    %5821 = vmatprep.subr.mxu0 0.0
    %5822 = vmatpush1.msra.mxu0 0.0
    %5823 = vmatprep.subr.mxu0 0.0
    %5824 = vmatpush1.msra.mxu0 0.0
    %5825 = vmatprep.subr.mxu0 0.0
    %5826 = vmatpush1.msra.mxu0 0.0
    %5827 = vmatprep.subr.mxu0 0.0
    %5828 = vmatpush1.msra.mxu0 0.0
    %5829 = vmatprep.subr.mxu0 0.0
    %5830 = vmatpush1.msra.mxu0 0.0
    %5831 = vmatprep.subr.mxu0 0.0
    %5832 = vmatpush1.msra.mxu0 0.0
    %5833 = vmatprep.subr.mxu0 0.0
    %5834 = vmatpush1.msra.mxu0 0.0
    %5835 = vmatprep.subr.mxu0 0.0
    %5836 = vmatpush1.msra.mxu0 0.0
    %5837 = vmatprep.subr.mxu0 0.0
    %5838 = vmatpush1.msra.mxu0 0.0
    %5839 = vmatprep.subr.mxu0 0.0
    %5840 = vmatpush1.msra.mxu0 0.0
    %5841 = vmatprep.subr.mxu0 0.0
    %5842 = vmatpush1.msra.mxu0 0.0
    %5843 = vmatprep.subr.mxu0 0.0
    %5844 = vmatpush1.msra.mxu0 0.0
    %5845 = vmatprep.subr.mxu0 0.0
    %5846 = vmatpush1.msra.mxu0 0.0
    %5847 = vmatprep.subr.mxu0 0.0
    %5848 = vmatpush1.msra.mxu0 0.0
    %5849 = vmatprep.subr.mxu0 0.0
    %5850 = vmatpush1.msra.mxu0 0.0
    %5851 = vmatprep.subr.mxu0 0.0
    %5852 = vmatpush1.msra.mxu0 0.0
    %5853 = vmatprep.subr.mxu0 0.0
    %5854 = vmatpush1.msra.mxu0 0.0
    %5855 = vmatprep.subr.mxu0 0.0
    %5856 = vmatpush1.msra.mxu0 0.0
    %5857 = vmatprep.subr.mxu0 0.0
    %5858 = vmatpush1.msra.mxu0 0.0
    %5859 = vmatprep.subr.mxu0 0.0
    %5860 = vmatpush1.msra.mxu0 0.0
    %5861 = vmatprep.subr.mxu0 0.0
    %5862 = vmatpush1.msra.mxu0 0.0
    %5863 = vmatprep.mubr.f32.mxu0 0.0
    %5864 = vmatmul.mubr.f32.gmra.mrb[0].mxu0 %v5794
    %v5865 = vpop.f32.mrb[0].mxu0
    %v5866 = vadd.f32 0.0, %v5865
    %v5867 = vpop.f32.mrb[0].mxu0
    %5868 = vmatprep.mubr.f32.mxu0 0.0
    %5869 = vmatmul.mubr.f32.gmra.mrb[0].mxu0 %v5797
    %v5870 = vpop.f32.mrb[0].mxu0
    %v5871 = vadd.f32 0.0, %v5870
    %v5872 = vpop.f32.mrb[0].mxu0
    %5873 = vdwg.mxu0
    %v5874 = vadd.f32 %v5462, %v5866
    %v5875 = vadd.f32 %v5462, %v5871
    %5876 = vrot.lane.b32.xlu0 %v5357, 112
    %v5877 = vpop.permute.xlu0 %5876
    %5878 = vrot.lane.b32.xlu0 %v5443, 112
    %v5879 = vpop.permute.xlu0 %5878
    %v5880 = vsel %vm339, %v5877, 0
    %v5882 = vsel %vm339, %v5879, 0
    %5884 = vmatprep.subr.mxu0 0.0
    %5885 = vmatpush1.xpose.msra.mxu0 %v5882
    %5886 = vmatprep.subr.mxu0 0.0
    %5887 = vmatpush1.xpose.msra.mxu0 0.0
    %5888 = vmatprep.subr.mxu0 0.0
    %5889 = vmatpush1.xpose.msra.mxu0 0.0
    %5890 = vmatprep.subr.mxu0 0.0
    %5891 = vmatpush1.xpose.msra.mxu0 0.0
    %5892 = vmatprep.subr.mxu0 0.0
    %5893 = vmatpush1.xpose.msra.mxu0 0.0
    %5894 = vmatprep.subr.mxu0 0.0
    %5895 = vmatpush1.xpose.msra.mxu0 0.0
    %5896 = vmatprep.subr.mxu0 0.0
    %5897 = vmatpush1.xpose.msra.mxu0 0.0
    %5898 = vmatprep.subr.mxu0 0.0
    %5899 = vmatpush1.xpose.msra.mxu0 0.0
    %5900 = vmatprep.subr.mxu0 0.0
    %5901 = vmatpush1.xpose.msra.mxu0 0.0
    %5902 = vmatprep.subr.mxu0 0.0
    %5903 = vmatpush1.xpose.msra.mxu0 0.0
    %5904 = vmatprep.subr.mxu0 0.0
    %5905 = vmatpush1.xpose.msra.mxu0 0.0
    %5906 = vmatprep.subr.mxu0 0.0
    %5907 = vmatpush1.xpose.msra.mxu0 0.0
    %5908 = vmatprep.subr.mxu0 0.0
    %5909 = vmatpush1.xpose.msra.mxu0 0.0
    %5910 = vmatprep.subr.mxu0 0.0
    %5911 = vmatpush1.xpose.msra.mxu0 0.0
    %5912 = vmatprep.subr.mxu0 0.0
    %5913 = vmatpush1.xpose.msra.mxu0 0.0
    %5914 = vmatprep.subr.mxu0 0.0
    %5915 = vmatpush1.xpose.msra.mxu0 0.0
    %5916 = vmatprep.subr.mxu0 0.0
    %5917 = vmatpush1.xpose.msra.mxu0 0.0
    %5918 = vmatprep.subr.mxu0 0.0
    %5919 = vmatpush1.xpose.msra.mxu0 0.0
    %5920 = vmatprep.subr.mxu0 0.0
    %5921 = vmatpush1.xpose.msra.mxu0 0.0
    %5922 = vmatprep.subr.mxu0 0.0
    %5923 = vmatpush1.xpose.msra.mxu0 0.0
    %5924 = vmatprep.subr.mxu0 0.0
    %5925 = vmatpush1.xpose.msra.mxu0 0.0
    %5926 = vmatprep.subr.mxu0 0.0
    %5927 = vmatpush1.xpose.msra.mxu0 0.0
    %5928 = vmatprep.subr.mxu0 0.0
    %5929 = vmatpush1.xpose.msra.mxu0 0.0
    %5930 = vmatprep.subr.mxu0 0.0
    %5931 = vmatpush1.xpose.msra.mxu0 0.0
    %5932 = vmatprep.subr.mxu0 0.0
    %5933 = vmatpush1.xpose.msra.mxu0 0.0
    %5934 = vmatprep.subr.mxu0 0.0
    %5935 = vmatpush1.xpose.msra.mxu0 0.0
    %5936 = vmatprep.subr.mxu0 0.0
    %5937 = vmatpush1.xpose.msra.mxu0 0.0
    %5938 = vmatprep.subr.mxu0 0.0
    %5939 = vmatpush1.xpose.msra.mxu0 0.0
    %5940 = vmatprep.subr.mxu0 0.0
    %5941 = vmatpush1.xpose.msra.mxu0 0.0
    %5942 = vmatprep.subr.mxu0 0.0
    %5943 = vmatpush1.xpose.msra.mxu0 0.0
    %5944 = vmatprep.subr.mxu0 0.0
    %5945 = vmatpush1.xpose.msra.mxu0 0.0
    %5946 = vmatprep.subr.mxu0 0.0
    %5947 = vmatpush1.xpose.msra.mxu0 0.0
    %5948 = vmatprep.mubr.f32.mxu0 0.0
    %5949 = vmatmul.mubr.f32.gmra.mrb[0].mxu0 %v5880
    %v5950 = vpop.f32.mrb[0].mxu0
    %v5951 = vadd.f32 0.0, %v5950
    %v5952 = vpop.f32.mrb[0].mxu0
    %5953 = vdwg.mxu0
    %5954 = vrot.lane.b32.xlu0 %v5362, 112
    %v5955 = vpop.permute.xlu0 %5954
    %5956 = vrot.lane.b32.xlu0 %v5448, 112
    %v5957 = vpop.permute.xlu0 %5956
    %v5958 = vsel %vm339, %v5955, 0
    %v5960 = vsel %vm339, %v5957, 0
    %5962 = vmatprep.subr.mxu0 0.0
    %5963 = vmatpush1.xpose.msra.mxu0 %v5960
    %5964 = vmatprep.subr.mxu0 0.0
    %5965 = vmatpush1.xpose.msra.mxu0 0.0
    %5966 = vmatprep.subr.mxu0 0.0
    %5967 = vmatpush1.xpose.msra.mxu0 0.0
    %5968 = vmatprep.subr.mxu0 0.0
    %5969 = vmatpush1.xpose.msra.mxu0 0.0
    %5970 = vmatprep.subr.mxu0 0.0
    %5971 = vmatpush1.xpose.msra.mxu0 0.0
    %5972 = vmatprep.subr.mxu0 0.0
    %5973 = vmatpush1.xpose.msra.mxu0 0.0
    %5974 = vmatprep.subr.mxu0 0.0
    %5975 = vmatpush1.xpose.msra.mxu0 0.0
    %5976 = vmatprep.subr.mxu0 0.0
    %5977 = vmatpush1.xpose.msra.mxu0 0.0
    %5978 = vmatprep.subr.mxu0 0.0
    %5979 = vmatpush1.xpose.msra.mxu0 0.0
    %5980 = vmatprep.subr.mxu0 0.0
    %5981 = vmatpush1.xpose.msra.mxu0 0.0
    %5982 = vmatprep.subr.mxu0 0.0
    %5983 = vmatpush1.xpose.msra.mxu0 0.0
    %5984 = vmatprep.subr.mxu0 0.0
    %5985 = vmatpush1.xpose.msra.mxu0 0.0
    %5986 = vmatprep.subr.mxu0 0.0
    %5987 = vmatpush1.xpose.msra.mxu0 0.0
    %5988 = vmatprep.subr.mxu0 0.0
    %5989 = vmatpush1.xpose.msra.mxu0 0.0
    %5990 = vmatprep.subr.mxu0 0.0
    %5991 = vmatpush1.xpose.msra.mxu0 0.0
    %5992 = vmatprep.subr.mxu0 0.0
    %5993 = vmatpush1.xpose.msra.mxu0 0.0
    %5994 = vmatprep.subr.mxu0 0.0
    %5995 = vmatpush1.xpose.msra.mxu0 0.0
    %5996 = vmatprep.subr.mxu0 0.0
    %5997 = vmatpush1.xpose.msra.mxu0 0.0
    %5998 = vmatprep.subr.mxu0 0.0
    %5999 = vmatpush1.xpose.msra.mxu0 0.0
    %6000 = vmatprep.subr.mxu0 0.0
    %6001 = vmatpush1.xpose.msra.mxu0 0.0
    %6002 = vmatprep.subr.mxu0 0.0
    %6003 = vmatpush1.xpose.msra.mxu0 0.0
    %6004 = vmatprep.subr.mxu0 0.0
    %6005 = vmatpush1.xpose.msra.mxu0 0.0
    %6006 = vmatprep.subr.mxu0 0.0
    %6007 = vmatpush1.xpose.msra.mxu0 0.0
    %6008 = vmatprep.subr.mxu0 0.0
    %6009 = vmatpush1.xpose.msra.mxu0 0.0
    %6010 = vmatprep.subr.mxu0 0.0
    %6011 = vmatpush1.xpose.msra.mxu0 0.0
    %6012 = vmatprep.subr.mxu0 0.0
    %6013 = vmatpush1.xpose.msra.mxu0 0.0
    %6014 = vmatprep.subr.mxu0 0.0
    %6015 = vmatpush1.xpose.msra.mxu0 0.0
    %6016 = vmatprep.subr.mxu0 0.0
    %6017 = vmatpush1.xpose.msra.mxu0 0.0
    %6018 = vmatprep.subr.mxu0 0.0
    %6019 = vmatpush1.xpose.msra.mxu0 0.0
    %6020 = vmatprep.subr.mxu0 0.0
    %6021 = vmatpush1.xpose.msra.mxu0 0.0
    %6022 = vmatprep.subr.mxu0 0.0
    %6023 = vmatpush1.xpose.msra.mxu0 0.0
    %6024 = vmatprep.subr.mxu0 0.0
    %6025 = vmatpush1.xpose.msra.mxu0 0.0
    %6026 = vmatprep.mubr.f32.mxu0 0.0
    %6027 = vmatmul.mubr.f32.gmra.mrb[0].mxu0 %v5958
    %v6028 = vpop.f32.mrb[0].mxu0
    %v6029 = vadd.f32 0.0, %v6028
    %v6030 = vpop.f32.mrb[0].mxu0
    %6031 = vdwg.mxu0
    %v6032 = vmul.f32 %v5951, 0.25
    %v6033 = vmul.f32 %v6029, 0.25
    %v6034 = vadd.f32 %v6032, %v225
    %v6035 = vadd.f32 %v6033, %v226
    %v6036 = vsel %vm495, %v6034, -inf
    %6037 = vmax.xlane.f32.xlu0 %v6036
    %v6038 = vpop.xlane.xlu0 %6037
    %v6039 = vsel %vm495, %v6035, -inf
    %6040 = vmax.xlane.f32.xlu0 %v6039
    %v6041 = vpop.xlane.xlu0 %6040
    %v6042 = vsub.f32 %v6034, %v6038
    %v6043 = vsub.f32 %v6035, %v6041
    %v6044 = vmul.f32 %v6042, 1.442695
    %v6045 = vpow.pop %v6044
    %v6046 = vmul.f32 %v6043, 1.442695
    %v6047 = vpow.pop %v6046
    %v6048 = vsel %vm495, %v6045, 0.0
    %6049 = vadd.xlane.f32.xlu0 %v6048
    %v6050 = vpop.xlane.xlu0 %6049
    %v6051 = vsel %vm495, %v6047, 0.0
    %6052 = vadd.xlane.f32.xlu0 %v6051
    %v6053 = vpop.xlane.xlu0 %6052
    %v6054 = vrcp.pop %v6050
    %v6055 = vrcp.pop %v6053
    %v6056 = vmul.f32 %v6045, %v6054
    %v6057 = vmul.f32 %v6047, %v6055
    %6058 = vrot.lane.b32.xlu0 %v5443, 80
    %v6059 = vpop.permute.xlu0 %6058
    %v6062 = vsel %vm495, %v6056, 0
    %6064 = vmatprep.subr.mxu0 0.0
    %6065 = vmatpush1.msra.mxu0 %v6059
    %6066 = vmatprep.subr.mxu0 0.0
    %6067 = vmatpush1.msra.mxu0 0.0
    %6068 = vmatprep.subr.mxu0 0.0
    %6069 = vmatpush1.msra.mxu0 0.0
    %6070 = vmatprep.subr.mxu0 0.0
    %6071 = vmatpush1.msra.mxu0 0.0
    %6072 = vmatprep.subr.mxu0 0.0
    %6073 = vmatpush1.msra.mxu0 0.0
    %6074 = vmatprep.subr.mxu0 0.0
    %6075 = vmatpush1.msra.mxu0 0.0
    %6076 = vmatprep.subr.mxu0 0.0
    %6077 = vmatpush1.msra.mxu0 0.0
    %6078 = vmatprep.subr.mxu0 0.0
    %6079 = vmatpush1.msra.mxu0 0.0
    %6080 = vmatprep.subr.mxu0 0.0
    %6081 = vmatpush1.msra.mxu0 0.0
    %6082 = vmatprep.subr.mxu0 0.0
    %6083 = vmatpush1.msra.mxu0 0.0
    %6084 = vmatprep.subr.mxu0 0.0
    %6085 = vmatpush1.msra.mxu0 0.0
    %6086 = vmatprep.subr.mxu0 0.0
    %6087 = vmatpush1.msra.mxu0 0.0
    %6088 = vmatprep.subr.mxu0 0.0
    %6089 = vmatpush1.msra.mxu0 0.0
    %6090 = vmatprep.subr.mxu0 0.0
    %6091 = vmatpush1.msra.mxu0 0.0
    %6092 = vmatprep.subr.mxu0 0.0
    %6093 = vmatpush1.msra.mxu0 0.0
    %6094 = vmatprep.subr.mxu0 0.0
    %6095 = vmatpush1.msra.mxu0 0.0
    %6096 = vmatprep.subr.mxu0 0.0
    %6097 = vmatpush1.msra.mxu0 0.0
    %6098 = vmatprep.subr.mxu0 0.0
    %6099 = vmatpush1.msra.mxu0 0.0
    %6100 = vmatprep.subr.mxu0 0.0
    %6101 = vmatpush1.msra.mxu0 0.0
    %6102 = vmatprep.subr.mxu0 0.0
    %6103 = vmatpush1.msra.mxu0 0.0
    %6104 = vmatprep.subr.mxu0 0.0
    %6105 = vmatpush1.msra.mxu0 0.0
    %6106 = vmatprep.subr.mxu0 0.0
    %6107 = vmatpush1.msra.mxu0 0.0
    %6108 = vmatprep.subr.mxu0 0.0
    %6109 = vmatpush1.msra.mxu0 0.0
    %6110 = vmatprep.subr.mxu0 0.0
    %6111 = vmatpush1.msra.mxu0 0.0
    %6112 = vmatprep.subr.mxu0 0.0
    %6113 = vmatpush1.msra.mxu0 0.0
    %6114 = vmatprep.subr.mxu0 0.0
    %6115 = vmatpush1.msra.mxu0 0.0
    %6116 = vmatprep.subr.mxu0 0.0
    %6117 = vmatpush1.msra.mxu0 0.0
    %6118 = vmatprep.subr.mxu0 0.0
    %6119 = vmatpush1.msra.mxu0 0.0
    %6120 = vmatprep.subr.mxu0 0.0
    %6121 = vmatpush1.msra.mxu0 0.0
    %6122 = vmatprep.subr.mxu0 0.0
    %6123 = vmatpush1.msra.mxu0 0.0
    %6124 = vmatprep.subr.mxu0 0.0
    %6125 = vmatpush1.msra.mxu0 0.0
    %6126 = vmatprep.subr.mxu0 0.0
    %6127 = vmatpush1.msra.mxu0 0.0
    %6128 = vmatprep.mubr.f32.mxu0 0.0
    %6129 = vmatmul.mubr.f32.gmra.mrb[0].mxu0 %v6062
    %v6130 = vpop.f32.mrb[0].mxu0
    %v6131 = vadd.f32 0.0, %v6130
    %v6132 = vpop.f32.mrb[0].mxu0
    %6133 = vdwg.mxu0
    %6134 = vrot.lane.b32.xlu0 %v5448, 80
    %v6135 = vpop.permute.xlu0 %6134
    %v6138 = vsel %vm495, %v6057, 0
    %6140 = vmatprep.subr.mxu0 0.0
    %6141 = vmatpush1.msra.mxu0 %v6135
    %6142 = vmatprep.subr.mxu0 0.0
    %6143 = vmatpush1.msra.mxu0 0.0
    %6144 = vmatprep.subr.mxu0 0.0
    %6145 = vmatpush1.msra.mxu0 0.0
    %6146 = vmatprep.subr.mxu0 0.0
    %6147 = vmatpush1.msra.mxu0 0.0
    %6148 = vmatprep.subr.mxu0 0.0
    %6149 = vmatpush1.msra.mxu0 0.0
    %6150 = vmatprep.subr.mxu0 0.0
    %6151 = vmatpush1.msra.mxu0 0.0
    %6152 = vmatprep.subr.mxu0 0.0
    %6153 = vmatpush1.msra.mxu0 0.0
    %6154 = vmatprep.subr.mxu0 0.0
    %6155 = vmatpush1.msra.mxu0 0.0
    %6156 = vmatprep.subr.mxu0 0.0
    %6157 = vmatpush1.msra.mxu0 0.0
    %6158 = vmatprep.subr.mxu0 0.0
    %6159 = vmatpush1.msra.mxu0 0.0
    %6160 = vmatprep.subr.mxu0 0.0
    %6161 = vmatpush1.msra.mxu0 0.0
    %6162 = vmatprep.subr.mxu0 0.0
    %6163 = vmatpush1.msra.mxu0 0.0
    %6164 = vmatprep.subr.mxu0 0.0
    %6165 = vmatpush1.msra.mxu0 0.0
    %6166 = vmatprep.subr.mxu0 0.0
    %6167 = vmatpush1.msra.mxu0 0.0
    %6168 = vmatprep.subr.mxu0 0.0
    %6169 = vmatpush1.msra.mxu0 0.0
    %6170 = vmatprep.subr.mxu0 0.0
    %6171 = vmatpush1.msra.mxu0 0.0
    %6172 = vmatprep.subr.mxu0 0.0
    %6173 = vmatpush1.msra.mxu0 0.0
    %6174 = vmatprep.subr.mxu0 0.0
    %6175 = vmatpush1.msra.mxu0 0.0
    %6176 = vmatprep.subr.mxu0 0.0
    %6177 = vmatpush1.msra.mxu0 0.0
    %6178 = vmatprep.subr.mxu0 0.0
    %6179 = vmatpush1.msra.mxu0 0.0
    %6180 = vmatprep.subr.mxu0 0.0
    %6181 = vmatpush1.msra.mxu0 0.0
    %6182 = vmatprep.subr.mxu0 0.0
    %6183 = vmatpush1.msra.mxu0 0.0
    %6184 = vmatprep.subr.mxu0 0.0
    %6185 = vmatpush1.msra.mxu0 0.0
    %6186 = vmatprep.subr.mxu0 0.0
    %6187 = vmatpush1.msra.mxu0 0.0
    %6188 = vmatprep.subr.mxu0 0.0
    %6189 = vmatpush1.msra.mxu0 0.0
    %6190 = vmatprep.subr.mxu0 0.0
    %6191 = vmatpush1.msra.mxu0 0.0
    %6192 = vmatprep.subr.mxu0 0.0
    %6193 = vmatpush1.msra.mxu0 0.0
    %6194 = vmatprep.subr.mxu0 0.0
    %6195 = vmatpush1.msra.mxu0 0.0
    %6196 = vmatprep.subr.mxu0 0.0
    %6197 = vmatpush1.msra.mxu0 0.0
    %6198 = vmatprep.subr.mxu0 0.0
    %6199 = vmatpush1.msra.mxu0 0.0
    %6200 = vmatprep.subr.mxu0 0.0
    %6201 = vmatpush1.msra.mxu0 0.0
    %6202 = vmatprep.subr.mxu0 0.0
    %6203 = vmatpush1.msra.mxu0 0.0
    %6204 = vmatprep.mubr.f32.mxu0 0.0
    %6205 = vmatmul.mubr.f32.gmra.mrb[0].mxu0 %v6138
    %v6206 = vpop.f32.mrb[0].mxu0
    %v6207 = vadd.f32 0.0, %v6206
    %v6208 = vpop.f32.mrb[0].mxu0
    %6209 = vdwg.mxu0
    %v6211 = vsel %vm339, %v6131, 0
    %v6214 = vsel %vm339, %v6207, 0
    %6216 = vmatprep.subr.mxu0 0.0
    %6217 = vmatpush1.msra.mxu0 %v5453
    %6218 = vmatprep.subr.mxu0 0.0
    %6219 = vmatpush1.msra.mxu0 %v5454
    %6220 = vmatprep.subr.mxu0 0.0
    %6221 = vmatpush1.msra.mxu0 0.0
    %6222 = vmatprep.subr.mxu0 0.0
    %6223 = vmatpush1.msra.mxu0 0.0
    %6224 = vmatprep.subr.mxu0 0.0
    %6225 = vmatpush1.msra.mxu0 0.0
    %6226 = vmatprep.subr.mxu0 0.0
    %6227 = vmatpush1.msra.mxu0 0.0
    %6228 = vmatprep.subr.mxu0 0.0
    %6229 = vmatpush1.msra.mxu0 0.0
    %6230 = vmatprep.subr.mxu0 0.0
    %6231 = vmatpush1.msra.mxu0 0.0
    %6232 = vmatprep.subr.mxu0 0.0
    %6233 = vmatpush1.msra.mxu0 0.0
    %6234 = vmatprep.subr.mxu0 0.0
    %6235 = vmatpush1.msra.mxu0 0.0
    %6236 = vmatprep.subr.mxu0 0.0
    %6237 = vmatpush1.msra.mxu0 0.0
    %6238 = vmatprep.subr.mxu0 0.0
    %6239 = vmatpush1.msra.mxu0 0.0
    %6240 = vmatprep.subr.mxu0 0.0
    %6241 = vmatpush1.msra.mxu0 0.0
    %6242 = vmatprep.subr.mxu0 0.0
    %6243 = vmatpush1.msra.mxu0 0.0
    %6244 = vmatprep.subr.mxu0 0.0
    %6245 = vmatpush1.msra.mxu0 0.0
    %6246 = vmatprep.subr.mxu0 0.0
    %6247 = vmatpush1.msra.mxu0 0.0
    %6248 = vmatprep.subr.mxu0 0.0
    %6249 = vmatpush1.msra.mxu0 0.0
    %6250 = vmatprep.subr.mxu0 0.0
    %6251 = vmatpush1.msra.mxu0 0.0
    %6252 = vmatprep.subr.mxu0 0.0
    %6253 = vmatpush1.msra.mxu0 0.0
    %6254 = vmatprep.subr.mxu0 0.0
    %6255 = vmatpush1.msra.mxu0 0.0
    %6256 = vmatprep.subr.mxu0 0.0
    %6257 = vmatpush1.msra.mxu0 0.0
    %6258 = vmatprep.subr.mxu0 0.0
    %6259 = vmatpush1.msra.mxu0 0.0
    %6260 = vmatprep.subr.mxu0 0.0
    %6261 = vmatpush1.msra.mxu0 0.0
    %6262 = vmatprep.subr.mxu0 0.0
    %6263 = vmatpush1.msra.mxu0 0.0
    %6264 = vmatprep.subr.mxu0 0.0
    %6265 = vmatpush1.msra.mxu0 0.0
    %6266 = vmatprep.subr.mxu0 0.0
    %6267 = vmatpush1.msra.mxu0 0.0
    %6268 = vmatprep.subr.mxu0 0.0
    %6269 = vmatpush1.msra.mxu0 0.0
    %6270 = vmatprep.subr.mxu0 0.0
    %6271 = vmatpush1.msra.mxu0 0.0
    %6272 = vmatprep.subr.mxu0 0.0
    %6273 = vmatpush1.msra.mxu0 0.0
    %6274 = vmatprep.subr.mxu0 0.0
    %6275 = vmatpush1.msra.mxu0 0.0
    %6276 = vmatprep.subr.mxu0 0.0
    %6277 = vmatpush1.msra.mxu0 0.0
    %6278 = vmatprep.subr.mxu0 0.0
    %6279 = vmatpush1.msra.mxu0 0.0
    %6280 = vmatprep.mubr.f32.mxu0 0.0
    %6281 = vmatmul.mubr.f32.gmra.mrb[0].mxu0 %v6211
    %v6282 = vpop.f32.mrb[0].mxu0
    %v6283 = vadd.f32 0.0, %v6282
    %v6284 = vpop.f32.mrb[0].mxu0
    %6285 = vmatprep.mubr.f32.mxu0 0.0
    %6286 = vmatmul.mubr.f32.gmra.mrb[0].mxu0 %v6214
    %v6287 = vpop.f32.mrb[0].mxu0
    %v6288 = vadd.f32 0.0, %v6287
    %v6289 = vpop.f32.mrb[0].mxu0
    %6290 = vdwg.mxu0
    %v6291 = vadd.f32 %v5874, %v6283
    %v6292 = vadd.f32 %v5875, %v6288
    %v6293 = vadd.f32 %v5271, %v6291
    %v6294 = vadd.f32 %v5272, %v6292
    %v6295 = vsel %vm242, %v6293, 0.0
    %6296 = vadd.xlane.f32.xlu0 %v6295
    %v6297 = vpop.xlane.xlu0 %6296
    %v6298 = vsel %vm242, %v6294, 0.0
    %6299 = vadd.xlane.f32.xlu0 %v6298
    %v6300 = vpop.xlane.xlu0 %6299
    %v6301 = vmul.f32 %v6297, %v1178
    %v6302 = vmul.f32 %v6300, %v1178
    %v6303 = vsub.f32 %v6293, %v6301
    %v6304 = vsub.f32 %v6294, %v6302
    %v6305 = vmul.f32 %v6303, %v6303
    %v6306 = vmul.f32 %v6304, %v6304
    %v6307 = vsel %vm242, %v6305, 0.0
    %6308 = vadd.xlane.f32.xlu0 %v6307
    %v6309 = vpop.xlane.xlu0 %6308
    %v6310 = vsel %vm242, %v6306, 0.0
    %6311 = vadd.xlane.f32.xlu0 %v6310
    %v6312 = vpop.xlane.xlu0 %6311
    %v6313 = vmul.f32 %v6309, %v1178
    %v6314 = vmul.f32 %v6312, %v1178
    %v6315 = vadd.f32 %v6313, 1e-05
    %v6316 = vadd.f32 %v6314, 1e-05
    %v6317 = vrsqrt.pop %v6315
    %v6318 = vrsqrt.pop %v6316
    %v6319 = vmul.f32 %v6303, %v6317
    %v6320 = vmul.f32 %v6304, %v6318
    %v6321 = vmul.f32 %v6319, %v5261
    %v6322 = vmul.f32 %v6320, %v5261
    %v6323 = vadd.f32 %v6321, %v5269
    %v6324 = vadd.f32 %v6322, %v5269
    %v6325 = vld [vmem:[%s71] sm:$0xff]
    %v6326 = vld [vmem:[%s71 + $0x8] sm:$0xff]
    %v6327 = vld [vmem:[%s71 + $0x10] sm:$0xff]
    %v6328 = vld [vmem:[%s71 + $0x18] sm:$0xff]
    %v6329 = vld [vmem:[%s73] sm:$0x1]
    %v6331 = vlaneseq
    %v6332 = vshrl.u32 %v6331, 7
    %v6333 = vsub.s32 0, %v6332
    %v6334 = vrot.slane %v6329, %v6333
    %v6337 = vsel %vm242, %v6323, 0
    %v6340 = vsel %vm242, %v6324, 0
    %6342 = vmatprep.subr.mxu0 0.0
    %6343 = vmatpush1.msra.mxu0 %v6325
    %6344 = vmatprep.subr.mxu0 0.0
    %6345 = vmatpush1.msra.mxu0 %v6326
    %6346 = vmatprep.subr.mxu0 0.0
    %6347 = vmatpush1.msra.mxu0 %v6327
    %6348 = vmatprep.subr.mxu0 0.0
    %6349 = vmatpush1.msra.mxu0 %v6328
    %6350 = vmatprep.subr.mxu0 0.0
    %6351 = vmatpush1.msra.mxu0 0.0
    %6352 = vmatprep.subr.mxu0 0.0
    %6353 = vmatpush1.msra.mxu0 0.0
    %6354 = vmatprep.subr.mxu0 0.0
    %6355 = vmatpush1.msra.mxu0 0.0
    %6356 = vmatprep.subr.mxu0 0.0
    %6357 = vmatpush1.msra.mxu0 0.0
    %6358 = vmatprep.subr.mxu0 0.0
    %6359 = vmatpush1.msra.mxu0 0.0
    %6360 = vmatprep.subr.mxu0 0.0
    %6361 = vmatpush1.msra.mxu0 0.0
    %6362 = vmatprep.subr.mxu0 0.0
    %6363 = vmatpush1.msra.mxu0 0.0
    %6364 = vmatprep.subr.mxu0 0.0
    %6365 = vmatpush1.msra.mxu0 0.0
    %6366 = vmatprep.subr.mxu0 0.0
    %6367 = vmatpush1.msra.mxu0 0.0
    %6368 = vmatprep.subr.mxu0 0.0
    %6369 = vmatpush1.msra.mxu0 0.0
    %6370 = vmatprep.subr.mxu0 0.0
    %6371 = vmatpush1.msra.mxu0 0.0
    %6372 = vmatprep.subr.mxu0 0.0
    %6373 = vmatpush1.msra.mxu0 0.0
    %6374 = vmatprep.subr.mxu0 0.0
    %6375 = vmatpush1.msra.mxu0 0.0
    %6376 = vmatprep.subr.mxu0 0.0
    %6377 = vmatpush1.msra.mxu0 0.0
    %6378 = vmatprep.subr.mxu0 0.0
    %6379 = vmatpush1.msra.mxu0 0.0
    %6380 = vmatprep.subr.mxu0 0.0
    %6381 = vmatpush1.msra.mxu0 0.0
    %6382 = vmatprep.subr.mxu0 0.0
    %6383 = vmatpush1.msra.mxu0 0.0
    %6384 = vmatprep.subr.mxu0 0.0
    %6385 = vmatpush1.msra.mxu0 0.0
    %6386 = vmatprep.subr.mxu0 0.0
    %6387 = vmatpush1.msra.mxu0 0.0
    %6388 = vmatprep.subr.mxu0 0.0
    %6389 = vmatpush1.msra.mxu0 0.0
    %6390 = vmatprep.subr.mxu0 0.0
    %6391 = vmatpush1.msra.mxu0 0.0
    %6392 = vmatprep.subr.mxu0 0.0
    %6393 = vmatpush1.msra.mxu0 0.0
    %6394 = vmatprep.subr.mxu0 0.0
    %6395 = vmatpush1.msra.mxu0 0.0
    %6396 = vmatprep.subr.mxu0 0.0
    %6397 = vmatpush1.msra.mxu0 0.0
    %6398 = vmatprep.subr.mxu0 0.0
    %6399 = vmatpush1.msra.mxu0 0.0
    %6400 = vmatprep.subr.mxu0 0.0
    %6401 = vmatpush1.msra.mxu0 0.0
    %6402 = vmatprep.subr.mxu0 0.0
    %6403 = vmatpush1.msra.mxu0 0.0
    %6404 = vmatprep.subr.mxu0 0.0
    %6405 = vmatpush1.msra.mxu0 0.0
    %6406 = vmatprep.mubr.f32.mxu0 0.0
    %6407 = vmatmul.mubr.f32.gmra.mrb[0].mxu0 %v6337
    %v6408 = vpop.f32.mrb[0].mxu0
    %v6409 = vadd.f32 %v6334, %v6408
    %v6410 = vpop.f32.mrb[0].mxu0
    %6411 = vmatprep.mubr.f32.mxu0 0.0
    %6412 = vmatmul.mubr.f32.gmra.mrb[0].mxu0 %v6340
    %v6413 = vpop.f32.mrb[0].mxu0
    %v6414 = vadd.f32 %v6334, %v6413
    %v6415 = vpop.f32.mrb[0].mxu0
    %6416 = vdwg.mxu0
    %v6417 = vmax.f32 %v6409, 0.0
    %v6418 = vmax.f32 %v6414, 0.0
    %v6419 = vld [vmem:[%s75] sm:$0xff]
    %v6420 = vld [vmem:[%s75 + $0x8] sm:$0xff]
    %v6421 = vld [vmem:[%s75 + $0x10] sm:$0xff]
    %v6422 = vld [vmem:[%s75 + $0x18] sm:$0xff]
    %v6423 = vld [vmem:[%s75 + $0x20] sm:$0xff]
    %v6424 = vld [vmem:[%s75 + $0x28] sm:$0xff]
    %v6425 = vld [vmem:[%s75 + $0x30] sm:$0xff]
    %v6426 = vld [vmem:[%s75 + $0x38] sm:$0xff]
    %v6427 = vld [vmem:[%s77] sm:$0x1]
    %v6429 = vlaneseq
    %v6430 = vshrl.u32 %v6429, 7
    %v6431 = vsub.s32 0, %v6430
    %v6432 = vrot.slane %v6427, %v6431
    %v6435 = vsel %vm1324, %v6417, 0
    %v6438 = vsel %vm1324, %v6418, 0
    %6440 = vmatprep.subr.mxu0 0.0
    %6441 = vmatpush1.msra.mxu0 %v6419
    %6442 = vmatprep.subr.mxu0 0.0
    %6443 = vmatpush1.msra.mxu0 %v6420
    %6444 = vmatprep.subr.mxu0 0.0
    %6445 = vmatpush1.msra.mxu0 %v6421
    %6446 = vmatprep.subr.mxu0 0.0
    %6447 = vmatpush1.msra.mxu0 %v6422
    %6448 = vmatprep.subr.mxu0 0.0
    %6449 = vmatpush1.msra.mxu0 %v6423
    %6450 = vmatprep.subr.mxu0 0.0
    %6451 = vmatpush1.msra.mxu0 %v6424
    %6452 = vmatprep.subr.mxu0 0.0
    %6453 = vmatpush1.msra.mxu0 %v6425
    %6454 = vmatprep.subr.mxu0 0.0
    %6455 = vmatpush1.msra.mxu0 %v6426
    %6456 = vmatprep.subr.mxu0 0.0
    %6457 = vmatpush1.msra.mxu0 0.0
    %6458 = vmatprep.subr.mxu0 0.0
    %6459 = vmatpush1.msra.mxu0 0.0
    %6460 = vmatprep.subr.mxu0 0.0
    %6461 = vmatpush1.msra.mxu0 0.0
    %6462 = vmatprep.subr.mxu0 0.0
    %6463 = vmatpush1.msra.mxu0 0.0
    %6464 = vmatprep.subr.mxu0 0.0
    %6465 = vmatpush1.msra.mxu0 0.0
    %6466 = vmatprep.subr.mxu0 0.0
    %6467 = vmatpush1.msra.mxu0 0.0
    %6468 = vmatprep.subr.mxu0 0.0
    %6469 = vmatpush1.msra.mxu0 0.0
    %6470 = vmatprep.subr.mxu0 0.0
    %6471 = vmatpush1.msra.mxu0 0.0
    %6472 = vmatprep.subr.mxu0 0.0
    %6473 = vmatpush1.msra.mxu0 0.0
    %6474 = vmatprep.subr.mxu0 0.0
    %6475 = vmatpush1.msra.mxu0 0.0
    %6476 = vmatprep.subr.mxu0 0.0
    %6477 = vmatpush1.msra.mxu0 0.0
    %6478 = vmatprep.subr.mxu0 0.0
    %6479 = vmatpush1.msra.mxu0 0.0
    %6480 = vmatprep.subr.mxu0 0.0
    %6481 = vmatpush1.msra.mxu0 0.0
    %6482 = vmatprep.subr.mxu0 0.0
    %6483 = vmatpush1.msra.mxu0 0.0
    %6484 = vmatprep.subr.mxu0 0.0
    %6485 = vmatpush1.msra.mxu0 0.0
    %6486 = vmatprep.subr.mxu0 0.0
    %6487 = vmatpush1.msra.mxu0 0.0
    %6488 = vmatprep.subr.mxu0 0.0
    %6489 = vmatpush1.msra.mxu0 0.0
    %6490 = vmatprep.subr.mxu0 0.0
    %6491 = vmatpush1.msra.mxu0 0.0
    %6492 = vmatprep.subr.mxu0 0.0
    %6493 = vmatpush1.msra.mxu0 0.0
    %6494 = vmatprep.subr.mxu0 0.0
    %6495 = vmatpush1.msra.mxu0 0.0
    %6496 = vmatprep.subr.mxu0 0.0
    %6497 = vmatpush1.msra.mxu0 0.0
    %6498 = vmatprep.subr.mxu0 0.0
    %6499 = vmatpush1.msra.mxu0 0.0
    %6500 = vmatprep.subr.mxu0 0.0
    %6501 = vmatpush1.msra.mxu0 0.0
    %6502 = vmatprep.subr.mxu0 0.0
    %6503 = vmatpush1.msra.mxu0 0.0
    %6504 = vmatprep.mubr.f32.mxu0 0.0
    %6505 = vmatmul.mubr.f32.gmra.mrb[0].mxu0 %v6435
    %v6506 = vpop.f32.mrb[0].mxu0
    %v6507 = vadd.f32 %v6432, %v6506
    %v6508 = vpop.f32.mrb[0].mxu0
    %6509 = vmatprep.mubr.f32.mxu0 0.0
    %6510 = vmatmul.mubr.f32.gmra.mrb[0].mxu0 %v6438
    %v6511 = vpop.f32.mrb[0].mxu0
    %v6512 = vadd.f32 %v6432, %v6511
    %v6513 = vpop.f32.mrb[0].mxu0
    %6514 = vdwg.mxu0
    %v6515 = vadd.f32 %v6323, %v6507
    %v6516 = vadd.f32 %v6324, %v6512
    %v6517 = vsel %vm242, %v6515, 0.0
    %6518 = vadd.xlane.f32.xlu0 %v6517
    %v6519 = vpop.xlane.xlu0 %6518
    %v6520 = vsel %vm242, %v6516, 0.0
    %6521 = vadd.xlane.f32.xlu0 %v6520
    %v6522 = vpop.xlane.xlu0 %6521
    %v6523 = vmul.f32 %v6519, %v1178
    %v6524 = vmul.f32 %v6522, %v1178
    %v6525 = vsub.f32 %v6515, %v6523
    %v6526 = vsub.f32 %v6516, %v6524
    %v6527 = vmul.f32 %v6525, %v6525
    %v6528 = vmul.f32 %v6526, %v6526
    %v6529 = vsel %vm242, %v6527, 0.0
    %6530 = vadd.xlane.f32.xlu0 %v6529
    %v6531 = vpop.xlane.xlu0 %6530
    %v6532 = vsel %vm242, %v6528, 0.0
    %6533 = vadd.xlane.f32.xlu0 %v6532
    %v6534 = vpop.xlane.xlu0 %6533
    %v6535 = vmul.f32 %v6531, %v1178
    %v6536 = vmul.f32 %v6534, %v1178
    %v6537 = vadd.f32 %v6535, 1e-05
    %v6538 = vadd.f32 %v6536, 1e-05
    %v6539 = vrsqrt.pop %v6537
    %v6540 = vrsqrt.pop %v6538
    %v6541 = vmul.f32 %v6525, %v6539
    %v6542 = vmul.f32 %v6526, %v6540
    %v6543 = vmul.f32 %v6541, %v5261
    %v6544 = vmul.f32 %v6542, %v5261
    %v6545 = vadd.f32 %v6543, %v5269
    %v6546 = vadd.f32 %v6544, %v5269
    %s6547 = scalar_lea.vmem %s67, 1
    %v6548 = vld [vmem:[%s6547] sm:$0x1]
    %s6549 = scalar_lea.vmem %s69, 1
    %v6550 = vld [vmem:[%s6549] sm:$0x1]
    %s6551 = scalar_lea.vmem %s47, 32
    %v6552 = vld [vmem:[%s6551] sm:$0xff]
    %v6553 = vld [vmem:[%s6551 + $0x8] sm:$0xff]
    %v6554 = vld [vmem:[%s6551 + $0x10] sm:$0xff]
    %v6555 = vld [vmem:[%s6551 + $0x18] sm:$0xff]
    %s6556 = scalar_lea.vmem %s49, 1
    %v6557 = vld [vmem:[%s6556] sm:$0x1]
    %v6559 = vlaneseq
    %v6560 = vshrl.u32 %v6559, 7
    %v6561 = vsub.s32 0, %v6560
    %v6562 = vrot.slane %v6557, %v6561
    %v6565 = vsel %vm242, %v6545, 0
    %v6568 = vsel %vm242, %v6546, 0
    %6570 = vmatprep.subr.mxu0 0.0
    %6571 = vmatpush1.msra.mxu0 %v6552
    %6572 = vmatprep.subr.mxu0 0.0
    %6573 = vmatpush1.msra.mxu0 %v6553
    %6574 = vmatprep.subr.mxu0 0.0
    %6575 = vmatpush1.msra.mxu0 %v6554
    %6576 = vmatprep.subr.mxu0 0.0
    %6577 = vmatpush1.msra.mxu0 %v6555
    %6578 = vmatprep.subr.mxu0 0.0
    %6579 = vmatpush1.msra.mxu0 0.0
    %6580 = vmatprep.subr.mxu0 0.0
    %6581 = vmatpush1.msra.mxu0 0.0
    %6582 = vmatprep.subr.mxu0 0.0
    %6583 = vmatpush1.msra.mxu0 0.0
    %6584 = vmatprep.subr.mxu0 0.0
    %6585 = vmatpush1.msra.mxu0 0.0
    %6586 = vmatprep.subr.mxu0 0.0
    %6587 = vmatpush1.msra.mxu0 0.0
    %6588 = vmatprep.subr.mxu0 0.0
    %6589 = vmatpush1.msra.mxu0 0.0
    %6590 = vmatprep.subr.mxu0 0.0
    %6591 = vmatpush1.msra.mxu0 0.0
    %6592 = vmatprep.subr.mxu0 0.0
    %6593 = vmatpush1.msra.mxu0 0.0
    %6594 = vmatprep.subr.mxu0 0.0
    %6595 = vmatpush1.msra.mxu0 0.0
    %6596 = vmatprep.subr.mxu0 0.0
    %6597 = vmatpush1.msra.mxu0 0.0
    %6598 = vmatprep.subr.mxu0 0.0
    %6599 = vmatpush1.msra.mxu0 0.0
    %6600 = vmatprep.subr.mxu0 0.0
    %6601 = vmatpush1.msra.mxu0 0.0
    %6602 = vmatprep.subr.mxu0 0.0
    %6603 = vmatpush1.msra.mxu0 0.0
    %6604 = vmatprep.subr.mxu0 0.0
    %6605 = vmatpush1.msra.mxu0 0.0
    %6606 = vmatprep.subr.mxu0 0.0
    %6607 = vmatpush1.msra.mxu0 0.0
    %6608 = vmatprep.subr.mxu0 0.0
    %6609 = vmatpush1.msra.mxu0 0.0
    %6610 = vmatprep.subr.mxu0 0.0
    %6611 = vmatpush1.msra.mxu0 0.0
    %6612 = vmatprep.subr.mxu0 0.0
    %6613 = vmatpush1.msra.mxu0 0.0
    %6614 = vmatprep.subr.mxu0 0.0
    %6615 = vmatpush1.msra.mxu0 0.0
    %6616 = vmatprep.subr.mxu0 0.0
    %6617 = vmatpush1.msra.mxu0 0.0
    %6618 = vmatprep.subr.mxu0 0.0
    %6619 = vmatpush1.msra.mxu0 0.0
    %6620 = vmatprep.subr.mxu0 0.0
    %6621 = vmatpush1.msra.mxu0 0.0
    %6622 = vmatprep.subr.mxu0 0.0
    %6623 = vmatpush1.msra.mxu0 0.0
    %6624 = vmatprep.subr.mxu0 0.0
    %6625 = vmatpush1.msra.mxu0 0.0
    %6626 = vmatprep.subr.mxu0 0.0
    %6627 = vmatpush1.msra.mxu0 0.0
    %6628 = vmatprep.subr.mxu0 0.0
    %6629 = vmatpush1.msra.mxu0 0.0
    %6630 = vmatprep.subr.mxu0 0.0
    %6631 = vmatpush1.msra.mxu0 0.0
    %6632 = vmatprep.subr.mxu0 0.0
    %6633 = vmatpush1.msra.mxu0 0.0
    %6634 = vmatprep.mubr.f32.mxu0 0.0
    %6635 = vmatmul.mubr.f32.gmra.mrb[0].mxu0 %v6565
    %v6636 = vpop.f32.mrb[0].mxu0
    %v6637 = vadd.f32 %v6562, %v6636
    %v6638 = vpop.f32.mrb[0].mxu0
    %6639 = vmatprep.mubr.f32.mxu0 0.0
    %6640 = vmatmul.mubr.f32.gmra.mrb[0].mxu0 %v6568
    %v6641 = vpop.f32.mrb[0].mxu0
    %v6642 = vadd.f32 %v6562, %v6641
    %v6643 = vpop.f32.mrb[0].mxu0
    %6644 = vdwg.mxu0
    %s6645 = scalar_lea.vmem %s51, 32
    %v6646 = vld [vmem:[%s6645] sm:$0xff]
    %v6647 = vld [vmem:[%s6645 + $0x8] sm:$0xff]
    %v6648 = vld [vmem:[%s6645 + $0x10] sm:$0xff]
    %v6649 = vld [vmem:[%s6645 + $0x18] sm:$0xff]
    %s6650 = scalar_lea.vmem %s53, 1
    %v6651 = vld [vmem:[%s6650] sm:$0x1]
    %v6653 = vlaneseq
    %v6654 = vshrl.u32 %v6653, 7
    %v6655 = vsub.s32 0, %v6654
    %v6656 = vrot.slane %v6651, %v6655
    %v6658 = vadd.f32 %v6656, 0.0
    %6660 = vrot.lane.b32.xlu0 %v6637, 96
    %v6661 = vpop.permute.xlu0 %6660
    %v6662 = vsel %vm339, %v6637, 0
    %v6664 = vsel %vm339, %v6661, 0
    %6666 = vmatprep.subr.mxu0 0.0
    %6667 = vmatpush1.xpose.msra.mxu0 %v6664
    %6668 = vmatprep.subr.mxu0 0.0
    %6669 = vmatpush1.xpose.msra.mxu0 0.0
    %6670 = vmatprep.subr.mxu0 0.0
    %6671 = vmatpush1.xpose.msra.mxu0 0.0
    %6672 = vmatprep.subr.mxu0 0.0
    %6673 = vmatpush1.xpose.msra.mxu0 0.0
    %6674 = vmatprep.subr.mxu0 0.0
    %6675 = vmatpush1.xpose.msra.mxu0 0.0
    %6676 = vmatprep.subr.mxu0 0.0
    %6677 = vmatpush1.xpose.msra.mxu0 0.0
    %6678 = vmatprep.subr.mxu0 0.0
    %6679 = vmatpush1.xpose.msra.mxu0 0.0
    %6680 = vmatprep.subr.mxu0 0.0
    %6681 = vmatpush1.xpose.msra.mxu0 0.0
    %6682 = vmatprep.subr.mxu0 0.0
    %6683 = vmatpush1.xpose.msra.mxu0 0.0
    %6684 = vmatprep.subr.mxu0 0.0
    %6685 = vmatpush1.xpose.msra.mxu0 0.0
    %6686 = vmatprep.subr.mxu0 0.0
    %6687 = vmatpush1.xpose.msra.mxu0 0.0
    %6688 = vmatprep.subr.mxu0 0.0
    %6689 = vmatpush1.xpose.msra.mxu0 0.0
    %6690 = vmatprep.subr.mxu0 0.0
    %6691 = vmatpush1.xpose.msra.mxu0 0.0
    %6692 = vmatprep.subr.mxu0 0.0
    %6693 = vmatpush1.xpose.msra.mxu0 0.0
    %6694 = vmatprep.subr.mxu0 0.0
    %6695 = vmatpush1.xpose.msra.mxu0 0.0
    %6696 = vmatprep.subr.mxu0 0.0
    %6697 = vmatpush1.xpose.msra.mxu0 0.0
    %6698 = vmatprep.subr.mxu0 0.0
    %6699 = vmatpush1.xpose.msra.mxu0 0.0
    %6700 = vmatprep.subr.mxu0 0.0
    %6701 = vmatpush1.xpose.msra.mxu0 0.0
    %6702 = vmatprep.subr.mxu0 0.0
    %6703 = vmatpush1.xpose.msra.mxu0 0.0
    %6704 = vmatprep.subr.mxu0 0.0
    %6705 = vmatpush1.xpose.msra.mxu0 0.0
    %6706 = vmatprep.subr.mxu0 0.0
    %6707 = vmatpush1.xpose.msra.mxu0 0.0
    %6708 = vmatprep.subr.mxu0 0.0
    %6709 = vmatpush1.xpose.msra.mxu0 0.0
    %6710 = vmatprep.subr.mxu0 0.0
    %6711 = vmatpush1.xpose.msra.mxu0 0.0
    %6712 = vmatprep.subr.mxu0 0.0
    %6713 = vmatpush1.xpose.msra.mxu0 0.0
    %6714 = vmatprep.subr.mxu0 0.0
    %6715 = vmatpush1.xpose.msra.mxu0 0.0
    %6716 = vmatprep.subr.mxu0 0.0
    %6717 = vmatpush1.xpose.msra.mxu0 0.0
    %6718 = vmatprep.subr.mxu0 0.0
    %6719 = vmatpush1.xpose.msra.mxu0 0.0
    %6720 = vmatprep.subr.mxu0 0.0
    %6721 = vmatpush1.xpose.msra.mxu0 0.0
    %6722 = vmatprep.subr.mxu0 0.0
    %6723 = vmatpush1.xpose.msra.mxu0 0.0
    %6724 = vmatprep.subr.mxu0 0.0
    %6725 = vmatpush1.xpose.msra.mxu0 0.0
    %6726 = vmatprep.subr.mxu0 0.0
    %6727 = vmatpush1.xpose.msra.mxu0 0.0
    %6728 = vmatprep.subr.mxu0 0.0
    %6729 = vmatpush1.xpose.msra.mxu0 0.0
    %6730 = vmatprep.mubr.f32.mxu0 0.0
    %6731 = vmatmul.mubr.f32.gmra.mrb[0].mxu0 %v6662
    %v6732 = vpop.f32.mrb[0].mxu0
    %v6733 = vadd.f32 0.0, %v6732
    %v6734 = vpop.f32.mrb[0].mxu0
    %6735 = vdwg.mxu0
    %6737 = vrot.lane.b32.xlu0 %v6642, 96
    %v6738 = vpop.permute.xlu0 %6737
    %v6739 = vsel %vm339, %v6642, 0
    %v6741 = vsel %vm339, %v6738, 0
    %6743 = vmatprep.subr.mxu0 0.0
    %6744 = vmatpush1.xpose.msra.mxu0 %v6741
    %6745 = vmatprep.subr.mxu0 0.0
    %6746 = vmatpush1.xpose.msra.mxu0 0.0
    %6747 = vmatprep.subr.mxu0 0.0
    %6748 = vmatpush1.xpose.msra.mxu0 0.0
    %6749 = vmatprep.subr.mxu0 0.0
    %6750 = vmatpush1.xpose.msra.mxu0 0.0
    %6751 = vmatprep.subr.mxu0 0.0
    %6752 = vmatpush1.xpose.msra.mxu0 0.0
    %6753 = vmatprep.subr.mxu0 0.0
    %6754 = vmatpush1.xpose.msra.mxu0 0.0
    %6755 = vmatprep.subr.mxu0 0.0
    %6756 = vmatpush1.xpose.msra.mxu0 0.0
    %6757 = vmatprep.subr.mxu0 0.0
    %6758 = vmatpush1.xpose.msra.mxu0 0.0
    %6759 = vmatprep.subr.mxu0 0.0
    %6760 = vmatpush1.xpose.msra.mxu0 0.0
    %6761 = vmatprep.subr.mxu0 0.0
    %6762 = vmatpush1.xpose.msra.mxu0 0.0
    %6763 = vmatprep.subr.mxu0 0.0
    %6764 = vmatpush1.xpose.msra.mxu0 0.0
    %6765 = vmatprep.subr.mxu0 0.0
    %6766 = vmatpush1.xpose.msra.mxu0 0.0
    %6767 = vmatprep.subr.mxu0 0.0
    %6768 = vmatpush1.xpose.msra.mxu0 0.0
    %6769 = vmatprep.subr.mxu0 0.0
    %6770 = vmatpush1.xpose.msra.mxu0 0.0
    %6771 = vmatprep.subr.mxu0 0.0
    %6772 = vmatpush1.xpose.msra.mxu0 0.0
    %6773 = vmatprep.subr.mxu0 0.0
    %6774 = vmatpush1.xpose.msra.mxu0 0.0
    %6775 = vmatprep.subr.mxu0 0.0
    %6776 = vmatpush1.xpose.msra.mxu0 0.0
    %6777 = vmatprep.subr.mxu0 0.0
    %6778 = vmatpush1.xpose.msra.mxu0 0.0
    %6779 = vmatprep.subr.mxu0 0.0
    %6780 = vmatpush1.xpose.msra.mxu0 0.0
    %6781 = vmatprep.subr.mxu0 0.0
    %6782 = vmatpush1.xpose.msra.mxu0 0.0
    %6783 = vmatprep.subr.mxu0 0.0
    %6784 = vmatpush1.xpose.msra.mxu0 0.0
    %6785 = vmatprep.subr.mxu0 0.0
    %6786 = vmatpush1.xpose.msra.mxu0 0.0
    %6787 = vmatprep.subr.mxu0 0.0
    %6788 = vmatpush1.xpose.msra.mxu0 0.0
    %6789 = vmatprep.subr.mxu0 0.0
    %6790 = vmatpush1.xpose.msra.mxu0 0.0
    %6791 = vmatprep.subr.mxu0 0.0
    %6792 = vmatpush1.xpose.msra.mxu0 0.0
    %6793 = vmatprep.subr.mxu0 0.0
    %6794 = vmatpush1.xpose.msra.mxu0 0.0
    %6795 = vmatprep.subr.mxu0 0.0
    %6796 = vmatpush1.xpose.msra.mxu0 0.0
    %6797 = vmatprep.subr.mxu0 0.0
    %6798 = vmatpush1.xpose.msra.mxu0 0.0
    %6799 = vmatprep.subr.mxu0 0.0
    %6800 = vmatpush1.xpose.msra.mxu0 0.0
    %6801 = vmatprep.subr.mxu0 0.0
    %6802 = vmatpush1.xpose.msra.mxu0 0.0
    %6803 = vmatprep.subr.mxu0 0.0
    %6804 = vmatpush1.xpose.msra.mxu0 0.0
    %6805 = vmatprep.subr.mxu0 0.0
    %6806 = vmatpush1.xpose.msra.mxu0 0.0
    %6807 = vmatprep.mubr.f32.mxu0 0.0
    %6808 = vmatmul.mubr.f32.gmra.mrb[0].mxu0 %v6739
    %v6809 = vpop.f32.mrb[0].mxu0
    %v6810 = vadd.f32 0.0, %v6809
    %v6811 = vpop.f32.mrb[0].mxu0
    %6812 = vdwg.mxu0
    %v6813 = vmul.f32 %v6733, 0.25
    %v6814 = vmul.f32 %v6810, 0.25
    %v6815 = vadd.f32 %v6813, %v223
    %v6816 = vadd.f32 %v6814, %v224
    %v6817 = vsel %vm495, %v6815, -inf
    %6818 = vmax.xlane.f32.xlu0 %v6817
    %v6819 = vpop.xlane.xlu0 %6818
    %v6820 = vsel %vm495, %v6816, -inf
    %6821 = vmax.xlane.f32.xlu0 %v6820
    %v6822 = vpop.xlane.xlu0 %6821
    %v6823 = vsub.f32 %v6815, %v6819
    %v6824 = vsub.f32 %v6816, %v6822
    %v6825 = vmul.f32 %v6823, 1.442695
    %v6826 = vpow.pop %v6825
    %v6827 = vmul.f32 %v6824, 1.442695
    %v6828 = vpow.pop %v6827
    %v6829 = vsel %vm495, %v6826, 0.0
    %6830 = vadd.xlane.f32.xlu0 %v6829
    %v6831 = vpop.xlane.xlu0 %6830
    %v6832 = vsel %vm495, %v6828, 0.0
    %6833 = vadd.xlane.f32.xlu0 %v6832
    %v6834 = vpop.xlane.xlu0 %6833
    %v6835 = vrcp.pop %v6831
    %v6836 = vrcp.pop %v6834
    %v6837 = vmul.f32 %v6826, %v6835
    %v6838 = vmul.f32 %v6828, %v6836
    %6839 = vrot.lane.b32.xlu0 %v6637, 64
    %v6840 = vpop.permute.xlu0 %6839
    %v6843 = vsel %vm495, %v6837, 0
    %6845 = vmatprep.subr.mxu0 0.0
    %6846 = vmatpush1.msra.mxu0 %v6840
    %6847 = vmatprep.subr.mxu0 0.0
    %6848 = vmatpush1.msra.mxu0 0.0
    %6849 = vmatprep.subr.mxu0 0.0
    %6850 = vmatpush1.msra.mxu0 0.0
    %6851 = vmatprep.subr.mxu0 0.0
    %6852 = vmatpush1.msra.mxu0 0.0
    %6853 = vmatprep.subr.mxu0 0.0
    %6854 = vmatpush1.msra.mxu0 0.0
    %6855 = vmatprep.subr.mxu0 0.0
    %6856 = vmatpush1.msra.mxu0 0.0
    %6857 = vmatprep.subr.mxu0 0.0
    %6858 = vmatpush1.msra.mxu0 0.0
    %6859 = vmatprep.subr.mxu0 0.0
    %6860 = vmatpush1.msra.mxu0 0.0
    %6861 = vmatprep.subr.mxu0 0.0
    %6862 = vmatpush1.msra.mxu0 0.0
    %6863 = vmatprep.subr.mxu0 0.0
    %6864 = vmatpush1.msra.mxu0 0.0
    %6865 = vmatprep.subr.mxu0 0.0
    %6866 = vmatpush1.msra.mxu0 0.0
    %6867 = vmatprep.subr.mxu0 0.0
    %6868 = vmatpush1.msra.mxu0 0.0
    %6869 = vmatprep.subr.mxu0 0.0
    %6870 = vmatpush1.msra.mxu0 0.0
    %6871 = vmatprep.subr.mxu0 0.0
    %6872 = vmatpush1.msra.mxu0 0.0
    %6873 = vmatprep.subr.mxu0 0.0
    %6874 = vmatpush1.msra.mxu0 0.0
    %6875 = vmatprep.subr.mxu0 0.0
    %6876 = vmatpush1.msra.mxu0 0.0
    %6877 = vmatprep.subr.mxu0 0.0
    %6878 = vmatpush1.msra.mxu0 0.0
    %6879 = vmatprep.subr.mxu0 0.0
    %6880 = vmatpush1.msra.mxu0 0.0
    %6881 = vmatprep.subr.mxu0 0.0
    %6882 = vmatpush1.msra.mxu0 0.0
    %6883 = vmatprep.subr.mxu0 0.0
    %6884 = vmatpush1.msra.mxu0 0.0
    %6885 = vmatprep.subr.mxu0 0.0
    %6886 = vmatpush1.msra.mxu0 0.0
    %6887 = vmatprep.subr.mxu0 0.0
    %6888 = vmatpush1.msra.mxu0 0.0
    %6889 = vmatprep.subr.mxu0 0.0
    %6890 = vmatpush1.msra.mxu0 0.0
    %6891 = vmatprep.subr.mxu0 0.0
    %6892 = vmatpush1.msra.mxu0 0.0
    %6893 = vmatprep.subr.mxu0 0.0
    %6894 = vmatpush1.msra.mxu0 0.0
    %6895 = vmatprep.subr.mxu0 0.0
    %6896 = vmatpush1.msra.mxu0 0.0
    %6897 = vmatprep.subr.mxu0 0.0
    %6898 = vmatpush1.msra.mxu0 0.0
    %6899 = vmatprep.subr.mxu0 0.0
    %6900 = vmatpush1.msra.mxu0 0.0
    %6901 = vmatprep.subr.mxu0 0.0
    %6902 = vmatpush1.msra.mxu0 0.0
    %6903 = vmatprep.subr.mxu0 0.0
    %6904 = vmatpush1.msra.mxu0 0.0
    %6905 = vmatprep.subr.mxu0 0.0
    %6906 = vmatpush1.msra.mxu0 0.0
    %6907 = vmatprep.subr.mxu0 0.0
    %6908 = vmatpush1.msra.mxu0 0.0
    %6909 = vmatprep.mubr.f32.mxu0 0.0
    %6910 = vmatmul.mubr.f32.gmra.mrb[0].mxu0 %v6843
    %v6911 = vpop.f32.mrb[0].mxu0
    %v6912 = vadd.f32 0.0, %v6911
    %v6913 = vpop.f32.mrb[0].mxu0
    %6914 = vdwg.mxu0
    %6915 = vrot.lane.b32.xlu0 %v6642, 64
    %v6916 = vpop.permute.xlu0 %6915
    %v6919 = vsel %vm495, %v6838, 0
    %6921 = vmatprep.subr.mxu0 0.0
    %6922 = vmatpush1.msra.mxu0 %v6916
    %6923 = vmatprep.subr.mxu0 0.0
    %6924 = vmatpush1.msra.mxu0 0.0
    %6925 = vmatprep.subr.mxu0 0.0
    %6926 = vmatpush1.msra.mxu0 0.0
    %6927 = vmatprep.subr.mxu0 0.0
    %6928 = vmatpush1.msra.mxu0 0.0
    %6929 = vmatprep.subr.mxu0 0.0
    %6930 = vmatpush1.msra.mxu0 0.0
    %6931 = vmatprep.subr.mxu0 0.0
    %6932 = vmatpush1.msra.mxu0 0.0
    %6933 = vmatprep.subr.mxu0 0.0
    %6934 = vmatpush1.msra.mxu0 0.0
    %6935 = vmatprep.subr.mxu0 0.0
    %6936 = vmatpush1.msra.mxu0 0.0
    %6937 = vmatprep.subr.mxu0 0.0
    %6938 = vmatpush1.msra.mxu0 0.0
    %6939 = vmatprep.subr.mxu0 0.0
    %6940 = vmatpush1.msra.mxu0 0.0
    %6941 = vmatprep.subr.mxu0 0.0
    %6942 = vmatpush1.msra.mxu0 0.0
    %6943 = vmatprep.subr.mxu0 0.0
    %6944 = vmatpush1.msra.mxu0 0.0
    %6945 = vmatprep.subr.mxu0 0.0
    %6946 = vmatpush1.msra.mxu0 0.0
    %6947 = vmatprep.subr.mxu0 0.0
    %6948 = vmatpush1.msra.mxu0 0.0
    %6949 = vmatprep.subr.mxu0 0.0
    %6950 = vmatpush1.msra.mxu0 0.0
    %6951 = vmatprep.subr.mxu0 0.0
    %6952 = vmatpush1.msra.mxu0 0.0
    %6953 = vmatprep.subr.mxu0 0.0
    %6954 = vmatpush1.msra.mxu0 0.0
    %6955 = vmatprep.subr.mxu0 0.0
    %6956 = vmatpush1.msra.mxu0 0.0
    %6957 = vmatprep.subr.mxu0 0.0
    %6958 = vmatpush1.msra.mxu0 0.0
    %6959 = vmatprep.subr.mxu0 0.0
    %6960 = vmatpush1.msra.mxu0 0.0
    %6961 = vmatprep.subr.mxu0 0.0
    %6962 = vmatpush1.msra.mxu0 0.0
    %6963 = vmatprep.subr.mxu0 0.0
    %6964 = vmatpush1.msra.mxu0 0.0
    %6965 = vmatprep.subr.mxu0 0.0
    %6966 = vmatpush1.msra.mxu0 0.0
    %6967 = vmatprep.subr.mxu0 0.0
    %6968 = vmatpush1.msra.mxu0 0.0
    %6969 = vmatprep.subr.mxu0 0.0
    %6970 = vmatpush1.msra.mxu0 0.0
    %6971 = vmatprep.subr.mxu0 0.0
    %6972 = vmatpush1.msra.mxu0 0.0
    %6973 = vmatprep.subr.mxu0 0.0
    %6974 = vmatpush1.msra.mxu0 0.0
    %6975 = vmatprep.subr.mxu0 0.0
    %6976 = vmatpush1.msra.mxu0 0.0
    %6977 = vmatprep.subr.mxu0 0.0
    %6978 = vmatpush1.msra.mxu0 0.0
    %6979 = vmatprep.subr.mxu0 0.0
    %6980 = vmatpush1.msra.mxu0 0.0
    %6981 = vmatprep.subr.mxu0 0.0
    %6982 = vmatpush1.msra.mxu0 0.0
    %6983 = vmatprep.subr.mxu0 0.0
    %6984 = vmatpush1.msra.mxu0 0.0
    %6985 = vmatprep.mubr.f32.mxu0 0.0
    %6986 = vmatmul.mubr.f32.gmra.mrb[0].mxu0 %v6919
    %v6987 = vpop.f32.mrb[0].mxu0
    %v6988 = vadd.f32 0.0, %v6987
    %v6989 = vpop.f32.mrb[0].mxu0
    %6990 = vdwg.mxu0
    %v6992 = vsel %vm339, %v6912, 0
    %v6995 = vsel %vm339, %v6988, 0
    %6997 = vmatprep.subr.mxu0 0.0
    %6998 = vmatpush1.msra.mxu0 %v6646
    %6999 = vmatprep.subr.mxu0 0.0
    %7000 = vmatpush1.msra.mxu0 %v6647
    %7001 = vmatprep.subr.mxu0 0.0
    %7002 = vmatpush1.msra.mxu0 0.0
    %7003 = vmatprep.subr.mxu0 0.0
    %7004 = vmatpush1.msra.mxu0 0.0
    %7005 = vmatprep.subr.mxu0 0.0
    %7006 = vmatpush1.msra.mxu0 0.0
    %7007 = vmatprep.subr.mxu0 0.0
    %7008 = vmatpush1.msra.mxu0 0.0
    %7009 = vmatprep.subr.mxu0 0.0
    %7010 = vmatpush1.msra.mxu0 0.0
    %7011 = vmatprep.subr.mxu0 0.0
    %7012 = vmatpush1.msra.mxu0 0.0
    %7013 = vmatprep.subr.mxu0 0.0
    %7014 = vmatpush1.msra.mxu0 0.0
    %7015 = vmatprep.subr.mxu0 0.0
    %7016 = vmatpush1.msra.mxu0 0.0
    %7017 = vmatprep.subr.mxu0 0.0
    %7018 = vmatpush1.msra.mxu0 0.0
    %7019 = vmatprep.subr.mxu0 0.0
    %7020 = vmatpush1.msra.mxu0 0.0
    %7021 = vmatprep.subr.mxu0 0.0
    %7022 = vmatpush1.msra.mxu0 0.0
    %7023 = vmatprep.subr.mxu0 0.0
    %7024 = vmatpush1.msra.mxu0 0.0
    %7025 = vmatprep.subr.mxu0 0.0
    %7026 = vmatpush1.msra.mxu0 0.0
    %7027 = vmatprep.subr.mxu0 0.0
    %7028 = vmatpush1.msra.mxu0 0.0
    %7029 = vmatprep.subr.mxu0 0.0
    %7030 = vmatpush1.msra.mxu0 0.0
    %7031 = vmatprep.subr.mxu0 0.0
    %7032 = vmatpush1.msra.mxu0 0.0
    %7033 = vmatprep.subr.mxu0 0.0
    %7034 = vmatpush1.msra.mxu0 0.0
    %7035 = vmatprep.subr.mxu0 0.0
    %7036 = vmatpush1.msra.mxu0 0.0
    %7037 = vmatprep.subr.mxu0 0.0
    %7038 = vmatpush1.msra.mxu0 0.0
    %7039 = vmatprep.subr.mxu0 0.0
    %7040 = vmatpush1.msra.mxu0 0.0
    %7041 = vmatprep.subr.mxu0 0.0
    %7042 = vmatpush1.msra.mxu0 0.0
    %7043 = vmatprep.subr.mxu0 0.0
    %7044 = vmatpush1.msra.mxu0 0.0
    %7045 = vmatprep.subr.mxu0 0.0
    %7046 = vmatpush1.msra.mxu0 0.0
    %7047 = vmatprep.subr.mxu0 0.0
    %7048 = vmatpush1.msra.mxu0 0.0
    %7049 = vmatprep.subr.mxu0 0.0
    %7050 = vmatpush1.msra.mxu0 0.0
    %7051 = vmatprep.subr.mxu0 0.0
    %7052 = vmatpush1.msra.mxu0 0.0
    %7053 = vmatprep.subr.mxu0 0.0
    %7054 = vmatpush1.msra.mxu0 0.0
    %7055 = vmatprep.subr.mxu0 0.0
    %7056 = vmatpush1.msra.mxu0 0.0
    %7057 = vmatprep.subr.mxu0 0.0
    %7058 = vmatpush1.msra.mxu0 0.0
    %7059 = vmatprep.subr.mxu0 0.0
    %7060 = vmatpush1.msra.mxu0 0.0
    %7061 = vmatprep.mubr.f32.mxu0 0.0
    %7062 = vmatmul.mubr.f32.gmra.mrb[0].mxu0 %v6992
    %v7063 = vpop.f32.mrb[0].mxu0
    %v7064 = vadd.f32 0.0, %v7063
    %v7065 = vpop.f32.mrb[0].mxu0
    %7066 = vmatprep.mubr.f32.mxu0 0.0
    %7067 = vmatmul.mubr.f32.gmra.mrb[0].mxu0 %v6995
    %v7068 = vpop.f32.mrb[0].mxu0
    %v7069 = vadd.f32 0.0, %v7068
    %v7070 = vpop.f32.mrb[0].mxu0
    %7071 = vdwg.mxu0
    %v7072 = vadd.f32 %v6658, %v7064
    %v7073 = vadd.f32 %v6658, %v7069
    %7074 = vrot.lane.b32.xlu0 %v6637, 112
    %v7075 = vpop.permute.xlu0 %7074
    %7076 = vrot.lane.b32.xlu0 %v6637, 80
    %v7077 = vpop.permute.xlu0 %7076
    %v7078 = vsel %vm339, %v7075, 0
    %v7080 = vsel %vm339, %v7077, 0
    %7082 = vmatprep.subr.mxu0 0.0
    %7083 = vmatpush1.xpose.msra.mxu0 %v7080
    %7084 = vmatprep.subr.mxu0 0.0
    %7085 = vmatpush1.xpose.msra.mxu0 0.0
    %7086 = vmatprep.subr.mxu0 0.0
    %7087 = vmatpush1.xpose.msra.mxu0 0.0
    %7088 = vmatprep.subr.mxu0 0.0
    %7089 = vmatpush1.xpose.msra.mxu0 0.0
    %7090 = vmatprep.subr.mxu0 0.0
    %7091 = vmatpush1.xpose.msra.mxu0 0.0
    %7092 = vmatprep.subr.mxu0 0.0
    %7093 = vmatpush1.xpose.msra.mxu0 0.0
    %7094 = vmatprep.subr.mxu0 0.0
    %7095 = vmatpush1.xpose.msra.mxu0 0.0
    %7096 = vmatprep.subr.mxu0 0.0
    %7097 = vmatpush1.xpose.msra.mxu0 0.0
    %7098 = vmatprep.subr.mxu0 0.0
    %7099 = vmatpush1.xpose.msra.mxu0 0.0
    %7100 = vmatprep.subr.mxu0 0.0
    %7101 = vmatpush1.xpose.msra.mxu0 0.0
    %7102 = vmatprep.subr.mxu0 0.0
    %7103 = vmatpush1.xpose.msra.mxu0 0.0
    %7104 = vmatprep.subr.mxu0 0.0
    %7105 = vmatpush1.xpose.msra.mxu0 0.0
    %7106 = vmatprep.subr.mxu0 0.0
    %7107 = vmatpush1.xpose.msra.mxu0 0.0
    %7108 = vmatprep.subr.mxu0 0.0
    %7109 = vmatpush1.xpose.msra.mxu0 0.0
    %7110 = vmatprep.subr.mxu0 0.0
    %7111 = vmatpush1.xpose.msra.mxu0 0.0
    %7112 = vmatprep.subr.mxu0 0.0
    %7113 = vmatpush1.xpose.msra.mxu0 0.0
    %7114 = vmatprep.subr.mxu0 0.0
    %7115 = vmatpush1.xpose.msra.mxu0 0.0
    %7116 = vmatprep.subr.mxu0 0.0
    %7117 = vmatpush1.xpose.msra.mxu0 0.0
    %7118 = vmatprep.subr.mxu0 0.0
    %7119 = vmatpush1.xpose.msra.mxu0 0.0
    %7120 = vmatprep.subr.mxu0 0.0
    %7121 = vmatpush1.xpose.msra.mxu0 0.0
    %7122 = vmatprep.subr.mxu0 0.0
    %7123 = vmatpush1.xpose.msra.mxu0 0.0
    %7124 = vmatprep.subr.mxu0 0.0
    %7125 = vmatpush1.xpose.msra.mxu0 0.0
    %7126 = vmatprep.subr.mxu0 0.0
    %7127 = vmatpush1.xpose.msra.mxu0 0.0
    %7128 = vmatprep.subr.mxu0 0.0
    %7129 = vmatpush1.xpose.msra.mxu0 0.0
    %7130 = vmatprep.subr.mxu0 0.0
    %7131 = vmatpush1.xpose.msra.mxu0 0.0
    %7132 = vmatprep.subr.mxu0 0.0
    %7133 = vmatpush1.xpose.msra.mxu0 0.0
    %7134 = vmatprep.subr.mxu0 0.0
    %7135 = vmatpush1.xpose.msra.mxu0 0.0
    %7136 = vmatprep.subr.mxu0 0.0
    %7137 = vmatpush1.xpose.msra.mxu0 0.0
    %7138 = vmatprep.subr.mxu0 0.0
    %7139 = vmatpush1.xpose.msra.mxu0 0.0
    %7140 = vmatprep.subr.mxu0 0.0
    %7141 = vmatpush1.xpose.msra.mxu0 0.0
    %7142 = vmatprep.subr.mxu0 0.0
    %7143 = vmatpush1.xpose.msra.mxu0 0.0
    %7144 = vmatprep.subr.mxu0 0.0
    %7145 = vmatpush1.xpose.msra.mxu0 0.0
    %7146 = vmatprep.mubr.f32.mxu0 0.0
    %7147 = vmatmul.mubr.f32.gmra.mrb[0].mxu0 %v7078
    %v7148 = vpop.f32.mrb[0].mxu0
    %v7149 = vadd.f32 0.0, %v7148
    %v7150 = vpop.f32.mrb[0].mxu0
    %7151 = vdwg.mxu0
    %7152 = vrot.lane.b32.xlu0 %v6642, 112
    %v7153 = vpop.permute.xlu0 %7152
    %7154 = vrot.lane.b32.xlu0 %v6642, 80
    %v7155 = vpop.permute.xlu0 %7154
    %v7156 = vsel %vm339, %v7153, 0
    %v7158 = vsel %vm339, %v7155, 0
    %7160 = vmatprep.subr.mxu0 0.0
    %7161 = vmatpush1.xpose.msra.mxu0 %v7158
    %7162 = vmatprep.subr.mxu0 0.0
    %7163 = vmatpush1.xpose.msra.mxu0 0.0
    %7164 = vmatprep.subr.mxu0 0.0
    %7165 = vmatpush1.xpose.msra.mxu0 0.0
    %7166 = vmatprep.subr.mxu0 0.0
    %7167 = vmatpush1.xpose.msra.mxu0 0.0
    %7168 = vmatprep.subr.mxu0 0.0
    %7169 = vmatpush1.xpose.msra.mxu0 0.0
    %7170 = vmatprep.subr.mxu0 0.0
    %7171 = vmatpush1.xpose.msra.mxu0 0.0
    %7172 = vmatprep.subr.mxu0 0.0
    %7173 = vmatpush1.xpose.msra.mxu0 0.0
    %7174 = vmatprep.subr.mxu0 0.0
    %7175 = vmatpush1.xpose.msra.mxu0 0.0
    %7176 = vmatprep.subr.mxu0 0.0
    %7177 = vmatpush1.xpose.msra.mxu0 0.0
    %7178 = vmatprep.subr.mxu0 0.0
    %7179 = vmatpush1.xpose.msra.mxu0 0.0
    %7180 = vmatprep.subr.mxu0 0.0
    %7181 = vmatpush1.xpose.msra.mxu0 0.0
    %7182 = vmatprep.subr.mxu0 0.0
    %7183 = vmatpush1.xpose.msra.mxu0 0.0
    %7184 = vmatprep.subr.mxu0 0.0
    %7185 = vmatpush1.xpose.msra.mxu0 0.0
    %7186 = vmatprep.subr.mxu0 0.0
    %7187 = vmatpush1.xpose.msra.mxu0 0.0
    %7188 = vmatprep.subr.mxu0 0.0
    %7189 = vmatpush1.xpose.msra.mxu0 0.0
    %7190 = vmatprep.subr.mxu0 0.0
    %7191 = vmatpush1.xpose.msra.mxu0 0.0
    %7192 = vmatprep.subr.mxu0 0.0
    %7193 = vmatpush1.xpose.msra.mxu0 0.0
    %7194 = vmatprep.subr.mxu0 0.0
    %7195 = vmatpush1.xpose.msra.mxu0 0.0
    %7196 = vmatprep.subr.mxu0 0.0
    %7197 = vmatpush1.xpose.msra.mxu0 0.0
    %7198 = vmatprep.subr.mxu0 0.0
    %7199 = vmatpush1.xpose.msra.mxu0 0.0
    %7200 = vmatprep.subr.mxu0 0.0
    %7201 = vmatpush1.xpose.msra.mxu0 0.0
    %7202 = vmatprep.subr.mxu0 0.0
    %7203 = vmatpush1.xpose.msra.mxu0 0.0
    %7204 = vmatprep.subr.mxu0 0.0
    %7205 = vmatpush1.xpose.msra.mxu0 0.0
    %7206 = vmatprep.subr.mxu0 0.0
    %7207 = vmatpush1.xpose.msra.mxu0 0.0
    %7208 = vmatprep.subr.mxu0 0.0
    %7209 = vmatpush1.xpose.msra.mxu0 0.0
    %7210 = vmatprep.subr.mxu0 0.0
    %7211 = vmatpush1.xpose.msra.mxu0 0.0
    %7212 = vmatprep.subr.mxu0 0.0
    %7213 = vmatpush1.xpose.msra.mxu0 0.0
    %7214 = vmatprep.subr.mxu0 0.0
    %7215 = vmatpush1.xpose.msra.mxu0 0.0
    %7216 = vmatprep.subr.mxu0 0.0
    %7217 = vmatpush1.xpose.msra.mxu0 0.0
    %7218 = vmatprep.subr.mxu0 0.0
    %7219 = vmatpush1.xpose.msra.mxu0 0.0
    %7220 = vmatprep.subr.mxu0 0.0
    %7221 = vmatpush1.xpose.msra.mxu0 0.0
    %7222 = vmatprep.subr.mxu0 0.0
    %7223 = vmatpush1.xpose.msra.mxu0 0.0
    %7224 = vmatprep.mubr.f32.mxu0 0.0
    %7225 = vmatmul.mubr.f32.gmra.mrb[0].mxu0 %v7156
    %v7226 = vpop.f32.mrb[0].mxu0
    %v7227 = vadd.f32 0.0, %v7226
    %v7228 = vpop.f32.mrb[0].mxu0
    %7229 = vdwg.mxu0
    %v7230 = vmul.f32 %v7149, 0.25
    %v7231 = vmul.f32 %v7227, 0.25
    %v7232 = vadd.f32 %v7230, %v223
    %v7233 = vadd.f32 %v7231, %v224
    %v7234 = vsel %vm495, %v7232, -inf
    %7235 = vmax.xlane.f32.xlu0 %v7234
    %v7236 = vpop.xlane.xlu0 %7235
    %v7237 = vsel %vm495, %v7233, -inf
    %7238 = vmax.xlane.f32.xlu0 %v7237
    %v7239 = vpop.xlane.xlu0 %7238
    %v7240 = vsub.f32 %v7232, %v7236
    %v7241 = vsub.f32 %v7233, %v7239
    %v7242 = vmul.f32 %v7240, 1.442695
    %v7243 = vpow.pop %v7242
    %v7244 = vmul.f32 %v7241, 1.442695
    %v7245 = vpow.pop %v7244
    %v7246 = vsel %vm495, %v7243, 0.0
    %7247 = vadd.xlane.f32.xlu0 %v7246
    %v7248 = vpop.xlane.xlu0 %7247
    %v7249 = vsel %vm495, %v7245, 0.0
    %7250 = vadd.xlane.f32.xlu0 %v7249
    %v7251 = vpop.xlane.xlu0 %7250
    %v7252 = vrcp.pop %v7248
    %v7253 = vrcp.pop %v7251
    %v7254 = vmul.f32 %v7243, %v7252
    %v7255 = vmul.f32 %v7245, %v7253
    %7256 = vrot.lane.b32.xlu0 %v6637, 48
    %v7257 = vpop.permute.xlu0 %7256
    %v7260 = vsel %vm495, %v7254, 0
    %7262 = vmatprep.subr.mxu0 0.0
    %7263 = vmatpush1.msra.mxu0 %v7257
    %7264 = vmatprep.subr.mxu0 0.0
    %7265 = vmatpush1.msra.mxu0 0.0
    %7266 = vmatprep.subr.mxu0 0.0
    %7267 = vmatpush1.msra.mxu0 0.0
    %7268 = vmatprep.subr.mxu0 0.0
    %7269 = vmatpush1.msra.mxu0 0.0
    %7270 = vmatprep.subr.mxu0 0.0
    %7271 = vmatpush1.msra.mxu0 0.0
    %7272 = vmatprep.subr.mxu0 0.0
    %7273 = vmatpush1.msra.mxu0 0.0
    %7274 = vmatprep.subr.mxu0 0.0
    %7275 = vmatpush1.msra.mxu0 0.0
    %7276 = vmatprep.subr.mxu0 0.0
    %7277 = vmatpush1.msra.mxu0 0.0
    %7278 = vmatprep.subr.mxu0 0.0
    %7279 = vmatpush1.msra.mxu0 0.0
    %7280 = vmatprep.subr.mxu0 0.0
    %7281 = vmatpush1.msra.mxu0 0.0
    %7282 = vmatprep.subr.mxu0 0.0
    %7283 = vmatpush1.msra.mxu0 0.0
    %7284 = vmatprep.subr.mxu0 0.0
    %7285 = vmatpush1.msra.mxu0 0.0
    %7286 = vmatprep.subr.mxu0 0.0
    %7287 = vmatpush1.msra.mxu0 0.0
    %7288 = vmatprep.subr.mxu0 0.0
    %7289 = vmatpush1.msra.mxu0 0.0
    %7290 = vmatprep.subr.mxu0 0.0
    %7291 = vmatpush1.msra.mxu0 0.0
    %7292 = vmatprep.subr.mxu0 0.0
    %7293 = vmatpush1.msra.mxu0 0.0
    %7294 = vmatprep.subr.mxu0 0.0
    %7295 = vmatpush1.msra.mxu0 0.0
    %7296 = vmatprep.subr.mxu0 0.0
    %7297 = vmatpush1.msra.mxu0 0.0
    %7298 = vmatprep.subr.mxu0 0.0
    %7299 = vmatpush1.msra.mxu0 0.0
    %7300 = vmatprep.subr.mxu0 0.0
    %7301 = vmatpush1.msra.mxu0 0.0
    %7302 = vmatprep.subr.mxu0 0.0
    %7303 = vmatpush1.msra.mxu0 0.0
    %7304 = vmatprep.subr.mxu0 0.0
    %7305 = vmatpush1.msra.mxu0 0.0
    %7306 = vmatprep.subr.mxu0 0.0
    %7307 = vmatpush1.msra.mxu0 0.0
    %7308 = vmatprep.subr.mxu0 0.0
    %7309 = vmatpush1.msra.mxu0 0.0
    %7310 = vmatprep.subr.mxu0 0.0
    %7311 = vmatpush1.msra.mxu0 0.0
    %7312 = vmatprep.subr.mxu0 0.0
    %7313 = vmatpush1.msra.mxu0 0.0
    %7314 = vmatprep.subr.mxu0 0.0
    %7315 = vmatpush1.msra.mxu0 0.0
    %7316 = vmatprep.subr.mxu0 0.0
    %7317 = vmatpush1.msra.mxu0 0.0
    %7318 = vmatprep.subr.mxu0 0.0
    %7319 = vmatpush1.msra.mxu0 0.0
    %7320 = vmatprep.subr.mxu0 0.0
    %7321 = vmatpush1.msra.mxu0 0.0
    %7322 = vmatprep.subr.mxu0 0.0
    %7323 = vmatpush1.msra.mxu0 0.0
    %7324 = vmatprep.subr.mxu0 0.0
    %7325 = vmatpush1.msra.mxu0 0.0
    %7326 = vmatprep.mubr.f32.mxu0 0.0
    %7327 = vmatmul.mubr.f32.gmra.mrb[0].mxu0 %v7260
    %v7328 = vpop.f32.mrb[0].mxu0
    %v7329 = vadd.f32 0.0, %v7328
    %v7330 = vpop.f32.mrb[0].mxu0
    %7331 = vdwg.mxu0
    %7332 = vrot.lane.b32.xlu0 %v6642, 48
    %v7333 = vpop.permute.xlu0 %7332
    %v7336 = vsel %vm495, %v7255, 0
    %7338 = vmatprep.subr.mxu0 0.0
    %7339 = vmatpush1.msra.mxu0 %v7333
    %7340 = vmatprep.subr.mxu0 0.0
    %7341 = vmatpush1.msra.mxu0 0.0
    %7342 = vmatprep.subr.mxu0 0.0
    %7343 = vmatpush1.msra.mxu0 0.0
    %7344 = vmatprep.subr.mxu0 0.0
    %7345 = vmatpush1.msra.mxu0 0.0
    %7346 = vmatprep.subr.mxu0 0.0
    %7347 = vmatpush1.msra.mxu0 0.0
    %7348 = vmatprep.subr.mxu0 0.0
    %7349 = vmatpush1.msra.mxu0 0.0
    %7350 = vmatprep.subr.mxu0 0.0
    %7351 = vmatpush1.msra.mxu0 0.0
    %7352 = vmatprep.subr.mxu0 0.0
    %7353 = vmatpush1.msra.mxu0 0.0
    %7354 = vmatprep.subr.mxu0 0.0
    %7355 = vmatpush1.msra.mxu0 0.0
    %7356 = vmatprep.subr.mxu0 0.0
    %7357 = vmatpush1.msra.mxu0 0.0
    %7358 = vmatprep.subr.mxu0 0.0
    %7359 = vmatpush1.msra.mxu0 0.0
    %7360 = vmatprep.subr.mxu0 0.0
    %7361 = vmatpush1.msra.mxu0 0.0
    %7362 = vmatprep.subr.mxu0 0.0
    %7363 = vmatpush1.msra.mxu0 0.0
    %7364 = vmatprep.subr.mxu0 0.0
    %7365 = vmatpush1.msra.mxu0 0.0
    %7366 = vmatprep.subr.mxu0 0.0
    %7367 = vmatpush1.msra.mxu0 0.0
    %7368 = vmatprep.subr.mxu0 0.0
    %7369 = vmatpush1.msra.mxu0 0.0
    %7370 = vmatprep.subr.mxu0 0.0
    %7371 = vmatpush1.msra.mxu0 0.0
    %7372 = vmatprep.subr.mxu0 0.0
    %7373 = vmatpush1.msra.mxu0 0.0
    %7374 = vmatprep.subr.mxu0 0.0
    %7375 = vmatpush1.msra.mxu0 0.0
    %7376 = vmatprep.subr.mxu0 0.0
    %7377 = vmatpush1.msra.mxu0 0.0
    %7378 = vmatprep.subr.mxu0 0.0
    %7379 = vmatpush1.msra.mxu0 0.0
    %7380 = vmatprep.subr.mxu0 0.0
    %7381 = vmatpush1.msra.mxu0 0.0
    %7382 = vmatprep.subr.mxu0 0.0
    %7383 = vmatpush1.msra.mxu0 0.0
    %7384 = vmatprep.subr.mxu0 0.0
    %7385 = vmatpush1.msra.mxu0 0.0
    %7386 = vmatprep.subr.mxu0 0.0
    %7387 = vmatpush1.msra.mxu0 0.0
    %7388 = vmatprep.subr.mxu0 0.0
    %7389 = vmatpush1.msra.mxu0 0.0
    %7390 = vmatprep.subr.mxu0 0.0
    %7391 = vmatpush1.msra.mxu0 0.0
    %7392 = vmatprep.subr.mxu0 0.0
    %7393 = vmatpush1.msra.mxu0 0.0
    %7394 = vmatprep.subr.mxu0 0.0
    %7395 = vmatpush1.msra.mxu0 0.0
    %7396 = vmatprep.subr.mxu0 0.0
    %7397 = vmatpush1.msra.mxu0 0.0
    %7398 = vmatprep.subr.mxu0 0.0
    %7399 = vmatpush1.msra.mxu0 0.0
    %7400 = vmatprep.subr.mxu0 0.0
    %7401 = vmatpush1.msra.mxu0 0.0
    %7402 = vmatprep.mubr.f32.mxu0 0.0
    %7403 = vmatmul.mubr.f32.gmra.mrb[0].mxu0 %v7336
    %v7404 = vpop.f32.mrb[0].mxu0
    %v7405 = vadd.f32 0.0, %v7404
    %v7406 = vpop.f32.mrb[0].mxu0
    %7407 = vdwg.mxu0
    %v7409 = vsel %vm339, %v7329, 0
    %v7412 = vsel %vm339, %v7405, 0
    %7414 = vmatprep.subr.mxu0 0.0
    %7415 = vmatpush1.msra.mxu0 %v6648
    %7416 = vmatprep.subr.mxu0 0.0
    %7417 = vmatpush1.msra.mxu0 %v6649
    %7418 = vmatprep.subr.mxu0 0.0
    %7419 = vmatpush1.msra.mxu0 0.0
    %7420 = vmatprep.subr.mxu0 0.0
    %7421 = vmatpush1.msra.mxu0 0.0
    %7422 = vmatprep.subr.mxu0 0.0
    %7423 = vmatpush1.msra.mxu0 0.0
    %7424 = vmatprep.subr.mxu0 0.0
    %7425 = vmatpush1.msra.mxu0 0.0
    %7426 = vmatprep.subr.mxu0 0.0
    %7427 = vmatpush1.msra.mxu0 0.0
    %7428 = vmatprep.subr.mxu0 0.0
    %7429 = vmatpush1.msra.mxu0 0.0
    %7430 = vmatprep.subr.mxu0 0.0
    %7431 = vmatpush1.msra.mxu0 0.0
    %7432 = vmatprep.subr.mxu0 0.0
    %7433 = vmatpush1.msra.mxu0 0.0
    %7434 = vmatprep.subr.mxu0 0.0
    %7435 = vmatpush1.msra.mxu0 0.0
    %7436 = vmatprep.subr.mxu0 0.0
    %7437 = vmatpush1.msra.mxu0 0.0
    %7438 = vmatprep.subr.mxu0 0.0
    %7439 = vmatpush1.msra.mxu0 0.0
    %7440 = vmatprep.subr.mxu0 0.0
    %7441 = vmatpush1.msra.mxu0 0.0
    %7442 = vmatprep.subr.mxu0 0.0
    %7443 = vmatpush1.msra.mxu0 0.0
    %7444 = vmatprep.subr.mxu0 0.0
    %7445 = vmatpush1.msra.mxu0 0.0
    %7446 = vmatprep.subr.mxu0 0.0
    %7447 = vmatpush1.msra.mxu0 0.0
    %7448 = vmatprep.subr.mxu0 0.0
    %7449 = vmatpush1.msra.mxu0 0.0
    %7450 = vmatprep.subr.mxu0 0.0
    %7451 = vmatpush1.msra.mxu0 0.0
    %7452 = vmatprep.subr.mxu0 0.0
    %7453 = vmatpush1.msra.mxu0 0.0
    %7454 = vmatprep.subr.mxu0 0.0
    %7455 = vmatpush1.msra.mxu0 0.0
    %7456 = vmatprep.subr.mxu0 0.0
    %7457 = vmatpush1.msra.mxu0 0.0
    %7458 = vmatprep.subr.mxu0 0.0
    %7459 = vmatpush1.msra.mxu0 0.0
    %7460 = vmatprep.subr.mxu0 0.0
    %7461 = vmatpush1.msra.mxu0 0.0
    %7462 = vmatprep.subr.mxu0 0.0
    %7463 = vmatpush1.msra.mxu0 0.0
    %7464 = vmatprep.subr.mxu0 0.0
    %7465 = vmatpush1.msra.mxu0 0.0
    %7466 = vmatprep.subr.mxu0 0.0
    %7467 = vmatpush1.msra.mxu0 0.0
    %7468 = vmatprep.subr.mxu0 0.0
    %7469 = vmatpush1.msra.mxu0 0.0
    %7470 = vmatprep.subr.mxu0 0.0
    %7471 = vmatpush1.msra.mxu0 0.0
    %7472 = vmatprep.subr.mxu0 0.0
    %7473 = vmatpush1.msra.mxu0 0.0
    %7474 = vmatprep.subr.mxu0 0.0
    %7475 = vmatpush1.msra.mxu0 0.0
    %7476 = vmatprep.subr.mxu0 0.0
    %7477 = vmatpush1.msra.mxu0 0.0
    %7478 = vmatprep.mubr.f32.mxu0 0.0
    %7479 = vmatmul.mubr.f32.gmra.mrb[0].mxu0 %v7409
    %v7480 = vpop.f32.mrb[0].mxu0
    %v7481 = vadd.f32 0.0, %v7480
    %v7482 = vpop.f32.mrb[0].mxu0
    %7483 = vmatprep.mubr.f32.mxu0 0.0
    %7484 = vmatmul.mubr.f32.gmra.mrb[0].mxu0 %v7412
    %v7485 = vpop.f32.mrb[0].mxu0
    %v7486 = vadd.f32 0.0, %v7485
    %v7487 = vpop.f32.mrb[0].mxu0
    %7488 = vdwg.mxu0
    %v7489 = vadd.f32 %v7072, %v7481
    %v7490 = vadd.f32 %v7073, %v7486
    %v7491 = vadd.f32 %v6545, %v7489
    %v7492 = vadd.f32 %v6546, %v7490
    %v7493 = vsel %vm242, %v7491, 0.0
    %7494 = vadd.xlane.f32.xlu0 %v7493
    %v7495 = vpop.xlane.xlu0 %7494
    %v7496 = vsel %vm242, %v7492, 0.0
    %7497 = vadd.xlane.f32.xlu0 %v7496
    %v7498 = vpop.xlane.xlu0 %7497
    %v7499 = vmul.f32 %v7495, %v1178
    %v7500 = vmul.f32 %v7498, %v1178
    %v7501 = vsub.f32 %v7491, %v7499
    %v7502 = vsub.f32 %v7492, %v7500
    %v7503 = vmul.f32 %v7501, %v7501
    %v7504 = vmul.f32 %v7502, %v7502
    %v7505 = vsel %vm242, %v7503, 0.0
    %7506 = vadd.xlane.f32.xlu0 %v7505
    %v7507 = vpop.xlane.xlu0 %7506
    %v7508 = vsel %vm242, %v7504, 0.0
    %7509 = vadd.xlane.f32.xlu0 %v7508
    %v7510 = vpop.xlane.xlu0 %7509
    %v7511 = vmul.f32 %v7507, %v1178
    %v7512 = vmul.f32 %v7510, %v1178
    %v7513 = vadd.f32 %v7511, 1e-05
    %v7514 = vadd.f32 %v7512, 1e-05
    %v7515 = vrsqrt.pop %v7513
    %v7516 = vrsqrt.pop %v7514
    %v7517 = vmul.f32 %v7501, %v7515
    %v7518 = vmul.f32 %v7502, %v7516
    %v7520 = vlaneseq
    %v7521 = vshrl.u32 %v7520, 7
    %v7522 = vsub.s32 0, %v7521
    %v7523 = vrot.slane %v6548, %v7522
    %v7525 = vmul.f32 %v7517, %v7523
    %v7526 = vmul.f32 %v7518, %v7523
    %v7528 = vlaneseq
    %v7529 = vshrl.u32 %v7528, 7
    %v7530 = vsub.s32 0, %v7529
    %v7531 = vrot.slane %v6550, %v7530
    %v7533 = vadd.f32 %v7525, %v7531
    %v7534 = vadd.f32 %v7526, %v7531
    %s7535 = scalar_lea.vmem %s55, 32
    %v7536 = vld [vmem:[%s7535] sm:$0xff]
    %v7537 = vld [vmem:[%s7535 + $0x8] sm:$0xff]
    %v7538 = vld [vmem:[%s7535 + $0x10] sm:$0xff]
    %v7539 = vld [vmem:[%s7535 + $0x18] sm:$0xff]
    %s7540 = scalar_lea.vmem %s57, 1
    %v7541 = vld [vmem:[%s7540] sm:$0x1]
    %v7543 = vlaneseq
    %v7544 = vshrl.u32 %v7543, 7
    %v7545 = vsub.s32 0, %v7544
    %v7546 = vrot.slane %v7541, %v7545
    %v7549 = vsel %vm242, %v7533, 0
    %v7552 = vsel %vm242, %v7534, 0
    %7554 = vmatprep.subr.mxu0 0.0
    %7555 = vmatpush1.msra.mxu0 %v7536
    %7556 = vmatprep.subr.mxu0 0.0
    %7557 = vmatpush1.msra.mxu0 %v7537
    %7558 = vmatprep.subr.mxu0 0.0
    %7559 = vmatpush1.msra.mxu0 %v7538
    %7560 = vmatprep.subr.mxu0 0.0
    %7561 = vmatpush1.msra.mxu0 %v7539
    %7562 = vmatprep.subr.mxu0 0.0
    %7563 = vmatpush1.msra.mxu0 0.0
    %7564 = vmatprep.subr.mxu0 0.0
    %7565 = vmatpush1.msra.mxu0 0.0
    %7566 = vmatprep.subr.mxu0 0.0
    %7567 = vmatpush1.msra.mxu0 0.0
    %7568 = vmatprep.subr.mxu0 0.0
    %7569 = vmatpush1.msra.mxu0 0.0
    %7570 = vmatprep.subr.mxu0 0.0
    %7571 = vmatpush1.msra.mxu0 0.0
    %7572 = vmatprep.subr.mxu0 0.0
    %7573 = vmatpush1.msra.mxu0 0.0
    %7574 = vmatprep.subr.mxu0 0.0
    %7575 = vmatpush1.msra.mxu0 0.0
    %7576 = vmatprep.subr.mxu0 0.0
    %7577 = vmatpush1.msra.mxu0 0.0
    %7578 = vmatprep.subr.mxu0 0.0
    %7579 = vmatpush1.msra.mxu0 0.0
    %7580 = vmatprep.subr.mxu0 0.0
    %7581 = vmatpush1.msra.mxu0 0.0
    %7582 = vmatprep.subr.mxu0 0.0
    %7583 = vmatpush1.msra.mxu0 0.0
    %7584 = vmatprep.subr.mxu0 0.0
    %7585 = vmatpush1.msra.mxu0 0.0
    %7586 = vmatprep.subr.mxu0 0.0
    %7587 = vmatpush1.msra.mxu0 0.0
    %7588 = vmatprep.subr.mxu0 0.0
    %7589 = vmatpush1.msra.mxu0 0.0
    %7590 = vmatprep.subr.mxu0 0.0
    %7591 = vmatpush1.msra.mxu0 0.0
    %7592 = vmatprep.subr.mxu0 0.0
    %7593 = vmatpush1.msra.mxu0 0.0
    %7594 = vmatprep.subr.mxu0 0.0
    %7595 = vmatpush1.msra.mxu0 0.0
    %7596 = vmatprep.subr.mxu0 0.0
    %7597 = vmatpush1.msra.mxu0 0.0
    %7598 = vmatprep.subr.mxu0 0.0
    %7599 = vmatpush1.msra.mxu0 0.0
    %7600 = vmatprep.subr.mxu0 0.0
    %7601 = vmatpush1.msra.mxu0 0.0
    %7602 = vmatprep.subr.mxu0 0.0
    %7603 = vmatpush1.msra.mxu0 0.0
    %7604 = vmatprep.subr.mxu0 0.0
    %7605 = vmatpush1.msra.mxu0 0.0
    %7606 = vmatprep.subr.mxu0 0.0
    %7607 = vmatpush1.msra.mxu0 0.0
    %7608 = vmatprep.subr.mxu0 0.0
    %7609 = vmatpush1.msra.mxu0 0.0
    %7610 = vmatprep.subr.mxu0 0.0
    %7611 = vmatpush1.msra.mxu0 0.0
    %7612 = vmatprep.subr.mxu0 0.0
    %7613 = vmatpush1.msra.mxu0 0.0
    %7614 = vmatprep.subr.mxu0 0.0
    %7615 = vmatpush1.msra.mxu0 0.0
    %7616 = vmatprep.subr.mxu0 0.0
    %7617 = vmatpush1.msra.mxu0 0.0
    %7618 = vmatprep.mubr.f32.mxu0 0.0
    %7619 = vmatmul.mubr.f32.gmra.mrb[0].mxu0 %v7549
    %v7620 = vpop.f32.mrb[0].mxu0
    %v7621 = vadd.f32 %v7546, %v7620
    %v7622 = vpop.f32.mrb[0].mxu0
    %7623 = vmatprep.mubr.f32.mxu0 0.0
    %7624 = vmatmul.mubr.f32.gmra.mrb[0].mxu0 %v7552
    %v7625 = vpop.f32.mrb[0].mxu0
    %v7626 = vadd.f32 %v7546, %v7625
    %v7627 = vpop.f32.mrb[0].mxu0
    %7628 = vdwg.mxu0
    %s7629 = scalar_lea.vmem %s59, 32
    %v7630 = vld [vmem:[%s7629] sm:$0xff]
    %v7631 = vld [vmem:[%s7629 + $0x8] sm:$0xff]
    %v7632 = vld [vmem:[%s7629 + $0x10] sm:$0xff]
    %v7633 = vld [vmem:[%s7629 + $0x18] sm:$0xff]
    %s7634 = scalar_lea.vmem %s61, 1
    %v7635 = vld [vmem:[%s7634] sm:$0x1]
    %v7637 = vlaneseq
    %v7638 = vshrl.u32 %v7637, 7
    %v7639 = vsub.s32 0, %v7638
    %v7640 = vrot.slane %v7635, %v7639
    %7642 = vmatprep.subr.mxu0 0.0
    %7643 = vmatpush1.msra.mxu0 %v7630
    %7644 = vmatprep.subr.mxu0 0.0
    %7645 = vmatpush1.msra.mxu0 %v7631
    %7646 = vmatprep.subr.mxu0 0.0
    %7647 = vmatpush1.msra.mxu0 %v7632
    %7648 = vmatprep.subr.mxu0 0.0
    %7649 = vmatpush1.msra.mxu0 %v7633
    %7650 = vmatprep.subr.mxu0 0.0
    %7651 = vmatpush1.msra.mxu0 0.0
    %7652 = vmatprep.subr.mxu0 0.0
    %7653 = vmatpush1.msra.mxu0 0.0
    %7654 = vmatprep.subr.mxu0 0.0
    %7655 = vmatpush1.msra.mxu0 0.0
    %7656 = vmatprep.subr.mxu0 0.0
    %7657 = vmatpush1.msra.mxu0 0.0
    %7658 = vmatprep.subr.mxu0 0.0
    %7659 = vmatpush1.msra.mxu0 0.0
    %7660 = vmatprep.subr.mxu0 0.0
    %7661 = vmatpush1.msra.mxu0 0.0
    %7662 = vmatprep.subr.mxu0 0.0
    %7663 = vmatpush1.msra.mxu0 0.0
    %7664 = vmatprep.subr.mxu0 0.0
    %7665 = vmatpush1.msra.mxu0 0.0
    %7666 = vmatprep.subr.mxu0 0.0
    %7667 = vmatpush1.msra.mxu0 0.0
    %7668 = vmatprep.subr.mxu0 0.0
    %7669 = vmatpush1.msra.mxu0 0.0
    %7670 = vmatprep.subr.mxu0 0.0
    %7671 = vmatpush1.msra.mxu0 0.0
    %7672 = vmatprep.subr.mxu0 0.0
    %7673 = vmatpush1.msra.mxu0 0.0
    %7674 = vmatprep.subr.mxu0 0.0
    %7675 = vmatpush1.msra.mxu0 0.0
    %7676 = vmatprep.subr.mxu0 0.0
    %7677 = vmatpush1.msra.mxu0 0.0
    %7678 = vmatprep.subr.mxu0 0.0
    %7679 = vmatpush1.msra.mxu0 0.0
    %7680 = vmatprep.subr.mxu0 0.0
    %7681 = vmatpush1.msra.mxu0 0.0
    %7682 = vmatprep.subr.mxu0 0.0
    %7683 = vmatpush1.msra.mxu0 0.0
    %7684 = vmatprep.subr.mxu0 0.0
    %7685 = vmatpush1.msra.mxu0 0.0
    %7686 = vmatprep.subr.mxu0 0.0
    %7687 = vmatpush1.msra.mxu0 0.0
    %7688 = vmatprep.subr.mxu0 0.0
    %7689 = vmatpush1.msra.mxu0 0.0
    %7690 = vmatprep.subr.mxu0 0.0
    %7691 = vmatpush1.msra.mxu0 0.0
    %7692 = vmatprep.subr.mxu0 0.0
    %7693 = vmatpush1.msra.mxu0 0.0
    %7694 = vmatprep.subr.mxu0 0.0
    %7695 = vmatpush1.msra.mxu0 0.0
    %7696 = vmatprep.subr.mxu0 0.0
    %7697 = vmatpush1.msra.mxu0 0.0
    %7698 = vmatprep.subr.mxu0 0.0
    %7699 = vmatpush1.msra.mxu0 0.0
    %7700 = vmatprep.subr.mxu0 0.0
    %7701 = vmatpush1.msra.mxu0 0.0
    %7702 = vmatprep.subr.mxu0 0.0
    %7703 = vmatpush1.msra.mxu0 0.0
    %7704 = vmatprep.subr.mxu0 0.0
    %7705 = vmatpush1.msra.mxu0 0.0
    %7706 = vmatprep.mubr.f32.mxu0 0.0
    %7707 = vmatmul.mubr.f32.gmra.mrb[0].mxu0 %v2664
    %v7708 = vpop.f32.mrb[0].mxu0
    %v7709 = vadd.f32 %v7640, %v7708
    %v7710 = vpop.f32.mrb[0].mxu0
    %7711 = vmatprep.mubr.f32.mxu0 0.0
    %7712 = vmatmul.mubr.f32.gmra.mrb[0].mxu0 %v2667
    %v7713 = vpop.f32.mrb[0].mxu0
    %v7714 = vadd.f32 %v7640, %v7713
    %v7715 = vpop.f32.mrb[0].mxu0
    %7716 = vdwg.mxu0
    %s7717 = scalar_lea.vmem %s63, 32
    %v7718 = vld [vmem:[%s7717] sm:$0xff]
    %v7719 = vld [vmem:[%s7717 + $0x8] sm:$0xff]
    %v7720 = vld [vmem:[%s7717 + $0x10] sm:$0xff]
    %v7721 = vld [vmem:[%s7717 + $0x18] sm:$0xff]
    %s7722 = scalar_lea.vmem %s65, 1
    %v7723 = vld [vmem:[%s7722] sm:$0x1]
    %v7725 = vlaneseq
    %v7726 = vshrl.u32 %v7725, 7
    %v7727 = vsub.s32 0, %v7726
    %v7728 = vrot.slane %v7723, %v7727
    %v7730 = vadd.f32 %v7728, 0.0
    %v7732 = vsel %vm339, %v7621, 0
    %v7735 = vsel %vm339, %v7709, 0
    %7737 = vmatprep.subr.mxu0 0.0
    %7738 = vmatpush1.xpose.msra.mxu0 %v7735
    %7739 = vmatprep.subr.mxu0 0.0
    %7740 = vmatpush1.xpose.msra.mxu0 0.0
    %7741 = vmatprep.subr.mxu0 0.0
    %7742 = vmatpush1.xpose.msra.mxu0 0.0
    %7743 = vmatprep.subr.mxu0 0.0
    %7744 = vmatpush1.xpose.msra.mxu0 0.0
    %7745 = vmatprep.subr.mxu0 0.0
    %7746 = vmatpush1.xpose.msra.mxu0 0.0
    %7747 = vmatprep.subr.mxu0 0.0
    %7748 = vmatpush1.xpose.msra.mxu0 0.0
    %7749 = vmatprep.subr.mxu0 0.0
    %7750 = vmatpush1.xpose.msra.mxu0 0.0
    %7751 = vmatprep.subr.mxu0 0.0
    %7752 = vmatpush1.xpose.msra.mxu0 0.0
    %7753 = vmatprep.subr.mxu0 0.0
    %7754 = vmatpush1.xpose.msra.mxu0 0.0
    %7755 = vmatprep.subr.mxu0 0.0
    %7756 = vmatpush1.xpose.msra.mxu0 0.0
    %7757 = vmatprep.subr.mxu0 0.0
    %7758 = vmatpush1.xpose.msra.mxu0 0.0
    %7759 = vmatprep.subr.mxu0 0.0
    %7760 = vmatpush1.xpose.msra.mxu0 0.0
    %7761 = vmatprep.subr.mxu0 0.0
    %7762 = vmatpush1.xpose.msra.mxu0 0.0
    %7763 = vmatprep.subr.mxu0 0.0
    %7764 = vmatpush1.xpose.msra.mxu0 0.0
    %7765 = vmatprep.subr.mxu0 0.0
    %7766 = vmatpush1.xpose.msra.mxu0 0.0
    %7767 = vmatprep.subr.mxu0 0.0
    %7768 = vmatpush1.xpose.msra.mxu0 0.0
    %7769 = vmatprep.subr.mxu0 0.0
    %7770 = vmatpush1.xpose.msra.mxu0 0.0
    %7771 = vmatprep.subr.mxu0 0.0
    %7772 = vmatpush1.xpose.msra.mxu0 0.0
    %7773 = vmatprep.subr.mxu0 0.0
    %7774 = vmatpush1.xpose.msra.mxu0 0.0
    %7775 = vmatprep.subr.mxu0 0.0
    %7776 = vmatpush1.xpose.msra.mxu0 0.0
    %7777 = vmatprep.subr.mxu0 0.0
    %7778 = vmatpush1.xpose.msra.mxu0 0.0
    %7779 = vmatprep.subr.mxu0 0.0
    %7780 = vmatpush1.xpose.msra.mxu0 0.0
    %7781 = vmatprep.subr.mxu0 0.0
    %7782 = vmatpush1.xpose.msra.mxu0 0.0
    %7783 = vmatprep.subr.mxu0 0.0
    %7784 = vmatpush1.xpose.msra.mxu0 0.0
    %7785 = vmatprep.subr.mxu0 0.0
    %7786 = vmatpush1.xpose.msra.mxu0 0.0
    %7787 = vmatprep.subr.mxu0 0.0
    %7788 = vmatpush1.xpose.msra.mxu0 0.0
    %7789 = vmatprep.subr.mxu0 0.0
    %7790 = vmatpush1.xpose.msra.mxu0 0.0
    %7791 = vmatprep.subr.mxu0 0.0
    %7792 = vmatpush1.xpose.msra.mxu0 0.0
    %7793 = vmatprep.subr.mxu0 0.0
    %7794 = vmatpush1.xpose.msra.mxu0 0.0
    %7795 = vmatprep.subr.mxu0 0.0
    %7796 = vmatpush1.xpose.msra.mxu0 0.0
    %7797 = vmatprep.subr.mxu0 0.0
    %7798 = vmatpush1.xpose.msra.mxu0 0.0
    %7799 = vmatprep.subr.mxu0 0.0
    %7800 = vmatpush1.xpose.msra.mxu0 0.0
    %7801 = vmatprep.mubr.f32.mxu0 0.0
    %7802 = vmatmul.mubr.f32.gmra.mrb[0].mxu0 %v7732
    %v7803 = vpop.f32.mrb[0].mxu0
    %v7804 = vadd.f32 0.0, %v7803
    %v7805 = vpop.f32.mrb[0].mxu0
    %7806 = vdwg.mxu0
    %v7808 = vsel %vm339, %v7626, 0
    %v7811 = vsel %vm339, %v7714, 0
    %7813 = vmatprep.subr.mxu0 0.0
    %7814 = vmatpush1.xpose.msra.mxu0 %v7811
    %7815 = vmatprep.subr.mxu0 0.0
    %7816 = vmatpush1.xpose.msra.mxu0 0.0
    %7817 = vmatprep.subr.mxu0 0.0
    %7818 = vmatpush1.xpose.msra.mxu0 0.0
    %7819 = vmatprep.subr.mxu0 0.0
    %7820 = vmatpush1.xpose.msra.mxu0 0.0
    %7821 = vmatprep.subr.mxu0 0.0
    %7822 = vmatpush1.xpose.msra.mxu0 0.0
    %7823 = vmatprep.subr.mxu0 0.0
    %7824 = vmatpush1.xpose.msra.mxu0 0.0
    %7825 = vmatprep.subr.mxu0 0.0
    %7826 = vmatpush1.xpose.msra.mxu0 0.0
    %7827 = vmatprep.subr.mxu0 0.0
    %7828 = vmatpush1.xpose.msra.mxu0 0.0
    %7829 = vmatprep.subr.mxu0 0.0
    %7830 = vmatpush1.xpose.msra.mxu0 0.0
    %7831 = vmatprep.subr.mxu0 0.0
    %7832 = vmatpush1.xpose.msra.mxu0 0.0
    %7833 = vmatprep.subr.mxu0 0.0
    %7834 = vmatpush1.xpose.msra.mxu0 0.0
    %7835 = vmatprep.subr.mxu0 0.0
    %7836 = vmatpush1.xpose.msra.mxu0 0.0
    %7837 = vmatprep.subr.mxu0 0.0
    %7838 = vmatpush1.xpose.msra.mxu0 0.0
    %7839 = vmatprep.subr.mxu0 0.0
    %7840 = vmatpush1.xpose.msra.mxu0 0.0
    %7841 = vmatprep.subr.mxu0 0.0
    %7842 = vmatpush1.xpose.msra.mxu0 0.0
    %7843 = vmatprep.subr.mxu0 0.0
    %7844 = vmatpush1.xpose.msra.mxu0 0.0
    %7845 = vmatprep.subr.mxu0 0.0
    %7846 = vmatpush1.xpose.msra.mxu0 0.0
    %7847 = vmatprep.subr.mxu0 0.0
    %7848 = vmatpush1.xpose.msra.mxu0 0.0
    %7849 = vmatprep.subr.mxu0 0.0
    %7850 = vmatpush1.xpose.msra.mxu0 0.0
    %7851 = vmatprep.subr.mxu0 0.0
    %7852 = vmatpush1.xpose.msra.mxu0 0.0
    %7853 = vmatprep.subr.mxu0 0.0
    %7854 = vmatpush1.xpose.msra.mxu0 0.0
    %7855 = vmatprep.subr.mxu0 0.0
    %7856 = vmatpush1.xpose.msra.mxu0 0.0
    %7857 = vmatprep.subr.mxu0 0.0
    %7858 = vmatpush1.xpose.msra.mxu0 0.0
    %7859 = vmatprep.subr.mxu0 0.0
    %7860 = vmatpush1.xpose.msra.mxu0 0.0
    %7861 = vmatprep.subr.mxu0 0.0
    %7862 = vmatpush1.xpose.msra.mxu0 0.0
    %7863 = vmatprep.subr.mxu0 0.0
    %7864 = vmatpush1.xpose.msra.mxu0 0.0
    %7865 = vmatprep.subr.mxu0 0.0
    %7866 = vmatpush1.xpose.msra.mxu0 0.0
    %7867 = vmatprep.subr.mxu0 0.0
    %7868 = vmatpush1.xpose.msra.mxu0 0.0
    %7869 = vmatprep.subr.mxu0 0.0
    %7870 = vmatpush1.xpose.msra.mxu0 0.0
    %7871 = vmatprep.subr.mxu0 0.0
    %7872 = vmatpush1.xpose.msra.mxu0 0.0
    %7873 = vmatprep.subr.mxu0 0.0
    %7874 = vmatpush1.xpose.msra.mxu0 0.0
    %7875 = vmatprep.subr.mxu0 0.0
    %7876 = vmatpush1.xpose.msra.mxu0 0.0
    %7877 = vmatprep.mubr.f32.mxu0 0.0
    %7878 = vmatmul.mubr.f32.gmra.mrb[0].mxu0 %v7808
    %v7879 = vpop.f32.mrb[0].mxu0
    %v7880 = vadd.f32 0.0, %v7879
    %v7881 = vpop.f32.mrb[0].mxu0
    %7882 = vdwg.mxu0
    %v7883 = vmul.f32 %v7804, 0.25
    %v7884 = vmul.f32 %v7880, 0.25
    %v7885 = vadd.f32 %v7883, %v225
    %v7886 = vadd.f32 %v7884, %v226
    %v7887 = vsel %vm495, %v7885, -inf
    %7888 = vmax.xlane.f32.xlu0 %v7887
    %v7889 = vpop.xlane.xlu0 %7888
    %v7890 = vsel %vm495, %v7886, -inf
    %7891 = vmax.xlane.f32.xlu0 %v7890
    %v7892 = vpop.xlane.xlu0 %7891
    %v7893 = vsub.f32 %v7885, %v7889
    %v7894 = vsub.f32 %v7886, %v7892
    %v7895 = vmul.f32 %v7893, 1.442695
    %v7896 = vpow.pop %v7895
    %v7897 = vmul.f32 %v7894, 1.442695
    %v7898 = vpow.pop %v7897
    %v7899 = vsel %vm495, %v7896, 0.0
    %7900 = vadd.xlane.f32.xlu0 %v7899
    %v7901 = vpop.xlane.xlu0 %7900
    %v7902 = vsel %vm495, %v7898, 0.0
    %7903 = vadd.xlane.f32.xlu0 %v7902
    %v7904 = vpop.xlane.xlu0 %7903
    %v7905 = vrcp.pop %v7901
    %v7906 = vrcp.pop %v7904
    %v7907 = vmul.f32 %v7896, %v7905
    %v7908 = vmul.f32 %v7898, %v7906
    %7909 = vrot.lane.b32.xlu0 %v7709, 96
    %v7910 = vpop.permute.xlu0 %7909
    %v7913 = vsel %vm495, %v7907, 0
    %7915 = vmatprep.subr.mxu0 0.0
    %7916 = vmatpush1.msra.mxu0 %v7910
    %7917 = vmatprep.subr.mxu0 0.0
    %7918 = vmatpush1.msra.mxu0 0.0
    %7919 = vmatprep.subr.mxu0 0.0
    %7920 = vmatpush1.msra.mxu0 0.0
    %7921 = vmatprep.subr.mxu0 0.0
    %7922 = vmatpush1.msra.mxu0 0.0
    %7923 = vmatprep.subr.mxu0 0.0
    %7924 = vmatpush1.msra.mxu0 0.0
    %7925 = vmatprep.subr.mxu0 0.0
    %7926 = vmatpush1.msra.mxu0 0.0
    %7927 = vmatprep.subr.mxu0 0.0
    %7928 = vmatpush1.msra.mxu0 0.0
    %7929 = vmatprep.subr.mxu0 0.0
    %7930 = vmatpush1.msra.mxu0 0.0
    %7931 = vmatprep.subr.mxu0 0.0
    %7932 = vmatpush1.msra.mxu0 0.0
    %7933 = vmatprep.subr.mxu0 0.0
    %7934 = vmatpush1.msra.mxu0 0.0
    %7935 = vmatprep.subr.mxu0 0.0
    %7936 = vmatpush1.msra.mxu0 0.0
    %7937 = vmatprep.subr.mxu0 0.0
    %7938 = vmatpush1.msra.mxu0 0.0
    %7939 = vmatprep.subr.mxu0 0.0
    %7940 = vmatpush1.msra.mxu0 0.0
    %7941 = vmatprep.subr.mxu0 0.0
    %7942 = vmatpush1.msra.mxu0 0.0
    %7943 = vmatprep.subr.mxu0 0.0
    %7944 = vmatpush1.msra.mxu0 0.0
    %7945 = vmatprep.subr.mxu0 0.0
    %7946 = vmatpush1.msra.mxu0 0.0
    %7947 = vmatprep.subr.mxu0 0.0
    %7948 = vmatpush1.msra.mxu0 0.0
    %7949 = vmatprep.subr.mxu0 0.0
    %7950 = vmatpush1.msra.mxu0 0.0
    %7951 = vmatprep.subr.mxu0 0.0
    %7952 = vmatpush1.msra.mxu0 0.0
    %7953 = vmatprep.subr.mxu0 0.0
    %7954 = vmatpush1.msra.mxu0 0.0
    %7955 = vmatprep.subr.mxu0 0.0
    %7956 = vmatpush1.msra.mxu0 0.0
    %7957 = vmatprep.subr.mxu0 0.0
    %7958 = vmatpush1.msra.mxu0 0.0
    %7959 = vmatprep.subr.mxu0 0.0
    %7960 = vmatpush1.msra.mxu0 0.0
    %7961 = vmatprep.subr.mxu0 0.0
    %7962 = vmatpush1.msra.mxu0 0.0
    %7963 = vmatprep.subr.mxu0 0.0
    %7964 = vmatpush1.msra.mxu0 0.0
    %7965 = vmatprep.subr.mxu0 0.0
    %7966 = vmatpush1.msra.mxu0 0.0
    %7967 = vmatprep.subr.mxu0 0.0
    %7968 = vmatpush1.msra.mxu0 0.0
    %7969 = vmatprep.subr.mxu0 0.0
    %7970 = vmatpush1.msra.mxu0 0.0
    %7971 = vmatprep.subr.mxu0 0.0
    %7972 = vmatpush1.msra.mxu0 0.0
    %7973 = vmatprep.subr.mxu0 0.0
    %7974 = vmatpush1.msra.mxu0 0.0
    %7975 = vmatprep.subr.mxu0 0.0
    %7976 = vmatpush1.msra.mxu0 0.0
    %7977 = vmatprep.subr.mxu0 0.0
    %7978 = vmatpush1.msra.mxu0 0.0
    %7979 = vmatprep.mubr.f32.mxu0 0.0
    %7980 = vmatmul.mubr.f32.gmra.mrb[0].mxu0 %v7913
    %v7981 = vpop.f32.mrb[0].mxu0
    %v7982 = vadd.f32 0.0, %v7981
    %v7983 = vpop.f32.mrb[0].mxu0
    %7984 = vdwg.mxu0
    %7985 = vrot.lane.b32.xlu0 %v7714, 96
    %v7986 = vpop.permute.xlu0 %7985
    %v7989 = vsel %vm495, %v7908, 0
    %7991 = vmatprep.subr.mxu0 0.0
    %7992 = vmatpush1.msra.mxu0 %v7986
    %7993 = vmatprep.subr.mxu0 0.0
    %7994 = vmatpush1.msra.mxu0 0.0
    %7995 = vmatprep.subr.mxu0 0.0
    %7996 = vmatpush1.msra.mxu0 0.0
    %7997 = vmatprep.subr.mxu0 0.0
    %7998 = vmatpush1.msra.mxu0 0.0
    %7999 = vmatprep.subr.mxu0 0.0
    %8000 = vmatpush1.msra.mxu0 0.0
    %8001 = vmatprep.subr.mxu0 0.0
    %8002 = vmatpush1.msra.mxu0 0.0
    %8003 = vmatprep.subr.mxu0 0.0
    %8004 = vmatpush1.msra.mxu0 0.0
    %8005 = vmatprep.subr.mxu0 0.0
    %8006 = vmatpush1.msra.mxu0 0.0
    %8007 = vmatprep.subr.mxu0 0.0
    %8008 = vmatpush1.msra.mxu0 0.0
    %8009 = vmatprep.subr.mxu0 0.0
    %8010 = vmatpush1.msra.mxu0 0.0
    %8011 = vmatprep.subr.mxu0 0.0
    %8012 = vmatpush1.msra.mxu0 0.0
    %8013 = vmatprep.subr.mxu0 0.0
    %8014 = vmatpush1.msra.mxu0 0.0
    %8015 = vmatprep.subr.mxu0 0.0
    %8016 = vmatpush1.msra.mxu0 0.0
    %8017 = vmatprep.subr.mxu0 0.0
    %8018 = vmatpush1.msra.mxu0 0.0
    %8019 = vmatprep.subr.mxu0 0.0
    %8020 = vmatpush1.msra.mxu0 0.0
    %8021 = vmatprep.subr.mxu0 0.0
    %8022 = vmatpush1.msra.mxu0 0.0
    %8023 = vmatprep.subr.mxu0 0.0
    %8024 = vmatpush1.msra.mxu0 0.0
    %8025 = vmatprep.subr.mxu0 0.0
    %8026 = vmatpush1.msra.mxu0 0.0
    %8027 = vmatprep.subr.mxu0 0.0
    %8028 = vmatpush1.msra.mxu0 0.0
    %8029 = vmatprep.subr.mxu0 0.0
    %8030 = vmatpush1.msra.mxu0 0.0
    %8031 = vmatprep.subr.mxu0 0.0
    %8032 = vmatpush1.msra.mxu0 0.0
    %8033 = vmatprep.subr.mxu0 0.0
    %8034 = vmatpush1.msra.mxu0 0.0
    %8035 = vmatprep.subr.mxu0 0.0
    %8036 = vmatpush1.msra.mxu0 0.0
    %8037 = vmatprep.subr.mxu0 0.0
    %8038 = vmatpush1.msra.mxu0 0.0
    %8039 = vmatprep.subr.mxu0 0.0
    %8040 = vmatpush1.msra.mxu0 0.0
    %8041 = vmatprep.subr.mxu0 0.0
    %8042 = vmatpush1.msra.mxu0 0.0
    %8043 = vmatprep.subr.mxu0 0.0
    %8044 = vmatpush1.msra.mxu0 0.0
    %8045 = vmatprep.subr.mxu0 0.0
    %8046 = vmatpush1.msra.mxu0 0.0
    %8047 = vmatprep.subr.mxu0 0.0
    %8048 = vmatpush1.msra.mxu0 0.0
    %8049 = vmatprep.subr.mxu0 0.0
    %8050 = vmatpush1.msra.mxu0 0.0
    %8051 = vmatprep.subr.mxu0 0.0
    %8052 = vmatpush1.msra.mxu0 0.0
    %8053 = vmatprep.subr.mxu0 0.0
    %8054 = vmatpush1.msra.mxu0 0.0
    %8055 = vmatprep.mubr.f32.mxu0 0.0
    %8056 = vmatmul.mubr.f32.gmra.mrb[0].mxu0 %v7989
    %v8057 = vpop.f32.mrb[0].mxu0
    %v8058 = vadd.f32 0.0, %v8057
    %v8059 = vpop.f32.mrb[0].mxu0
    %8060 = vdwg.mxu0
    %v8062 = vsel %vm339, %v7982, 0
    %v8065 = vsel %vm339, %v8058, 0
    %8067 = vmatprep.subr.mxu0 0.0
    %8068 = vmatpush1.msra.mxu0 %v7718
    %8069 = vmatprep.subr.mxu0 0.0
    %8070 = vmatpush1.msra.mxu0 %v7719
    %8071 = vmatprep.subr.mxu0 0.0
    %8072 = vmatpush1.msra.mxu0 0.0
    %8073 = vmatprep.subr.mxu0 0.0
    %8074 = vmatpush1.msra.mxu0 0.0
    %8075 = vmatprep.subr.mxu0 0.0
    %8076 = vmatpush1.msra.mxu0 0.0
    %8077 = vmatprep.subr.mxu0 0.0
    %8078 = vmatpush1.msra.mxu0 0.0
    %8079 = vmatprep.subr.mxu0 0.0
    %8080 = vmatpush1.msra.mxu0 0.0
    %8081 = vmatprep.subr.mxu0 0.0
    %8082 = vmatpush1.msra.mxu0 0.0
    %8083 = vmatprep.subr.mxu0 0.0
    %8084 = vmatpush1.msra.mxu0 0.0
    %8085 = vmatprep.subr.mxu0 0.0
    %8086 = vmatpush1.msra.mxu0 0.0
    %8087 = vmatprep.subr.mxu0 0.0
    %8088 = vmatpush1.msra.mxu0 0.0
    %8089 = vmatprep.subr.mxu0 0.0
    %8090 = vmatpush1.msra.mxu0 0.0
    %8091 = vmatprep.subr.mxu0 0.0
    %8092 = vmatpush1.msra.mxu0 0.0
    %8093 = vmatprep.subr.mxu0 0.0
    %8094 = vmatpush1.msra.mxu0 0.0
    %8095 = vmatprep.subr.mxu0 0.0
    %8096 = vmatpush1.msra.mxu0 0.0
    %8097 = vmatprep.subr.mxu0 0.0
    %8098 = vmatpush1.msra.mxu0 0.0
    %8099 = vmatprep.subr.mxu0 0.0
    %8100 = vmatpush1.msra.mxu0 0.0
    %8101 = vmatprep.subr.mxu0 0.0
    %8102 = vmatpush1.msra.mxu0 0.0
    %8103 = vmatprep.subr.mxu0 0.0
    %8104 = vmatpush1.msra.mxu0 0.0
    %8105 = vmatprep.subr.mxu0 0.0
    %8106 = vmatpush1.msra.mxu0 0.0
    %8107 = vmatprep.subr.mxu0 0.0
    %8108 = vmatpush1.msra.mxu0 0.0
    %8109 = vmatprep.subr.mxu0 0.0
    %8110 = vmatpush1.msra.mxu0 0.0
    %8111 = vmatprep.subr.mxu0 0.0
    %8112 = vmatpush1.msra.mxu0 0.0
    %8113 = vmatprep.subr.mxu0 0.0
    %8114 = vmatpush1.msra.mxu0 0.0
    %8115 = vmatprep.subr.mxu0 0.0
    %8116 = vmatpush1.msra.mxu0 0.0
    %8117 = vmatprep.subr.mxu0 0.0
    %8118 = vmatpush1.msra.mxu0 0.0
    %8119 = vmatprep.subr.mxu0 0.0
    %8120 = vmatpush1.msra.mxu0 0.0
    %8121 = vmatprep.subr.mxu0 0.0
    %8122 = vmatpush1.msra.mxu0 0.0
    %8123 = vmatprep.subr.mxu0 0.0
    %8124 = vmatpush1.msra.mxu0 0.0
    %8125 = vmatprep.subr.mxu0 0.0
    %8126 = vmatpush1.msra.mxu0 0.0
    %8127 = vmatprep.subr.mxu0 0.0
    %8128 = vmatpush1.msra.mxu0 0.0
    %8129 = vmatprep.subr.mxu0 0.0
    %8130 = vmatpush1.msra.mxu0 0.0
    %8131 = vmatprep.mubr.f32.mxu0 0.0
    %8132 = vmatmul.mubr.f32.gmra.mrb[0].mxu0 %v8062
    %v8133 = vpop.f32.mrb[0].mxu0
    %v8134 = vadd.f32 0.0, %v8133
    %v8135 = vpop.f32.mrb[0].mxu0
    %8136 = vmatprep.mubr.f32.mxu0 0.0
    %8137 = vmatmul.mubr.f32.gmra.mrb[0].mxu0 %v8065
    %v8138 = vpop.f32.mrb[0].mxu0
    %v8139 = vadd.f32 0.0, %v8138
    %v8140 = vpop.f32.mrb[0].mxu0
    %8141 = vdwg.mxu0
    %v8142 = vadd.f32 %v7730, %v8134
    %v8143 = vadd.f32 %v7730, %v8139
    %8144 = vrot.lane.b32.xlu0 %v7621, 112
    %v8145 = vpop.permute.xlu0 %8144
    %8146 = vrot.lane.b32.xlu0 %v7709, 112
    %v8147 = vpop.permute.xlu0 %8146
    %v8148 = vsel %vm339, %v8145, 0
    %v8150 = vsel %vm339, %v8147, 0
    %8152 = vmatprep.subr.mxu0 0.0
    %8153 = vmatpush1.xpose.msra.mxu0 %v8150
    %8154 = vmatprep.subr.mxu0 0.0
    %8155 = vmatpush1.xpose.msra.mxu0 0.0
    %8156 = vmatprep.subr.mxu0 0.0
    %8157 = vmatpush1.xpose.msra.mxu0 0.0
    %8158 = vmatprep.subr.mxu0 0.0
    %8159 = vmatpush1.xpose.msra.mxu0 0.0
    %8160 = vmatprep.subr.mxu0 0.0
    %8161 = vmatpush1.xpose.msra.mxu0 0.0
    %8162 = vmatprep.subr.mxu0 0.0
    %8163 = vmatpush1.xpose.msra.mxu0 0.0
    %8164 = vmatprep.subr.mxu0 0.0
    %8165 = vmatpush1.xpose.msra.mxu0 0.0
    %8166 = vmatprep.subr.mxu0 0.0
    %8167 = vmatpush1.xpose.msra.mxu0 0.0
    %8168 = vmatprep.subr.mxu0 0.0
    %8169 = vmatpush1.xpose.msra.mxu0 0.0
    %8170 = vmatprep.subr.mxu0 0.0
    %8171 = vmatpush1.xpose.msra.mxu0 0.0
    %8172 = vmatprep.subr.mxu0 0.0
    %8173 = vmatpush1.xpose.msra.mxu0 0.0
    %8174 = vmatprep.subr.mxu0 0.0
    %8175 = vmatpush1.xpose.msra.mxu0 0.0
    %8176 = vmatprep.subr.mxu0 0.0
    %8177 = vmatpush1.xpose.msra.mxu0 0.0
    %8178 = vmatprep.subr.mxu0 0.0
    %8179 = vmatpush1.xpose.msra.mxu0 0.0
    %8180 = vmatprep.subr.mxu0 0.0
    %8181 = vmatpush1.xpose.msra.mxu0 0.0
    %8182 = vmatprep.subr.mxu0 0.0
    %8183 = vmatpush1.xpose.msra.mxu0 0.0
    %8184 = vmatprep.subr.mxu0 0.0
    %8185 = vmatpush1.xpose.msra.mxu0 0.0
    %8186 = vmatprep.subr.mxu0 0.0
    %8187 = vmatpush1.xpose.msra.mxu0 0.0
    %8188 = vmatprep.subr.mxu0 0.0
    %8189 = vmatpush1.xpose.msra.mxu0 0.0
    %8190 = vmatprep.subr.mxu0 0.0
    %8191 = vmatpush1.xpose.msra.mxu0 0.0
    %8192 = vmatprep.subr.mxu0 0.0
    %8193 = vmatpush1.xpose.msra.mxu0 0.0
    %8194 = vmatprep.subr.mxu0 0.0
    %8195 = vmatpush1.xpose.msra.mxu0 0.0
    %8196 = vmatprep.subr.mxu0 0.0
    %8197 = vmatpush1.xpose.msra.mxu0 0.0
    %8198 = vmatprep.subr.mxu0 0.0
    %8199 = vmatpush1.xpose.msra.mxu0 0.0
    %8200 = vmatprep.subr.mxu0 0.0
    %8201 = vmatpush1.xpose.msra.mxu0 0.0
    %8202 = vmatprep.subr.mxu0 0.0
    %8203 = vmatpush1.xpose.msra.mxu0 0.0
    %8204 = vmatprep.subr.mxu0 0.0
    %8205 = vmatpush1.xpose.msra.mxu0 0.0
    %8206 = vmatprep.subr.mxu0 0.0
    %8207 = vmatpush1.xpose.msra.mxu0 0.0
    %8208 = vmatprep.subr.mxu0 0.0
    %8209 = vmatpush1.xpose.msra.mxu0 0.0
    %8210 = vmatprep.subr.mxu0 0.0
    %8211 = vmatpush1.xpose.msra.mxu0 0.0
    %8212 = vmatprep.subr.mxu0 0.0
    %8213 = vmatpush1.xpose.msra.mxu0 0.0
    %8214 = vmatprep.subr.mxu0 0.0
    %8215 = vmatpush1.xpose.msra.mxu0 0.0
    %8216 = vmatprep.mubr.f32.mxu0 0.0
    %8217 = vmatmul.mubr.f32.gmra.mrb[0].mxu0 %v8148
    %v8218 = vpop.f32.mrb[0].mxu0
    %v8219 = vadd.f32 0.0, %v8218
    %v8220 = vpop.f32.mrb[0].mxu0
    %8221 = vdwg.mxu0
    %8222 = vrot.lane.b32.xlu0 %v7626, 112
    %v8223 = vpop.permute.xlu0 %8222
    %8224 = vrot.lane.b32.xlu0 %v7714, 112
    %v8225 = vpop.permute.xlu0 %8224
    %v8226 = vsel %vm339, %v8223, 0
    %v8228 = vsel %vm339, %v8225, 0
    %8230 = vmatprep.subr.mxu0 0.0
    %8231 = vmatpush1.xpose.msra.mxu0 %v8228
    %8232 = vmatprep.subr.mxu0 0.0
    %8233 = vmatpush1.xpose.msra.mxu0 0.0
    %8234 = vmatprep.subr.mxu0 0.0
    %8235 = vmatpush1.xpose.msra.mxu0 0.0
    %8236 = vmatprep.subr.mxu0 0.0
    %8237 = vmatpush1.xpose.msra.mxu0 0.0
    %8238 = vmatprep.subr.mxu0 0.0
    %8239 = vmatpush1.xpose.msra.mxu0 0.0
    %8240 = vmatprep.subr.mxu0 0.0
    %8241 = vmatpush1.xpose.msra.mxu0 0.0
    %8242 = vmatprep.subr.mxu0 0.0
    %8243 = vmatpush1.xpose.msra.mxu0 0.0
    %8244 = vmatprep.subr.mxu0 0.0
    %8245 = vmatpush1.xpose.msra.mxu0 0.0
    %8246 = vmatprep.subr.mxu0 0.0
    %8247 = vmatpush1.xpose.msra.mxu0 0.0
    %8248 = vmatprep.subr.mxu0 0.0
    %8249 = vmatpush1.xpose.msra.mxu0 0.0
    %8250 = vmatprep.subr.mxu0 0.0
    %8251 = vmatpush1.xpose.msra.mxu0 0.0
    %8252 = vmatprep.subr.mxu0 0.0
    %8253 = vmatpush1.xpose.msra.mxu0 0.0
    %8254 = vmatprep.subr.mxu0 0.0
    %8255 = vmatpush1.xpose.msra.mxu0 0.0
    %8256 = vmatprep.subr.mxu0 0.0
    %8257 = vmatpush1.xpose.msra.mxu0 0.0
    %8258 = vmatprep.subr.mxu0 0.0
    %8259 = vmatpush1.xpose.msra.mxu0 0.0
    %8260 = vmatprep.subr.mxu0 0.0
    %8261 = vmatpush1.xpose.msra.mxu0 0.0
    %8262 = vmatprep.subr.mxu0 0.0
    %8263 = vmatpush1.xpose.msra.mxu0 0.0
    %8264 = vmatprep.subr.mxu0 0.0
    %8265 = vmatpush1.xpose.msra.mxu0 0.0
    %8266 = vmatprep.subr.mxu0 0.0
    %8267 = vmatpush1.xpose.msra.mxu0 0.0
    %8268 = vmatprep.subr.mxu0 0.0
    %8269 = vmatpush1.xpose.msra.mxu0 0.0
    %8270 = vmatprep.subr.mxu0 0.0
    %8271 = vmatpush1.xpose.msra.mxu0 0.0
    %8272 = vmatprep.subr.mxu0 0.0
    %8273 = vmatpush1.xpose.msra.mxu0 0.0
    %8274 = vmatprep.subr.mxu0 0.0
    %8275 = vmatpush1.xpose.msra.mxu0 0.0
    %8276 = vmatprep.subr.mxu0 0.0
    %8277 = vmatpush1.xpose.msra.mxu0 0.0
    %8278 = vmatprep.subr.mxu0 0.0
    %8279 = vmatpush1.xpose.msra.mxu0 0.0
    %8280 = vmatprep.subr.mxu0 0.0
    %8281 = vmatpush1.xpose.msra.mxu0 0.0
    %8282 = vmatprep.subr.mxu0 0.0
    %8283 = vmatpush1.xpose.msra.mxu0 0.0
    %8284 = vmatprep.subr.mxu0 0.0
    %8285 = vmatpush1.xpose.msra.mxu0 0.0
    %8286 = vmatprep.subr.mxu0 0.0
    %8287 = vmatpush1.xpose.msra.mxu0 0.0
    %8288 = vmatprep.subr.mxu0 0.0
    %8289 = vmatpush1.xpose.msra.mxu0 0.0
    %8290 = vmatprep.subr.mxu0 0.0
    %8291 = vmatpush1.xpose.msra.mxu0 0.0
    %8292 = vmatprep.subr.mxu0 0.0
    %8293 = vmatpush1.xpose.msra.mxu0 0.0
    %8294 = vmatprep.mubr.f32.mxu0 0.0
    %8295 = vmatmul.mubr.f32.gmra.mrb[0].mxu0 %v8226
    %v8296 = vpop.f32.mrb[0].mxu0
    %v8297 = vadd.f32 0.0, %v8296
    %v8298 = vpop.f32.mrb[0].mxu0
    %8299 = vdwg.mxu0
    %v8300 = vmul.f32 %v8219, 0.25
    %v8301 = vmul.f32 %v8297, 0.25
    %v8302 = vadd.f32 %v8300, %v225
    %v8303 = vadd.f32 %v8301, %v226
    %v8304 = vsel %vm495, %v8302, -inf
    %8305 = vmax.xlane.f32.xlu0 %v8304
    %v8306 = vpop.xlane.xlu0 %8305
    %v8307 = vsel %vm495, %v8303, -inf
    %8308 = vmax.xlane.f32.xlu0 %v8307
    %v8309 = vpop.xlane.xlu0 %8308
    %v8310 = vsub.f32 %v8302, %v8306
    %v8311 = vsub.f32 %v8303, %v8309
    %v8312 = vmul.f32 %v8310, 1.442695
    %v8313 = vpow.pop %v8312
    %v8314 = vmul.f32 %v8311, 1.442695
    %v8315 = vpow.pop %v8314
    %v8316 = vsel %vm495, %v8313, 0.0
    %8317 = vadd.xlane.f32.xlu0 %v8316
    %v8318 = vpop.xlane.xlu0 %8317
    %v8319 = vsel %vm495, %v8315, 0.0
    %8320 = vadd.xlane.f32.xlu0 %v8319
    %v8321 = vpop.xlane.xlu0 %8320
    %v8322 = vrcp.pop %v8318
    %v8323 = vrcp.pop %v8321
    %v8324 = vmul.f32 %v8313, %v8322
    %v8325 = vmul.f32 %v8315, %v8323
    %8326 = vrot.lane.b32.xlu0 %v7709, 80
    %v8327 = vpop.permute.xlu0 %8326
    %v8330 = vsel %vm495, %v8324, 0
    %8332 = vmatprep.subr.mxu0 0.0
    %8333 = vmatpush1.msra.mxu0 %v8327
    %8334 = vmatprep.subr.mxu0 0.0
    %8335 = vmatpush1.msra.mxu0 0.0
    %8336 = vmatprep.subr.mxu0 0.0
    %8337 = vmatpush1.msra.mxu0 0.0
    %8338 = vmatprep.subr.mxu0 0.0
    %8339 = vmatpush1.msra.mxu0 0.0
    %8340 = vmatprep.subr.mxu0 0.0
    %8341 = vmatpush1.msra.mxu0 0.0
    %8342 = vmatprep.subr.mxu0 0.0
    %8343 = vmatpush1.msra.mxu0 0.0
    %8344 = vmatprep.subr.mxu0 0.0
    %8345 = vmatpush1.msra.mxu0 0.0
    %8346 = vmatprep.subr.mxu0 0.0
    %8347 = vmatpush1.msra.mxu0 0.0
    %8348 = vmatprep.subr.mxu0 0.0
    %8349 = vmatpush1.msra.mxu0 0.0
    %8350 = vmatprep.subr.mxu0 0.0
    %8351 = vmatpush1.msra.mxu0 0.0
    %8352 = vmatprep.subr.mxu0 0.0
    %8353 = vmatpush1.msra.mxu0 0.0
    %8354 = vmatprep.subr.mxu0 0.0
    %8355 = vmatpush1.msra.mxu0 0.0
    %8356 = vmatprep.subr.mxu0 0.0
    %8357 = vmatpush1.msra.mxu0 0.0
    %8358 = vmatprep.subr.mxu0 0.0
    %8359 = vmatpush1.msra.mxu0 0.0
    %8360 = vmatprep.subr.mxu0 0.0
    %8361 = vmatpush1.msra.mxu0 0.0
    %8362 = vmatprep.subr.mxu0 0.0
    %8363 = vmatpush1.msra.mxu0 0.0
    %8364 = vmatprep.subr.mxu0 0.0
    %8365 = vmatpush1.msra.mxu0 0.0
    %8366 = vmatprep.subr.mxu0 0.0
    %8367 = vmatpush1.msra.mxu0 0.0
    %8368 = vmatprep.subr.mxu0 0.0
    %8369 = vmatpush1.msra.mxu0 0.0
    %8370 = vmatprep.subr.mxu0 0.0
    %8371 = vmatpush1.msra.mxu0 0.0
    %8372 = vmatprep.subr.mxu0 0.0
    %8373 = vmatpush1.msra.mxu0 0.0
    %8374 = vmatprep.subr.mxu0 0.0
    %8375 = vmatpush1.msra.mxu0 0.0
    %8376 = vmatprep.subr.mxu0 0.0
    %8377 = vmatpush1.msra.mxu0 0.0
    %8378 = vmatprep.subr.mxu0 0.0
    %8379 = vmatpush1.msra.mxu0 0.0
    %8380 = vmatprep.subr.mxu0 0.0
    %8381 = vmatpush1.msra.mxu0 0.0
    %8382 = vmatprep.subr.mxu0 0.0
    %8383 = vmatpush1.msra.mxu0 0.0
    %8384 = vmatprep.subr.mxu0 0.0
    %8385 = vmatpush1.msra.mxu0 0.0
    %8386 = vmatprep.subr.mxu0 0.0
    %8387 = vmatpush1.msra.mxu0 0.0
    %8388 = vmatprep.subr.mxu0 0.0
    %8389 = vmatpush1.msra.mxu0 0.0
    %8390 = vmatprep.subr.mxu0 0.0
    %8391 = vmatpush1.msra.mxu0 0.0
    %8392 = vmatprep.subr.mxu0 0.0
    %8393 = vmatpush1.msra.mxu0 0.0
    %8394 = vmatprep.subr.mxu0 0.0
    %8395 = vmatpush1.msra.mxu0 0.0
    %8396 = vmatprep.mubr.f32.mxu0 0.0
    %8397 = vmatmul.mubr.f32.gmra.mrb[0].mxu0 %v8330
    %v8398 = vpop.f32.mrb[0].mxu0
    %v8399 = vadd.f32 0.0, %v8398
    %v8400 = vpop.f32.mrb[0].mxu0
    %8401 = vdwg.mxu0
    %8402 = vrot.lane.b32.xlu0 %v7714, 80
    %v8403 = vpop.permute.xlu0 %8402
    %v8406 = vsel %vm495, %v8325, 0
    %8408 = vmatprep.subr.mxu0 0.0
    %8409 = vmatpush1.msra.mxu0 %v8403
    %8410 = vmatprep.subr.mxu0 0.0
    %8411 = vmatpush1.msra.mxu0 0.0
    %8412 = vmatprep.subr.mxu0 0.0
    %8413 = vmatpush1.msra.mxu0 0.0
    %8414 = vmatprep.subr.mxu0 0.0
    %8415 = vmatpush1.msra.mxu0 0.0
    %8416 = vmatprep.subr.mxu0 0.0
    %8417 = vmatpush1.msra.mxu0 0.0
    %8418 = vmatprep.subr.mxu0 0.0
    %8419 = vmatpush1.msra.mxu0 0.0
    %8420 = vmatprep.subr.mxu0 0.0
    %8421 = vmatpush1.msra.mxu0 0.0
    %8422 = vmatprep.subr.mxu0 0.0
    %8423 = vmatpush1.msra.mxu0 0.0
    %8424 = vmatprep.subr.mxu0 0.0
    %8425 = vmatpush1.msra.mxu0 0.0
    %8426 = vmatprep.subr.mxu0 0.0
    %8427 = vmatpush1.msra.mxu0 0.0
    %8428 = vmatprep.subr.mxu0 0.0
    %8429 = vmatpush1.msra.mxu0 0.0
    %8430 = vmatprep.subr.mxu0 0.0
    %8431 = vmatpush1.msra.mxu0 0.0
    %8432 = vmatprep.subr.mxu0 0.0
    %8433 = vmatpush1.msra.mxu0 0.0
    %8434 = vmatprep.subr.mxu0 0.0
    %8435 = vmatpush1.msra.mxu0 0.0
    %8436 = vmatprep.subr.mxu0 0.0
    %8437 = vmatpush1.msra.mxu0 0.0
    %8438 = vmatprep.subr.mxu0 0.0
    %8439 = vmatpush1.msra.mxu0 0.0
    %8440 = vmatprep.subr.mxu0 0.0
    %8441 = vmatpush1.msra.mxu0 0.0
    %8442 = vmatprep.subr.mxu0 0.0
    %8443 = vmatpush1.msra.mxu0 0.0
    %8444 = vmatprep.subr.mxu0 0.0
    %8445 = vmatpush1.msra.mxu0 0.0
    %8446 = vmatprep.subr.mxu0 0.0
    %8447 = vmatpush1.msra.mxu0 0.0
    %8448 = vmatprep.subr.mxu0 0.0
    %8449 = vmatpush1.msra.mxu0 0.0
    %8450 = vmatprep.subr.mxu0 0.0
    %8451 = vmatpush1.msra.mxu0 0.0
    %8452 = vmatprep.subr.mxu0 0.0
    %8453 = vmatpush1.msra.mxu0 0.0
    %8454 = vmatprep.subr.mxu0 0.0
    %8455 = vmatpush1.msra.mxu0 0.0
    %8456 = vmatprep.subr.mxu0 0.0
    %8457 = vmatpush1.msra.mxu0 0.0
    %8458 = vmatprep.subr.mxu0 0.0
    %8459 = vmatpush1.msra.mxu0 0.0
    %8460 = vmatprep.subr.mxu0 0.0
    %8461 = vmatpush1.msra.mxu0 0.0
    %8462 = vmatprep.subr.mxu0 0.0
    %8463 = vmatpush1.msra.mxu0 0.0
    %8464 = vmatprep.subr.mxu0 0.0
    %8465 = vmatpush1.msra.mxu0 0.0
    %8466 = vmatprep.subr.mxu0 0.0
    %8467 = vmatpush1.msra.mxu0 0.0
    %8468 = vmatprep.subr.mxu0 0.0
    %8469 = vmatpush1.msra.mxu0 0.0
    %8470 = vmatprep.subr.mxu0 0.0
    %8471 = vmatpush1.msra.mxu0 0.0
    %8472 = vmatprep.mubr.f32.mxu0 0.0
    %8473 = vmatmul.mubr.f32.gmra.mrb[0].mxu0 %v8406
    %v8474 = vpop.f32.mrb[0].mxu0
    %v8475 = vadd.f32 0.0, %v8474
    %v8476 = vpop.f32.mrb[0].mxu0
    %8477 = vdwg.mxu0
    %v8479 = vsel %vm339, %v8399, 0
    %v8482 = vsel %vm339, %v8475, 0
    %8484 = vmatprep.subr.mxu0 0.0
    %8485 = vmatpush1.msra.mxu0 %v7720
    %8486 = vmatprep.subr.mxu0 0.0
    %8487 = vmatpush1.msra.mxu0 %v7721
    %8488 = vmatprep.subr.mxu0 0.0
    %8489 = vmatpush1.msra.mxu0 0.0
    %8490 = vmatprep.subr.mxu0 0.0
    %8491 = vmatpush1.msra.mxu0 0.0
    %8492 = vmatprep.subr.mxu0 0.0
    %8493 = vmatpush1.msra.mxu0 0.0
    %8494 = vmatprep.subr.mxu0 0.0
    %8495 = vmatpush1.msra.mxu0 0.0
    %8496 = vmatprep.subr.mxu0 0.0
    %8497 = vmatpush1.msra.mxu0 0.0
    %8498 = vmatprep.subr.mxu0 0.0
    %8499 = vmatpush1.msra.mxu0 0.0
    %8500 = vmatprep.subr.mxu0 0.0
    %8501 = vmatpush1.msra.mxu0 0.0
    %8502 = vmatprep.subr.mxu0 0.0
    %8503 = vmatpush1.msra.mxu0 0.0
    %8504 = vmatprep.subr.mxu0 0.0
    %8505 = vmatpush1.msra.mxu0 0.0
    %8506 = vmatprep.subr.mxu0 0.0
    %8507 = vmatpush1.msra.mxu0 0.0
    %8508 = vmatprep.subr.mxu0 0.0
    %8509 = vmatpush1.msra.mxu0 0.0
    %8510 = vmatprep.subr.mxu0 0.0
    %8511 = vmatpush1.msra.mxu0 0.0
    %8512 = vmatprep.subr.mxu0 0.0
    %8513 = vmatpush1.msra.mxu0 0.0
    %8514 = vmatprep.subr.mxu0 0.0
    %8515 = vmatpush1.msra.mxu0 0.0
    %8516 = vmatprep.subr.mxu0 0.0
    %8517 = vmatpush1.msra.mxu0 0.0
    %8518 = vmatprep.subr.mxu0 0.0
    %8519 = vmatpush1.msra.mxu0 0.0
    %8520 = vmatprep.subr.mxu0 0.0
    %8521 = vmatpush1.msra.mxu0 0.0
    %8522 = vmatprep.subr.mxu0 0.0
    %8523 = vmatpush1.msra.mxu0 0.0
    %8524 = vmatprep.subr.mxu0 0.0
    %8525 = vmatpush1.msra.mxu0 0.0
    %8526 = vmatprep.subr.mxu0 0.0
    %8527 = vmatpush1.msra.mxu0 0.0
    %8528 = vmatprep.subr.mxu0 0.0
    %8529 = vmatpush1.msra.mxu0 0.0
    %8530 = vmatprep.subr.mxu0 0.0
    %8531 = vmatpush1.msra.mxu0 0.0
    %8532 = vmatprep.subr.mxu0 0.0
    %8533 = vmatpush1.msra.mxu0 0.0
    %8534 = vmatprep.subr.mxu0 0.0
    %8535 = vmatpush1.msra.mxu0 0.0
    %8536 = vmatprep.subr.mxu0 0.0
    %8537 = vmatpush1.msra.mxu0 0.0
    %8538 = vmatprep.subr.mxu0 0.0
    %8539 = vmatpush1.msra.mxu0 0.0
    %8540 = vmatprep.subr.mxu0 0.0
    %8541 = vmatpush1.msra.mxu0 0.0
    %8542 = vmatprep.subr.mxu0 0.0
    %8543 = vmatpush1.msra.mxu0 0.0
    %8544 = vmatprep.subr.mxu0 0.0
    %8545 = vmatpush1.msra.mxu0 0.0
    %8546 = vmatprep.subr.mxu0 0.0
    %8547 = vmatpush1.msra.mxu0 0.0
    %8548 = vmatprep.mubr.f32.mxu0 0.0
    %8549 = vmatmul.mubr.f32.gmra.mrb[0].mxu0 %v8479
    %v8550 = vpop.f32.mrb[0].mxu0
    %v8551 = vadd.f32 0.0, %v8550
    %v8552 = vpop.f32.mrb[0].mxu0
    %8553 = vmatprep.mubr.f32.mxu0 0.0
    %8554 = vmatmul.mubr.f32.gmra.mrb[0].mxu0 %v8482
    %v8555 = vpop.f32.mrb[0].mxu0
    %v8556 = vadd.f32 0.0, %v8555
    %v8557 = vpop.f32.mrb[0].mxu0
    %8558 = vdwg.mxu0
    %v8559 = vadd.f32 %v8142, %v8551
    %v8560 = vadd.f32 %v8143, %v8556
    %v8561 = vadd.f32 %v7533, %v8559
    %v8562 = vadd.f32 %v7534, %v8560
    %v8563 = vsel %vm242, %v8561, 0.0
    %8564 = vadd.xlane.f32.xlu0 %v8563
    %v8565 = vpop.xlane.xlu0 %8564
    %v8566 = vsel %vm242, %v8562, 0.0
    %8567 = vadd.xlane.f32.xlu0 %v8566
    %v8568 = vpop.xlane.xlu0 %8567
    %v8569 = vmul.f32 %v8565, %v1178
    %v8570 = vmul.f32 %v8568, %v1178
    %v8571 = vsub.f32 %v8561, %v8569
    %v8572 = vsub.f32 %v8562, %v8570
    %v8573 = vmul.f32 %v8571, %v8571
    %v8574 = vmul.f32 %v8572, %v8572
    %v8575 = vsel %vm242, %v8573, 0.0
    %8576 = vadd.xlane.f32.xlu0 %v8575
    %v8577 = vpop.xlane.xlu0 %8576
    %v8578 = vsel %vm242, %v8574, 0.0
    %8579 = vadd.xlane.f32.xlu0 %v8578
    %v8580 = vpop.xlane.xlu0 %8579
    %v8581 = vmul.f32 %v8577, %v1178
    %v8582 = vmul.f32 %v8580, %v1178
    %v8583 = vadd.f32 %v8581, 1e-05
    %v8584 = vadd.f32 %v8582, 1e-05
    %v8585 = vrsqrt.pop %v8583
    %v8586 = vrsqrt.pop %v8584
    %v8587 = vmul.f32 %v8571, %v8585
    %v8588 = vmul.f32 %v8572, %v8586
    %v8589 = vmul.f32 %v8587, %v7523
    %v8590 = vmul.f32 %v8588, %v7523
    %v8591 = vadd.f32 %v8589, %v7531
    %v8592 = vadd.f32 %v8590, %v7531
    %s8593 = scalar_lea.vmem %s71, 32
    %v8594 = vld [vmem:[%s8593] sm:$0xff]
    %v8595 = vld [vmem:[%s8593 + $0x8] sm:$0xff]
    %v8596 = vld [vmem:[%s8593 + $0x10] sm:$0xff]
    %v8597 = vld [vmem:[%s8593 + $0x18] sm:$0xff]
    %s8598 = scalar_lea.vmem %s73, 1
    %v8599 = vld [vmem:[%s8598] sm:$0x1]
    %v8601 = vlaneseq
    %v8602 = vshrl.u32 %v8601, 7
    %v8603 = vsub.s32 0, %v8602
    %v8604 = vrot.slane %v8599, %v8603
    %v8607 = vsel %vm242, %v8591, 0
    %v8610 = vsel %vm242, %v8592, 0
    %8612 = vmatprep.subr.mxu0 0.0
    %8613 = vmatpush1.msra.mxu0 %v8594
    %8614 = vmatprep.subr.mxu0 0.0
    %8615 = vmatpush1.msra.mxu0 %v8595
    %8616 = vmatprep.subr.mxu0 0.0
    %8617 = vmatpush1.msra.mxu0 %v8596
    %8618 = vmatprep.subr.mxu0 0.0
    %8619 = vmatpush1.msra.mxu0 %v8597
    %8620 = vmatprep.subr.mxu0 0.0
    %8621 = vmatpush1.msra.mxu0 0.0
    %8622 = vmatprep.subr.mxu0 0.0
    %8623 = vmatpush1.msra.mxu0 0.0
    %8624 = vmatprep.subr.mxu0 0.0
    %8625 = vmatpush1.msra.mxu0 0.0
    %8626 = vmatprep.subr.mxu0 0.0
    %8627 = vmatpush1.msra.mxu0 0.0
    %8628 = vmatprep.subr.mxu0 0.0
    %8629 = vmatpush1.msra.mxu0 0.0
    %8630 = vmatprep.subr.mxu0 0.0
    %8631 = vmatpush1.msra.mxu0 0.0
    %8632 = vmatprep.subr.mxu0 0.0
    %8633 = vmatpush1.msra.mxu0 0.0
    %8634 = vmatprep.subr.mxu0 0.0
    %8635 = vmatpush1.msra.mxu0 0.0
    %8636 = vmatprep.subr.mxu0 0.0
    %8637 = vmatpush1.msra.mxu0 0.0
    %8638 = vmatprep.subr.mxu0 0.0
    %8639 = vmatpush1.msra.mxu0 0.0
    %8640 = vmatprep.subr.mxu0 0.0
    %8641 = vmatpush1.msra.mxu0 0.0
    %8642 = vmatprep.subr.mxu0 0.0
    %8643 = vmatpush1.msra.mxu0 0.0
    %8644 = vmatprep.subr.mxu0 0.0
    %8645 = vmatpush1.msra.mxu0 0.0
    %8646 = vmatprep.subr.mxu0 0.0
    %8647 = vmatpush1.msra.mxu0 0.0
    %8648 = vmatprep.subr.mxu0 0.0
    %8649 = vmatpush1.msra.mxu0 0.0
    %8650 = vmatprep.subr.mxu0 0.0
    %8651 = vmatpush1.msra.mxu0 0.0
    %8652 = vmatprep.subr.mxu0 0.0
    %8653 = vmatpush1.msra.mxu0 0.0
    %8654 = vmatprep.subr.mxu0 0.0
    %8655 = vmatpush1.msra.mxu0 0.0
    %8656 = vmatprep.subr.mxu0 0.0
    %8657 = vmatpush1.msra.mxu0 0.0
    %8658 = vmatprep.subr.mxu0 0.0
    %8659 = vmatpush1.msra.mxu0 0.0
    %8660 = vmatprep.subr.mxu0 0.0
    %8661 = vmatpush1.msra.mxu0 0.0
    %8662 = vmatprep.subr.mxu0 0.0
    %8663 = vmatpush1.msra.mxu0 0.0
    %8664 = vmatprep.subr.mxu0 0.0
    %8665 = vmatpush1.msra.mxu0 0.0
    %8666 = vmatprep.subr.mxu0 0.0
    %8667 = vmatpush1.msra.mxu0 0.0
    %8668 = vmatprep.subr.mxu0 0.0
    %8669 = vmatpush1.msra.mxu0 0.0
    %8670 = vmatprep.subr.mxu0 0.0
    %8671 = vmatpush1.msra.mxu0 0.0
    %8672 = vmatprep.subr.mxu0 0.0
    %8673 = vmatpush1.msra.mxu0 0.0
    %8674 = vmatprep.subr.mxu0 0.0
    %8675 = vmatpush1.msra.mxu0 0.0
    %8676 = vmatprep.mubr.f32.mxu0 0.0
    %8677 = vmatmul.mubr.f32.gmra.mrb[0].mxu0 %v8607
    %v8678 = vpop.f32.mrb[0].mxu0
    %v8679 = vadd.f32 %v8604, %v8678
    %v8680 = vpop.f32.mrb[0].mxu0
    %8681 = vmatprep.mubr.f32.mxu0 0.0
    %8682 = vmatmul.mubr.f32.gmra.mrb[0].mxu0 %v8610
    %v8683 = vpop.f32.mrb[0].mxu0
    %v8684 = vadd.f32 %v8604, %v8683
    %v8685 = vpop.f32.mrb[0].mxu0
    %8686 = vdwg.mxu0
    %v8687 = vmax.f32 %v8679, 0.0
    %v8688 = vmax.f32 %v8684, 0.0
    %s8689 = scalar_lea.vmem %s75, 64
    %v8690 = vld [vmem:[%s8689] sm:$0xff]
    %v8691 = vld [vmem:[%s8689 + $0x8] sm:$0xff]
    %v8692 = vld [vmem:[%s8689 + $0x10] sm:$0xff]
    %v8693 = vld [vmem:[%s8689 + $0x18] sm:$0xff]
    %v8694 = vld [vmem:[%s8689 + $0x20] sm:$0xff]
    %v8695 = vld [vmem:[%s8689 + $0x28] sm:$0xff]
    %v8696 = vld [vmem:[%s8689 + $0x30] sm:$0xff]
    %v8697 = vld [vmem:[%s8689 + $0x38] sm:$0xff]
    %s8698 = scalar_lea.vmem %s77, 1
    %v8699 = vld [vmem:[%s8698] sm:$0x1]
    %v8701 = vlaneseq
    %v8702 = vshrl.u32 %v8701, 7
    %v8703 = vsub.s32 0, %v8702
    %v8704 = vrot.slane %v8699, %v8703
    %v8707 = vsel %vm1324, %v8687, 0
    %v8710 = vsel %vm1324, %v8688, 0
    %8712 = vmatprep.subr.mxu0 0.0
    %8713 = vmatpush1.msra.mxu0 %v8690
    %8714 = vmatprep.subr.mxu0 0.0
    %8715 = vmatpush1.msra.mxu0 %v8691
    %8716 = vmatprep.subr.mxu0 0.0
    %8717 = vmatpush1.msra.mxu0 %v8692
    %8718 = vmatprep.subr.mxu0 0.0
    %8719 = vmatpush1.msra.mxu0 %v8693
    %8720 = vmatprep.subr.mxu0 0.0
    %8721 = vmatpush1.msra.mxu0 %v8694
    %8722 = vmatprep.subr.mxu0 0.0
    %8723 = vmatpush1.msra.mxu0 %v8695
    %8724 = vmatprep.subr.mxu0 0.0
    %8725 = vmatpush1.msra.mxu0 %v8696
    %8726 = vmatprep.subr.mxu0 0.0
    %8727 = vmatpush1.msra.mxu0 %v8697
    %8728 = vmatprep.subr.mxu0 0.0
    %8729 = vmatpush1.msra.mxu0 0.0
    %8730 = vmatprep.subr.mxu0 0.0
    %8731 = vmatpush1.msra.mxu0 0.0
    %8732 = vmatprep.subr.mxu0 0.0
    %8733 = vmatpush1.msra.mxu0 0.0
    %8734 = vmatprep.subr.mxu0 0.0
    %8735 = vmatpush1.msra.mxu0 0.0
    %8736 = vmatprep.subr.mxu0 0.0
    %8737 = vmatpush1.msra.mxu0 0.0
    %8738 = vmatprep.subr.mxu0 0.0
    %8739 = vmatpush1.msra.mxu0 0.0
    %8740 = vmatprep.subr.mxu0 0.0
    %8741 = vmatpush1.msra.mxu0 0.0
    %8742 = vmatprep.subr.mxu0 0.0
    %8743 = vmatpush1.msra.mxu0 0.0
    %8744 = vmatprep.subr.mxu0 0.0
    %8745 = vmatpush1.msra.mxu0 0.0
    %8746 = vmatprep.subr.mxu0 0.0
    %8747 = vmatpush1.msra.mxu0 0.0
    %8748 = vmatprep.subr.mxu0 0.0
    %8749 = vmatpush1.msra.mxu0 0.0
    %8750 = vmatprep.subr.mxu0 0.0
    %8751 = vmatpush1.msra.mxu0 0.0
    %8752 = vmatprep.subr.mxu0 0.0
    %8753 = vmatpush1.msra.mxu0 0.0
    %8754 = vmatprep.subr.mxu0 0.0
    %8755 = vmatpush1.msra.mxu0 0.0
    %8756 = vmatprep.subr.mxu0 0.0
    %8757 = vmatpush1.msra.mxu0 0.0
    %8758 = vmatprep.subr.mxu0 0.0
    %8759 = vmatpush1.msra.mxu0 0.0
    %8760 = vmatprep.subr.mxu0 0.0
    %8761 = vmatpush1.msra.mxu0 0.0
    %8762 = vmatprep.subr.mxu0 0.0
    %8763 = vmatpush1.msra.mxu0 0.0
    %8764 = vmatprep.subr.mxu0 0.0
    %8765 = vmatpush1.msra.mxu0 0.0
    %8766 = vmatprep.subr.mxu0 0.0
    %8767 = vmatpush1.msra.mxu0 0.0
    %8768 = vmatprep.subr.mxu0 0.0
    %8769 = vmatpush1.msra.mxu0 0.0
    %8770 = vmatprep.subr.mxu0 0.0
    %8771 = vmatpush1.msra.mxu0 0.0
    %8772 = vmatprep.subr.mxu0 0.0
    %8773 = vmatpush1.msra.mxu0 0.0
    %8774 = vmatprep.subr.mxu0 0.0
    %8775 = vmatpush1.msra.mxu0 0.0
    %8776 = vmatprep.mubr.f32.mxu0 0.0
    %8777 = vmatmul.mubr.f32.gmra.mrb[0].mxu0 %v8707
    %v8778 = vpop.f32.mrb[0].mxu0
    %v8779 = vadd.f32 %v8704, %v8778
    %v8780 = vpop.f32.mrb[0].mxu0
    %8781 = vmatprep.mubr.f32.mxu0 0.0
    %8782 = vmatmul.mubr.f32.gmra.mrb[0].mxu0 %v8710
    %v8783 = vpop.f32.mrb[0].mxu0
    %v8784 = vadd.f32 %v8704, %v8783
    %v8785 = vpop.f32.mrb[0].mxu0
    %8786 = vdwg.mxu0
    %v8787 = vadd.f32 %v8591, %v8779
    %v8788 = vadd.f32 %v8592, %v8784
    %v8789 = vsel %vm242, %v8787, 0.0
    %8790 = vadd.xlane.f32.xlu0 %v8789
    %v8791 = vpop.xlane.xlu0 %8790
    %v8792 = vsel %vm242, %v8788, 0.0
    %8793 = vadd.xlane.f32.xlu0 %v8792
    %v8794 = vpop.xlane.xlu0 %8793
    %v8795 = vmul.f32 %v8791, %v1178
    %v8796 = vmul.f32 %v8794, %v1178
    %v8797 = vsub.f32 %v8787, %v8795
    %v8798 = vsub.f32 %v8788, %v8796
    %v8799 = vmul.f32 %v8797, %v8797
    %v8800 = vmul.f32 %v8798, %v8798
    %v8801 = vsel %vm242, %v8799, 0.0
    %8802 = vadd.xlane.f32.xlu0 %v8801
    %v8803 = vpop.xlane.xlu0 %8802
    %v8804 = vsel %vm242, %v8800, 0.0
    %8805 = vadd.xlane.f32.xlu0 %v8804
    %v8806 = vpop.xlane.xlu0 %8805
    %v8807 = vmul.f32 %v8803, %v1178
    %v8808 = vmul.f32 %v8806, %v1178
    %v8809 = vadd.f32 %v8807, 1e-05
    %v8810 = vadd.f32 %v8808, 1e-05
    %v8811 = vrsqrt.pop %v8809
    %v8812 = vrsqrt.pop %v8810
    %v8813 = vmul.f32 %v8797, %v8811
    %v8814 = vmul.f32 %v8798, %v8812
    %v8815 = vmul.f32 %v8813, %v7523
    %v8816 = vmul.f32 %v8814, %v7523
    %v8817 = vadd.f32 %v8815, %v7531
    %v8818 = vadd.f32 %v8816, %v7531
    %v8819 = vld [vmem:[%s79] sm:$0xff]
    %v8820 = vld [vmem:[%s79 + $0x8] sm:$0xff]
    %v8821 = vld [vmem:[%s79 + $0x10] sm:$0xff]
    %v8822 = vld [vmem:[%s79 + $0x18] sm:$0xff]
    %v8823 = vld [vmem:[%s81] sm:$0x1]
    %v8825 = vlaneseq
    %v8826 = vshrl.u32 %v8825, 7
    %v8827 = vsub.s32 0, %v8826
    %v8828 = vrot.slane %v8823, %v8827
    %v8831 = vsel %vm242, %v8817, 0
    %v8834 = vsel %vm242, %v8818, 0
    %8836 = vmatprep.subr.mxu0 0.0
    %8837 = vmatpush1.msra.mxu0 %v8819
    %8838 = vmatprep.subr.mxu0 0.0
    %8839 = vmatpush1.msra.mxu0 %v8820
    %8840 = vmatprep.subr.mxu0 0.0
    %8841 = vmatpush1.msra.mxu0 %v8821
    %8842 = vmatprep.subr.mxu0 0.0
    %8843 = vmatpush1.msra.mxu0 %v8822
    %8844 = vmatprep.subr.mxu0 0.0
    %8845 = vmatpush1.msra.mxu0 0.0
    %8846 = vmatprep.subr.mxu0 0.0
    %8847 = vmatpush1.msra.mxu0 0.0
    %8848 = vmatprep.subr.mxu0 0.0
    %8849 = vmatpush1.msra.mxu0 0.0
    %8850 = vmatprep.subr.mxu0 0.0
    %8851 = vmatpush1.msra.mxu0 0.0
    %8852 = vmatprep.subr.mxu0 0.0
    %8853 = vmatpush1.msra.mxu0 0.0
    %8854 = vmatprep.subr.mxu0 0.0
    %8855 = vmatpush1.msra.mxu0 0.0
    %8856 = vmatprep.subr.mxu0 0.0
    %8857 = vmatpush1.msra.mxu0 0.0
    %8858 = vmatprep.subr.mxu0 0.0
    %8859 = vmatpush1.msra.mxu0 0.0
    %8860 = vmatprep.subr.mxu0 0.0
    %8861 = vmatpush1.msra.mxu0 0.0
    %8862 = vmatprep.subr.mxu0 0.0
    %8863 = vmatpush1.msra.mxu0 0.0
    %8864 = vmatprep.subr.mxu0 0.0
    %8865 = vmatpush1.msra.mxu0 0.0
    %8866 = vmatprep.subr.mxu0 0.0
    %8867 = vmatpush1.msra.mxu0 0.0
    %8868 = vmatprep.subr.mxu0 0.0
    %8869 = vmatpush1.msra.mxu0 0.0
    %8870 = vmatprep.subr.mxu0 0.0
    %8871 = vmatpush1.msra.mxu0 0.0
    %8872 = vmatprep.subr.mxu0 0.0
    %8873 = vmatpush1.msra.mxu0 0.0
    %8874 = vmatprep.subr.mxu0 0.0
    %8875 = vmatpush1.msra.mxu0 0.0
    %8876 = vmatprep.subr.mxu0 0.0
    %8877 = vmatpush1.msra.mxu0 0.0
    %8878 = vmatprep.subr.mxu0 0.0
    %8879 = vmatpush1.msra.mxu0 0.0
    %8880 = vmatprep.subr.mxu0 0.0
    %8881 = vmatpush1.msra.mxu0 0.0
    %8882 = vmatprep.subr.mxu0 0.0
    %8883 = vmatpush1.msra.mxu0 0.0
    %8884 = vmatprep.subr.mxu0 0.0
    %8885 = vmatpush1.msra.mxu0 0.0
    %8886 = vmatprep.subr.mxu0 0.0
    %8887 = vmatpush1.msra.mxu0 0.0
    %8888 = vmatprep.subr.mxu0 0.0
    %8889 = vmatpush1.msra.mxu0 0.0
    %8890 = vmatprep.subr.mxu0 0.0
    %8891 = vmatpush1.msra.mxu0 0.0
    %8892 = vmatprep.subr.mxu0 0.0
    %8893 = vmatpush1.msra.mxu0 0.0
    %8894 = vmatprep.subr.mxu0 0.0
    %8895 = vmatpush1.msra.mxu0 0.0
    %8896 = vmatprep.subr.mxu0 0.0
    %8897 = vmatpush1.msra.mxu0 0.0
    %8898 = vmatprep.subr.mxu0 0.0
    %8899 = vmatpush1.msra.mxu0 0.0
    %8900 = vmatprep.mubr.f32.mxu0 0.0
    %8901 = vmatmul.mubr.f32.gmra.mrb[0].mxu0 %v8831
    %v8902 = vpop.f32.mrb[0].mxu0
    %v8903 = vadd.f32 %v8828, %v8902
    %v8904 = vpop.f32.mrb[0].mxu0
    %8905 = vmatprep.mubr.f32.mxu0 0.0
    %8906 = vmatmul.mubr.f32.gmra.mrb[0].mxu0 %v8834
    %v8907 = vpop.f32.mrb[0].mxu0
    %v8908 = vadd.f32 %v8828, %v8907
    %v8909 = vpop.f32.mrb[0].mxu0
    %8910 = vdwg.mxu0
    %v8911 = vld [vmem:[%s83] sm:$0xff]
    %v8912 = vld [vmem:[%s83 + $0x8] sm:$0xff]
    %v8913 = vld [vmem:[%s83 + $0x10] sm:$0xff]
    %v8914 = vld [vmem:[%s83 + $0x18] sm:$0xff]
    %v8915 = vld [vmem:[%s85] sm:$0x1]
    %v8917 = vlaneseq
    %v8918 = vshrl.u32 %v8917, 7
    %v8919 = vsub.s32 0, %v8918
    %v8920 = vrot.slane %v8915, %v8919
    %v8922 = vrot.slane %v2650, 7
    %v8923 = vrot.slane %v2651, 6
    %v8924 = vsel %vm2887, %v8923, %v8922
    %v8925 = vsel %vm242, %v8924, 0
    %8927 = vmatprep.subr.mxu0 0.0
    %8928 = vmatpush1.msra.mxu0 %v8911
    %8929 = vmatprep.subr.mxu0 0.0
    %8930 = vmatpush1.msra.mxu0 %v8912
    %8931 = vmatprep.subr.mxu0 0.0
    %8932 = vmatpush1.msra.mxu0 %v8913
    %8933 = vmatprep.subr.mxu0 0.0
    %8934 = vmatpush1.msra.mxu0 %v8914
    %8935 = vmatprep.subr.mxu0 0.0
    %8936 = vmatpush1.msra.mxu0 0.0
    %8937 = vmatprep.subr.mxu0 0.0
    %8938 = vmatpush1.msra.mxu0 0.0
    %8939 = vmatprep.subr.mxu0 0.0
    %8940 = vmatpush1.msra.mxu0 0.0
    %8941 = vmatprep.subr.mxu0 0.0
    %8942 = vmatpush1.msra.mxu0 0.0
    %8943 = vmatprep.subr.mxu0 0.0
    %8944 = vmatpush1.msra.mxu0 0.0
    %8945 = vmatprep.subr.mxu0 0.0
    %8946 = vmatpush1.msra.mxu0 0.0
    %8947 = vmatprep.subr.mxu0 0.0
    %8948 = vmatpush1.msra.mxu0 0.0
    %8949 = vmatprep.subr.mxu0 0.0
    %8950 = vmatpush1.msra.mxu0 0.0
    %8951 = vmatprep.subr.mxu0 0.0
    %8952 = vmatpush1.msra.mxu0 0.0
    %8953 = vmatprep.subr.mxu0 0.0
    %8954 = vmatpush1.msra.mxu0 0.0
    %8955 = vmatprep.subr.mxu0 0.0
    %8956 = vmatpush1.msra.mxu0 0.0
    %8957 = vmatprep.subr.mxu0 0.0
    %8958 = vmatpush1.msra.mxu0 0.0
    %8959 = vmatprep.subr.mxu0 0.0
    %8960 = vmatpush1.msra.mxu0 0.0
    %8961 = vmatprep.subr.mxu0 0.0
    %8962 = vmatpush1.msra.mxu0 0.0
    %8963 = vmatprep.subr.mxu0 0.0
    %8964 = vmatpush1.msra.mxu0 0.0
    %8965 = vmatprep.subr.mxu0 0.0
    %8966 = vmatpush1.msra.mxu0 0.0
    %8967 = vmatprep.subr.mxu0 0.0
    %8968 = vmatpush1.msra.mxu0 0.0
    %8969 = vmatprep.subr.mxu0 0.0
    %8970 = vmatpush1.msra.mxu0 0.0
    %8971 = vmatprep.subr.mxu0 0.0
    %8972 = vmatpush1.msra.mxu0 0.0
    %8973 = vmatprep.subr.mxu0 0.0
    %8974 = vmatpush1.msra.mxu0 0.0
    %8975 = vmatprep.subr.mxu0 0.0
    %8976 = vmatpush1.msra.mxu0 0.0
    %8977 = vmatprep.subr.mxu0 0.0
    %8978 = vmatpush1.msra.mxu0 0.0
    %8979 = vmatprep.subr.mxu0 0.0
    %8980 = vmatpush1.msra.mxu0 0.0
    %8981 = vmatprep.subr.mxu0 0.0
    %8982 = vmatpush1.msra.mxu0 0.0
    %8983 = vmatprep.subr.mxu0 0.0
    %8984 = vmatpush1.msra.mxu0 0.0
    %8985 = vmatprep.subr.mxu0 0.0
    %8986 = vmatpush1.msra.mxu0 0.0
    %8987 = vmatprep.subr.mxu0 0.0
    %8988 = vmatpush1.msra.mxu0 0.0
    %8989 = vmatprep.subr.mxu0 0.0
    %8990 = vmatpush1.msra.mxu0 0.0
    %8991 = vmatprep.mubr.f32.mxu0 0.0
    %8992 = vmatmul.mubr.f32.gmra.mrb[0].mxu0 %v8925
    %v8993 = vpop.f32.mrb[0].mxu0
    %v8994 = vadd.f32 %v8920, %v8993
    %v8995 = vpop.f32.mrb[0].mxu0
    %8996 = vdwg.mxu0
    %v8997 = vld [vmem:[%s87] sm:$0xff]
    %v8998 = vld [vmem:[%s87 + $0x8] sm:$0xff]
    %v8999 = vld [vmem:[%s87 + $0x10] sm:$0xff]
    %v9000 = vld [vmem:[%s87 + $0x18] sm:$0xff]
    %v9001 = vld [vmem:[%s87 + $0x20] sm:$0xff]
    %v9002 = vld [vmem:[%s87 + $0x28] sm:$0xff]
    %v9003 = vld [vmem:[%s87 + $0x30] sm:$0xff]
    %v9004 = vld [vmem:[%s87 + $0x38] sm:$0xff]
    %9005 = vmatprep.subr.mxu0 0.0
    %9006 = vmatpush1.msra.mxu0 %v8997
    %9007 = vmatprep.subr.mxu0 0.0
    %9008 = vmatpush1.msra.mxu0 %v8998
    %9009 = vmatprep.subr.mxu0 0.0
    %9010 = vmatpush1.msra.mxu0 %v8999
    %9011 = vmatprep.subr.mxu0 0.0
    %9012 = vmatpush1.msra.mxu0 %v9000
    %9013 = vmatprep.subr.mxu0 0.0
    %9014 = vmatpush1.msra.mxu0 0.0
    %9015 = vmatprep.subr.mxu0 0.0
    %9016 = vmatpush1.msra.mxu0 0.0
    %9017 = vmatprep.subr.mxu0 0.0
    %9018 = vmatpush1.msra.mxu0 0.0
    %9019 = vmatprep.subr.mxu0 0.0
    %9020 = vmatpush1.msra.mxu0 0.0
    %9021 = vmatprep.subr.mxu0 0.0
    %9022 = vmatpush1.msra.mxu0 0.0
    %9023 = vmatprep.subr.mxu0 0.0
    %9024 = vmatpush1.msra.mxu0 0.0
    %9025 = vmatprep.subr.mxu0 0.0
    %9026 = vmatpush1.msra.mxu0 0.0
    %9027 = vmatprep.subr.mxu0 0.0
    %9028 = vmatpush1.msra.mxu0 0.0
    %9029 = vmatprep.subr.mxu0 0.0
    %9030 = vmatpush1.msra.mxu0 0.0
    %9031 = vmatprep.subr.mxu0 0.0
    %9032 = vmatpush1.msra.mxu0 0.0
    %9033 = vmatprep.subr.mxu0 0.0
    %9034 = vmatpush1.msra.mxu0 0.0
    %9035 = vmatprep.subr.mxu0 0.0
    %9036 = vmatpush1.msra.mxu0 0.0
    %9037 = vmatprep.subr.mxu0 0.0
    %9038 = vmatpush1.msra.mxu0 0.0
    %9039 = vmatprep.subr.mxu0 0.0
    %9040 = vmatpush1.msra.mxu0 0.0
    %9041 = vmatprep.subr.mxu0 0.0
    %9042 = vmatpush1.msra.mxu0 0.0
    %9043 = vmatprep.subr.mxu0 0.0
    %9044 = vmatpush1.msra.mxu0 0.0
    %9045 = vmatprep.subr.mxu0 0.0
    %9046 = vmatpush1.msra.mxu0 0.0
    %9047 = vmatprep.subr.mxu0 0.0
    %9048 = vmatpush1.msra.mxu0 0.0
    %9049 = vmatprep.subr.mxu0 0.0
    %9050 = vmatpush1.msra.mxu0 0.0
    %9051 = vmatprep.subr.mxu0 0.0
    %9052 = vmatpush1.msra.mxu0 0.0
    %9053 = vmatprep.subr.mxu0 0.0
    %9054 = vmatpush1.msra.mxu0 0.0
    %9055 = vmatprep.subr.mxu0 0.0
    %9056 = vmatpush1.msra.mxu0 0.0
    %9057 = vmatprep.subr.mxu0 0.0
    %9058 = vmatpush1.msra.mxu0 0.0
    %9059 = vmatprep.subr.mxu0 0.0
    %9060 = vmatpush1.msra.mxu0 0.0
    %9061 = vmatprep.subr.mxu0 0.0
    %9062 = vmatpush1.msra.mxu0 0.0
    %9063 = vmatprep.subr.mxu0 0.0
    %9064 = vmatpush1.msra.mxu0 0.0
    %9065 = vmatprep.subr.mxu0 0.0
    %9066 = vmatpush1.msra.mxu0 0.0
    %9067 = vmatprep.subr.mxu0 0.0
    %9068 = vmatpush1.msra.mxu0 0.0
    %9069 = vmatprep.mubr.f32.mxu0 0.0
    %9070 = vmatmul.mubr.f32.gmra.mrb[0].mxu0 %v8925
    %v9071 = vpop.f32.mrb[0].mxu0
    %v9072 = vadd.f32 0.0, %v9071
    %v9073 = vpop.f32.mrb[0].mxu0
    %9074 = vdwg.mxu0
    %v9077 = vunpack.c.l.s4 1966171168
    %v9078 = vunpack.c.0.s8 %v9077
    %v9079 = vlaneseq
    %v9080 = vshrl.u32 %v9079, 7
    %v9081 = vsub.s32 %v9078, %v9080
    %v9082 = vrot.slane %v9072, %v9081
    %v9083 = vcombine.high %v9082, %v9082
    %v9085 = vunpack.c.l.s4 1966171168
    %v9086 = vunpack.c.0.s8 %v9085
    %v9087 = vlaneseq
    %v9088 = vshrl.u32 %v9087, 7
    %v9089 = vsub.s32 %v9086, %v9088
    %v9090 = vrot.slane %v9082, %v9089
    %v9092 = vunpack.c.l.s4 1966171168
    %v9093 = vunpack.c.0.s8 %v9092
    %v9094 = vlaneseq
    %v9095 = vshrl.u32 %v9094, 7
    %v9096 = vsub.s32 %v9093, %v9095
    %v9097 = vrot.slane %v9083, %v9096
    %v9098 = vlaneseq
    %v9099 = vshrl.u32 %v9098, 7
    %v9100 = vsub.s32 0, %v9099
    %v9101 = vrot.slane %v9090, %v9100
    %v9102 = vlaneseq
    %v9103 = vshrl.u32 %v9102, 7
    %v9104 = vsub.s32 0, %v9103
    %v9105 = vrot.slane %v9097, %v9104
    %9108 = vmatprep.subr.mxu0 0.0
    %9109 = vmatpush1.msra.mxu0 %v9001
    %9110 = vmatprep.subr.mxu0 0.0
    %9111 = vmatpush1.msra.mxu0 %v9002
    %9112 = vmatprep.subr.mxu0 0.0
    %9113 = vmatpush1.msra.mxu0 %v9003
    %9114 = vmatprep.subr.mxu0 0.0
    %9115 = vmatpush1.msra.mxu0 %v9004
    %9116 = vmatprep.subr.mxu0 0.0
    %9117 = vmatpush1.msra.mxu0 0.0
    %9118 = vmatprep.subr.mxu0 0.0
    %9119 = vmatpush1.msra.mxu0 0.0
    %9120 = vmatprep.subr.mxu0 0.0
    %9121 = vmatpush1.msra.mxu0 0.0
    %9122 = vmatprep.subr.mxu0 0.0
    %9123 = vmatpush1.msra.mxu0 0.0
    %9124 = vmatprep.subr.mxu0 0.0
    %9125 = vmatpush1.msra.mxu0 0.0
    %9126 = vmatprep.subr.mxu0 0.0
    %9127 = vmatpush1.msra.mxu0 0.0
    %9128 = vmatprep.subr.mxu0 0.0
    %9129 = vmatpush1.msra.mxu0 0.0
    %9130 = vmatprep.subr.mxu0 0.0
    %9131 = vmatpush1.msra.mxu0 0.0
    %9132 = vmatprep.subr.mxu0 0.0
    %9133 = vmatpush1.msra.mxu0 0.0
    %9134 = vmatprep.subr.mxu0 0.0
    %9135 = vmatpush1.msra.mxu0 0.0
    %9136 = vmatprep.subr.mxu0 0.0
    %9137 = vmatpush1.msra.mxu0 0.0
    %9138 = vmatprep.subr.mxu0 0.0
    %9139 = vmatpush1.msra.mxu0 0.0
    %9140 = vmatprep.subr.mxu0 0.0
    %9141 = vmatpush1.msra.mxu0 0.0
    %9142 = vmatprep.subr.mxu0 0.0
    %9143 = vmatpush1.msra.mxu0 0.0
    %9144 = vmatprep.subr.mxu0 0.0
    %9145 = vmatpush1.msra.mxu0 0.0
    %9146 = vmatprep.subr.mxu0 0.0
    %9147 = vmatpush1.msra.mxu0 0.0
    %9148 = vmatprep.subr.mxu0 0.0
    %9149 = vmatpush1.msra.mxu0 0.0
    %9150 = vmatprep.subr.mxu0 0.0
    %9151 = vmatpush1.msra.mxu0 0.0
    %9152 = vmatprep.subr.mxu0 0.0
    %9153 = vmatpush1.msra.mxu0 0.0
    %9154 = vmatprep.subr.mxu0 0.0
    %9155 = vmatpush1.msra.mxu0 0.0
    %9156 = vmatprep.subr.mxu0 0.0
    %9157 = vmatpush1.msra.mxu0 0.0
    %9158 = vmatprep.subr.mxu0 0.0
    %9159 = vmatpush1.msra.mxu0 0.0
    %9160 = vmatprep.subr.mxu0 0.0
    %9161 = vmatpush1.msra.mxu0 0.0
    %9162 = vmatprep.subr.mxu0 0.0
    %9163 = vmatpush1.msra.mxu0 0.0
    %9164 = vmatprep.subr.mxu0 0.0
    %9165 = vmatpush1.msra.mxu0 0.0
    %9166 = vmatprep.subr.mxu0 0.0
    %9167 = vmatpush1.msra.mxu0 0.0
    %9168 = vmatprep.subr.mxu0 0.0
    %9169 = vmatpush1.msra.mxu0 0.0
    %9170 = vmatprep.subr.mxu0 0.0
    %9171 = vmatpush1.msra.mxu0 0.0
    %9172 = vmatprep.mubr.f32.mxu0 0.0
    %9173 = vmatmul.mubr.f32.gmra.mrb[0].mxu0 %v8831
    %v9174 = vpop.f32.mrb[0].mxu0
    %v9175 = vadd.f32 %v9101, %v9174
    %v9176 = vpop.f32.mrb[0].mxu0
    %9177 = vmatprep.mubr.f32.mxu0 0.0
    %9178 = vmatmul.mubr.f32.gmra.mrb[0].mxu0 %v8834
    %v9179 = vpop.f32.mrb[0].mxu0
    %v9180 = vadd.f32 %v9105, %v9179
    %v9181 = vpop.f32.mrb[0].mxu0
    %9182 = vdwg.mxu0
    %v9183 = vld [vmem:[#allocation3] sm:$0x1]
    %v9185 = vlaneseq
    %v9186 = vshrl.u32 %v9185, 7
    %v9187 = vsub.s32 0, %v9186
    %v9188 = vrot.slane %v9183, %v9187
    %v9190 = vadd.f32 %v9175, %v9188
    %v9191 = vadd.f32 %v9180, %v9188
    %vm9192 = vcmp.gt.f32.partialorder %v9190, 0.0
    %vm9193 = vcmp.gt.f32.partialorder %v9191, 0.0
    %v9194 = vmul.f32 %v9190, 0.01
    %v9195 = vmul.f32 %v9191, 0.01
    %v9196 = vsel %vm9192, %v9190, %v9194
    %v9197 = vsel %vm9193, %v9191, %v9195
    %v9198 = vld [vmem:[%s91] sm:$0xff]
    %v9199 = vld [vmem:[%s91 + $0x8] sm:$0xff]
    %v9200 = vld [vmem:[%s91 + $0x10] sm:$0xff]
    %v9201 = vld [vmem:[%s91 + $0x18] sm:$0xff]
    %v9202 = vld [vmem:[#allocation5] sm:$0x1]
    %v9204 = vlaneseq
    %v9205 = vshrl.u32 %v9204, 7
    %v9206 = vsub.s32 0, %v9205
    %v9207 = vrot.slane %v9202, %v9206
    %v9210 = vsel %vm242, %v9196, 0
    %v9213 = vsel %vm242, %v9197, 0
    %9215 = vmatprep.subr.mxu0 0.0
    %9216 = vmatpush1.msra.mxu0 %v9198
    %9217 = vmatprep.subr.mxu0 0.0
    %9218 = vmatpush1.msra.mxu0 %v9199
    %9219 = vmatprep.subr.mxu0 0.0
    %9220 = vmatpush1.msra.mxu0 %v9200
    %9221 = vmatprep.subr.mxu0 0.0
    %9222 = vmatpush1.msra.mxu0 %v9201
    %9223 = vmatprep.subr.mxu0 0.0
    %9224 = vmatpush1.msra.mxu0 0.0
    %9225 = vmatprep.subr.mxu0 0.0
    %9226 = vmatpush1.msra.mxu0 0.0
    %9227 = vmatprep.subr.mxu0 0.0
    %9228 = vmatpush1.msra.mxu0 0.0
    %9229 = vmatprep.subr.mxu0 0.0
    %9230 = vmatpush1.msra.mxu0 0.0
    %9231 = vmatprep.subr.mxu0 0.0
    %9232 = vmatpush1.msra.mxu0 0.0
    %9233 = vmatprep.subr.mxu0 0.0
    %9234 = vmatpush1.msra.mxu0 0.0
    %9235 = vmatprep.subr.mxu0 0.0
    %9236 = vmatpush1.msra.mxu0 0.0
    %9237 = vmatprep.subr.mxu0 0.0
    %9238 = vmatpush1.msra.mxu0 0.0
    %9239 = vmatprep.subr.mxu0 0.0
    %9240 = vmatpush1.msra.mxu0 0.0
    %9241 = vmatprep.subr.mxu0 0.0
    %9242 = vmatpush1.msra.mxu0 0.0
    %9243 = vmatprep.subr.mxu0 0.0
    %9244 = vmatpush1.msra.mxu0 0.0
    %9245 = vmatprep.subr.mxu0 0.0
    %9246 = vmatpush1.msra.mxu0 0.0
    %9247 = vmatprep.subr.mxu0 0.0
    %9248 = vmatpush1.msra.mxu0 0.0
    %9249 = vmatprep.subr.mxu0 0.0
    %9250 = vmatpush1.msra.mxu0 0.0
    %9251 = vmatprep.subr.mxu0 0.0
    %9252 = vmatpush1.msra.mxu0 0.0
    %9253 = vmatprep.subr.mxu0 0.0
    %9254 = vmatpush1.msra.mxu0 0.0
    %9255 = vmatprep.subr.mxu0 0.0
    %9256 = vmatpush1.msra.mxu0 0.0
    %9257 = vmatprep.subr.mxu0 0.0
    %9258 = vmatpush1.msra.mxu0 0.0
    %9259 = vmatprep.subr.mxu0 0.0
    %9260 = vmatpush1.msra.mxu0 0.0
    %9261 = vmatprep.subr.mxu0 0.0
    %9262 = vmatpush1.msra.mxu0 0.0
    %9263 = vmatprep.subr.mxu0 0.0
    %9264 = vmatpush1.msra.mxu0 0.0
    %9265 = vmatprep.subr.mxu0 0.0
    %9266 = vmatpush1.msra.mxu0 0.0
    %9267 = vmatprep.subr.mxu0 0.0
    %9268 = vmatpush1.msra.mxu0 0.0
    %9269 = vmatprep.subr.mxu0 0.0
    %9270 = vmatpush1.msra.mxu0 0.0
    %9271 = vmatprep.subr.mxu0 0.0
    %9272 = vmatpush1.msra.mxu0 0.0
    %9273 = vmatprep.subr.mxu0 0.0
    %9274 = vmatpush1.msra.mxu0 0.0
    %9275 = vmatprep.subr.mxu0 0.0
    %9276 = vmatpush1.msra.mxu0 0.0
    %9277 = vmatprep.subr.mxu0 0.0
    %9278 = vmatpush1.msra.mxu0 0.0
    %9279 = vmatprep.mubr.f32.mxu0 0.0
    %9280 = vmatmul.mubr.f32.gmra.mrb[0].mxu0 %v9210
    %v9281 = vpop.f32.mrb[0].mxu0
    %v9282 = vadd.f32 %v9207, %v9281
    %v9283 = vpop.f32.mrb[0].mxu0
    %9284 = vmatprep.mubr.f32.mxu0 0.0
    %9285 = vmatmul.mubr.f32.gmra.mrb[0].mxu0 %v9213
    %v9286 = vpop.f32.mrb[0].mxu0
    %v9287 = vadd.f32 %v9207, %v9286
    %v9288 = vpop.f32.mrb[0].mxu0
    %9289 = vdwg.mxu0
    %v9292 = vunpack.c.l.s4 1966171168
    %v9293 = vunpack.c.0.s8 %v9292
    %v9294 = vlaneseq
    %v9295 = vshrl.u32 %v9294, 7
    %v9296 = vsub.s32 %v9293, %v9295
    %v9297 = vrot.slane %v8994, %v9296
    %v9298 = vcombine.high %v9297, %v9297
    %v9300 = vunpack.c.l.s4 1966171168
    %v9301 = vunpack.c.0.s8 %v9300
    %v9302 = vlaneseq
    %v9303 = vshrl.u32 %v9302, 7
    %v9304 = vsub.s32 %v9301, %v9303
    %v9305 = vrot.slane %v9297, %v9304
    %v9307 = vunpack.c.l.s4 1966171168
    %v9308 = vunpack.c.0.s8 %v9307
    %v9309 = vlaneseq
    %v9310 = vshrl.u32 %v9309, 7
    %v9311 = vsub.s32 %v9308, %v9310
    %v9312 = vrot.slane %v9298, %v9311
    %v9313 = vlaneseq
    %v9314 = vshrl.u32 %v9313, 7
    %v9315 = vsub.s32 0, %v9314
    %v9316 = vrot.slane %v9305, %v9315
    %v9317 = vlaneseq
    %v9318 = vshrl.u32 %v9317, 7
    %v9319 = vsub.s32 0, %v9318
    %v9320 = vrot.slane %v9312, %v9319
    %v9323 = vmul.f32 %v9282, %v9316
    %v9324 = vmul.f32 %v9287, %v9320
    %v9325 = vadd.f32 %v8903, %v9323
    %v9326 = vadd.f32 %v8908, %v9324
    %9327 = vst [vmem:[%s97] sm:$0xff] %v9325
    %9328 = vst [vmem:[%s97 + $0x8] sm:$0xff] %v9326
    // Predicated region
    $region198: #{lasagne_forward.1} parent=1 // pred_check
      _
    $region199: #{lasagne_forward.1} parent=1 // pred_check_branch
      %9330 = sbr.rel (0) target = $region201
    $region200: #{lasagne_forward.1} parent=1 // pred_region
      _
    $region201: #{lasagne_forward.1} parent=1 // pred_fallthru
      _
    // Predicated region
    $region202: #{lasagne_forward.1} parent=1 // pred_check
      _
    $region203: #{lasagne_forward.1} parent=1 // pred_check_branch
      %9332 = sbr.rel (0) target = $region205
    $region204: #{lasagne_forward.1} parent=1 // pred_region
      _
    $region205: #{lasagne_forward.1} parent=1 // pred_fallthru
      _
    // Predicated region
    $region206: #{lasagne_forward.1} parent=1 // pred_check
      _
    $region207: #{lasagne_forward.1} parent=1 // pred_check_branch
      %9334 = sbr.rel (0) target = $region209
    $region208: #{lasagne_forward.1} parent=1 // pred_region
      _
    $region209: #{lasagne_forward.1} parent=1 // pred_fallthru
      _
    // Predicated region
    $region210: #{lasagne_forward.1} parent=1 // pred_check
      _
    $region211: #{lasagne_forward.1} parent=1 // pred_check_branch
      %9336 = sbr.rel (0) target = $region213
    $region212: #{lasagne_forward.1} parent=1 // pred_region
      _
    $region213: #{lasagne_forward.1} parent=1 // pred_fallthru
      _
    %9337 = vsyncpa [#allocation4], 1
    %9338 = vsyncpa [#allocation6], 1

</llo_original>
